<compile_context>
chip_gen: v6e
topology: v6e:2x2x1
jax: 0.10.0
libtpu: 0.0.40
codegen_flags: <defaults>
</compile_context>

<pallas_src>
import jax
import jax.numpy as jnp
from jax.experimental import pallas as pl
from jax.experimental.pallas import tpu as pltpu


# ----------------------------------------------------------------------------
# Fused kernel
#   x_ref : (TN, 14, 14, Cin) f32   NHWC batch tile
#   wc_ref: (Cin, 128)        bf16  1x1 conv weight with BN scale and the 1/25
#                                   avg-pool factor folded in
#   bc_ref: (1, 128)          f32   folded conv+BN bias
#   w1_ref: (16, 128, 1024)   bf16  fc1 weight permuted to (p=(oh,ow), c, f)
#   b1_ref: (1, 1024)         f32
#   w2_ref: (1024, Kpad)      bf16  fc2 weight, zero-padded to lane-dense Kpad
#   b2_ref: (1, Kpad)         f32
#   o_ref : (TN, Kpad)        f32   padded logits
# ----------------------------------------------------------------------------
def _inception_aux_kernel(x_ref, wc_ref, bc_ref, w1_ref, b1_ref, w2_ref, b2_ref,
                          o_ref):
    x = x_ref[...]
    wc = wc_ref[...]
    bc = bc_ref[...]

    acc = None
    for oh in range(4):
        # 5-row H window sum: H is a leading (untiled) dim -> cheap slab adds.
        hsum = jnp.sum(x[:, oh * 3:oh * 3 + 5, :, :], axis=1)            # (TN,14,Cin)
        for ow in range(4):
            # 5-col W window sum (sublane dim).
            pooled = jnp.sum(hsum[:, ow * 3:ow * 3 + 5, :], axis=1)      # (TN,Cin)
            # 1x1 conv + BN (scale folded into wc, 1/25 pool factor folded too).
            z = jnp.dot(pooled.astype(jnp.bfloat16), wc,
                        preferred_element_type=jnp.float32)              # (TN,128)
            z = jnp.maximum(z + bc, 0.0)
            # fc1 partial: this (oh,ow) block of the flattened feature vector.
            part = jnp.dot(z.astype(jnp.bfloat16), w1_ref[oh * 4 + ow],
                           preferred_element_type=jnp.float32)           # (TN,1024)
            acc = part if acc is None else acc + part

    h = jnp.maximum(acc + b1_ref[...], 0.0)                              # (TN,1024)
    # TODO(synk): F.dropout(p=0.7) is training-only; eval mode => identity.
    out = jnp.dot(h.astype(jnp.bfloat16), w2_ref[...],
                  preferred_element_type=jnp.float32)                    # (TN,Kpad)
    o_ref[...] = out + b2_ref[...]


# ----------------------------------------------------------------------------
# Parameter prep (done once, plain JAX): BN folding, weight permutation, bf16.
# ----------------------------------------------------------------------------
def prepare_params(params, eps=1e-5):
    cin = params["conv_w"].shape[1]
    scale = params["bn_gamma"] / jnp.sqrt(params["bn_var"] + eps)        # (128,)
    # Fold BN scale and the 1/25 average-pool factor into the conv weight.
    wc = params["conv_w"].reshape(128, cin).T * scale[None, :] * (1.0 / 25.0)
    bias_c = (params["conv_b"] * scale + params["bn_beta"]
              - params["bn_mean"] * scale).reshape(1, 128)
    # fc1 weight: PyTorch flatten order is (c, oh, ow); permute rows so the
    # kernel can consume the pooled features directly as (p=(oh,ow), c).
    w1 = (params["fc1_w"].reshape(1024, 128, 4, 4)
          .transpose(2, 3, 1, 0).reshape(16, 128, 1024))
    b1 = params["fc1_b"].reshape(1, 1024)
    k = params["fc2_w"].shape[0]
    kpad = max(128, ((k + 127) // 128) * 128)                            # lane-dense
    w2 = jnp.zeros((1024, kpad), jnp.float32).at[:, :k].set(params["fc2_w"].T)
    b2 = jnp.zeros((1, kpad), jnp.float32).at[:, :k].set(params["fc2_b"])
    return {
        "wc": wc.astype(jnp.bfloat16),
        "bias_c": bias_c.astype(jnp.float32),
        "w1": w1.astype(jnp.bfloat16),
        "b1": b1.astype(jnp.float32),
        "w2": w2.astype(jnp.bfloat16),
        "b2": b2.astype(jnp.float32),
    }


def inception_aux_forward(x_nchw, prep, class_nums):
    """x_nchw: (N, Cin, 14, 14) float32. Returns (N, class_nums) logits."""
    n, cin, hh, ww = x_nchw.shape
    assert hh == 14 and ww == 14, "InceptionAux expects a 14x14 feature map"

    x = jnp.transpose(x_nchw, (0, 2, 3, 1)).astype(jnp.float32)          # NHWC
    kpad = prep["w2"].shape[1]

    tn = 8 if n >= 8 else n                      # batch tile (sublane friendly)
    n_pad = pl.cdiv(n, tn) * tn
    if n_pad != n:
        x = jnp.pad(x, ((0, n_pad - n), (0, 0), (0, 0), (0, 0)))

    out = pl.pallas_call(
        _inception_aux_kernel,
        out_shape=jax.ShapeDtypeStruct((n_pad, kpad), jnp.float32),
        grid=(n_pad // tn,),
        in_specs=[
            pl.BlockSpec((tn, 14, 14, cin), lambda i: (i, 0, 0, 0)),
            pl.BlockSpec((cin, 128), lambda i: (0, 0)),
            pl.BlockSpec((1, 128), lambda i: (0, 0)),
            pl.BlockSpec((16, 128, 1024), lambda i: (0, 0, 0)),
            pl.BlockSpec((1, 1024), lambda i: (0, 0)),
            pl.BlockSpec((1024, kpad), lambda i: (0, 0)),
            pl.BlockSpec((1, kpad), lambda i: (0, 0)),
        ],
        out_specs=pl.BlockSpec((tn, kpad), lambda i: (i, 0)),
        compiler_params=pltpu.CompilerParams(
            dimension_semantics=("parallel",),
            vmem_limit_bytes=48 * 1024 * 1024,
        ),
    )(x, prep["wc"], prep["bias_c"], prep["w1"], prep["b1"],
      prep["w2"], prep["b2"])

    return out[:n, :class_nums]


# ---- deterministic parameter init (PyTorch-like uniform bounds) ----
def init_params(key, input_channel, class_nums):
    ks = jax.random.split(key, 6)

    def u(k, shape, fan_in):
        b = 1.0 / jnp.sqrt(float(fan_in))
        return jax.random.uniform(k, shape, jnp.float32, minval=-b, maxval=b)

    return {
        "conv_w": u(ks[0], (128, input_channel, 1, 1), input_channel),
        "conv_b": u(ks[1], (128,), input_channel),
        "bn_gamma": jnp.ones((128,), jnp.float32),
        "bn_beta": jnp.zeros((128,), jnp.float32),
        "bn_mean": jnp.zeros((128,), jnp.float32),
        "bn_var": jnp.ones((128,), jnp.float32),
        "fc1_w": u(ks[2], (1024, 128 * 4 * 4), 128 * 4 * 4),
        "fc1_b": u(ks[3], (1024,), 128 * 4 * 4),
        "fc2_w": u(ks[4], (class_nums, 1024), 1024),
        "fc2_b": u(ks[5], (class_nums,), 1024),
    }


# ---- pure-JAX f32 reference for sanity checking ----
def reference_forward(x, p):
    n, cin, _, _ = x.shape
    pooled = jax.lax.reduce_window(
        x, 0.0, jax.lax.add, (1, 1, 5, 5), (1, 1, 3, 3), "VALID") / 25.0
    w = p["conv_w"].reshape(128, cin)
    z = jnp.einsum("nchw,oc->nohw", pooled, w) + p["conv_b"][None, :, None, None]
    scale = p["bn_gamma"] / jnp.sqrt(p["bn_var"] + 1e-5)
    z = (z - p["bn_mean"][None, :, None, None]) * scale[None, :, None, None] \
        + p["bn_beta"][None, :, None, None]
    z = jnp.maximum(z, 0.0)
    flat = z.reshape(n, -1)
    h = jnp.maximum(flat @ p["fc1_w"].T + p["fc1_b"], 0.0)
    return h @ p["fc2_w"].T + p["fc2_b"]


if __name__ == "__main__":
    N, CIN, HW, CLASSES = 2, 16, 14, 10
    key = jax.random.PRNGKey(0)
    kx, kp = jax.random.split(key)
    x = jax.random.normal(kx, (N, CIN, HW, HW), jnp.float32)
    params = init_params(kp, CIN, CLASSES)
    prep = prepare_params(params)

    out = jax.block_until_ready(inception_aux_forward(x, prep, CLASSES))
    ref = jax.block_until_ready(reference_forward(x, params))

    assert out.shape == (N, CLASSES), out.shape
    max_diff = float(jnp.max(jnp.abs(out - ref)))
    assert jnp.allclose(out, ref, rtol=2e-2, atol=2e-2), \
        f"max abs diff {max_diff}"
    print("KERNEL_OK")
</pallas_src>

<mosaic_0001>
module attributes {stable_mosaic.version = 11 : i64} {
  func.func @_inception_aux_kernel(%arg0: i32, %arg1: memref<2x14x14x16xf32, #tpu.memory_space<vmem>>, %arg2: memref<16x128xbf16, #tpu.memory_space<vmem>>, %arg3: memref<1x128xf32, #tpu.memory_space<vmem>>, %arg4: memref<16x128x1024xbf16, #tpu.memory_space<vmem>>, %arg5: memref<1x1024xf32, #tpu.memory_space<vmem>>, %arg6: memref<1024x128xbf16, #tpu.memory_space<vmem>>, %arg7: memref<1x128xf32, #tpu.memory_space<vmem>>, %arg8: memref<2x128xf32, #tpu.memory_space<vmem>>) attributes {dimension_semantics = [#tpu.dimension_semantics<parallel>], iteration_bounds = array<i64: 1>, scalar_prefetch = 0 : i64, scratch_operands = 0 : i64, tpu.core_type = #tpu.core_type<tc>, window_params = [{transform_indices = @transform_0, window_bounds = array<i64: 2, 14, 14, 16>}, {pipeline_mode = #tpu.pipeline_mode<synchronous>, transform_indices = @transform_1, window_bounds = array<i64: 16, 128>}, {pipeline_mode = #tpu.pipeline_mode<synchronous>, transform_indices = @transform_2, window_bounds = array<i64: 1, 128>}, {pipeline_mode = #tpu.pipeline_mode<synchronous>, transform_indices = @transform_3, window_bounds = array<i64: 16, 128, 1024>}, {pipeline_mode = #tpu.pipeline_mode<synchronous>, transform_indices = @transform_4, window_bounds = array<i64: 1, 1024>}, {pipeline_mode = #tpu.pipeline_mode<synchronous>, transform_indices = @transform_5, window_bounds = array<i64: 1024, 128>}, {pipeline_mode = #tpu.pipeline_mode<synchronous>, transform_indices = @transform_6, window_bounds = array<i64: 1, 128>}, {transform_indices = @transform_7, window_bounds = array<i64: 2, 128>}]} {
    %c0 = arith.constant 0 : index
    %c0_0 = arith.constant 0 : index
    %c0_1 = arith.constant 0 : index
    %c0_2 = arith.constant 0 : index
    %0 = vector.load %arg1[%c0, %c0_0, %c0_1, %c0_2] : memref<2x14x14x16xf32, #tpu.memory_space<vmem>>, vector<2x14x14x16xf32>
    %c0_3 = arith.constant 0 : index
    %c0_4 = arith.constant 0 : index
    %1 = vector.load %arg2[%c0_3, %c0_4] : memref<16x128xbf16, #tpu.memory_space<vmem>>, vector<16x128xbf16>
    %c0_5 = arith.constant 0 : index
    %c0_6 = arith.constant 0 : index
    %2 = vector.load %arg3[%c0_5, %c0_6] : memref<1x128xf32, #tpu.memory_space<vmem>>, vector<1x128xf32>
    %3 = vector.extract_strided_slice %0 {offsets = [0, 0, 0, 0], sizes = [2, 5, 14, 16], strides = [1, 1, 1, 1]} : vector<2x14x14x16xf32> to vector<2x5x14x16xf32>
    %cst = arith.constant dense<0.000000e+00> : vector<2x14x16xf32>
    %4 = vector.multi_reduction <add>, %3, %cst [1] : vector<2x5x14x16xf32> to vector<2x14x16xf32>
    %5 = vector.extract_strided_slice %4 {offsets = [0, 0, 0], sizes = [2, 5, 16], strides = [1, 1, 1]} : vector<2x14x16xf32> to vector<2x5x16xf32>
    %cst_7 = arith.constant dense<0.000000e+00> : vector<2x16xf32>
    %6 = vector.multi_reduction <add>, %5, %cst_7 [1] : vector<2x5x16xf32> to vector<2x16xf32>
    %7 = arith.truncf %6 : vector<2x16xf32> to vector<2x16xbf16>
    %cst_8 = arith.constant dense<0.000000e+00> : vector<2x128xf32>
    %8 = tpu.matmul %7, %1, %cst_8 {dimension_numbers = #tpu.dot_dimension_numbers<[1], [0], [0], [1], [0, 0, 1, 1], [], []>} : vector<2x16xbf16>, vector<16x128xbf16>, vector<2x128xf32> -> vector<2x128xf32>
    %9 = vector.broadcast %2 : vector<1x128xf32> to vector<2x128xf32>
    %10 = arith.addf %8, %9 : vector<2x128xf32>
    %cst_9 = arith.constant 0.000000e+00 : f32
    %11 = vector.broadcast %cst_9 : f32 to vector<2x128xf32>
    %12 = arith.maximumf %10, %11 : vector<2x128xf32>
    %13 = arith.truncf %12 : vector<2x128xf32> to vector<2x128xbf16>
    %c0_10 = arith.constant 0 : index
    %c0_11 = arith.constant 0 : index
    %c0_12 = arith.constant 0 : index
    %14 = vector.load %arg4[%c0_10, %c0_11, %c0_12] : memref<16x128x1024xbf16, #tpu.memory_space<vmem>>, vector<1x128x1024xbf16>
    %15 = vector.shape_cast %14 : vector<1x128x1024xbf16> to vector<128x1024xbf16>
    %cst_13 = arith.constant dense<0.000000e+00> : vector<2x1024xf32>
    %16 = tpu.matmul %13, %15, %cst_13 {dimension_numbers = #tpu.dot_dimension_numbers<[1], [0], [0], [1], [0, 0, 1, 1], [], []>} : vector<2x128xbf16>, vector<128x1024xbf16>, vector<2x1024xf32> -> vector<2x1024xf32>
    %17 = vector.extract_strided_slice %4 {offsets = [0, 3, 0], sizes = [2, 5, 16], strides = [1, 1, 1]} : vector<2x14x16xf32> to vector<2x5x16xf32>
    %cst_14 = arith.constant dense<0.000000e+00> : vector<2x16xf32>
    %18 = vector.multi_reduction <add>, %17, %cst_14 [1] : vector<2x5x16xf32> to vector<2x16xf32>
    %19 = arith.truncf %18 : vector<2x16xf32> to vector<2x16xbf16>
    %cst_15 = arith.constant dense<0.000000e+00> : vector<2x128xf32>
    %20 = tpu.matmul %19, %1, %cst_15 {dimension_numbers = #tpu.dot_dimension_numbers<[1], [0], [0], [1], [0, 0, 1, 1], [], []>} : vector<2x16xbf16>, vector<16x128xbf16>, vector<2x128xf32> -> vector<2x128xf32>
    %21 = vector.broadcast %2 : vector<1x128xf32> to vector<2x128xf32>
    %22 = arith.addf %20, %21 : vector<2x128xf32>
    %cst_16 = arith.constant 0.000000e+00 : f32
    %23 = vector.broadcast %cst_16 : f32 to vector<2x128xf32>
    %24 = arith.maximumf %22, %23 : vector<2x128xf32>
    %25 = arith.truncf %24 : vector<2x128xf32> to vector<2x128xbf16>
    %c1 = arith.constant 1 : index
    %c0_17 = arith.constant 0 : index
    %c0_18 = arith.constant 0 : index
    %26 = vector.load %arg4[%c1, %c0_17, %c0_18] : memref<16x128x1024xbf16, #tpu.memory_space<vmem>>, vector<1x128x1024xbf16>
    %27 = vector.shape_cast %26 : vector<1x128x1024xbf16> to vector<128x1024xbf16>
    %cst_19 = arith.constant dense<0.000000e+00> : vector<2x1024xf32>
    %28 = tpu.matmul %25, %27, %cst_19 {dimension_numbers = #tpu.dot_dimension_numbers<[1], [0], [0], [1], [0, 0, 1, 1], [], []>} : vector<2x128xbf16>, vector<128x1024xbf16>, vector<2x1024xf32> -> vector<2x1024xf32>
    %29 = arith.addf %16, %28 : vector<2x1024xf32>
    %30 = vector.extract_strided_slice %4 {offsets = [0, 6, 0], sizes = [2, 5, 16], strides = [1, 1, 1]} : vector<2x14x16xf32> to vector<2x5x16xf32>
    %cst_20 = arith.constant dense<0.000000e+00> : vector<2x16xf32>
    %31 = vector.multi_reduction <add>, %30, %cst_20 [1] : vector<2x5x16xf32> to vector<2x16xf32>
    %32 = arith.truncf %31 : vector<2x16xf32> to vector<2x16xbf16>
    %cst_21 = arith.constant dense<0.000000e+00> : vector<2x128xf32>
    %33 = tpu.matmul %32, %1, %cst_21 {dimension_numbers = #tpu.dot_dimension_numbers<[1], [0], [0], [1], [0, 0, 1, 1], [], []>} : vector<2x16xbf16>, vector<16x128xbf16>, vector<2x128xf32> -> vector<2x128xf32>
    %34 = vector.broadcast %2 : vector<1x128xf32> to vector<2x128xf32>
    %35 = arith.addf %33, %34 : vector<2x128xf32>
    %cst_22 = arith.constant 0.000000e+00 : f32
    %36 = vector.broadcast %cst_22 : f32 to vector<2x128xf32>
    %37 = arith.maximumf %35, %36 : vector<2x128xf32>
    %38 = arith.truncf %37 : vector<2x128xf32> to vector<2x128xbf16>
    %c2 = arith.constant 2 : index
    %c0_23 = arith.constant 0 : index
    %c0_24 = arith.constant 0 : index
    %39 = vector.load %arg4[%c2, %c0_23, %c0_24] : memref<16x128x1024xbf16, #tpu.memory_space<vmem>>, vector<1x128x1024xbf16>
    %40 = vector.shape_cast %39 : vector<1x128x1024xbf16> to vector<128x1024xbf16>
    %cst_25 = arith.constant dense<0.000000e+00> : vector<2x1024xf32>
    %41 = tpu.matmul %38, %40, %cst_25 {dimension_numbers = #tpu.dot_dimension_numbers<[1], [0], [0], [1], [0, 0, 1, 1], [], []>} : vector<2x128xbf16>, vector<128x1024xbf16>, vector<2x1024xf32> -> vector<2x1024xf32>
    %42 = arith.addf %29, %41 : vector<2x1024xf32>
    %43 = vector.extract_strided_slice %4 {offsets = [0, 9, 0], sizes = [2, 5, 16], strides = [1, 1, 1]} : vector<2x14x16xf32> to vector<2x5x16xf32>
    %cst_26 = arith.constant dense<0.000000e+00> : vector<2x16xf32>
    %44 = vector.multi_reduction <add>, %43, %cst_26 [1] : vector<2x5x16xf32> to vector<2x16xf32>
    %45 = arith.truncf %44 : vector<2x16xf32> to vector<2x16xbf16>
    %cst_27 = arith.constant dense<0.000000e+00> : vector<2x128xf32>
    %46 = tpu.matmul %45, %1, %cst_27 {dimension_numbers = #tpu.dot_dimension_numbers<[1], [0], [0], [1], [0, 0, 1, 1], [], []>} : vector<2x16xbf16>, vector<16x128xbf16>, vector<2x128xf32> -> vector<2x128xf32>
    %47 = vector.broadcast %2 : vector<1x128xf32> to vector<2x128xf32>
    %48 = arith.addf %46, %47 : vector<2x128xf32>
    %cst_28 = arith.constant 0.000000e+00 : f32
    %49 = vector.broadcast %cst_28 : f32 to vector<2x128xf32>
    %50 = arith.maximumf %48, %49 : vector<2x128xf32>
    %51 = arith.truncf %50 : vector<2x128xf32> to vector<2x128xbf16>
    %c3 = arith.constant 3 : index
    %c0_29 = arith.constant 0 : index
    %c0_30 = arith.constant 0 : index
    %52 = vector.load %arg4[%c3, %c0_29, %c0_30] : memref<16x128x1024xbf16, #tpu.memory_space<vmem>>, vector<1x128x1024xbf16>
    %53 = vector.shape_cast %52 : vector<1x128x1024xbf16> to vector<128x1024xbf16>
    %cst_31 = arith.constant dense<0.000000e+00> : vector<2x1024xf32>
    %54 = tpu.matmul %51, %53, %cst_31 {dimension_numbers = #tpu.dot_dimension_numbers<[1], [0], [0], [1], [0, 0, 1, 1], [], []>} : vector<2x128xbf16>, vector<128x1024xbf16>, vector<2x1024xf32> -> vector<2x1024xf32>
    %55 = arith.addf %42, %54 : vector<2x1024xf32>
    %56 = vector.extract_strided_slice %0 {offsets = [0, 3, 0, 0], sizes = [2, 5, 14, 16], strides = [1, 1, 1, 1]} : vector<2x14x14x16xf32> to vector<2x5x14x16xf32>
    %cst_32 = arith.constant dense<0.000000e+00> : vector<2x14x16xf32>
    %57 = vector.multi_reduction <add>, %56, %cst_32 [1] : vector<2x5x14x16xf32> to vector<2x14x16xf32>
    %58 = vector.extract_strided_slice %57 {offsets = [0, 0, 0], sizes = [2, 5, 16], strides = [1, 1, 1]} : vector<2x14x16xf32> to vector<2x5x16xf32>
    %cst_33 = arith.constant dense<0.000000e+00> : vector<2x16xf32>
    %59 = vector.multi_reduction <add>, %58, %cst_33 [1] : vector<2x5x16xf32> to vector<2x16xf32>
    %60 = arith.truncf %59 : vector<2x16xf32> to vector<2x16xbf16>
    %cst_34 = arith.constant dense<0.000000e+00> : vector<2x128xf32>
    %61 = tpu.matmul %60, %1, %cst_34 {dimension_numbers = #tpu.dot_dimension_numbers<[1], [0], [0], [1], [0, 0, 1, 1], [], []>} : vector<2x16xbf16>, vector<16x128xbf16>, vector<2x128xf32> -> vector<2x128xf32>
    %62 = vector.broadcast %2 : vector<1x128xf32> to vector<2x128xf32>
    %63 = arith.addf %61, %62 : vector<2x128xf32>
    %cst_35 = arith.constant 0.000000e+00 : f32
    %64 = vector.broadcast %cst_35 : f32 to vector<2x128xf32>
    %65 = arith.maximumf %63, %64 : vector<2x128xf32>
    %66 = arith.truncf %65 : vector<2x128xf32> to vector<2x128xbf16>
    %c4 = arith.constant 4 : index
    %c0_36 = arith.constant 0 : index
    %c0_37 = arith.constant 0 : index
    %67 = vector.load %arg4[%c4, %c0_36, %c0_37] : memref<16x128x1024xbf16, #tpu.memory_space<vmem>>, vector<1x128x1024xbf16>
    %68 = vector.shape_cast %67 : vector<1x128x1024xbf16> to vector<128x1024xbf16>
    %cst_38 = arith.constant dense<0.000000e+00> : vector<2x1024xf32>
    %69 = tpu.matmul %66, %68, %cst_38 {dimension_numbers = #tpu.dot_dimension_numbers<[1], [0], [0], [1], [0, 0, 1, 1], [], []>} : vector<2x128xbf16>, vector<128x1024xbf16>, vector<2x1024xf32> -> vector<2x1024xf32>
    %70 = arith.addf %55, %69 : vector<2x1024xf32>
    %71 = vector.extract_strided_slice %57 {offsets = [0, 3, 0], sizes = [2, 5, 16], strides = [1, 1, 1]} : vector<2x14x16xf32> to vector<2x5x16xf32>
    %cst_39 = arith.constant dense<0.000000e+00> : vector<2x16xf32>
    %72 = vector.multi_reduction <add>, %71, %cst_39 [1] : vector<2x5x16xf32> to vector<2x16xf32>
    %73 = arith.truncf %72 : vector<2x16xf32> to vector<2x16xbf16>
    %cst_40 = arith.constant dense<0.000000e+00> : vector<2x128xf32>
    %74 = tpu.matmul %73, %1, %cst_40 {dimension_numbers = #tpu.dot_dimension_numbers<[1], [0], [0], [1], [0, 0, 1, 1], [], []>} : vector<2x16xbf16>, vector<16x128xbf16>, vector<2x128xf32> -> vector<2x128xf32>
    %75 = vector.broadcast %2 : vector<1x128xf32> to vector<2x128xf32>
    %76 = arith.addf %74, %75 : vector<2x128xf32>
    %cst_41 = arith.constant 0.000000e+00 : f32
    %77 = vector.broadcast %cst_41 : f32 to vector<2x128xf32>
    %78 = arith.maximumf %76, %77 : vector<2x128xf32>
    %79 = arith.truncf %78 : vector<2x128xf32> to vector<2x128xbf16>
    %c5 = arith.constant 5 : index
    %c0_42 = arith.constant 0 : index
    %c0_43 = arith.constant 0 : index
    %80 = vector.load %arg4[%c5, %c0_42, %c0_43] : memref<16x128x1024xbf16, #tpu.memory_space<vmem>>, vector<1x128x1024xbf16>
    %81 = vector.shape_cast %80 : vector<1x128x1024xbf16> to vector<128x1024xbf16>
    %cst_44 = arith.constant dense<0.000000e+00> : vector<2x1024xf32>
    %82 = tpu.matmul %79, %81, %cst_44 {dimension_numbers = #tpu.dot_dimension_numbers<[1], [0], [0], [1], [0, 0, 1, 1], [], []>} : vector<2x128xbf16>, vector<128x1024xbf16>, vector<2x1024xf32> -> vector<2x1024xf32>
    %83 = arith.addf %70, %82 : vector<2x1024xf32>
    %84 = vector.extract_strided_slice %57 {offsets = [0, 6, 0], sizes = [2, 5, 16], strides = [1, 1, 1]} : vector<2x14x16xf32> to vector<2x5x16xf32>
    %cst_45 = arith.constant dense<0.000000e+00> : vector<2x16xf32>
    %85 = vector.multi_reduction <add>, %84, %cst_45 [1] : vector<2x5x16xf32> to vector<2x16xf32>
    %86 = arith.truncf %85 : vector<2x16xf32> to vector<2x16xbf16>
    %cst_46 = arith.constant dense<0.000000e+00> : vector<2x128xf32>
    %87 = tpu.matmul %86, %1, %cst_46 {dimension_numbers = #tpu.dot_dimension_numbers<[1], [0], [0], [1], [0, 0, 1, 1], [], []>} : vector<2x16xbf16>, vector<16x128xbf16>, vector<2x128xf32> -> vector<2x128xf32>
    %88 = vector.broadcast %2 : vector<1x128xf32> to vector<2x128xf32>
    %89 = arith.addf %87, %88 : vector<2x128xf32>
    %cst_47 = arith.constant 0.000000e+00 : f32
    %90 = vector.broadcast %cst_47 : f32 to vector<2x128xf32>
    %91 = arith.maximumf %89, %90 : vector<2x128xf32>
    %92 = arith.truncf %91 : vector<2x128xf32> to vector<2x128xbf16>
    %c6 = arith.constant 6 : index
    %c0_48 = arith.constant 0 : index
    %c0_49 = arith.constant 0 : index
    %93 = vector.load %arg4[%c6, %c0_48, %c0_49] : memref<16x128x1024xbf16, #tpu.memory_space<vmem>>, vector<1x128x1024xbf16>
    %94 = vector.shape_cast %93 : vector<1x128x1024xbf16> to vector<128x1024xbf16>
    %cst_50 = arith.constant dense<0.000000e+00> : vector<2x1024xf32>
    %95 = tpu.matmul %92, %94, %cst_50 {dimension_numbers = #tpu.dot_dimension_numbers<[1], [0], [0], [1], [0, 0, 1, 1], [], []>} : vector<2x128xbf16>, vector<128x1024xbf16>, vector<2x1024xf32> -> vector<2x1024xf32>
    %96 = arith.addf %83, %95 : vector<2x1024xf32>
    %97 = vector.extract_strided_slice %57 {offsets = [0, 9, 0], sizes = [2, 5, 16], strides = [1, 1, 1]} : vector<2x14x16xf32> to vector<2x5x16xf32>
    %cst_51 = arith.constant dense<0.000000e+00> : vector<2x16xf32>
    %98 = vector.multi_reduction <add>, %97, %cst_51 [1] : vector<2x5x16xf32> to vector<2x16xf32>
    %99 = arith.truncf %98 : vector<2x16xf32> to vector<2x16xbf16>
    %cst_52 = arith.constant dense<0.000000e+00> : vector<2x128xf32>
    %100 = tpu.matmul %99, %1, %cst_52 {dimension_numbers = #tpu.dot_dimension_numbers<[1], [0], [0], [1], [0, 0, 1, 1], [], []>} : vector<2x16xbf16>, vector<16x128xbf16>, vector<2x128xf32> -> vector<2x128xf32>
    %101 = vector.broadcast %2 : vector<1x128xf32> to vector<2x128xf32>
    %102 = arith.addf %100, %101 : vector<2x128xf32>
    %cst_53 = arith.constant 0.000000e+00 : f32
    %103 = vector.broadcast %cst_53 : f32 to vector<2x128xf32>
    %104 = arith.maximumf %102, %103 : vector<2x128xf32>
    %105 = arith.truncf %104 : vector<2x128xf32> to vector<2x128xbf16>
    %c7 = arith.constant 7 : index
    %c0_54 = arith.constant 0 : index
    %c0_55 = arith.constant 0 : index
    %106 = vector.load %arg4[%c7, %c0_54, %c0_55] : memref<16x128x1024xbf16, #tpu.memory_space<vmem>>, vector<1x128x1024xbf16>
    %107 = vector.shape_cast %106 : vector<1x128x1024xbf16> to vector<128x1024xbf16>
    %cst_56 = arith.constant dense<0.000000e+00> : vector<2x1024xf32>
    %108 = tpu.matmul %105, %107, %cst_56 {dimension_numbers = #tpu.dot_dimension_numbers<[1], [0], [0], [1], [0, 0, 1, 1], [], []>} : vector<2x128xbf16>, vector<128x1024xbf16>, vector<2x1024xf32> -> vector<2x1024xf32>
    %109 = arith.addf %96, %108 : vector<2x1024xf32>
    %110 = vector.extract_strided_slice %0 {offsets = [0, 6, 0, 0], sizes = [2, 5, 14, 16], strides = [1, 1, 1, 1]} : vector<2x14x14x16xf32> to vector<2x5x14x16xf32>
    %cst_57 = arith.constant dense<0.000000e+00> : vector<2x14x16xf32>
    %111 = vector.multi_reduction <add>, %110, %cst_57 [1] : vector<2x5x14x16xf32> to vector<2x14x16xf32>
    %112 = vector.extract_strided_slice %111 {offsets = [0, 0, 0], sizes = [2, 5, 16], strides = [1, 1, 1]} : vector<2x14x16xf32> to vector<2x5x16xf32>
    %cst_58 = arith.constant dense<0.000000e+00> : vector<2x16xf32>
    %113 = vector.multi_reduction <add>, %112, %cst_58 [1] : vector<2x5x16xf32> to vector<2x16xf32>
    %114 = arith.truncf %113 : vector<2x16xf32> to vector<2x16xbf16>
    %cst_59 = arith.constant dense<0.000000e+00> : vector<2x128xf32>
    %115 = tpu.matmul %114, %1, %cst_59 {dimension_numbers = #tpu.dot_dimension_numbers<[1], [0], [0], [1], [0, 0, 1, 1], [], []>} : vector<2x16xbf16>, vector<16x128xbf16>, vector<2x128xf32> -> vector<2x128xf32>
    %116 = vector.broadcast %2 : vector<1x128xf32> to vector<2x128xf32>
    %117 = arith.addf %115, %116 : vector<2x128xf32>
    %cst_60 = arith.constant 0.000000e+00 : f32
    %118 = vector.broadcast %cst_60 : f32 to vector<2x128xf32>
    %119 = arith.maximumf %117, %118 : vector<2x128xf32>
    %120 = arith.truncf %119 : vector<2x128xf32> to vector<2x128xbf16>
    %c8 = arith.constant 8 : index
    %c0_61 = arith.constant 0 : index
    %c0_62 = arith.constant 0 : index
    %121 = vector.load %arg4[%c8, %c0_61, %c0_62] : memref<16x128x1024xbf16, #tpu.memory_space<vmem>>, vector<1x128x1024xbf16>
    %122 = vector.shape_cast %121 : vector<1x128x1024xbf16> to vector<128x1024xbf16>
    %cst_63 = arith.constant dense<0.000000e+00> : vector<2x1024xf32>
    %123 = tpu.matmul %120, %122, %cst_63 {dimension_numbers = #tpu.dot_dimension_numbers<[1], [0], [0], [1], [0, 0, 1, 1], [], []>} : vector<2x128xbf16>, vector<128x1024xbf16>, vector<2x1024xf32> -> vector<2x1024xf32>
    %124 = arith.addf %109, %123 : vector<2x1024xf32>
    %125 = vector.extract_strided_slice %111 {offsets = [0, 3, 0], sizes = [2, 5, 16], strides = [1, 1, 1]} : vector<2x14x16xf32> to vector<2x5x16xf32>
    %cst_64 = arith.constant dense<0.000000e+00> : vector<2x16xf32>
    %126 = vector.multi_reduction <add>, %125, %cst_64 [1] : vector<2x5x16xf32> to vector<2x16xf32>
    %127 = arith.truncf %126 : vector<2x16xf32> to vector<2x16xbf16>
    %cst_65 = arith.constant dense<0.000000e+00> : vector<2x128xf32>
    %128 = tpu.matmul %127, %1, %cst_65 {dimension_numbers = #tpu.dot_dimension_numbers<[1], [0], [0], [1], [0, 0, 1, 1], [], []>} : vector<2x16xbf16>, vector<16x128xbf16>, vector<2x128xf32> -> vector<2x128xf32>
    %129 = vector.broadcast %2 : vector<1x128xf32> to vector<2x128xf32>
    %130 = arith.addf %128, %129 : vector<2x128xf32>
    %cst_66 = arith.constant 0.000000e+00 : f32
    %131 = vector.broadcast %cst_66 : f32 to vector<2x128xf32>
    %132 = arith.maximumf %130, %131 : vector<2x128xf32>
    %133 = arith.truncf %132 : vector<2x128xf32> to vector<2x128xbf16>
    %c9 = arith.constant 9 : index
    %c0_67 = arith.constant 0 : index
    %c0_68 = arith.constant 0 : index
    %134 = vector.load %arg4[%c9, %c0_67, %c0_68] : memref<16x128x1024xbf16, #tpu.memory_space<vmem>>, vector<1x128x1024xbf16>
    %135 = vector.shape_cast %134 : vector<1x128x1024xbf16> to vector<128x1024xbf16>
    %cst_69 = arith.constant dense<0.000000e+00> : vector<2x1024xf32>
    %136 = tpu.matmul %133, %135, %cst_69 {dimension_numbers = #tpu.dot_dimension_numbers<[1], [0], [0], [1], [0, 0, 1, 1], [], []>} : vector<2x128xbf16>, vector<128x1024xbf16>, vector<2x1024xf32> -> vector<2x1024xf32>
    %137 = arith.addf %124, %136 : vector<2x1024xf32>
    %138 = vector.extract_strided_slice %111 {offsets = [0, 6, 0], sizes = [2, 5, 16], strides = [1, 1, 1]} : vector<2x14x16xf32> to vector<2x5x16xf32>
    %cst_70 = arith.constant dense<0.000000e+00> : vector<2x16xf32>
    %139 = vector.multi_reduction <add>, %138, %cst_70 [1] : vector<2x5x16xf32> to vector<2x16xf32>
    %140 = arith.truncf %139 : vector<2x16xf32> to vector<2x16xbf16>
    %cst_71 = arith.constant dense<0.000000e+00> : vector<2x128xf32>
    %141 = tpu.matmul %140, %1, %cst_71 {dimension_numbers = #tpu.dot_dimension_numbers<[1], [0], [0], [1], [0, 0, 1, 1], [], []>} : vector<2x16xbf16>, vector<16x128xbf16>, vector<2x128xf32> -> vector<2x128xf32>
    %142 = vector.broadcast %2 : vector<1x128xf32> to vector<2x128xf32>
    %143 = arith.addf %141, %142 : vector<2x128xf32>
    %cst_72 = arith.constant 0.000000e+00 : f32
    %144 = vector.broadcast %cst_72 : f32 to vector<2x128xf32>
    %145 = arith.maximumf %143, %144 : vector<2x128xf32>
    %146 = arith.truncf %145 : vector<2x128xf32> to vector<2x128xbf16>
    %c10 = arith.constant 10 : index
    %c0_73 = arith.constant 0 : index
    %c0_74 = arith.constant 0 : index
    %147 = vector.load %arg4[%c10, %c0_73, %c0_74] : memref<16x128x1024xbf16, #tpu.memory_space<vmem>>, vector<1x128x1024xbf16>
    %148 = vector.shape_cast %147 : vector<1x128x1024xbf16> to vector<128x1024xbf16>
    %cst_75 = arith.constant dense<0.000000e+00> : vector<2x1024xf32>
    %149 = tpu.matmul %146, %148, %cst_75 {dimension_numbers = #tpu.dot_dimension_numbers<[1], [0], [0], [1], [0, 0, 1, 1], [], []>} : vector<2x128xbf16>, vector<128x1024xbf16>, vector<2x1024xf32> -> vector<2x1024xf32>
    %150 = arith.addf %137, %149 : vector<2x1024xf32>
    %151 = vector.extract_strided_slice %111 {offsets = [0, 9, 0], sizes = [2, 5, 16], strides = [1, 1, 1]} : vector<2x14x16xf32> to vector<2x5x16xf32>
    %cst_76 = arith.constant dense<0.000000e+00> : vector<2x16xf32>
    %152 = vector.multi_reduction <add>, %151, %cst_76 [1] : vector<2x5x16xf32> to vector<2x16xf32>
    %153 = arith.truncf %152 : vector<2x16xf32> to vector<2x16xbf16>
    %cst_77 = arith.constant dense<0.000000e+00> : vector<2x128xf32>
    %154 = tpu.matmul %153, %1, %cst_77 {dimension_numbers = #tpu.dot_dimension_numbers<[1], [0], [0], [1], [0, 0, 1, 1], [], []>} : vector<2x16xbf16>, vector<16x128xbf16>, vector<2x128xf32> -> vector<2x128xf32>
    %155 = vector.broadcast %2 : vector<1x128xf32> to vector<2x128xf32>
    %156 = arith.addf %154, %155 : vector<2x128xf32>
    %cst_78 = arith.constant 0.000000e+00 : f32
    %157 = vector.broadcast %cst_78 : f32 to vector<2x128xf32>
    %158 = arith.maximumf %156, %157 : vector<2x128xf32>
    %159 = arith.truncf %158 : vector<2x128xf32> to vector<2x128xbf16>
    %c11 = arith.constant 11 : index
    %c0_79 = arith.constant 0 : index
    %c0_80 = arith.constant 0 : index
    %160 = vector.load %arg4[%c11, %c0_79, %c0_80] : memref<16x128x1024xbf16, #tpu.memory_space<vmem>>, vector<1x128x1024xbf16>
    %161 = vector.shape_cast %160 : vector<1x128x1024xbf16> to vector<128x1024xbf16>
    %cst_81 = arith.constant dense<0.000000e+00> : vector<2x1024xf32>
    %162 = tpu.matmul %159, %161, %cst_81 {dimension_numbers = #tpu.dot_dimension_numbers<[1], [0], [0], [1], [0, 0, 1, 1], [], []>} : vector<2x128xbf16>, vector<128x1024xbf16>, vector<2x1024xf32> -> vector<2x1024xf32>
    %163 = arith.addf %150, %162 : vector<2x1024xf32>
    %164 = vector.extract_strided_slice %0 {offsets = [0, 9, 0, 0], sizes = [2, 5, 14, 16], strides = [1, 1, 1, 1]} : vector<2x14x14x16xf32> to vector<2x5x14x16xf32>
    %cst_82 = arith.constant dense<0.000000e+00> : vector<2x14x16xf32>
    %165 = vector.multi_reduction <add>, %164, %cst_82 [1] : vector<2x5x14x16xf32> to vector<2x14x16xf32>
    %166 = vector.extract_strided_slice %165 {offsets = [0, 0, 0], sizes = [2, 5, 16], strides = [1, 1, 1]} : vector<2x14x16xf32> to vector<2x5x16xf32>
    %cst_83 = arith.constant dense<0.000000e+00> : vector<2x16xf32>
    %167 = vector.multi_reduction <add>, %166, %cst_83 [1] : vector<2x5x16xf32> to vector<2x16xf32>
    %168 = arith.truncf %167 : vector<2x16xf32> to vector<2x16xbf16>
    %cst_84 = arith.constant dense<0.000000e+00> : vector<2x128xf32>
    %169 = tpu.matmul %168, %1, %cst_84 {dimension_numbers = #tpu.dot_dimension_numbers<[1], [0], [0], [1], [0, 0, 1, 1], [], []>} : vector<2x16xbf16>, vector<16x128xbf16>, vector<2x128xf32> -> vector<2x128xf32>
    %170 = vector.broadcast %2 : vector<1x128xf32> to vector<2x128xf32>
    %171 = arith.addf %169, %170 : vector<2x128xf32>
    %cst_85 = arith.constant 0.000000e+00 : f32
    %172 = vector.broadcast %cst_85 : f32 to vector<2x128xf32>
    %173 = arith.maximumf %171, %172 : vector<2x128xf32>
    %174 = arith.truncf %173 : vector<2x128xf32> to vector<2x128xbf16>
    %c12 = arith.constant 12 : index
    %c0_86 = arith.constant 0 : index
    %c0_87 = arith.constant 0 : index
    %175 = vector.load %arg4[%c12, %c0_86, %c0_87] : memref<16x128x1024xbf16, #tpu.memory_space<vmem>>, vector<1x128x1024xbf16>
    %176 = vector.shape_cast %175 : vector<1x128x1024xbf16> to vector<128x1024xbf16>
    %cst_88 = arith.constant dense<0.000000e+00> : vector<2x1024xf32>
    %177 = tpu.matmul %174, %176, %cst_88 {dimension_numbers = #tpu.dot_dimension_numbers<[1], [0], [0], [1], [0, 0, 1, 1], [], []>} : vector<2x128xbf16>, vector<128x1024xbf16>, vector<2x1024xf32> -> vector<2x1024xf32>
    %178 = arith.addf %163, %177 : vector<2x1024xf32>
    %179 = vector.extract_strided_slice %165 {offsets = [0, 3, 0], sizes = [2, 5, 16], strides = [1, 1, 1]} : vector<2x14x16xf32> to vector<2x5x16xf32>
    %cst_89 = arith.constant dense<0.000000e+00> : vector<2x16xf32>
    %180 = vector.multi_reduction <add>, %179, %cst_89 [1] : vector<2x5x16xf32> to vector<2x16xf32>
    %181 = arith.truncf %180 : vector<2x16xf32> to vector<2x16xbf16>
    %cst_90 = arith.constant dense<0.000000e+00> : vector<2x128xf32>
    %182 = tpu.matmul %181, %1, %cst_90 {dimension_numbers = #tpu.dot_dimension_numbers<[1], [0], [0], [1], [0, 0, 1, 1], [], []>} : vector<2x16xbf16>, vector<16x128xbf16>, vector<2x128xf32> -> vector<2x128xf32>
    %183 = vector.broadcast %2 : vector<1x128xf32> to vector<2x128xf32>
    %184 = arith.addf %182, %183 : vector<2x128xf32>
    %cst_91 = arith.constant 0.000000e+00 : f32
    %185 = vector.broadcast %cst_91 : f32 to vector<2x128xf32>
    %186 = arith.maximumf %184, %185 : vector<2x128xf32>
    %187 = arith.truncf %186 : vector<2x128xf32> to vector<2x128xbf16>
    %c13 = arith.constant 13 : index
    %c0_92 = arith.constant 0 : index
    %c0_93 = arith.constant 0 : index
    %188 = vector.load %arg4[%c13, %c0_92, %c0_93] : memref<16x128x1024xbf16, #tpu.memory_space<vmem>>, vector<1x128x1024xbf16>
    %189 = vector.shape_cast %188 : vector<1x128x1024xbf16> to vector<128x1024xbf16>
    %cst_94 = arith.constant dense<0.000000e+00> : vector<2x1024xf32>
    %190 = tpu.matmul %187, %189, %cst_94 {dimension_numbers = #tpu.dot_dimension_numbers<[1], [0], [0], [1], [0, 0, 1, 1], [], []>} : vector<2x128xbf16>, vector<128x1024xbf16>, vector<2x1024xf32> -> vector<2x1024xf32>
    %191 = arith.addf %178, %190 : vector<2x1024xf32>
    %192 = vector.extract_strided_slice %165 {offsets = [0, 6, 0], sizes = [2, 5, 16], strides = [1, 1, 1]} : vector<2x14x16xf32> to vector<2x5x16xf32>
    %cst_95 = arith.constant dense<0.000000e+00> : vector<2x16xf32>
    %193 = vector.multi_reduction <add>, %192, %cst_95 [1] : vector<2x5x16xf32> to vector<2x16xf32>
    %194 = arith.truncf %193 : vector<2x16xf32> to vector<2x16xbf16>
    %cst_96 = arith.constant dense<0.000000e+00> : vector<2x128xf32>
    %195 = tpu.matmul %194, %1, %cst_96 {dimension_numbers = #tpu.dot_dimension_numbers<[1], [0], [0], [1], [0, 0, 1, 1], [], []>} : vector<2x16xbf16>, vector<16x128xbf16>, vector<2x128xf32> -> vector<2x128xf32>
    %196 = vector.broadcast %2 : vector<1x128xf32> to vector<2x128xf32>
    %197 = arith.addf %195, %196 : vector<2x128xf32>
    %cst_97 = arith.constant 0.000000e+00 : f32
    %198 = vector.broadcast %cst_97 : f32 to vector<2x128xf32>
    %199 = arith.maximumf %197, %198 : vector<2x128xf32>
    %200 = arith.truncf %199 : vector<2x128xf32> to vector<2x128xbf16>
    %c14 = arith.constant 14 : index
    %c0_98 = arith.constant 0 : index
    %c0_99 = arith.constant 0 : index
    %201 = vector.load %arg4[%c14, %c0_98, %c0_99] : memref<16x128x1024xbf16, #tpu.memory_space<vmem>>, vector<1x128x1024xbf16>
    %202 = vector.shape_cast %201 : vector<1x128x1024xbf16> to vector<128x1024xbf16>
    %cst_100 = arith.constant dense<0.000000e+00> : vector<2x1024xf32>
    %203 = tpu.matmul %200, %202, %cst_100 {dimension_numbers = #tpu.dot_dimension_numbers<[1], [0], [0], [1], [0, 0, 1, 1], [], []>} : vector<2x128xbf16>, vector<128x1024xbf16>, vector<2x1024xf32> -> vector<2x1024xf32>
    %204 = arith.addf %191, %203 : vector<2x1024xf32>
    %205 = vector.extract_strided_slice %165 {offsets = [0, 9, 0], sizes = [2, 5, 16], strides = [1, 1, 1]} : vector<2x14x16xf32> to vector<2x5x16xf32>
    %cst_101 = arith.constant dense<0.000000e+00> : vector<2x16xf32>
    %206 = vector.multi_reduction <add>, %205, %cst_101 [1] : vector<2x5x16xf32> to vector<2x16xf32>
    %207 = arith.truncf %206 : vector<2x16xf32> to vector<2x16xbf16>
    %cst_102 = arith.constant dense<0.000000e+00> : vector<2x128xf32>
    %208 = tpu.matmul %207, %1, %cst_102 {dimension_numbers = #tpu.dot_dimension_numbers<[1], [0], [0], [1], [0, 0, 1, 1], [], []>} : vector<2x16xbf16>, vector<16x128xbf16>, vector<2x128xf32> -> vector<2x128xf32>
    %209 = vector.broadcast %2 : vector<1x128xf32> to vector<2x128xf32>
    %210 = arith.addf %208, %209 : vector<2x128xf32>
    %cst_103 = arith.constant 0.000000e+00 : f32
    %211 = vector.broadcast %cst_103 : f32 to vector<2x128xf32>
    %212 = arith.maximumf %210, %211 : vector<2x128xf32>
    %213 = arith.truncf %212 : vector<2x128xf32> to vector<2x128xbf16>
    %c15 = arith.constant 15 : index
    %c0_104 = arith.constant 0 : index
    %c0_105 = arith.constant 0 : index
    %214 = vector.load %arg4[%c15, %c0_104, %c0_105] : memref<16x128x1024xbf16, #tpu.memory_space<vmem>>, vector<1x128x1024xbf16>
    %215 = vector.shape_cast %214 : vector<1x128x1024xbf16> to vector<128x1024xbf16>
    %cst_106 = arith.constant dense<0.000000e+00> : vector<2x1024xf32>
    %216 = tpu.matmul %213, %215, %cst_106 {dimension_numbers = #tpu.dot_dimension_numbers<[1], [0], [0], [1], [0, 0, 1, 1], [], []>} : vector<2x128xbf16>, vector<128x1024xbf16>, vector<2x1024xf32> -> vector<2x1024xf32>
    %217 = arith.addf %204, %216 : vector<2x1024xf32>
    %c0_107 = arith.constant 0 : index
    %c0_108 = arith.constant 0 : index
    %218 = vector.load %arg5[%c0_107, %c0_108] : memref<1x1024xf32, #tpu.memory_space<vmem>>, vector<1x1024xf32>
    %219 = vector.broadcast %218 : vector<1x1024xf32> to vector<2x1024xf32>
    %220 = arith.addf %217, %219 : vector<2x1024xf32>
    %cst_109 = arith.constant 0.000000e+00 : f32
    %221 = vector.broadcast %cst_109 : f32 to vector<2x1024xf32>
    %222 = arith.maximumf %220, %221 : vector<2x1024xf32>
    %223 = arith.truncf %222 : vector<2x1024xf32> to vector<2x1024xbf16>
    %c0_110 = arith.constant 0 : index
    %c0_111 = arith.constant 0 : index
    %224 = vector.load %arg6[%c0_110, %c0_111] : memref<1024x128xbf16, #tpu.memory_space<vmem>>, vector<1024x128xbf16>
    %cst_112 = arith.constant dense<0.000000e+00> : vector<2x128xf32>
    %225 = tpu.matmul %223, %224, %cst_112 {dimension_numbers = #tpu.dot_dimension_numbers<[1], [0], [0], [1], [0, 0, 1, 1], [], []>} : vector<2x1024xbf16>, vector<1024x128xbf16>, vector<2x128xf32> -> vector<2x128xf32>
    %c0_113 = arith.constant 0 : index
    %c0_114 = arith.constant 0 : index
    %226 = vector.load %arg7[%c0_113, %c0_114] : memref<1x128xf32, #tpu.memory_space<vmem>>, vector<1x128xf32>
    %227 = vector.broadcast %226 : vector<1x128xf32> to vector<2x128xf32>
    %228 = arith.addf %225, %227 : vector<2x128xf32>
    %c0_115 = arith.constant 0 : index
    %c0_116 = arith.constant 0 : index
    %229 = vector.load %arg8[%c0_115, %c0_116] : memref<2x128xf32, #tpu.memory_space<vmem>>, vector<2x128xf32>
    tpu.vector_store %arg8[%c0_115, %c0_116], %228 {strides = array<i32>} : memref<2x128xf32, #tpu.memory_space<vmem>>, vector<2x128xf32>,
    return
  }
  func.func @transform_0(%arg0: i32) -> (i32, i32, i32, i32) {
    %c0_i32 = arith.constant 0 : i32
    %c0_i32_0 = arith.constant 0 : i32
    %c0_i32_1 = arith.constant 0 : i32
    %c0_i32_2 = arith.constant 0 : i32
    return %arg0, %c0_i32, %c0_i32_0, %c0_i32_1 : i32, i32, i32, i32
  }
  func.func @transform_1(%arg0: i32) -> (i32, i32) {
    %c0_i32 = arith.constant 0 : i32
    %c0_i32_0 = arith.constant 0 : i32
    %c0_i32_1 = arith.constant 0 : i32
    return %c0_i32, %c0_i32_0 : i32, i32
  }
  func.func @transform_2(%arg0: i32) -> (i32, i32) {
    %c0_i32 = arith.constant 0 : i32
    %c0_i32_0 = arith.constant 0 : i32
    %c0_i32_1 = arith.constant 0 : i32
    return %c0_i32, %c0_i32_0 : i32, i32
  }
  func.func @transform_3(%arg0: i32) -> (i32, i32, i32) {
    %c0_i32 = arith.constant 0 : i32
    %c0_i32_0 = arith.constant 0 : i32
    %c0_i32_1 = arith.constant 0 : i32
    %c0_i32_2 = arith.constant 0 : i32
    return %c0_i32, %c0_i32_0, %c0_i32_1 : i32, i32, i32
  }
  func.func @transform_4(%arg0: i32) -> (i32, i32) {
    %c0_i32 = arith.constant 0 : i32
    %c0_i32_0 = arith.constant 0 : i32
    %c0_i32_1 = arith.constant 0 : i32
    return %c0_i32, %c0_i32_0 : i32, i32
  }
  func.func @transform_5(%arg0: i32) -> (i32, i32) {
    %c0_i32 = arith.constant 0 : i32
    %c0_i32_0 = arith.constant 0 : i32
    %c0_i32_1 = arith.constant 0 : i32
    return %c0_i32, %c0_i32_0 : i32, i32
  }
  func.func @transform_6(%arg0: i32) -> (i32, i32) {
    %c0_i32 = arith.constant 0 : i32
    %c0_i32_0 = arith.constant 0 : i32
    %c0_i32_1 = arith.constant 0 : i32
    return %c0_i32, %c0_i32_0 : i32, i32
  }
  func.func @transform_7(%arg0: i32) -> (i32, i32) {
    %c0_i32 = arith.constant 0 : i32
    %c0_i32_0 = arith.constant 0 : i32
    return %arg0, %c0_i32 : i32, i32
  }
}

</mosaic_0001>

<llo_original>
// kernel: tpu_custom_call.1
$region0: #{tpu_custom_call.1}
  #allocation0 [shape = 'u32[]', space=smem, size = 0x4, offset = 0x4, fixed_abs, tag = 'smem constant byte address 0x4 - core index']
  #allocation1 [shape = 'u32[144,128]{1,0:T(1,128)}', space=vmem, size = 0x12000, scoped, tag = 'internal scratch']
  %s0 = inlined_call_operand.vmem [shape: f32[2,14,14,16], index: 0, kind: input, shape index: {}]
  %s1 = inlined_call_operand.hbm [shape: bf16[16,128], index: 1, kind: input, shape index: {}]
  %s2 = inlined_call_operand.hbm [shape: f32[1,128], index: 2, kind: input, shape index: {}]
  %s3 = inlined_call_operand.hbm [shape: bf16[16,128,1024], index: 3, kind: input, shape index: {}]
  %s4 = inlined_call_operand.hbm [shape: f32[1,1024], index: 4, kind: input, shape index: {}]
  %s5 = inlined_call_operand.hbm [shape: bf16[1024,128], index: 5, kind: input, shape index: {}]
  %s6 = inlined_call_operand.hbm [shape: f32[1,128], index: 6, kind: input, shape index: {}]
  %s7 = inlined_call_operand.hbm [shape: f32[2,128], index: 7, kind: output, shape index: {}]
  %s8 = sld [smem:[#allocation0]]
  $region62: #{tpu_custom_call.1} parent=0
    _
  %s10 = ssub.s32 1, %s8
  %s11 = scalar_select 0, %s10, %s8
  $region1: #{tpu_custom_call.1} parent=0
    #allocation2 [shape = 'u8[4096]{0}', space=vmem, size = 0x1000, scoped, tag = 'input window, operand 1, single buffered']
    #allocation3 [shape = 's32[1]{0}', space=sflag, size = 0x4, scoped, tag = 'scoped memory for tpu_custom_call.1']
    #allocation4 [shape = 's32[1]{0}', space=sflag, size = 0x4, scoped, tag = 'scoped memory for tpu_custom_call.1']
    #allocation5 [shape = 'u8[512]{0}', space=vmem, size = 0x400, scoped, tag = 'input window, operand 2, single buffered']
    #allocation6 [shape = 's32[1]{0}', space=sflag, size = 0x4, scoped, tag = 'scoped memory for tpu_custom_call.1']
    #allocation7 [shape = 'u8[4194304]{0}', space=vmem, size = 0x400000, scoped, tag = 'input window, operand 3, single buffered']
    #allocation8 [shape = 'u8[4096]{0}', space=vmem, size = 0x1000, scoped, tag = 'input window, operand 4, single buffered']
    #allocation9 [shape = 's32[1]{0}', space=sflag, size = 0x4, scoped, tag = 'scoped memory for tpu_custom_call.1']
    #allocation10 [shape = 'u8[262144]{0}', space=vmem, size = 0x40000, scoped, tag = 'input window, operand 5, single buffered']
    #allocation11 [shape = 'u8[512]{0}', space=vmem, size = 0x400, scoped, tag = 'input window, operand 6, single buffered']
    #allocation12 [shape = 's32[1]{0}', space=sflag, size = 0x4, scoped, tag = 'scoped memory for tpu_custom_call.1']
    #allocation13 [shape = 'u8[1024]{0}', space=vmem, size = 0x400, scoped, tag = 'output window, operand 0, single buffered']
    %12 = vsyncpa [#allocation3], 0
    %13 = vsyncpa [#allocation6], 0
    %14 = vsyncpa [#allocation9], 0
    %15 = vsyncpa [#allocation12], 0
    %16 = vsyncpa [#allocation4], 0
    // Predicated region
    $region2: #{tpu_custom_call.1} parent=1 // pred_check
      _
    $region3: #{tpu_custom_call.1} parent=1 // pred_check_branch
      %18 = sbr.rel (0) target = $region5
    $region4: #{tpu_custom_call.1} parent=1 // pred_region
      _
    $region5: #{tpu_custom_call.1} parent=1 // pred_fallthru
      _
    // Predicated region
    $region6: #{tpu_custom_call.1} parent=1 // pred_check
      _
    $region7: #{tpu_custom_call.1} parent=1 // pred_check_branch
      %20 = sbr.rel (0) target = $region9
    $region8: #{tpu_custom_call.1} parent=1 // pred_region
      %s22 = ssub.s32 128, 128
      %23 = vsyncadd [#allocation3], %s22
      %s24 = sshll.u32 [#allocation2], 4
      %s25 = int_to_ptr.vmem [resolvable:$true] %s24
      %30 = dma.hbm_to_vmem [thread:$0]  %s1, 128, %s25, [#allocation3], 64, 64, 4
    $region9: #{tpu_custom_call.1} parent=1 // pred_fallthru
      _
    // Predicated region
    $region10: #{tpu_custom_call.1} parent=1 // pred_check
      _
    $region11: #{tpu_custom_call.1} parent=1 // pred_check_branch
      %32 = sbr.rel (0) target = $region13
    $region12: #{tpu_custom_call.1} parent=1 // pred_region
      %s34 = ssub.s32 16, 16
      %35 = vsyncadd [#allocation6], %s34
      %s37 = sshll.u32 [#allocation5], 4
      %s38 = int_to_ptr.vmem [resolvable:$true] %s37
      %40 = dma.hbm_to_vmem [thread:$0]  %s2, 16, %s38, [#allocation6]
    $region13: #{tpu_custom_call.1} parent=1 // pred_fallthru
      _
    // Predicated region
    $region14: #{tpu_custom_call.1} parent=1 // pred_check
      _
    $region15: #{tpu_custom_call.1} parent=1 // pred_check_branch
      %42 = sbr.rel (0) target = $region17
    $region16: #{tpu_custom_call.1} parent=1 // pred_region
      %s44 = ssub.s32 131072, 131072
      %45 = vsyncadd [#allocation6], %s44
      %s46 = sshll.u32 [#allocation7], 4
      %s47 = int_to_ptr.vmem [resolvable:$true] %s46
      %52 = dma.hbm_to_vmem [thread:$0]  %s3, 131072, %s47, [#allocation6], 512, 512, 32
    $region17: #{tpu_custom_call.1} parent=1 // pred_fallthru
      _
    // Predicated region
    $region18: #{tpu_custom_call.1} parent=1 // pred_check
      _
    $region19: #{tpu_custom_call.1} parent=1 // pred_check_branch
      %54 = sbr.rel (0) target = $region21
    $region20: #{tpu_custom_call.1} parent=1 // pred_region
      %s56 = ssub.s32 128, 128
      %57 = vsyncadd [#allocation9], %s56
      %s59 = sshll.u32 [#allocation8], 4
      %s60 = int_to_ptr.vmem [resolvable:$true] %s59
      %62 = dma.hbm_to_vmem [thread:$0]  %s4, 128, %s60, [#allocation9]
    $region21: #{tpu_custom_call.1} parent=1 // pred_fallthru
      _
    // Predicated region
    $region22: #{tpu_custom_call.1} parent=1 // pred_check
      _
    $region23: #{tpu_custom_call.1} parent=1 // pred_check_branch
      %64 = sbr.rel (0) target = $region25
    $region24: #{tpu_custom_call.1} parent=1 // pred_region
      %s66 = ssub.s32 8192, 8192
      %67 = vsyncadd [#allocation9], %s66
      %s68 = sshll.u32 [#allocation10], 4
      %s69 = int_to_ptr.vmem [resolvable:$true] %s68
      %74 = dma.hbm_to_vmem [thread:$0]  %s5, 8192, %s69, [#allocation9], 64, 64, 4
    $region25: #{tpu_custom_call.1} parent=1 // pred_fallthru
      _
    // Predicated region
    $region26: #{tpu_custom_call.1} parent=1 // pred_check
      _
    $region27: #{tpu_custom_call.1} parent=1 // pred_check_branch
      %76 = sbr.rel (0) target = $region29
    $region28: #{tpu_custom_call.1} parent=1 // pred_region
      %s78 = ssub.s32 16, 16
      %79 = vsyncadd [#allocation12], %s78
      %s81 = sshll.u32 [#allocation11], 4
      %s82 = int_to_ptr.vmem [resolvable:$true] %s81
      %84 = dma.hbm_to_vmem [thread:$0]  %s6, 16, %s82, [#allocation12]
    $region29: #{tpu_custom_call.1} parent=1 // pred_fallthru
      _
    // Predicated region
    $region30: #{tpu_custom_call.1} parent=1 // pred_check
      _
    $region31: #{tpu_custom_call.1} parent=1 // pred_check_branch
      %86 = sbr.rel (0) target = $region33
    $region32: #{tpu_custom_call.1} parent=1 // pred_region
      %87 = dma.done [#allocation3], 128
    $region33: #{tpu_custom_call.1} parent=1 // pred_fallthru
      _
    // Predicated region
    $region34: #{tpu_custom_call.1} parent=1 // pred_check
      _
    $region35: #{tpu_custom_call.1} parent=1 // pred_check_branch
      %89 = sbr.rel (0) target = $region37
    $region36: #{tpu_custom_call.1} parent=1 // pred_region
      %90 = dma.done [#allocation6], 16
    $region37: #{tpu_custom_call.1} parent=1 // pred_fallthru
      _
    // Predicated region
    $region38: #{tpu_custom_call.1} parent=1 // pred_check
      _
    $region39: #{tpu_custom_call.1} parent=1 // pred_check_branch
      %92 = sbr.rel (0) target = $region41
    $region40: #{tpu_custom_call.1} parent=1 // pred_region
      %93 = dma.done [#allocation6], 131072
    $region41: #{tpu_custom_call.1} parent=1 // pred_fallthru
      _
    // Predicated region
    $region42: #{tpu_custom_call.1} parent=1 // pred_check
      _
    $region43: #{tpu_custom_call.1} parent=1 // pred_check_branch
      %95 = sbr.rel (0) target = $region45
    $region44: #{tpu_custom_call.1} parent=1 // pred_region
      %96 = dma.done [#allocation9], 128
    $region45: #{tpu_custom_call.1} parent=1 // pred_fallthru
      _
    // Predicated region
    $region46: #{tpu_custom_call.1} parent=1 // pred_check
      _
    $region47: #{tpu_custom_call.1} parent=1 // pred_check_branch
      %98 = sbr.rel (0) target = $region49
    $region48: #{tpu_custom_call.1} parent=1 // pred_region
      %99 = dma.done [#allocation9], 8192
    $region49: #{tpu_custom_call.1} parent=1 // pred_fallthru
      _
    // Predicated region
    $region50: #{tpu_custom_call.1} parent=1 // pred_check
      _
    $region51: #{tpu_custom_call.1} parent=1 // pred_check_branch
      %101 = sbr.rel (0) target = $region53
    $region52: #{tpu_custom_call.1} parent=1 // pred_region
      %102 = dma.done [#allocation12], 16
    $region53: #{tpu_custom_call.1} parent=1 // pred_fallthru
      _
    %v104 = vld [vmem:[%s0] sm:$0xff]
    %v105 = vld [vmem:[%s0 + $0x8] sm:$0x3f]
    %v106 = vld [vmem:[%s0 + $0x10] sm:$0xff]
    %v107 = vld [vmem:[%s0 + $0x18] sm:$0x3f]
    %v108 = vld [vmem:[%s0 + $0x20] sm:$0xff]
    %v109 = vld [vmem:[%s0 + $0x28] sm:$0x3f]
    %v110 = vld [vmem:[%s0 + $0x30] sm:$0xff]
    %v111 = vld [vmem:[%s0 + $0x38] sm:$0x3f]
    %v112 = vld [vmem:[%s0 + $0x40] sm:$0xff]
    %v113 = vld [vmem:[%s0 + $0x48] sm:$0x3f]
    %v114 = vld [vmem:[%s0 + $0x50] sm:$0xff]
    %v115 = vld [vmem:[%s0 + $0x58] sm:$0x3f]
    %v116 = vld [vmem:[%s0 + $0x60] sm:$0xff]
    %v117 = vld [vmem:[%s0 + $0x68] sm:$0x3f]
    %v118 = vld [vmem:[%s0 + $0x70] sm:$0xff]
    %v119 = vld [vmem:[%s0 + $0x78] sm:$0x3f]
    %v120 = vld [vmem:[%s0 + $0x80] sm:$0xff]
    %v121 = vld [vmem:[%s0 + $0x88] sm:$0x3f]
    %v122 = vld [vmem:[%s0 + $0x90] sm:$0xff]
    %v123 = vld [vmem:[%s0 + $0x98] sm:$0x3f]
    %v124 = vld [vmem:[%s0 + $0xa0] sm:$0xff]
    %v125 = vld [vmem:[%s0 + $0xa8] sm:$0x3f]
    %v126 = vld [vmem:[%s0 + $0xb0] sm:$0xff]
    %v127 = vld [vmem:[%s0 + $0xb8] sm:$0x3f]
    %v128 = vld [vmem:[%s0 + $0xc0] sm:$0xff]
    %v129 = vld [vmem:[%s0 + $0xc8] sm:$0x3f]
    %v130 = vld [vmem:[%s0 + $0xd0] sm:$0xff]
    %v131 = vld [vmem:[%s0 + $0xd8] sm:$0x3f]
    %v132 = vld [vmem:[%s0 + $0xe0] sm:$0xff]
    %v133 = vld [vmem:[%s0 + $0xe8] sm:$0x3f]
    %v134 = vld [vmem:[%s0 + $0xf0] sm:$0xff]
    %v135 = vld [vmem:[%s0 + $0xf8] sm:$0x3f]
    %v136 = vld [vmem:[%s0 + $0x100] sm:$0xff]
    %v137 = vld [vmem:[%s0 + $0x108] sm:$0x3f]
    %v138 = vld [vmem:[%s0 + $0x110] sm:$0xff]
    %v139 = vld [vmem:[%s0 + $0x118] sm:$0x3f]
    %v140 = vld [vmem:[%s0 + $0x120] sm:$0xff]
    %v141 = vld [vmem:[%s0 + $0x128] sm:$0x3f]
    %v142 = vld [vmem:[%s0 + $0x130] sm:$0xff]
    %v143 = vld [vmem:[%s0 + $0x138] sm:$0x3f]
    %v144 = vld [vmem:[%s0 + $0x140] sm:$0xff]
    %v145 = vld [vmem:[%s0 + $0x148] sm:$0x3f]
    %v146 = vld [vmem:[%s0 + $0x150] sm:$0xff]
    %v147 = vld [vmem:[%s0 + $0x158] sm:$0x3f]
    %v148 = vld [vmem:[%s0 + $0x160] sm:$0xff]
    %v149 = vld [vmem:[%s0 + $0x168] sm:$0x3f]
    %v150 = vld [vmem:[%s0 + $0x170] sm:$0xff]
    %v151 = vld [vmem:[%s0 + $0x178] sm:$0x3f]
    %v152 = vld [vmem:[%s0 + $0x180] sm:$0xff]
    %v153 = vld [vmem:[%s0 + $0x188] sm:$0x3f]
    %v154 = vld [vmem:[%s0 + $0x190] sm:$0xff]
    %v155 = vld [vmem:[%s0 + $0x198] sm:$0x3f]
    %v156 = vld [vmem:[%s0 + $0x1a0] sm:$0xff]
    %v157 = vld [vmem:[%s0 + $0x1a8] sm:$0x3f]
    %v158 = vld [vmem:[%s0 + $0x1b0] sm:$0xff]
    %v159 = vld [vmem:[%s0 + $0x1b8] sm:$0x3f]
    %v160 = vld [vmem:[#allocation2] sm:$0xf]
    %v161 = vld [vmem:[#allocation2 + $0x4] sm:$0xf]
    %v162 = vld [vmem:[#allocation5] sm:$0x1]
    %vm163 = vcmask 130048
    %v164 = vsel %vm163, %v104, 0.0
    %v165 = vsel %vm163, %v106, 0.0
    %v166 = vadd.f32 %v164, %v165
    %v167 = vsel %vm163, %v108, 0.0
    %v168 = vadd.f32 %v166, %v167
    %v169 = vsel %vm163, %v110, 0.0
    %v170 = vadd.f32 %v168, %v169
    %v171 = vsel %vm163, %v112, 0.0
    %v172 = vadd.f32 %v170, %v171
    %vm173 = vcmask 128000
    %v174 = vsel %vm173, %v105, 0.0
    %v175 = vsel %vm173, %v107, 0.0
    %v176 = vadd.f32 %v174, %v175
    %v177 = vsel %vm173, %v109, 0.0
    %v178 = vadd.f32 %v176, %v177
    %v179 = vsel %vm173, %v111, 0.0
    %v180 = vadd.f32 %v178, %v179
    %v181 = vsel %vm173, %v113, 0.0
    %v182 = vadd.f32 %v180, %v181
    %v183 = vsel %vm163, %v132, 0.0
    %v184 = vsel %vm163, %v134, 0.0
    %v185 = vadd.f32 %v183, %v184
    %v186 = vsel %vm163, %v136, 0.0
    %v187 = vadd.f32 %v185, %v186
    %v188 = vsel %vm163, %v138, 0.0
    %v189 = vadd.f32 %v187, %v188
    %v190 = vsel %vm163, %v140, 0.0
    %v191 = vadd.f32 %v189, %v190
    %v192 = vsel %vm173, %v133, 0.0
    %v193 = vsel %vm173, %v135, 0.0
    %v194 = vadd.f32 %v192, %v193
    %v195 = vsel %vm173, %v137, 0.0
    %v196 = vadd.f32 %v194, %v195
    %v197 = vsel %vm173, %v139, 0.0
    %v198 = vadd.f32 %v196, %v197
    %v199 = vsel %vm173, %v141, 0.0
    %v200 = vadd.f32 %v198, %v199
    %vm201 = vcmask 126976
    %v202 = vsel %vm201, %v172, 0.0
    %v203 = vrot.slane %v202, 4
    %v204 = vadd.f32 %v202, %v203
    %v205 = vrot.slane %v204, 2
    %v206 = vadd.f32 %v204, %v205
    %v207 = vrot.slane %v206, 1
    %v208 = vadd.f32 %v206, %v207
    %v209 = vsel %vm201, %v191, 0.0
    %v210 = vrot.slane %v209, 4
    %v211 = vadd.f32 %v209, %v210
    %v212 = vrot.slane %v211, 2
    %v213 = vadd.f32 %v211, %v212
    %v214 = vrot.slane %v213, 1
    %v215 = vadd.f32 %v213, %v214
    %v216 = vpack.c.bf16 %v208, %v208
    %v217 = vpack.c.bf16 %v215, %v215
    %v219 = vlaneseq
    %v220 = vshrl.u32 %v219, 7
    %v221 = vsub.s32 0, %v220
    %v222 = vrot.slane %v162, %v221
    %v226 = vunpack.c.l.b16 %v216
    %v227 = vunpack.c.l.b16 %v217
    %vm228 = vcmask 1041409
    %v229 = vsel %vm228, %v227, %v226
    %v230 = vpack.c.b16 %v229, %v229
    %v233 = vunpack.c.l.b16 %v160
    %v234 = vunpack.c.l.b16 %v161
    %v235 = vpack.c.b16 %v234, %v233
    %v238 = vsel %vm163, %v230, 0
    %240 = vmatprep.subr.bf16.mxu0 0
    %241 = vmatpush1.bf16.msra.mxu0 0
    %242 = vmatprep.subr.bf16.mxu0 0
    %243 = vmatpush1.bf16.msra.mxu0 0
    %244 = vmatprep.subr.bf16.mxu0 0
    %245 = vmatpush1.bf16.msra.mxu0 0
    %246 = vmatprep.subr.bf16.mxu0 0
    %247 = vmatpush1.bf16.msra.mxu0 0
    %248 = vmatprep.subr.bf16.mxu0 0
    %249 = vmatpush1.bf16.msra.mxu0 0
    %250 = vmatprep.subr.bf16.mxu0 0
    %251 = vmatpush1.bf16.msra.mxu0 0
    %252 = vmatprep.subr.bf16.mxu0 0
    %253 = vmatpush1.bf16.msra.mxu0 0
    %254 = vmatprep.subr.bf16.mxu0 0
    %255 = vmatpush1.bf16.msra.mxu0 %v235
    %256 = vmatprep.subr.bf16.mxu0 0
    %257 = vmatpush2.bf16.msra.mxu0 0
    %258 = vmatprep.subr.bf16.mxu0 0
    %259 = vmatpush2.bf16.msra.mxu0 0
    %260 = vmatprep.subr.bf16.mxu0 0
    %261 = vmatpush2.bf16.msra.mxu0 0
    %262 = vmatprep.subr.bf16.mxu0 0
    %263 = vmatpush2.bf16.msra.mxu0 0
    %264 = vmatprep.subr.bf16.mxu0 0
    %265 = vmatpush2.bf16.msra.mxu0 0
    %266 = vmatprep.subr.bf16.mxu0 0
    %267 = vmatpush2.bf16.msra.mxu0 0
    %268 = vmatprep.subr.bf16.mxu0 0
    %269 = vmatpush2.bf16.msra.mxu0 0
    %270 = vmatprep.subr.bf16.mxu0 0
    %271 = vmatpush2.bf16.msra.mxu0 0
    %272 = vmatprep.mubr.bf16.mxu0 0
    %273 = vmatmul.mubr.bf16.gmra.mxu0 %v238
    %v274 = vpop.f32.mrf.mxu0
    %v275 = vadd.f32 %v222, %v274
    %v276 = vpop.f32.mrf.mxu0
    %v277 = vpop.f32.mrf.mxu0
    %v278 = vpop.f32.mrf.mxu0
    %279 = vdwg.mxu0
    %v280 = vmax.f32 %v275, 0.0
    %v281 = vpack.c.bf16 %v280, %v280
    %v282 = vld [vmem:[#allocation7] sm:$0xff]
    %v283 = vld [vmem:[#allocation7 + $0x8] sm:$0xff]
    %v284 = vld [vmem:[#allocation7 + $0x10] sm:$0xff]
    %v285 = vld [vmem:[#allocation7 + $0x18] sm:$0xff]
    %v286 = vld [vmem:[#allocation7 + $0x20] sm:$0xff]
    %v287 = vld [vmem:[#allocation7 + $0x28] sm:$0xff]
    %v288 = vld [vmem:[#allocation7 + $0x30] sm:$0xff]
    %v289 = vld [vmem:[#allocation7 + $0x38] sm:$0xff]
    %v290 = vld [vmem:[#allocation7 + $0x40] sm:$0xff]
    %v291 = vld [vmem:[#allocation7 + $0x48] sm:$0xff]
    %v292 = vld [vmem:[#allocation7 + $0x50] sm:$0xff]
    %v293 = vld [vmem:[#allocation7 + $0x58] sm:$0xff]
    %v294 = vld [vmem:[#allocation7 + $0x60] sm:$0xff]
    %v295 = vld [vmem:[#allocation7 + $0x68] sm:$0xff]
    %v296 = vld [vmem:[#allocation7 + $0x70] sm:$0xff]
    %v297 = vld [vmem:[#allocation7 + $0x78] sm:$0xff]
    %v298 = vld [vmem:[#allocation7 + $0x80] sm:$0xff]
    %v299 = vld [vmem:[#allocation7 + $0x88] sm:$0xff]
    %v300 = vld [vmem:[#allocation7 + $0x90] sm:$0xff]
    %v301 = vld [vmem:[#allocation7 + $0x98] sm:$0xff]
    %v302 = vld [vmem:[#allocation7 + $0xa0] sm:$0xff]
    %v303 = vld [vmem:[#allocation7 + $0xa8] sm:$0xff]
    %v304 = vld [vmem:[#allocation7 + $0xb0] sm:$0xff]
    %v305 = vld [vmem:[#allocation7 + $0xb8] sm:$0xff]
    %v306 = vld [vmem:[#allocation7 + $0xc0] sm:$0xff]
    %v307 = vld [vmem:[#allocation7 + $0xc8] sm:$0xff]
    %v308 = vld [vmem:[#allocation7 + $0xd0] sm:$0xff]
    %v309 = vld [vmem:[#allocation7 + $0xd8] sm:$0xff]
    %v310 = vld [vmem:[#allocation7 + $0xe0] sm:$0xff]
    %v311 = vld [vmem:[#allocation7 + $0xe8] sm:$0xff]
    %v312 = vld [vmem:[#allocation7 + $0xf0] sm:$0xff]
    %v313 = vld [vmem:[#allocation7 + $0xf8] sm:$0xff]
    %v314 = vld [vmem:[#allocation7 + $0x100] sm:$0xff]
    %v315 = vld [vmem:[#allocation7 + $0x108] sm:$0xff]
    %v316 = vld [vmem:[#allocation7 + $0x110] sm:$0xff]
    %v317 = vld [vmem:[#allocation7 + $0x118] sm:$0xff]
    %v318 = vld [vmem:[#allocation7 + $0x120] sm:$0xff]
    %v319 = vld [vmem:[#allocation7 + $0x128] sm:$0xff]
    %v320 = vld [vmem:[#allocation7 + $0x130] sm:$0xff]
    %v321 = vld [vmem:[#allocation7 + $0x138] sm:$0xff]
    %v322 = vld [vmem:[#allocation7 + $0x140] sm:$0xff]
    %v323 = vld [vmem:[#allocation7 + $0x148] sm:$0xff]
    %v324 = vld [vmem:[#allocation7 + $0x150] sm:$0xff]
    %v325 = vld [vmem:[#allocation7 + $0x158] sm:$0xff]
    %v326 = vld [vmem:[#allocation7 + $0x160] sm:$0xff]
    %v327 = vld [vmem:[#allocation7 + $0x168] sm:$0xff]
    %v328 = vld [vmem:[#allocation7 + $0x170] sm:$0xff]
    %v329 = vld [vmem:[#allocation7 + $0x178] sm:$0xff]
    %v330 = vld [vmem:[#allocation7 + $0x180] sm:$0xff]
    %v331 = vld [vmem:[#allocation7 + $0x188] sm:$0xff]
    %v332 = vld [vmem:[#allocation7 + $0x190] sm:$0xff]
    %v333 = vld [vmem:[#allocation7 + $0x198] sm:$0xff]
    %v334 = vld [vmem:[#allocation7 + $0x1a0] sm:$0xff]
    %v335 = vld [vmem:[#allocation7 + $0x1a8] sm:$0xff]
    %v336 = vld [vmem:[#allocation7 + $0x1b0] sm:$0xff]
    %v337 = vld [vmem:[#allocation7 + $0x1b8] sm:$0xff]
    %v338 = vld [vmem:[#allocation7 + $0x1c0] sm:$0xff]
    %v339 = vld [vmem:[#allocation7 + $0x1c8] sm:$0xff]
    %v340 = vld [vmem:[#allocation7 + $0x1d0] sm:$0xff]
    %v341 = vld [vmem:[#allocation7 + $0x1d8] sm:$0xff]
    %v342 = vld [vmem:[#allocation7 + $0x1e0] sm:$0xff]
    %v343 = vld [vmem:[#allocation7 + $0x1e8] sm:$0xff]
    %v344 = vld [vmem:[#allocation7 + $0x1f0] sm:$0xff]
    %v345 = vld [vmem:[#allocation7 + $0x1f8] sm:$0xff]
    %v348 = vrot.slane %v172, 3
    %v349 = vrot.slane %v191, 3
    %v352 = vsel %vm201, %v348, 0.0
    %v353 = vrot.slane %v352, 4
    %v354 = vadd.f32 %v352, %v353
    %v355 = vrot.slane %v354, 2
    %v356 = vadd.f32 %v354, %v355
    %v357 = vrot.slane %v356, 1
    %v358 = vadd.f32 %v356, %v357
    %v359 = vsel %vm201, %v349, 0.0
    %v360 = vrot.slane %v359, 4
    %v361 = vadd.f32 %v359, %v360
    %v362 = vrot.slane %v361, 2
    %v363 = vadd.f32 %v361, %v362
    %v364 = vrot.slane %v363, 1
    %v365 = vadd.f32 %v363, %v364
    %v366 = vpack.c.bf16 %v358, %v358
    %v367 = vpack.c.bf16 %v365, %v365
    %v370 = vunpack.c.l.b16 %v366
    %v371 = vunpack.c.l.b16 %v367
    %v372 = vsel %vm228, %v371, %v370
    %v373 = vpack.c.b16 %v372, %v372
    %v375 = vsel %vm163, %v373, 0
    %377 = vmatprep.subr.bf16.mxu0 0
    %378 = vmatpush1.bf16.msra.mxu0 0
    %379 = vmatprep.subr.bf16.mxu0 0
    %380 = vmatpush1.bf16.msra.mxu0 0
    %381 = vmatprep.subr.bf16.mxu0 0
    %382 = vmatpush1.bf16.msra.mxu0 0
    %383 = vmatprep.subr.bf16.mxu0 0
    %384 = vmatpush1.bf16.msra.mxu0 0
    %385 = vmatprep.subr.bf16.mxu0 0
    %386 = vmatpush1.bf16.msra.mxu0 0
    %387 = vmatprep.subr.bf16.mxu0 0
    %388 = vmatpush1.bf16.msra.mxu0 0
    %389 = vmatprep.subr.bf16.mxu0 0
    %390 = vmatpush1.bf16.msra.mxu0 0
    %391 = vmatprep.subr.bf16.mxu0 0
    %392 = vmatpush1.bf16.msra.mxu0 %v235
    %393 = vmatprep.subr.bf16.mxu0 0
    %394 = vmatpush2.bf16.msra.mxu0 0
    %395 = vmatprep.subr.bf16.mxu0 0
    %396 = vmatpush2.bf16.msra.mxu0 0
    %397 = vmatprep.subr.bf16.mxu0 0
    %398 = vmatpush2.bf16.msra.mxu0 0
    %399 = vmatprep.subr.bf16.mxu0 0
    %400 = vmatpush2.bf16.msra.mxu0 0
    %401 = vmatprep.subr.bf16.mxu0 0
    %402 = vmatpush2.bf16.msra.mxu0 0
    %403 = vmatprep.subr.bf16.mxu0 0
    %404 = vmatpush2.bf16.msra.mxu0 0
    %405 = vmatprep.subr.bf16.mxu0 0
    %406 = vmatpush2.bf16.msra.mxu0 0
    %407 = vmatprep.subr.bf16.mxu0 0
    %408 = vmatpush2.bf16.msra.mxu0 0
    %409 = vmatprep.mubr.bf16.mxu0 0
    %410 = vmatmul.mubr.bf16.gmra.mxu0 %v375
    %v411 = vpop.f32.mrf.mxu0
    %v412 = vadd.f32 %v222, %v411
    %v413 = vpop.f32.mrf.mxu0
    %v414 = vpop.f32.mrf.mxu0
    %v415 = vpop.f32.mrf.mxu0
    %416 = vdwg.mxu0
    %v417 = vmax.f32 %v412, 0.0
    %v418 = vpack.c.bf16 %v417, %v417
    %s419 = scalar_lea.vmem [#allocation7], 512
    %v420 = vld [vmem:[%s419] sm:$0xff]
    %v421 = vld [vmem:[%s419 + $0x8] sm:$0xff]
    %v422 = vld [vmem:[%s419 + $0x10] sm:$0xff]
    %v423 = vld [vmem:[%s419 + $0x18] sm:$0xff]
    %v424 = vld [vmem:[%s419 + $0x20] sm:$0xff]
    %v425 = vld [vmem:[%s419 + $0x28] sm:$0xff]
    %v426 = vld [vmem:[%s419 + $0x30] sm:$0xff]
    %v427 = vld [vmem:[%s419 + $0x38] sm:$0xff]
    %v428 = vld [vmem:[%s419 + $0x40] sm:$0xff]
    %v429 = vld [vmem:[%s419 + $0x48] sm:$0xff]
    %v430 = vld [vmem:[%s419 + $0x50] sm:$0xff]
    %v431 = vld [vmem:[%s419 + $0x58] sm:$0xff]
    %v432 = vld [vmem:[%s419 + $0x60] sm:$0xff]
    %v433 = vld [vmem:[%s419 + $0x68] sm:$0xff]
    %v434 = vld [vmem:[%s419 + $0x70] sm:$0xff]
    %v435 = vld [vmem:[%s419 + $0x78] sm:$0xff]
    %v436 = vld [vmem:[%s419 + $0x80] sm:$0xff]
    %v437 = vld [vmem:[%s419 + $0x88] sm:$0xff]
    %v438 = vld [vmem:[%s419 + $0x90] sm:$0xff]
    %v439 = vld [vmem:[%s419 + $0x98] sm:$0xff]
    %v440 = vld [vmem:[%s419 + $0xa0] sm:$0xff]
    %v441 = vld [vmem:[%s419 + $0xa8] sm:$0xff]
    %v442 = vld [vmem:[%s419 + $0xb0] sm:$0xff]
    %v443 = vld [vmem:[%s419 + $0xb8] sm:$0xff]
    %v444 = vld [vmem:[%s419 + $0xc0] sm:$0xff]
    %v445 = vld [vmem:[%s419 + $0xc8] sm:$0xff]
    %v446 = vld [vmem:[%s419 + $0xd0] sm:$0xff]
    %v447 = vld [vmem:[%s419 + $0xd8] sm:$0xff]
    %v448 = vld [vmem:[%s419 + $0xe0] sm:$0xff]
    %v449 = vld [vmem:[%s419 + $0xe8] sm:$0xff]
    %v450 = vld [vmem:[%s419 + $0xf0] sm:$0xff]
    %v451 = vld [vmem:[%s419 + $0xf8] sm:$0xff]
    %v452 = vld [vmem:[%s419 + $0x100] sm:$0xff]
    %v453 = vld [vmem:[%s419 + $0x108] sm:$0xff]
    %v454 = vld [vmem:[%s419 + $0x110] sm:$0xff]
    %v455 = vld [vmem:[%s419 + $0x118] sm:$0xff]
    %v456 = vld [vmem:[%s419 + $0x120] sm:$0xff]
    %v457 = vld [vmem:[%s419 + $0x128] sm:$0xff]
    %v458 = vld [vmem:[%s419 + $0x130] sm:$0xff]
    %v459 = vld [vmem:[%s419 + $0x138] sm:$0xff]
    %v460 = vld [vmem:[%s419 + $0x140] sm:$0xff]
    %v461 = vld [vmem:[%s419 + $0x148] sm:$0xff]
    %v462 = vld [vmem:[%s419 + $0x150] sm:$0xff]
    %v463 = vld [vmem:[%s419 + $0x158] sm:$0xff]
    %v464 = vld [vmem:[%s419 + $0x160] sm:$0xff]
    %v465 = vld [vmem:[%s419 + $0x168] sm:$0xff]
    %v466 = vld [vmem:[%s419 + $0x170] sm:$0xff]
    %v467 = vld [vmem:[%s419 + $0x178] sm:$0xff]
    %v468 = vld [vmem:[%s419 + $0x180] sm:$0xff]
    %v469 = vld [vmem:[%s419 + $0x188] sm:$0xff]
    %v470 = vld [vmem:[%s419 + $0x190] sm:$0xff]
    %v471 = vld [vmem:[%s419 + $0x198] sm:$0xff]
    %v472 = vld [vmem:[%s419 + $0x1a0] sm:$0xff]
    %v473 = vld [vmem:[%s419 + $0x1a8] sm:$0xff]
    %v474 = vld [vmem:[%s419 + $0x1b0] sm:$0xff]
    %v475 = vld [vmem:[%s419 + $0x1b8] sm:$0xff]
    %v476 = vld [vmem:[%s419 + $0x1c0] sm:$0xff]
    %v477 = vld [vmem:[%s419 + $0x1c8] sm:$0xff]
    %v478 = vld [vmem:[%s419 + $0x1d0] sm:$0xff]
    %v479 = vld [vmem:[%s419 + $0x1d8] sm:$0xff]
    %v480 = vld [vmem:[%s419 + $0x1e0] sm:$0xff]
    %v481 = vld [vmem:[%s419 + $0x1e8] sm:$0xff]
    %v482 = vld [vmem:[%s419 + $0x1f0] sm:$0xff]
    %v483 = vld [vmem:[%s419 + $0x1f8] sm:$0xff]
    %v548 = vunpack.c.l.b16 %v420
    %v549 = vunpack.c.h.b16 %v420
    %v550 = vunpack.c.l.b16 %v421
    %v551 = vunpack.c.h.b16 %v421
    %v552 = vunpack.c.l.b16 %v422
    %v553 = vunpack.c.h.b16 %v422
    %v554 = vunpack.c.l.b16 %v423
    %v555 = vunpack.c.h.b16 %v423
    %v556 = vunpack.c.l.b16 %v424
    %v557 = vunpack.c.h.b16 %v424
    %v558 = vunpack.c.l.b16 %v425
    %v559 = vunpack.c.h.b16 %v425
    %v560 = vunpack.c.l.b16 %v426
    %v561 = vunpack.c.h.b16 %v426
    %v562 = vunpack.c.l.b16 %v427
    %v563 = vunpack.c.h.b16 %v427
    %v564 = vunpack.c.l.b16 %v428
    %v565 = vunpack.c.h.b16 %v428
    %v566 = vunpack.c.l.b16 %v429
    %v567 = vunpack.c.h.b16 %v429
    %v568 = vunpack.c.l.b16 %v430
    %v569 = vunpack.c.h.b16 %v430
    %v570 = vunpack.c.l.b16 %v431
    %v571 = vunpack.c.h.b16 %v431
    %v572 = vunpack.c.l.b16 %v432
    %v573 = vunpack.c.h.b16 %v432
    %v574 = vunpack.c.l.b16 %v433
    %v575 = vunpack.c.h.b16 %v433
    %v576 = vunpack.c.l.b16 %v434
    %v577 = vunpack.c.h.b16 %v434
    %v578 = vunpack.c.l.b16 %v435
    %v579 = vunpack.c.h.b16 %v435
    %v580 = vunpack.c.l.b16 %v436
    %v581 = vunpack.c.h.b16 %v436
    %v582 = vunpack.c.l.b16 %v437
    %v583 = vunpack.c.h.b16 %v437
    %v584 = vunpack.c.l.b16 %v438
    %v585 = vunpack.c.h.b16 %v438
    %v586 = vunpack.c.l.b16 %v439
    %v587 = vunpack.c.h.b16 %v439
    %v588 = vunpack.c.l.b16 %v440
    %v589 = vunpack.c.h.b16 %v440
    %v590 = vunpack.c.l.b16 %v441
    %v591 = vunpack.c.h.b16 %v441
    %v592 = vunpack.c.l.b16 %v442
    %v593 = vunpack.c.h.b16 %v442
    %v594 = vunpack.c.l.b16 %v443
    %v595 = vunpack.c.h.b16 %v443
    %v596 = vunpack.c.l.b16 %v444
    %v597 = vunpack.c.h.b16 %v444
    %v598 = vunpack.c.l.b16 %v445
    %v599 = vunpack.c.h.b16 %v445
    %v600 = vunpack.c.l.b16 %v446
    %v601 = vunpack.c.h.b16 %v446
    %v602 = vunpack.c.l.b16 %v447
    %v603 = vunpack.c.h.b16 %v447
    %v604 = vunpack.c.l.b16 %v448
    %v605 = vunpack.c.h.b16 %v448
    %v606 = vunpack.c.l.b16 %v449
    %v607 = vunpack.c.h.b16 %v449
    %v608 = vunpack.c.l.b16 %v450
    %v609 = vunpack.c.h.b16 %v450
    %v610 = vunpack.c.l.b16 %v451
    %v611 = vunpack.c.h.b16 %v451
    %v612 = vunpack.c.l.b16 %v452
    %v613 = vunpack.c.h.b16 %v452
    %v614 = vunpack.c.l.b16 %v453
    %v615 = vunpack.c.h.b16 %v453
    %v616 = vunpack.c.l.b16 %v454
    %v617 = vunpack.c.h.b16 %v454
    %v618 = vunpack.c.l.b16 %v455
    %v619 = vunpack.c.h.b16 %v455
    %v620 = vunpack.c.l.b16 %v456
    %v621 = vunpack.c.h.b16 %v456
    %v622 = vunpack.c.l.b16 %v457
    %v623 = vunpack.c.h.b16 %v457
    %v624 = vunpack.c.l.b16 %v458
    %v625 = vunpack.c.h.b16 %v458
    %v626 = vunpack.c.l.b16 %v459
    %v627 = vunpack.c.h.b16 %v459
    %v628 = vunpack.c.l.b16 %v460
    %v629 = vunpack.c.h.b16 %v460
    %v630 = vunpack.c.l.b16 %v461
    %v631 = vunpack.c.h.b16 %v461
    %v632 = vunpack.c.l.b16 %v462
    %v633 = vunpack.c.h.b16 %v462
    %v634 = vunpack.c.l.b16 %v463
    %v635 = vunpack.c.h.b16 %v463
    %v636 = vunpack.c.l.b16 %v464
    %v637 = vunpack.c.h.b16 %v464
    %v638 = vunpack.c.l.b16 %v465
    %v639 = vunpack.c.h.b16 %v465
    %v640 = vunpack.c.l.b16 %v466
    %v641 = vunpack.c.h.b16 %v466
    %v642 = vunpack.c.l.b16 %v467
    %v643 = vunpack.c.h.b16 %v467
    %v644 = vunpack.c.l.b16 %v468
    %v645 = vunpack.c.h.b16 %v468
    %v646 = vunpack.c.l.b16 %v469
    %v647 = vunpack.c.h.b16 %v469
    %v648 = vunpack.c.l.b16 %v470
    %v649 = vunpack.c.h.b16 %v470
    %v650 = vunpack.c.l.b16 %v471
    %v651 = vunpack.c.h.b16 %v471
    %v652 = vunpack.c.l.b16 %v472
    %v653 = vunpack.c.h.b16 %v472
    %v654 = vunpack.c.l.b16 %v473
    %v655 = vunpack.c.h.b16 %v473
    %v656 = vunpack.c.l.b16 %v474
    %v657 = vunpack.c.h.b16 %v474
    %v658 = vunpack.c.l.b16 %v475
    %v659 = vunpack.c.h.b16 %v475
    %v660 = vunpack.c.l.b16 %v476
    %v661 = vunpack.c.h.b16 %v476
    %v662 = vunpack.c.l.b16 %v477
    %v663 = vunpack.c.h.b16 %v477
    %v664 = vunpack.c.l.b16 %v478
    %v665 = vunpack.c.h.b16 %v478
    %v666 = vunpack.c.l.b16 %v479
    %v667 = vunpack.c.h.b16 %v479
    %v668 = vunpack.c.l.b16 %v480
    %v669 = vunpack.c.h.b16 %v480
    %v670 = vunpack.c.l.b16 %v481
    %v671 = vunpack.c.h.b16 %v481
    %v672 = vunpack.c.l.b16 %v482
    %v673 = vunpack.c.h.b16 %v482
    %v674 = vunpack.c.l.b16 %v483
    %v675 = vunpack.c.h.b16 %v483
    %v676 = vpack.c.b16 %v556, %v548
    %v677 = vpack.c.b16 %v557, %v549
    %v678 = vpack.c.b16 %v558, %v550
    %v679 = vpack.c.b16 %v559, %v551
    %v680 = vpack.c.b16 %v560, %v552
    %v681 = vpack.c.b16 %v561, %v553
    %v682 = vpack.c.b16 %v562, %v554
    %v683 = vpack.c.b16 %v563, %v555
    %v684 = vpack.c.b16 %v572, %v564
    %v685 = vpack.c.b16 %v573, %v565
    %v686 = vpack.c.b16 %v574, %v566
    %v687 = vpack.c.b16 %v575, %v567
    %v688 = vpack.c.b16 %v576, %v568
    %v689 = vpack.c.b16 %v577, %v569
    %v690 = vpack.c.b16 %v578, %v570
    %v691 = vpack.c.b16 %v579, %v571
    %v692 = vpack.c.b16 %v588, %v580
    %v693 = vpack.c.b16 %v589, %v581
    %v694 = vpack.c.b16 %v590, %v582
    %v695 = vpack.c.b16 %v591, %v583
    %v696 = vpack.c.b16 %v592, %v584
    %v697 = vpack.c.b16 %v593, %v585
    %v698 = vpack.c.b16 %v594, %v586
    %v699 = vpack.c.b16 %v595, %v587
    %v700 = vpack.c.b16 %v604, %v596
    %v701 = vpack.c.b16 %v605, %v597
    %v702 = vpack.c.b16 %v606, %v598
    %v703 = vpack.c.b16 %v607, %v599
    %v704 = vpack.c.b16 %v608, %v600
    %v705 = vpack.c.b16 %v609, %v601
    %v706 = vpack.c.b16 %v610, %v602
    %v707 = vpack.c.b16 %v611, %v603
    %v708 = vpack.c.b16 %v620, %v612
    %v709 = vpack.c.b16 %v621, %v613
    %v710 = vpack.c.b16 %v622, %v614
    %v711 = vpack.c.b16 %v623, %v615
    %v712 = vpack.c.b16 %v624, %v616
    %v713 = vpack.c.b16 %v625, %v617
    %v714 = vpack.c.b16 %v626, %v618
    %v715 = vpack.c.b16 %v627, %v619
    %v716 = vpack.c.b16 %v636, %v628
    %v717 = vpack.c.b16 %v637, %v629
    %v718 = vpack.c.b16 %v638, %v630
    %v719 = vpack.c.b16 %v639, %v631
    %v720 = vpack.c.b16 %v640, %v632
    %v721 = vpack.c.b16 %v641, %v633
    %v722 = vpack.c.b16 %v642, %v634
    %v723 = vpack.c.b16 %v643, %v635
    %v724 = vpack.c.b16 %v652, %v644
    %v725 = vpack.c.b16 %v653, %v645
    %v726 = vpack.c.b16 %v654, %v646
    %v727 = vpack.c.b16 %v655, %v647
    %v728 = vpack.c.b16 %v656, %v648
    %v729 = vpack.c.b16 %v657, %v649
    %v730 = vpack.c.b16 %v658, %v650
    %v731 = vpack.c.b16 %v659, %v651
    %v732 = vpack.c.b16 %v668, %v660
    %v733 = vpack.c.b16 %v669, %v661
    %v734 = vpack.c.b16 %v670, %v662
    %v735 = vpack.c.b16 %v671, %v663
    %v736 = vpack.c.b16 %v672, %v664
    %v737 = vpack.c.b16 %v673, %v665
    %v738 = vpack.c.b16 %v674, %v666
    %v739 = vpack.c.b16 %v675, %v667
    %804 = vmatprep.subr.bf16.mxu0 %v733
    %805 = vmatpush1.bf16.msra.mxu0 %v732
    %806 = vmatprep.subr.bf16.mxu0 %v725
    %807 = vmatpush1.bf16.msra.mxu0 %v724
    %808 = vmatprep.subr.bf16.mxu0 %v717
    %809 = vmatpush1.bf16.msra.mxu0 %v716
    %810 = vmatprep.subr.bf16.mxu0 %v709
    %811 = vmatpush1.bf16.msra.mxu0 %v708
    %812 = vmatprep.subr.bf16.mxu0 %v701
    %813 = vmatpush1.bf16.msra.mxu0 %v700
    %814 = vmatprep.subr.bf16.mxu0 %v693
    %815 = vmatpush1.bf16.msra.mxu0 %v692
    %816 = vmatprep.subr.bf16.mxu0 %v685
    %817 = vmatpush1.bf16.msra.mxu0 %v684
    %818 = vmatprep.subr.bf16.mxu0 %v677
    %819 = vmatpush1.bf16.msra.mxu0 %v676
    %820 = vmatprep.subr.bf16.mxu0 0
    %821 = vmatpush2.bf16.msra.mxu0 0
    %822 = vmatprep.subr.bf16.mxu0 0
    %823 = vmatpush2.bf16.msra.mxu0 0
    %824 = vmatprep.subr.bf16.mxu0 0
    %825 = vmatpush2.bf16.msra.mxu0 0
    %826 = vmatprep.subr.bf16.mxu0 0
    %827 = vmatpush2.bf16.msra.mxu0 0
    %828 = vmatprep.subr.bf16.mxu0 0
    %829 = vmatpush2.bf16.msra.mxu0 0
    %830 = vmatprep.subr.bf16.mxu0 0
    %831 = vmatpush2.bf16.msra.mxu0 0
    %832 = vmatprep.subr.bf16.mxu0 0
    %833 = vmatpush2.bf16.msra.mxu0 0
    %834 = vmatprep.subr.bf16.mxu0 0
    %835 = vmatpush2.bf16.msra.mxu0 0
    %836 = vmatprep.mubr.bf16.mxu0 0
    %837 = vmatmul.mubr.bf16.gmra.mxu0 %v418
    %v838 = vpop.f32.mrf.mxu0
    %v839 = vadd.f32 0.0, %v838
    %v840 = vpop.f32.mrf.mxu0
    %v841 = vadd.f32 0.0, %v840
    %v842 = vpop.f32.mrf.mxu0
    %v843 = vpop.f32.mrf.mxu0
    %844 = vdwg.mxu0
    %845 = vmatprep.subr.bf16.mxu0 %v735
    %846 = vmatpush1.bf16.msra.mxu0 %v734
    %847 = vmatprep.subr.bf16.mxu0 %v727
    %848 = vmatpush1.bf16.msra.mxu0 %v726
    %849 = vmatprep.subr.bf16.mxu0 %v719
    %850 = vmatpush1.bf16.msra.mxu0 %v718
    %851 = vmatprep.subr.bf16.mxu0 %v711
    %852 = vmatpush1.bf16.msra.mxu0 %v710
    %853 = vmatprep.subr.bf16.mxu0 %v703
    %854 = vmatpush1.bf16.msra.mxu0 %v702
    %855 = vmatprep.subr.bf16.mxu0 %v695
    %856 = vmatpush1.bf16.msra.mxu0 %v694
    %857 = vmatprep.subr.bf16.mxu0 %v687
    %858 = vmatpush1.bf16.msra.mxu0 %v686
    %859 = vmatprep.subr.bf16.mxu0 %v679
    %860 = vmatpush1.bf16.msra.mxu0 %v678
    %861 = vmatprep.subr.bf16.mxu0 0
    %862 = vmatpush2.bf16.msra.mxu0 0
    %863 = vmatprep.subr.bf16.mxu0 0
    %864 = vmatpush2.bf16.msra.mxu0 0
    %865 = vmatprep.subr.bf16.mxu0 0
    %866 = vmatpush2.bf16.msra.mxu0 0
    %867 = vmatprep.subr.bf16.mxu0 0
    %868 = vmatpush2.bf16.msra.mxu0 0
    %869 = vmatprep.subr.bf16.mxu0 0
    %870 = vmatpush2.bf16.msra.mxu0 0
    %871 = vmatprep.subr.bf16.mxu0 0
    %872 = vmatpush2.bf16.msra.mxu0 0
    %873 = vmatprep.subr.bf16.mxu0 0
    %874 = vmatpush2.bf16.msra.mxu0 0
    %875 = vmatprep.subr.bf16.mxu0 0
    %876 = vmatpush2.bf16.msra.mxu0 0
    %877 = vmatprep.mubr.bf16.mxu0 0
    %878 = vmatmul.mubr.bf16.gmra.mxu0 %v418
    %v879 = vpop.f32.mrf.mxu0
    %v880 = vadd.f32 0.0, %v879
    %v881 = vpop.f32.mrf.mxu0
    %v882 = vadd.f32 0.0, %v881
    %v883 = vpop.f32.mrf.mxu0
    %v884 = vpop.f32.mrf.mxu0
    %885 = vdwg.mxu0
    %886 = vmatprep.subr.bf16.mxu0 %v737
    %887 = vmatpush1.bf16.msra.mxu0 %v736
    %888 = vmatprep.subr.bf16.mxu0 %v729
    %889 = vmatpush1.bf16.msra.mxu0 %v728
    %890 = vmatprep.subr.bf16.mxu0 %v721
    %891 = vmatpush1.bf16.msra.mxu0 %v720
    %892 = vmatprep.subr.bf16.mxu0 %v713
    %893 = vmatpush1.bf16.msra.mxu0 %v712
    %894 = vmatprep.subr.bf16.mxu0 %v705
    %895 = vmatpush1.bf16.msra.mxu0 %v704
    %896 = vmatprep.subr.bf16.mxu0 %v697
    %897 = vmatpush1.bf16.msra.mxu0 %v696
    %898 = vmatprep.subr.bf16.mxu0 %v689
    %899 = vmatpush1.bf16.msra.mxu0 %v688
    %900 = vmatprep.subr.bf16.mxu0 %v681
    %901 = vmatpush1.bf16.msra.mxu0 %v680
    %902 = vmatprep.subr.bf16.mxu0 0
    %903 = vmatpush2.bf16.msra.mxu0 0
    %904 = vmatprep.subr.bf16.mxu0 0
    %905 = vmatpush2.bf16.msra.mxu0 0
    %906 = vmatprep.subr.bf16.mxu0 0
    %907 = vmatpush2.bf16.msra.mxu0 0
    %908 = vmatprep.subr.bf16.mxu0 0
    %909 = vmatpush2.bf16.msra.mxu0 0
    %910 = vmatprep.subr.bf16.mxu0 0
    %911 = vmatpush2.bf16.msra.mxu0 0
    %912 = vmatprep.subr.bf16.mxu0 0
    %913 = vmatpush2.bf16.msra.mxu0 0
    %914 = vmatprep.subr.bf16.mxu0 0
    %915 = vmatpush2.bf16.msra.mxu0 0
    %916 = vmatprep.subr.bf16.mxu0 0
    %917 = vmatpush2.bf16.msra.mxu0 0
    %918 = vmatprep.mubr.bf16.mxu0 0
    %919 = vmatmul.mubr.bf16.gmra.mxu0 %v418
    %v920 = vpop.f32.mrf.mxu0
    %v921 = vadd.f32 0.0, %v920
    %v922 = vpop.f32.mrf.mxu0
    %v923 = vadd.f32 0.0, %v922
    %v924 = vpop.f32.mrf.mxu0
    %v925 = vpop.f32.mrf.mxu0
    %926 = vdwg.mxu0
    %927 = vmatprep.subr.bf16.mxu0 %v739
    %928 = vmatpush1.bf16.msra.mxu0 %v738
    %929 = vmatprep.subr.bf16.mxu0 %v731
    %930 = vmatpush1.bf16.msra.mxu0 %v730
    %931 = vmatprep.subr.bf16.mxu0 %v723
    %932 = vmatpush1.bf16.msra.mxu0 %v722
    %933 = vmatprep.subr.bf16.mxu0 %v715
    %934 = vmatpush1.bf16.msra.mxu0 %v714
    %935 = vmatprep.subr.bf16.mxu0 %v707
    %936 = vmatpush1.bf16.msra.mxu0 %v706
    %937 = vmatprep.subr.bf16.mxu0 %v699
    %938 = vmatpush1.bf16.msra.mxu0 %v698
    %939 = vmatprep.subr.bf16.mxu0 %v691
    %940 = vmatpush1.bf16.msra.mxu0 %v690
    %941 = vmatprep.subr.bf16.mxu0 %v683
    %942 = vmatpush1.bf16.msra.mxu0 %v682
    %943 = vmatprep.subr.bf16.mxu0 0
    %944 = vmatpush2.bf16.msra.mxu0 0
    %945 = vmatprep.subr.bf16.mxu0 0
    %946 = vmatpush2.bf16.msra.mxu0 0
    %947 = vmatprep.subr.bf16.mxu0 0
    %948 = vmatpush2.bf16.msra.mxu0 0
    %949 = vmatprep.subr.bf16.mxu0 0
    %950 = vmatpush2.bf16.msra.mxu0 0
    %951 = vmatprep.subr.bf16.mxu0 0
    %952 = vmatpush2.bf16.msra.mxu0 0
    %953 = vmatprep.subr.bf16.mxu0 0
    %954 = vmatpush2.bf16.msra.mxu0 0
    %955 = vmatprep.subr.bf16.mxu0 0
    %956 = vmatpush2.bf16.msra.mxu0 0
    %957 = vmatprep.subr.bf16.mxu0 0
    %958 = vmatpush2.bf16.msra.mxu0 0
    %959 = vmatprep.mubr.bf16.mxu0 0
    %960 = vmatmul.mubr.bf16.gmra.mxu0 %v418
    %v961 = vpop.f32.mrf.mxu0
    %v962 = vadd.f32 0.0, %v961
    %v963 = vpop.f32.mrf.mxu0
    %v964 = vadd.f32 0.0, %v963
    %v965 = vpop.f32.mrf.mxu0
    %v966 = vpop.f32.mrf.mxu0
    %967 = vdwg.mxu0
    %v1032 = vunpack.c.l.b16 %v282
    %v1033 = vunpack.c.h.b16 %v282
    %v1034 = vunpack.c.l.b16 %v283
    %v1035 = vunpack.c.h.b16 %v283
    %v1036 = vunpack.c.l.b16 %v284
    %v1037 = vunpack.c.h.b16 %v284
    %v1038 = vunpack.c.l.b16 %v285
    %v1039 = vunpack.c.h.b16 %v285
    %v1040 = vunpack.c.l.b16 %v286
    %v1041 = vunpack.c.h.b16 %v286
    %v1042 = vunpack.c.l.b16 %v287
    %v1043 = vunpack.c.h.b16 %v287
    %v1044 = vunpack.c.l.b16 %v288
    %v1045 = vunpack.c.h.b16 %v288
    %v1046 = vunpack.c.l.b16 %v289
    %v1047 = vunpack.c.h.b16 %v289
    %v1048 = vunpack.c.l.b16 %v290
    %v1049 = vunpack.c.h.b16 %v290
    %v1050 = vunpack.c.l.b16 %v291
    %v1051 = vunpack.c.h.b16 %v291
    %v1052 = vunpack.c.l.b16 %v292
    %v1053 = vunpack.c.h.b16 %v292
    %v1054 = vunpack.c.l.b16 %v293
    %v1055 = vunpack.c.h.b16 %v293
    %v1056 = vunpack.c.l.b16 %v294
    %v1057 = vunpack.c.h.b16 %v294
    %v1058 = vunpack.c.l.b16 %v295
    %v1059 = vunpack.c.h.b16 %v295
    %v1060 = vunpack.c.l.b16 %v296
    %v1061 = vunpack.c.h.b16 %v296
    %v1062 = vunpack.c.l.b16 %v297
    %v1063 = vunpack.c.h.b16 %v297
    %v1064 = vunpack.c.l.b16 %v298
    %v1065 = vunpack.c.h.b16 %v298
    %v1066 = vunpack.c.l.b16 %v299
    %v1067 = vunpack.c.h.b16 %v299
    %v1068 = vunpack.c.l.b16 %v300
    %v1069 = vunpack.c.h.b16 %v300
    %v1070 = vunpack.c.l.b16 %v301
    %v1071 = vunpack.c.h.b16 %v301
    %v1072 = vunpack.c.l.b16 %v302
    %v1073 = vunpack.c.h.b16 %v302
    %v1074 = vunpack.c.l.b16 %v303
    %v1075 = vunpack.c.h.b16 %v303
    %v1076 = vunpack.c.l.b16 %v304
    %v1077 = vunpack.c.h.b16 %v304
    %v1078 = vunpack.c.l.b16 %v305
    %v1079 = vunpack.c.h.b16 %v305
    %v1080 = vunpack.c.l.b16 %v306
    %v1081 = vunpack.c.h.b16 %v306
    %v1082 = vunpack.c.l.b16 %v307
    %v1083 = vunpack.c.h.b16 %v307
    %v1084 = vunpack.c.l.b16 %v308
    %v1085 = vunpack.c.h.b16 %v308
    %v1086 = vunpack.c.l.b16 %v309
    %v1087 = vunpack.c.h.b16 %v309
    %v1088 = vunpack.c.l.b16 %v310
    %v1089 = vunpack.c.h.b16 %v310
    %v1090 = vunpack.c.l.b16 %v311
    %v1091 = vunpack.c.h.b16 %v311
    %v1092 = vunpack.c.l.b16 %v312
    %v1093 = vunpack.c.h.b16 %v312
    %v1094 = vunpack.c.l.b16 %v313
    %v1095 = vunpack.c.h.b16 %v313
    %v1096 = vunpack.c.l.b16 %v314
    %v1097 = vunpack.c.h.b16 %v314
    %v1098 = vunpack.c.l.b16 %v315
    %v1099 = vunpack.c.h.b16 %v315
    %v1100 = vunpack.c.l.b16 %v316
    %v1101 = vunpack.c.h.b16 %v316
    %v1102 = vunpack.c.l.b16 %v317
    %v1103 = vunpack.c.h.b16 %v317
    %v1104 = vunpack.c.l.b16 %v318
    %v1105 = vunpack.c.h.b16 %v318
    %v1106 = vunpack.c.l.b16 %v319
    %v1107 = vunpack.c.h.b16 %v319
    %v1108 = vunpack.c.l.b16 %v320
    %v1109 = vunpack.c.h.b16 %v320
    %v1110 = vunpack.c.l.b16 %v321
    %v1111 = vunpack.c.h.b16 %v321
    %v1112 = vunpack.c.l.b16 %v322
    %v1113 = vunpack.c.h.b16 %v322
    %v1114 = vunpack.c.l.b16 %v323
    %v1115 = vunpack.c.h.b16 %v323
    %v1116 = vunpack.c.l.b16 %v324
    %v1117 = vunpack.c.h.b16 %v324
    %v1118 = vunpack.c.l.b16 %v325
    %v1119 = vunpack.c.h.b16 %v325
    %v1120 = vunpack.c.l.b16 %v326
    %v1121 = vunpack.c.h.b16 %v326
    %v1122 = vunpack.c.l.b16 %v327
    %v1123 = vunpack.c.h.b16 %v327
    %v1124 = vunpack.c.l.b16 %v328
    %v1125 = vunpack.c.h.b16 %v328
    %v1126 = vunpack.c.l.b16 %v329
    %v1127 = vunpack.c.h.b16 %v329
    %v1128 = vunpack.c.l.b16 %v330
    %v1129 = vunpack.c.h.b16 %v330
    %v1130 = vunpack.c.l.b16 %v331
    %v1131 = vunpack.c.h.b16 %v331
    %v1132 = vunpack.c.l.b16 %v332
    %v1133 = vunpack.c.h.b16 %v332
    %v1134 = vunpack.c.l.b16 %v333
    %v1135 = vunpack.c.h.b16 %v333
    %v1136 = vunpack.c.l.b16 %v334
    %v1137 = vunpack.c.h.b16 %v334
    %v1138 = vunpack.c.l.b16 %v335
    %v1139 = vunpack.c.h.b16 %v335
    %v1140 = vunpack.c.l.b16 %v336
    %v1141 = vunpack.c.h.b16 %v336
    %v1142 = vunpack.c.l.b16 %v337
    %v1143 = vunpack.c.h.b16 %v337
    %v1144 = vunpack.c.l.b16 %v338
    %v1145 = vunpack.c.h.b16 %v338
    %v1146 = vunpack.c.l.b16 %v339
    %v1147 = vunpack.c.h.b16 %v339
    %v1148 = vunpack.c.l.b16 %v340
    %v1149 = vunpack.c.h.b16 %v340
    %v1150 = vunpack.c.l.b16 %v341
    %v1151 = vunpack.c.h.b16 %v341
    %v1152 = vunpack.c.l.b16 %v342
    %v1153 = vunpack.c.h.b16 %v342
    %v1154 = vunpack.c.l.b16 %v343
    %v1155 = vunpack.c.h.b16 %v343
    %v1156 = vunpack.c.l.b16 %v344
    %v1157 = vunpack.c.h.b16 %v344
    %v1158 = vunpack.c.l.b16 %v345
    %v1159 = vunpack.c.h.b16 %v345
    %v1160 = vpack.c.b16 %v1040, %v1032
    %v1161 = vpack.c.b16 %v1041, %v1033
    %v1162 = vpack.c.b16 %v1042, %v1034
    %v1163 = vpack.c.b16 %v1043, %v1035
    %v1164 = vpack.c.b16 %v1044, %v1036
    %v1165 = vpack.c.b16 %v1045, %v1037
    %v1166 = vpack.c.b16 %v1046, %v1038
    %v1167 = vpack.c.b16 %v1047, %v1039
    %v1168 = vpack.c.b16 %v1056, %v1048
    %v1169 = vpack.c.b16 %v1057, %v1049
    %v1170 = vpack.c.b16 %v1058, %v1050
    %v1171 = vpack.c.b16 %v1059, %v1051
    %v1172 = vpack.c.b16 %v1060, %v1052
    %v1173 = vpack.c.b16 %v1061, %v1053
    %v1174 = vpack.c.b16 %v1062, %v1054
    %v1175 = vpack.c.b16 %v1063, %v1055
    %v1176 = vpack.c.b16 %v1072, %v1064
    %v1177 = vpack.c.b16 %v1073, %v1065
    %v1178 = vpack.c.b16 %v1074, %v1066
    %v1179 = vpack.c.b16 %v1075, %v1067
    %v1180 = vpack.c.b16 %v1076, %v1068
    %v1181 = vpack.c.b16 %v1077, %v1069
    %v1182 = vpack.c.b16 %v1078, %v1070
    %v1183 = vpack.c.b16 %v1079, %v1071
    %v1184 = vpack.c.b16 %v1088, %v1080
    %v1185 = vpack.c.b16 %v1089, %v1081
    %v1186 = vpack.c.b16 %v1090, %v1082
    %v1187 = vpack.c.b16 %v1091, %v1083
    %v1188 = vpack.c.b16 %v1092, %v1084
    %v1189 = vpack.c.b16 %v1093, %v1085
    %v1190 = vpack.c.b16 %v1094, %v1086
    %v1191 = vpack.c.b16 %v1095, %v1087
    %v1192 = vpack.c.b16 %v1104, %v1096
    %v1193 = vpack.c.b16 %v1105, %v1097
    %v1194 = vpack.c.b16 %v1106, %v1098
    %v1195 = vpack.c.b16 %v1107, %v1099
    %v1196 = vpack.c.b16 %v1108, %v1100
    %v1197 = vpack.c.b16 %v1109, %v1101
    %v1198 = vpack.c.b16 %v1110, %v1102
    %v1199 = vpack.c.b16 %v1111, %v1103
    %v1200 = vpack.c.b16 %v1120, %v1112
    %v1201 = vpack.c.b16 %v1121, %v1113
    %v1202 = vpack.c.b16 %v1122, %v1114
    %v1203 = vpack.c.b16 %v1123, %v1115
    %v1204 = vpack.c.b16 %v1124, %v1116
    %v1205 = vpack.c.b16 %v1125, %v1117
    %v1206 = vpack.c.b16 %v1126, %v1118
    %v1207 = vpack.c.b16 %v1127, %v1119
    %v1208 = vpack.c.b16 %v1136, %v1128
    %v1209 = vpack.c.b16 %v1137, %v1129
    %v1210 = vpack.c.b16 %v1138, %v1130
    %v1211 = vpack.c.b16 %v1139, %v1131
    %v1212 = vpack.c.b16 %v1140, %v1132
    %v1213 = vpack.c.b16 %v1141, %v1133
    %v1214 = vpack.c.b16 %v1142, %v1134
    %v1215 = vpack.c.b16 %v1143, %v1135
    %v1216 = vpack.c.b16 %v1152, %v1144
    %v1217 = vpack.c.b16 %v1153, %v1145
    %v1218 = vpack.c.b16 %v1154, %v1146
    %v1219 = vpack.c.b16 %v1155, %v1147
    %v1220 = vpack.c.b16 %v1156, %v1148
    %v1221 = vpack.c.b16 %v1157, %v1149
    %v1222 = vpack.c.b16 %v1158, %v1150
    %v1223 = vpack.c.b16 %v1159, %v1151
    %1288 = vmatprep.subr.bf16.mxu0 %v1217
    %1289 = vmatpush1.bf16.msra.mxu0 %v1216
    %1290 = vmatprep.subr.bf16.mxu0 %v1209
    %1291 = vmatpush1.bf16.msra.mxu0 %v1208
    %1292 = vmatprep.subr.bf16.mxu0 %v1201
    %1293 = vmatpush1.bf16.msra.mxu0 %v1200
    %1294 = vmatprep.subr.bf16.mxu0 %v1193
    %1295 = vmatpush1.bf16.msra.mxu0 %v1192
    %1296 = vmatprep.subr.bf16.mxu0 %v1185
    %1297 = vmatpush1.bf16.msra.mxu0 %v1184
    %1298 = vmatprep.subr.bf16.mxu0 %v1177
    %1299 = vmatpush1.bf16.msra.mxu0 %v1176
    %1300 = vmatprep.subr.bf16.mxu0 %v1169
    %1301 = vmatpush1.bf16.msra.mxu0 %v1168
    %1302 = vmatprep.subr.bf16.mxu0 %v1161
    %1303 = vmatpush1.bf16.msra.mxu0 %v1160
    %1304 = vmatprep.subr.bf16.mxu0 0
    %1305 = vmatpush2.bf16.msra.mxu0 0
    %1306 = vmatprep.subr.bf16.mxu0 0
    %1307 = vmatpush2.bf16.msra.mxu0 0
    %1308 = vmatprep.subr.bf16.mxu0 0
    %1309 = vmatpush2.bf16.msra.mxu0 0
    %1310 = vmatprep.subr.bf16.mxu0 0
    %1311 = vmatpush2.bf16.msra.mxu0 0
    %1312 = vmatprep.subr.bf16.mxu0 0
    %1313 = vmatpush2.bf16.msra.mxu0 0
    %1314 = vmatprep.subr.bf16.mxu0 0
    %1315 = vmatpush2.bf16.msra.mxu0 0
    %1316 = vmatprep.subr.bf16.mxu0 0
    %1317 = vmatpush2.bf16.msra.mxu0 0
    %1318 = vmatprep.subr.bf16.mxu0 0
    %1319 = vmatpush2.bf16.msra.mxu0 0
    %1320 = vmatprep.mubr.bf16.mxu0 0
    %1321 = vmatmul.mubr.bf16.gmra.mxu0 %v281
    %v1322 = vpop.f32.mrf.mxu0
    %v1323 = vadd.f32 %v839, %v1322
    %v1324 = vpop.f32.mrf.mxu0
    %v1325 = vadd.f32 %v841, %v1324
    %v1326 = vpop.f32.mrf.mxu0
    %v1327 = vpop.f32.mrf.mxu0
    %1328 = vdwg.mxu0
    %1329 = vmatprep.subr.bf16.mxu0 %v1219
    %1330 = vmatpush1.bf16.msra.mxu0 %v1218
    %1331 = vmatprep.subr.bf16.mxu0 %v1211
    %1332 = vmatpush1.bf16.msra.mxu0 %v1210
    %1333 = vmatprep.subr.bf16.mxu0 %v1203
    %1334 = vmatpush1.bf16.msra.mxu0 %v1202
    %1335 = vmatprep.subr.bf16.mxu0 %v1195
    %1336 = vmatpush1.bf16.msra.mxu0 %v1194
    %1337 = vmatprep.subr.bf16.mxu0 %v1187
    %1338 = vmatpush1.bf16.msra.mxu0 %v1186
    %1339 = vmatprep.subr.bf16.mxu0 %v1179
    %1340 = vmatpush1.bf16.msra.mxu0 %v1178
    %1341 = vmatprep.subr.bf16.mxu0 %v1171
    %1342 = vmatpush1.bf16.msra.mxu0 %v1170
    %1343 = vmatprep.subr.bf16.mxu0 %v1163
    %1344 = vmatpush1.bf16.msra.mxu0 %v1162
    %1345 = vmatprep.subr.bf16.mxu0 0
    %1346 = vmatpush2.bf16.msra.mxu0 0
    %1347 = vmatprep.subr.bf16.mxu0 0
    %1348 = vmatpush2.bf16.msra.mxu0 0
    %1349 = vmatprep.subr.bf16.mxu0 0
    %1350 = vmatpush2.bf16.msra.mxu0 0
    %1351 = vmatprep.subr.bf16.mxu0 0
    %1352 = vmatpush2.bf16.msra.mxu0 0
    %1353 = vmatprep.subr.bf16.mxu0 0
    %1354 = vmatpush2.bf16.msra.mxu0 0
    %1355 = vmatprep.subr.bf16.mxu0 0
    %1356 = vmatpush2.bf16.msra.mxu0 0
    %1357 = vmatprep.subr.bf16.mxu0 0
    %1358 = vmatpush2.bf16.msra.mxu0 0
    %1359 = vmatprep.subr.bf16.mxu0 0
    %1360 = vmatpush2.bf16.msra.mxu0 0
    %1361 = vmatprep.mubr.bf16.mxu0 0
    %1362 = vmatmul.mubr.bf16.gmra.mxu0 %v281
    %v1363 = vpop.f32.mrf.mxu0
    %v1364 = vadd.f32 %v880, %v1363
    %v1365 = vpop.f32.mrf.mxu0
    %v1366 = vadd.f32 %v882, %v1365
    %v1367 = vpop.f32.mrf.mxu0
    %v1368 = vpop.f32.mrf.mxu0
    %1369 = vdwg.mxu0
    %1370 = vmatprep.subr.bf16.mxu0 %v1221
    %1371 = vmatpush1.bf16.msra.mxu0 %v1220
    %1372 = vmatprep.subr.bf16.mxu0 %v1213
    %1373 = vmatpush1.bf16.msra.mxu0 %v1212
    %1374 = vmatprep.subr.bf16.mxu0 %v1205
    %1375 = vmatpush1.bf16.msra.mxu0 %v1204
    %1376 = vmatprep.subr.bf16.mxu0 %v1197
    %1377 = vmatpush1.bf16.msra.mxu0 %v1196
    %1378 = vmatprep.subr.bf16.mxu0 %v1189
    %1379 = vmatpush1.bf16.msra.mxu0 %v1188
    %1380 = vmatprep.subr.bf16.mxu0 %v1181
    %1381 = vmatpush1.bf16.msra.mxu0 %v1180
    %1382 = vmatprep.subr.bf16.mxu0 %v1173
    %1383 = vmatpush1.bf16.msra.mxu0 %v1172
    %1384 = vmatprep.subr.bf16.mxu0 %v1165
    %1385 = vmatpush1.bf16.msra.mxu0 %v1164
    %1386 = vmatprep.subr.bf16.mxu0 0
    %1387 = vmatpush2.bf16.msra.mxu0 0
    %1388 = vmatprep.subr.bf16.mxu0 0
    %1389 = vmatpush2.bf16.msra.mxu0 0
    %1390 = vmatprep.subr.bf16.mxu0 0
    %1391 = vmatpush2.bf16.msra.mxu0 0
    %1392 = vmatprep.subr.bf16.mxu0 0
    %1393 = vmatpush2.bf16.msra.mxu0 0
    %1394 = vmatprep.subr.bf16.mxu0 0
    %1395 = vmatpush2.bf16.msra.mxu0 0
    %1396 = vmatprep.subr.bf16.mxu0 0
    %1397 = vmatpush2.bf16.msra.mxu0 0
    %1398 = vmatprep.subr.bf16.mxu0 0
    %1399 = vmatpush2.bf16.msra.mxu0 0
    %1400 = vmatprep.subr.bf16.mxu0 0
    %1401 = vmatpush2.bf16.msra.mxu0 0
    %1402 = vmatprep.mubr.bf16.mxu0 0
    %1403 = vmatmul.mubr.bf16.gmra.mxu0 %v281
    %v1404 = vpop.f32.mrf.mxu0
    %v1405 = vadd.f32 %v921, %v1404
    %v1406 = vpop.f32.mrf.mxu0
    %v1407 = vadd.f32 %v923, %v1406
    %v1408 = vpop.f32.mrf.mxu0
    %v1409 = vpop.f32.mrf.mxu0
    %1410 = vdwg.mxu0
    %1411 = vmatprep.subr.bf16.mxu0 %v1223
    %1412 = vmatpush1.bf16.msra.mxu0 %v1222
    %1413 = vmatprep.subr.bf16.mxu0 %v1215
    %1414 = vmatpush1.bf16.msra.mxu0 %v1214
    %1415 = vmatprep.subr.bf16.mxu0 %v1207
    %1416 = vmatpush1.bf16.msra.mxu0 %v1206
    %1417 = vmatprep.subr.bf16.mxu0 %v1199
    %1418 = vmatpush1.bf16.msra.mxu0 %v1198
    %1419 = vmatprep.subr.bf16.mxu0 %v1191
    %1420 = vmatpush1.bf16.msra.mxu0 %v1190
    %1421 = vmatprep.subr.bf16.mxu0 %v1183
    %1422 = vmatpush1.bf16.msra.mxu0 %v1182
    %1423 = vmatprep.subr.bf16.mxu0 %v1175
    %1424 = vmatpush1.bf16.msra.mxu0 %v1174
    %1425 = vmatprep.subr.bf16.mxu0 %v1167
    %1426 = vmatpush1.bf16.msra.mxu0 %v1166
    %1427 = vmatprep.subr.bf16.mxu0 0
    %1428 = vmatpush2.bf16.msra.mxu0 0
    %1429 = vmatprep.subr.bf16.mxu0 0
    %1430 = vmatpush2.bf16.msra.mxu0 0
    %1431 = vmatprep.subr.bf16.mxu0 0
    %1432 = vmatpush2.bf16.msra.mxu0 0
    %1433 = vmatprep.subr.bf16.mxu0 0
    %1434 = vmatpush2.bf16.msra.mxu0 0
    %1435 = vmatprep.subr.bf16.mxu0 0
    %1436 = vmatpush2.bf16.msra.mxu0 0
    %1437 = vmatprep.subr.bf16.mxu0 0
    %1438 = vmatpush2.bf16.msra.mxu0 0
    %1439 = vmatprep.subr.bf16.mxu0 0
    %1440 = vmatpush2.bf16.msra.mxu0 0
    %1441 = vmatprep.subr.bf16.mxu0 0
    %1442 = vmatpush2.bf16.msra.mxu0 0
    %1443 = vmatprep.mubr.bf16.mxu0 0
    %1444 = vmatmul.mubr.bf16.gmra.mxu0 %v281
    %v1445 = vpop.f32.mrf.mxu0
    %v1446 = vadd.f32 %v962, %v1445
    %v1447 = vpop.f32.mrf.mxu0
    %v1448 = vadd.f32 %v964, %v1447
    %v1449 = vpop.f32.mrf.mxu0
    %v1450 = vpop.f32.mrf.mxu0
    %1451 = vdwg.mxu0
    %vm1454 = vcmask 1041408
    %v1455 = vrot.slane %v172, 6
    %v1456 = vrot.slane %v182, 6
    %v1457 = vsel %vm1454, %v1455, %v1456
    %v1458 = vrot.slane %v191, 6
    %v1459 = vrot.slane %v200, 6
    %v1460 = vsel %vm1454, %v1458, %v1459
    %v1463 = vsel %vm201, %v1457, 0.0
    %v1464 = vrot.slane %v1463, 4
    %v1465 = vadd.f32 %v1463, %v1464
    %v1466 = vrot.slane %v1465, 2
    %v1467 = vadd.f32 %v1465, %v1466
    %v1468 = vrot.slane %v1467, 1
    %v1469 = vadd.f32 %v1467, %v1468
    %v1470 = vsel %vm201, %v1460, 0.0
    %v1471 = vrot.slane %v1470, 4
    %v1472 = vadd.f32 %v1470, %v1471
    %v1473 = vrot.slane %v1472, 2
    %v1474 = vadd.f32 %v1472, %v1473
    %v1475 = vrot.slane %v1474, 1
    %v1476 = vadd.f32 %v1474, %v1475
    %v1477 = vpack.c.bf16 %v1469, %v1469
    %v1478 = vpack.c.bf16 %v1476, %v1476
    %v1481 = vunpack.c.l.b16 %v1477
    %v1482 = vunpack.c.l.b16 %v1478
    %v1483 = vsel %vm228, %v1482, %v1481
    %v1484 = vpack.c.b16 %v1483, %v1483
    %v1486 = vsel %vm163, %v1484, 0
    %1488 = vmatprep.subr.bf16.mxu0 0
    %1489 = vmatpush1.bf16.msra.mxu0 0
    %1490 = vmatprep.subr.bf16.mxu0 0
    %1491 = vmatpush1.bf16.msra.mxu0 0
    %1492 = vmatprep.subr.bf16.mxu0 0
    %1493 = vmatpush1.bf16.msra.mxu0 0
    %1494 = vmatprep.subr.bf16.mxu0 0
    %1495 = vmatpush1.bf16.msra.mxu0 0
    %1496 = vmatprep.subr.bf16.mxu0 0
    %1497 = vmatpush1.bf16.msra.mxu0 0
    %1498 = vmatprep.subr.bf16.mxu0 0
    %1499 = vmatpush1.bf16.msra.mxu0 0
    %1500 = vmatprep.subr.bf16.mxu0 0
    %1501 = vmatpush1.bf16.msra.mxu0 0
    %1502 = vmatprep.subr.bf16.mxu0 0
    %1503 = vmatpush1.bf16.msra.mxu0 %v235
    %1504 = vmatprep.subr.bf16.mxu0 0
    %1505 = vmatpush2.bf16.msra.mxu0 0
    %1506 = vmatprep.subr.bf16.mxu0 0
    %1507 = vmatpush2.bf16.msra.mxu0 0
    %1508 = vmatprep.subr.bf16.mxu0 0
    %1509 = vmatpush2.bf16.msra.mxu0 0
    %1510 = vmatprep.subr.bf16.mxu0 0
    %1511 = vmatpush2.bf16.msra.mxu0 0
    %1512 = vmatprep.subr.bf16.mxu0 0
    %1513 = vmatpush2.bf16.msra.mxu0 0
    %1514 = vmatprep.subr.bf16.mxu0 0
    %1515 = vmatpush2.bf16.msra.mxu0 0
    %1516 = vmatprep.subr.bf16.mxu0 0
    %1517 = vmatpush2.bf16.msra.mxu0 0
    %1518 = vmatprep.subr.bf16.mxu0 0
    %1519 = vmatpush2.bf16.msra.mxu0 0
    %1520 = vmatprep.mubr.bf16.mxu0 0
    %1521 = vmatmul.mubr.bf16.gmra.mxu0 %v1486
    %v1522 = vpop.f32.mrf.mxu0
    %v1523 = vadd.f32 %v222, %v1522
    %v1524 = vpop.f32.mrf.mxu0
    %v1525 = vpop.f32.mrf.mxu0
    %v1526 = vpop.f32.mrf.mxu0
    %1527 = vdwg.mxu0
    %v1528 = vmax.f32 %v1523, 0.0
    %v1529 = vpack.c.bf16 %v1528, %v1528
    %s1530 = scalar_lea.vmem [#allocation7], 1024
    %v1531 = vld [vmem:[%s1530] sm:$0xff]
    %v1532 = vld [vmem:[%s1530 + $0x8] sm:$0xff]
    %v1533 = vld [vmem:[%s1530 + $0x10] sm:$0xff]
    %v1534 = vld [vmem:[%s1530 + $0x18] sm:$0xff]
    %v1535 = vld [vmem:[%s1530 + $0x20] sm:$0xff]
    %v1536 = vld [vmem:[%s1530 + $0x28] sm:$0xff]
    %v1537 = vld [vmem:[%s1530 + $0x30] sm:$0xff]
    %v1538 = vld [vmem:[%s1530 + $0x38] sm:$0xff]
    %v1539 = vld [vmem:[%s1530 + $0x40] sm:$0xff]
    %v1540 = vld [vmem:[%s1530 + $0x48] sm:$0xff]
    %v1541 = vld [vmem:[%s1530 + $0x50] sm:$0xff]
    %v1542 = vld [vmem:[%s1530 + $0x58] sm:$0xff]
    %v1543 = vld [vmem:[%s1530 + $0x60] sm:$0xff]
    %v1544 = vld [vmem:[%s1530 + $0x68] sm:$0xff]
    %v1545 = vld [vmem:[%s1530 + $0x70] sm:$0xff]
    %v1546 = vld [vmem:[%s1530 + $0x78] sm:$0xff]
    %v1547 = vld [vmem:[%s1530 + $0x80] sm:$0xff]
    %v1548 = vld [vmem:[%s1530 + $0x88] sm:$0xff]
    %v1549 = vld [vmem:[%s1530 + $0x90] sm:$0xff]
    %v1550 = vld [vmem:[%s1530 + $0x98] sm:$0xff]
    %v1551 = vld [vmem:[%s1530 + $0xa0] sm:$0xff]
    %v1552 = vld [vmem:[%s1530 + $0xa8] sm:$0xff]
    %v1553 = vld [vmem:[%s1530 + $0xb0] sm:$0xff]
    %v1554 = vld [vmem:[%s1530 + $0xb8] sm:$0xff]
    %v1555 = vld [vmem:[%s1530 + $0xc0] sm:$0xff]
    %v1556 = vld [vmem:[%s1530 + $0xc8] sm:$0xff]
    %v1557 = vld [vmem:[%s1530 + $0xd0] sm:$0xff]
    %v1558 = vld [vmem:[%s1530 + $0xd8] sm:$0xff]
    %v1559 = vld [vmem:[%s1530 + $0xe0] sm:$0xff]
    %v1560 = vld [vmem:[%s1530 + $0xe8] sm:$0xff]
    %v1561 = vld [vmem:[%s1530 + $0xf0] sm:$0xff]
    %v1562 = vld [vmem:[%s1530 + $0xf8] sm:$0xff]
    %v1563 = vld [vmem:[%s1530 + $0x100] sm:$0xff]
    %v1564 = vld [vmem:[%s1530 + $0x108] sm:$0xff]
    %v1565 = vld [vmem:[%s1530 + $0x110] sm:$0xff]
    %v1566 = vld [vmem:[%s1530 + $0x118] sm:$0xff]
    %v1567 = vld [vmem:[%s1530 + $0x120] sm:$0xff]
    %v1568 = vld [vmem:[%s1530 + $0x128] sm:$0xff]
    %v1569 = vld [vmem:[%s1530 + $0x130] sm:$0xff]
    %v1570 = vld [vmem:[%s1530 + $0x138] sm:$0xff]
    %v1571 = vld [vmem:[%s1530 + $0x140] sm:$0xff]
    %v1572 = vld [vmem:[%s1530 + $0x148] sm:$0xff]
    %v1573 = vld [vmem:[%s1530 + $0x150] sm:$0xff]
    %v1574 = vld [vmem:[%s1530 + $0x158] sm:$0xff]
    %v1575 = vld [vmem:[%s1530 + $0x160] sm:$0xff]
    %v1576 = vld [vmem:[%s1530 + $0x168] sm:$0xff]
    %v1577 = vld [vmem:[%s1530 + $0x170] sm:$0xff]
    %v1578 = vld [vmem:[%s1530 + $0x178] sm:$0xff]
    %v1579 = vld [vmem:[%s1530 + $0x180] sm:$0xff]
    %v1580 = vld [vmem:[%s1530 + $0x188] sm:$0xff]
    %v1581 = vld [vmem:[%s1530 + $0x190] sm:$0xff]
    %v1582 = vld [vmem:[%s1530 + $0x198] sm:$0xff]
    %v1583 = vld [vmem:[%s1530 + $0x1a0] sm:$0xff]
    %v1584 = vld [vmem:[%s1530 + $0x1a8] sm:$0xff]
    %v1585 = vld [vmem:[%s1530 + $0x1b0] sm:$0xff]
    %v1586 = vld [vmem:[%s1530 + $0x1b8] sm:$0xff]
    %v1587 = vld [vmem:[%s1530 + $0x1c0] sm:$0xff]
    %v1588 = vld [vmem:[%s1530 + $0x1c8] sm:$0xff]
    %v1589 = vld [vmem:[%s1530 + $0x1d0] sm:$0xff]
    %v1590 = vld [vmem:[%s1530 + $0x1d8] sm:$0xff]
    %v1591 = vld [vmem:[%s1530 + $0x1e0] sm:$0xff]
    %v1592 = vld [vmem:[%s1530 + $0x1e8] sm:$0xff]
    %v1593 = vld [vmem:[%s1530 + $0x1f0] sm:$0xff]
    %v1594 = vld [vmem:[%s1530 + $0x1f8] sm:$0xff]
    %v1659 = vunpack.c.l.b16 %v1531
    %v1660 = vunpack.c.h.b16 %v1531
    %v1661 = vunpack.c.l.b16 %v1532
    %v1662 = vunpack.c.h.b16 %v1532
    %v1663 = vunpack.c.l.b16 %v1533
    %v1664 = vunpack.c.h.b16 %v1533
    %v1665 = vunpack.c.l.b16 %v1534
    %v1666 = vunpack.c.h.b16 %v1534
    %v1667 = vunpack.c.l.b16 %v1535
    %v1668 = vunpack.c.h.b16 %v1535
    %v1669 = vunpack.c.l.b16 %v1536
    %v1670 = vunpack.c.h.b16 %v1536
    %v1671 = vunpack.c.l.b16 %v1537
    %v1672 = vunpack.c.h.b16 %v1537
    %v1673 = vunpack.c.l.b16 %v1538
    %v1674 = vunpack.c.h.b16 %v1538
    %v1675 = vunpack.c.l.b16 %v1539
    %v1676 = vunpack.c.h.b16 %v1539
    %v1677 = vunpack.c.l.b16 %v1540
    %v1678 = vunpack.c.h.b16 %v1540
    %v1679 = vunpack.c.l.b16 %v1541
    %v1680 = vunpack.c.h.b16 %v1541
    %v1681 = vunpack.c.l.b16 %v1542
    %v1682 = vunpack.c.h.b16 %v1542
    %v1683 = vunpack.c.l.b16 %v1543
    %v1684 = vunpack.c.h.b16 %v1543
    %v1685 = vunpack.c.l.b16 %v1544
    %v1686 = vunpack.c.h.b16 %v1544
    %v1687 = vunpack.c.l.b16 %v1545
    %v1688 = vunpack.c.h.b16 %v1545
    %v1689 = vunpack.c.l.b16 %v1546
    %v1690 = vunpack.c.h.b16 %v1546
    %v1691 = vunpack.c.l.b16 %v1547
    %v1692 = vunpack.c.h.b16 %v1547
    %v1693 = vunpack.c.l.b16 %v1548
    %v1694 = vunpack.c.h.b16 %v1548
    %v1695 = vunpack.c.l.b16 %v1549
    %v1696 = vunpack.c.h.b16 %v1549
    %v1697 = vunpack.c.l.b16 %v1550
    %v1698 = vunpack.c.h.b16 %v1550
    %v1699 = vunpack.c.l.b16 %v1551
    %v1700 = vunpack.c.h.b16 %v1551
    %v1701 = vunpack.c.l.b16 %v1552
    %v1702 = vunpack.c.h.b16 %v1552
    %v1703 = vunpack.c.l.b16 %v1553
    %v1704 = vunpack.c.h.b16 %v1553
    %v1705 = vunpack.c.l.b16 %v1554
    %v1706 = vunpack.c.h.b16 %v1554
    %v1707 = vunpack.c.l.b16 %v1555
    %v1708 = vunpack.c.h.b16 %v1555
    %v1709 = vunpack.c.l.b16 %v1556
    %v1710 = vunpack.c.h.b16 %v1556
    %v1711 = vunpack.c.l.b16 %v1557
    %v1712 = vunpack.c.h.b16 %v1557
    %v1713 = vunpack.c.l.b16 %v1558
    %v1714 = vunpack.c.h.b16 %v1558
    %v1715 = vunpack.c.l.b16 %v1559
    %v1716 = vunpack.c.h.b16 %v1559
    %v1717 = vunpack.c.l.b16 %v1560
    %v1718 = vunpack.c.h.b16 %v1560
    %v1719 = vunpack.c.l.b16 %v1561
    %v1720 = vunpack.c.h.b16 %v1561
    %v1721 = vunpack.c.l.b16 %v1562
    %v1722 = vunpack.c.h.b16 %v1562
    %v1723 = vunpack.c.l.b16 %v1563
    %v1724 = vunpack.c.h.b16 %v1563
    %v1725 = vunpack.c.l.b16 %v1564
    %v1726 = vunpack.c.h.b16 %v1564
    %v1727 = vunpack.c.l.b16 %v1565
    %v1728 = vunpack.c.h.b16 %v1565
    %v1729 = vunpack.c.l.b16 %v1566
    %v1730 = vunpack.c.h.b16 %v1566
    %v1731 = vunpack.c.l.b16 %v1567
    %v1732 = vunpack.c.h.b16 %v1567
    %v1733 = vunpack.c.l.b16 %v1568
    %v1734 = vunpack.c.h.b16 %v1568
    %v1735 = vunpack.c.l.b16 %v1569
    %v1736 = vunpack.c.h.b16 %v1569
    %v1737 = vunpack.c.l.b16 %v1570
    %v1738 = vunpack.c.h.b16 %v1570
    %v1739 = vunpack.c.l.b16 %v1571
    %v1740 = vunpack.c.h.b16 %v1571
    %v1741 = vunpack.c.l.b16 %v1572
    %v1742 = vunpack.c.h.b16 %v1572
    %v1743 = vunpack.c.l.b16 %v1573
    %v1744 = vunpack.c.h.b16 %v1573
    %v1745 = vunpack.c.l.b16 %v1574
    %v1746 = vunpack.c.h.b16 %v1574
    %v1747 = vunpack.c.l.b16 %v1575
    %v1748 = vunpack.c.h.b16 %v1575
    %v1749 = vunpack.c.l.b16 %v1576
    %v1750 = vunpack.c.h.b16 %v1576
    %v1751 = vunpack.c.l.b16 %v1577
    %v1752 = vunpack.c.h.b16 %v1577
    %v1753 = vunpack.c.l.b16 %v1578
    %v1754 = vunpack.c.h.b16 %v1578
    %v1755 = vunpack.c.l.b16 %v1579
    %v1756 = vunpack.c.h.b16 %v1579
    %v1757 = vunpack.c.l.b16 %v1580
    %v1758 = vunpack.c.h.b16 %v1580
    %v1759 = vunpack.c.l.b16 %v1581
    %v1760 = vunpack.c.h.b16 %v1581
    %v1761 = vunpack.c.l.b16 %v1582
    %v1762 = vunpack.c.h.b16 %v1582
    %v1763 = vunpack.c.l.b16 %v1583
    %v1764 = vunpack.c.h.b16 %v1583
    %v1765 = vunpack.c.l.b16 %v1584
    %v1766 = vunpack.c.h.b16 %v1584
    %v1767 = vunpack.c.l.b16 %v1585
    %v1768 = vunpack.c.h.b16 %v1585
    %v1769 = vunpack.c.l.b16 %v1586
    %v1770 = vunpack.c.h.b16 %v1586
    %v1771 = vunpack.c.l.b16 %v1587
    %v1772 = vunpack.c.h.b16 %v1587
    %v1773 = vunpack.c.l.b16 %v1588
    %v1774 = vunpack.c.h.b16 %v1588
    %v1775 = vunpack.c.l.b16 %v1589
    %v1776 = vunpack.c.h.b16 %v1589
    %v1777 = vunpack.c.l.b16 %v1590
    %v1778 = vunpack.c.h.b16 %v1590
    %v1779 = vunpack.c.l.b16 %v1591
    %v1780 = vunpack.c.h.b16 %v1591
    %v1781 = vunpack.c.l.b16 %v1592
    %v1782 = vunpack.c.h.b16 %v1592
    %v1783 = vunpack.c.l.b16 %v1593
    %v1784 = vunpack.c.h.b16 %v1593
    %v1785 = vunpack.c.l.b16 %v1594
    %v1786 = vunpack.c.h.b16 %v1594
    %v1787 = vpack.c.b16 %v1667, %v1659
    %v1788 = vpack.c.b16 %v1668, %v1660
    %v1789 = vpack.c.b16 %v1669, %v1661
    %v1790 = vpack.c.b16 %v1670, %v1662
    %v1791 = vpack.c.b16 %v1671, %v1663
    %v1792 = vpack.c.b16 %v1672, %v1664
    %v1793 = vpack.c.b16 %v1673, %v1665
    %v1794 = vpack.c.b16 %v1674, %v1666
    %v1795 = vpack.c.b16 %v1683, %v1675
    %v1796 = vpack.c.b16 %v1684, %v1676
    %v1797 = vpack.c.b16 %v1685, %v1677
    %v1798 = vpack.c.b16 %v1686, %v1678
    %v1799 = vpack.c.b16 %v1687, %v1679
    %v1800 = vpack.c.b16 %v1688, %v1680
    %v1801 = vpack.c.b16 %v1689, %v1681
    %v1802 = vpack.c.b16 %v1690, %v1682
    %v1803 = vpack.c.b16 %v1699, %v1691
    %v1804 = vpack.c.b16 %v1700, %v1692
    %v1805 = vpack.c.b16 %v1701, %v1693
    %v1806 = vpack.c.b16 %v1702, %v1694
    %v1807 = vpack.c.b16 %v1703, %v1695
    %v1808 = vpack.c.b16 %v1704, %v1696
    %v1809 = vpack.c.b16 %v1705, %v1697
    %v1810 = vpack.c.b16 %v1706, %v1698
    %v1811 = vpack.c.b16 %v1715, %v1707
    %v1812 = vpack.c.b16 %v1716, %v1708
    %v1813 = vpack.c.b16 %v1717, %v1709
    %v1814 = vpack.c.b16 %v1718, %v1710
    %v1815 = vpack.c.b16 %v1719, %v1711
    %v1816 = vpack.c.b16 %v1720, %v1712
    %v1817 = vpack.c.b16 %v1721, %v1713
    %v1818 = vpack.c.b16 %v1722, %v1714
    %v1819 = vpack.c.b16 %v1731, %v1723
    %v1820 = vpack.c.b16 %v1732, %v1724
    %v1821 = vpack.c.b16 %v1733, %v1725
    %v1822 = vpack.c.b16 %v1734, %v1726
    %v1823 = vpack.c.b16 %v1735, %v1727
    %v1824 = vpack.c.b16 %v1736, %v1728
    %v1825 = vpack.c.b16 %v1737, %v1729
    %v1826 = vpack.c.b16 %v1738, %v1730
    %v1827 = vpack.c.b16 %v1747, %v1739
    %v1828 = vpack.c.b16 %v1748, %v1740
    %v1829 = vpack.c.b16 %v1749, %v1741
    %v1830 = vpack.c.b16 %v1750, %v1742
    %v1831 = vpack.c.b16 %v1751, %v1743
    %v1832 = vpack.c.b16 %v1752, %v1744
    %v1833 = vpack.c.b16 %v1753, %v1745
    %v1834 = vpack.c.b16 %v1754, %v1746
    %v1835 = vpack.c.b16 %v1763, %v1755
    %v1836 = vpack.c.b16 %v1764, %v1756
    %v1837 = vpack.c.b16 %v1765, %v1757
    %v1838 = vpack.c.b16 %v1766, %v1758
    %v1839 = vpack.c.b16 %v1767, %v1759
    %v1840 = vpack.c.b16 %v1768, %v1760
    %v1841 = vpack.c.b16 %v1769, %v1761
    %v1842 = vpack.c.b16 %v1770, %v1762
    %v1843 = vpack.c.b16 %v1779, %v1771
    %v1844 = vpack.c.b16 %v1780, %v1772
    %v1845 = vpack.c.b16 %v1781, %v1773
    %v1846 = vpack.c.b16 %v1782, %v1774
    %v1847 = vpack.c.b16 %v1783, %v1775
    %v1848 = vpack.c.b16 %v1784, %v1776
    %v1849 = vpack.c.b16 %v1785, %v1777
    %v1850 = vpack.c.b16 %v1786, %v1778
    %1915 = vmatprep.subr.bf16.mxu0 %v1844
    %1916 = vmatpush1.bf16.msra.mxu0 %v1843
    %1917 = vmatprep.subr.bf16.mxu0 %v1836
    %1918 = vmatpush1.bf16.msra.mxu0 %v1835
    %1919 = vmatprep.subr.bf16.mxu0 %v1828
    %1920 = vmatpush1.bf16.msra.mxu0 %v1827
    %1921 = vmatprep.subr.bf16.mxu0 %v1820
    %1922 = vmatpush1.bf16.msra.mxu0 %v1819
    %1923 = vmatprep.subr.bf16.mxu0 %v1812
    %1924 = vmatpush1.bf16.msra.mxu0 %v1811
    %1925 = vmatprep.subr.bf16.mxu0 %v1804
    %1926 = vmatpush1.bf16.msra.mxu0 %v1803
    %1927 = vmatprep.subr.bf16.mxu0 %v1796
    %1928 = vmatpush1.bf16.msra.mxu0 %v1795
    %1929 = vmatprep.subr.bf16.mxu0 %v1788
    %1930 = vmatpush1.bf16.msra.mxu0 %v1787
    %1931 = vmatprep.subr.bf16.mxu0 0
    %1932 = vmatpush2.bf16.msra.mxu0 0
    %1933 = vmatprep.subr.bf16.mxu0 0
    %1934 = vmatpush2.bf16.msra.mxu0 0
    %1935 = vmatprep.subr.bf16.mxu0 0
    %1936 = vmatpush2.bf16.msra.mxu0 0
    %1937 = vmatprep.subr.bf16.mxu0 0
    %1938 = vmatpush2.bf16.msra.mxu0 0
    %1939 = vmatprep.subr.bf16.mxu0 0
    %1940 = vmatpush2.bf16.msra.mxu0 0
    %1941 = vmatprep.subr.bf16.mxu0 0
    %1942 = vmatpush2.bf16.msra.mxu0 0
    %1943 = vmatprep.subr.bf16.mxu0 0
    %1944 = vmatpush2.bf16.msra.mxu0 0
    %1945 = vmatprep.subr.bf16.mxu0 0
    %1946 = vmatpush2.bf16.msra.mxu0 0
    %1947 = vmatprep.mubr.bf16.mxu0 0
    %1948 = vmatmul.mubr.bf16.gmra.mxu0 %v1529
    %v1949 = vpop.f32.mrf.mxu0
    %v1950 = vadd.f32 0.0, %v1949
    %v1951 = vpop.f32.mrf.mxu0
    %v1952 = vadd.f32 0.0, %v1951
    %v1953 = vpop.f32.mrf.mxu0
    %v1954 = vpop.f32.mrf.mxu0
    %1955 = vdwg.mxu0
    %1956 = vmatprep.subr.bf16.mxu0 %v1846
    %1957 = vmatpush1.bf16.msra.mxu0 %v1845
    %1958 = vmatprep.subr.bf16.mxu0 %v1838
    %1959 = vmatpush1.bf16.msra.mxu0 %v1837
    %1960 = vmatprep.subr.bf16.mxu0 %v1830
    %1961 = vmatpush1.bf16.msra.mxu0 %v1829
    %1962 = vmatprep.subr.bf16.mxu0 %v1822
    %1963 = vmatpush1.bf16.msra.mxu0 %v1821
    %1964 = vmatprep.subr.bf16.mxu0 %v1814
    %1965 = vmatpush1.bf16.msra.mxu0 %v1813
    %1966 = vmatprep.subr.bf16.mxu0 %v1806
    %1967 = vmatpush1.bf16.msra.mxu0 %v1805
    %1968 = vmatprep.subr.bf16.mxu0 %v1798
    %1969 = vmatpush1.bf16.msra.mxu0 %v1797
    %1970 = vmatprep.subr.bf16.mxu0 %v1790
    %1971 = vmatpush1.bf16.msra.mxu0 %v1789
    %1972 = vmatprep.subr.bf16.mxu0 0
    %1973 = vmatpush2.bf16.msra.mxu0 0
    %1974 = vmatprep.subr.bf16.mxu0 0
    %1975 = vmatpush2.bf16.msra.mxu0 0
    %1976 = vmatprep.subr.bf16.mxu0 0
    %1977 = vmatpush2.bf16.msra.mxu0 0
    %1978 = vmatprep.subr.bf16.mxu0 0
    %1979 = vmatpush2.bf16.msra.mxu0 0
    %1980 = vmatprep.subr.bf16.mxu0 0
    %1981 = vmatpush2.bf16.msra.mxu0 0
    %1982 = vmatprep.subr.bf16.mxu0 0
    %1983 = vmatpush2.bf16.msra.mxu0 0
    %1984 = vmatprep.subr.bf16.mxu0 0
    %1985 = vmatpush2.bf16.msra.mxu0 0
    %1986 = vmatprep.subr.bf16.mxu0 0
    %1987 = vmatpush2.bf16.msra.mxu0 0
    %1988 = vmatprep.mubr.bf16.mxu0 0
    %1989 = vmatmul.mubr.bf16.gmra.mxu0 %v1529
    %v1990 = vpop.f32.mrf.mxu0
    %v1991 = vadd.f32 0.0, %v1990
    %v1992 = vpop.f32.mrf.mxu0
    %v1993 = vadd.f32 0.0, %v1992
    %v1994 = vpop.f32.mrf.mxu0
    %v1995 = vpop.f32.mrf.mxu0
    %1996 = vdwg.mxu0
    %1997 = vmatprep.subr.bf16.mxu0 %v1848
    %1998 = vmatpush1.bf16.msra.mxu0 %v1847
    %1999 = vmatprep.subr.bf16.mxu0 %v1840
    %2000 = vmatpush1.bf16.msra.mxu0 %v1839
    %2001 = vmatprep.subr.bf16.mxu0 %v1832
    %2002 = vmatpush1.bf16.msra.mxu0 %v1831
    %2003 = vmatprep.subr.bf16.mxu0 %v1824
    %2004 = vmatpush1.bf16.msra.mxu0 %v1823
    %2005 = vmatprep.subr.bf16.mxu0 %v1816
    %2006 = vmatpush1.bf16.msra.mxu0 %v1815
    %2007 = vmatprep.subr.bf16.mxu0 %v1808
    %2008 = vmatpush1.bf16.msra.mxu0 %v1807
    %2009 = vmatprep.subr.bf16.mxu0 %v1800
    %2010 = vmatpush1.bf16.msra.mxu0 %v1799
    %2011 = vmatprep.subr.bf16.mxu0 %v1792
    %2012 = vmatpush1.bf16.msra.mxu0 %v1791
    %2013 = vmatprep.subr.bf16.mxu0 0
    %2014 = vmatpush2.bf16.msra.mxu0 0
    %2015 = vmatprep.subr.bf16.mxu0 0
    %2016 = vmatpush2.bf16.msra.mxu0 0
    %2017 = vmatprep.subr.bf16.mxu0 0
    %2018 = vmatpush2.bf16.msra.mxu0 0
    %2019 = vmatprep.subr.bf16.mxu0 0
    %2020 = vmatpush2.bf16.msra.mxu0 0
    %2021 = vmatprep.subr.bf16.mxu0 0
    %2022 = vmatpush2.bf16.msra.mxu0 0
    %2023 = vmatprep.subr.bf16.mxu0 0
    %2024 = vmatpush2.bf16.msra.mxu0 0
    %2025 = vmatprep.subr.bf16.mxu0 0
    %2026 = vmatpush2.bf16.msra.mxu0 0
    %2027 = vmatprep.subr.bf16.mxu0 0
    %2028 = vmatpush2.bf16.msra.mxu0 0
    %2029 = vmatprep.mubr.bf16.mxu0 0
    %2030 = vmatmul.mubr.bf16.gmra.mxu0 %v1529
    %v2031 = vpop.f32.mrf.mxu0
    %v2032 = vadd.f32 0.0, %v2031
    %v2033 = vpop.f32.mrf.mxu0
    %v2034 = vadd.f32 0.0, %v2033
    %v2035 = vpop.f32.mrf.mxu0
    %v2036 = vpop.f32.mrf.mxu0
    %2037 = vdwg.mxu0
    %2038 = vmatprep.subr.bf16.mxu0 %v1850
    %2039 = vmatpush1.bf16.msra.mxu0 %v1849
    %2040 = vmatprep.subr.bf16.mxu0 %v1842
    %2041 = vmatpush1.bf16.msra.mxu0 %v1841
    %2042 = vmatprep.subr.bf16.mxu0 %v1834
    %2043 = vmatpush1.bf16.msra.mxu0 %v1833
    %2044 = vmatprep.subr.bf16.mxu0 %v1826
    %2045 = vmatpush1.bf16.msra.mxu0 %v1825
    %2046 = vmatprep.subr.bf16.mxu0 %v1818
    %2047 = vmatpush1.bf16.msra.mxu0 %v1817
    %2048 = vmatprep.subr.bf16.mxu0 %v1810
    %2049 = vmatpush1.bf16.msra.mxu0 %v1809
    %2050 = vmatprep.subr.bf16.mxu0 %v1802
    %2051 = vmatpush1.bf16.msra.mxu0 %v1801
    %2052 = vmatprep.subr.bf16.mxu0 %v1794
    %2053 = vmatpush1.bf16.msra.mxu0 %v1793
    %2054 = vmatprep.subr.bf16.mxu0 0
    %2055 = vmatpush2.bf16.msra.mxu0 0
    %2056 = vmatprep.subr.bf16.mxu0 0
    %2057 = vmatpush2.bf16.msra.mxu0 0
    %2058 = vmatprep.subr.bf16.mxu0 0
    %2059 = vmatpush2.bf16.msra.mxu0 0
    %2060 = vmatprep.subr.bf16.mxu0 0
    %2061 = vmatpush2.bf16.msra.mxu0 0
    %2062 = vmatprep.subr.bf16.mxu0 0
    %2063 = vmatpush2.bf16.msra.mxu0 0
    %2064 = vmatprep.subr.bf16.mxu0 0
    %2065 = vmatpush2.bf16.msra.mxu0 0
    %2066 = vmatprep.subr.bf16.mxu0 0
    %2067 = vmatpush2.bf16.msra.mxu0 0
    %2068 = vmatprep.subr.bf16.mxu0 0
    %2069 = vmatpush2.bf16.msra.mxu0 0
    %2070 = vmatprep.mubr.bf16.mxu0 0
    %2071 = vmatmul.mubr.bf16.gmra.mxu0 %v1529
    %v2072 = vpop.f32.mrf.mxu0
    %v2073 = vadd.f32 0.0, %v2072
    %v2074 = vpop.f32.mrf.mxu0
    %v2075 = vadd.f32 0.0, %v2074
    %v2076 = vpop.f32.mrf.mxu0
    %v2077 = vpop.f32.mrf.mxu0
    %2078 = vdwg.mxu0
    %v2079 = vadd.f32 %v1323, %v1950
    %v2080 = vadd.f32 %v1325, %v1952
    %v2081 = vadd.f32 %v1364, %v1991
    %v2082 = vadd.f32 %v1366, %v1993
    %v2083 = vadd.f32 %v1405, %v2032
    %v2084 = vadd.f32 %v1407, %v2034
    %v2085 = vadd.f32 %v1446, %v2073
    %v2086 = vadd.f32 %v1448, %v2075
    %v2087 = vrot.slane %v182, 1
    %v2088 = vrot.slane %v200, 1
    %v2091 = vsel %vm201, %v2087, 0.0
    %v2092 = vrot.slane %v2091, 4
    %v2093 = vadd.f32 %v2091, %v2092
    %v2094 = vrot.slane %v2093, 2
    %v2095 = vadd.f32 %v2093, %v2094
    %v2096 = vrot.slane %v2095, 1
    %v2097 = vadd.f32 %v2095, %v2096
    %v2098 = vsel %vm201, %v2088, 0.0
    %v2099 = vrot.slane %v2098, 4
    %v2100 = vadd.f32 %v2098, %v2099
    %v2101 = vrot.slane %v2100, 2
    %v2102 = vadd.f32 %v2100, %v2101
    %v2103 = vrot.slane %v2102, 1
    %v2104 = vadd.f32 %v2102, %v2103
    %v2105 = vpack.c.bf16 %v2097, %v2097
    %v2106 = vpack.c.bf16 %v2104, %v2104
    %v2109 = vunpack.c.l.b16 %v2105
    %v2110 = vunpack.c.l.b16 %v2106
    %v2111 = vsel %vm228, %v2110, %v2109
    %v2112 = vpack.c.b16 %v2111, %v2111
    %v2114 = vsel %vm163, %v2112, 0
    %2116 = vmatprep.subr.bf16.mxu0 0
    %2117 = vmatpush1.bf16.msra.mxu0 0
    %2118 = vmatprep.subr.bf16.mxu0 0
    %2119 = vmatpush1.bf16.msra.mxu0 0
    %2120 = vmatprep.subr.bf16.mxu0 0
    %2121 = vmatpush1.bf16.msra.mxu0 0
    %2122 = vmatprep.subr.bf16.mxu0 0
    %2123 = vmatpush1.bf16.msra.mxu0 0
    %2124 = vmatprep.subr.bf16.mxu0 0
    %2125 = vmatpush1.bf16.msra.mxu0 0
    %2126 = vmatprep.subr.bf16.mxu0 0
    %2127 = vmatpush1.bf16.msra.mxu0 0
    %2128 = vmatprep.subr.bf16.mxu0 0
    %2129 = vmatpush1.bf16.msra.mxu0 0
    %2130 = vmatprep.subr.bf16.mxu0 0
    %2131 = vmatpush1.bf16.msra.mxu0 %v235
    %2132 = vmatprep.subr.bf16.mxu0 0
    %2133 = vmatpush2.bf16.msra.mxu0 0
    %2134 = vmatprep.subr.bf16.mxu0 0
    %2135 = vmatpush2.bf16.msra.mxu0 0
    %2136 = vmatprep.subr.bf16.mxu0 0
    %2137 = vmatpush2.bf16.msra.mxu0 0
    %2138 = vmatprep.subr.bf16.mxu0 0
    %2139 = vmatpush2.bf16.msra.mxu0 0
    %2140 = vmatprep.subr.bf16.mxu0 0
    %2141 = vmatpush2.bf16.msra.mxu0 0
    %2142 = vmatprep.subr.bf16.mxu0 0
    %2143 = vmatpush2.bf16.msra.mxu0 0
    %2144 = vmatprep.subr.bf16.mxu0 0
    %2145 = vmatpush2.bf16.msra.mxu0 0
    %2146 = vmatprep.subr.bf16.mxu0 0
    %2147 = vmatpush2.bf16.msra.mxu0 0
    %2148 = vmatprep.mubr.bf16.mxu0 0
    %2149 = vmatmul.mubr.bf16.gmra.mxu0 %v2114
    %v2150 = vpop.f32.mrf.mxu0
    %v2151 = vadd.f32 %v222, %v2150
    %v2152 = vpop.f32.mrf.mxu0
    %v2153 = vpop.f32.mrf.mxu0
    %v2154 = vpop.f32.mrf.mxu0
    %2155 = vdwg.mxu0
    %v2156 = vmax.f32 %v2151, 0.0
    %v2157 = vpack.c.bf16 %v2156, %v2156
    %s2158 = scalar_lea.vmem [#allocation7], 1536
    %v2159 = vld [vmem:[%s2158] sm:$0xff]
    %v2160 = vld [vmem:[%s2158 + $0x8] sm:$0xff]
    %v2161 = vld [vmem:[%s2158 + $0x10] sm:$0xff]
    %v2162 = vld [vmem:[%s2158 + $0x18] sm:$0xff]
    %v2163 = vld [vmem:[%s2158 + $0x20] sm:$0xff]
    %v2164 = vld [vmem:[%s2158 + $0x28] sm:$0xff]
    %v2165 = vld [vmem:[%s2158 + $0x30] sm:$0xff]
    %v2166 = vld [vmem:[%s2158 + $0x38] sm:$0xff]
    %v2167 = vld [vmem:[%s2158 + $0x40] sm:$0xff]
    %v2168 = vld [vmem:[%s2158 + $0x48] sm:$0xff]
    %v2169 = vld [vmem:[%s2158 + $0x50] sm:$0xff]
    %v2170 = vld [vmem:[%s2158 + $0x58] sm:$0xff]
    %v2171 = vld [vmem:[%s2158 + $0x60] sm:$0xff]
    %v2172 = vld [vmem:[%s2158 + $0x68] sm:$0xff]
    %v2173 = vld [vmem:[%s2158 + $0x70] sm:$0xff]
    %v2174 = vld [vmem:[%s2158 + $0x78] sm:$0xff]
    %v2175 = vld [vmem:[%s2158 + $0x80] sm:$0xff]
    %v2176 = vld [vmem:[%s2158 + $0x88] sm:$0xff]
    %v2177 = vld [vmem:[%s2158 + $0x90] sm:$0xff]
    %v2178 = vld [vmem:[%s2158 + $0x98] sm:$0xff]
    %v2179 = vld [vmem:[%s2158 + $0xa0] sm:$0xff]
    %v2180 = vld [vmem:[%s2158 + $0xa8] sm:$0xff]
    %v2181 = vld [vmem:[%s2158 + $0xb0] sm:$0xff]
    %v2182 = vld [vmem:[%s2158 + $0xb8] sm:$0xff]
    %v2183 = vld [vmem:[%s2158 + $0xc0] sm:$0xff]
    %v2184 = vld [vmem:[%s2158 + $0xc8] sm:$0xff]
    %v2185 = vld [vmem:[%s2158 + $0xd0] sm:$0xff]
    %v2186 = vld [vmem:[%s2158 + $0xd8] sm:$0xff]
    %v2187 = vld [vmem:[%s2158 + $0xe0] sm:$0xff]
    %v2188 = vld [vmem:[%s2158 + $0xe8] sm:$0xff]
    %v2189 = vld [vmem:[%s2158 + $0xf0] sm:$0xff]
    %v2190 = vld [vmem:[%s2158 + $0xf8] sm:$0xff]
    %v2191 = vld [vmem:[%s2158 + $0x100] sm:$0xff]
    %v2192 = vld [vmem:[%s2158 + $0x108] sm:$0xff]
    %v2193 = vld [vmem:[%s2158 + $0x110] sm:$0xff]
    %v2194 = vld [vmem:[%s2158 + $0x118] sm:$0xff]
    %v2195 = vld [vmem:[%s2158 + $0x120] sm:$0xff]
    %v2196 = vld [vmem:[%s2158 + $0x128] sm:$0xff]
    %v2197 = vld [vmem:[%s2158 + $0x130] sm:$0xff]
    %v2198 = vld [vmem:[%s2158 + $0x138] sm:$0xff]
    %v2199 = vld [vmem:[%s2158 + $0x140] sm:$0xff]
    %v2200 = vld [vmem:[%s2158 + $0x148] sm:$0xff]
    %v2201 = vld [vmem:[%s2158 + $0x150] sm:$0xff]
    %v2202 = vld [vmem:[%s2158 + $0x158] sm:$0xff]
    %v2203 = vld [vmem:[%s2158 + $0x160] sm:$0xff]
    %v2204 = vld [vmem:[%s2158 + $0x168] sm:$0xff]
    %v2205 = vld [vmem:[%s2158 + $0x170] sm:$0xff]
    %v2206 = vld [vmem:[%s2158 + $0x178] sm:$0xff]
    %v2207 = vld [vmem:[%s2158 + $0x180] sm:$0xff]
    %v2208 = vld [vmem:[%s2158 + $0x188] sm:$0xff]
    %v2209 = vld [vmem:[%s2158 + $0x190] sm:$0xff]
    %v2210 = vld [vmem:[%s2158 + $0x198] sm:$0xff]
    %v2211 = vld [vmem:[%s2158 + $0x1a0] sm:$0xff]
    %v2212 = vld [vmem:[%s2158 + $0x1a8] sm:$0xff]
    %v2213 = vld [vmem:[%s2158 + $0x1b0] sm:$0xff]
    %v2214 = vld [vmem:[%s2158 + $0x1b8] sm:$0xff]
    %v2215 = vld [vmem:[%s2158 + $0x1c0] sm:$0xff]
    %v2216 = vld [vmem:[%s2158 + $0x1c8] sm:$0xff]
    %v2217 = vld [vmem:[%s2158 + $0x1d0] sm:$0xff]
    %v2218 = vld [vmem:[%s2158 + $0x1d8] sm:$0xff]
    %v2219 = vld [vmem:[%s2158 + $0x1e0] sm:$0xff]
    %v2220 = vld [vmem:[%s2158 + $0x1e8] sm:$0xff]
    %v2221 = vld [vmem:[%s2158 + $0x1f0] sm:$0xff]
    %v2222 = vld [vmem:[%s2158 + $0x1f8] sm:$0xff]
    %v2287 = vunpack.c.l.b16 %v2159
    %v2288 = vunpack.c.h.b16 %v2159
    %v2289 = vunpack.c.l.b16 %v2160
    %v2290 = vunpack.c.h.b16 %v2160
    %v2291 = vunpack.c.l.b16 %v2161
    %v2292 = vunpack.c.h.b16 %v2161
    %v2293 = vunpack.c.l.b16 %v2162
    %v2294 = vunpack.c.h.b16 %v2162
    %v2295 = vunpack.c.l.b16 %v2163
    %v2296 = vunpack.c.h.b16 %v2163
    %v2297 = vunpack.c.l.b16 %v2164
    %v2298 = vunpack.c.h.b16 %v2164
    %v2299 = vunpack.c.l.b16 %v2165
    %v2300 = vunpack.c.h.b16 %v2165
    %v2301 = vunpack.c.l.b16 %v2166
    %v2302 = vunpack.c.h.b16 %v2166
    %v2303 = vunpack.c.l.b16 %v2167
    %v2304 = vunpack.c.h.b16 %v2167
    %v2305 = vunpack.c.l.b16 %v2168
    %v2306 = vunpack.c.h.b16 %v2168
    %v2307 = vunpack.c.l.b16 %v2169
    %v2308 = vunpack.c.h.b16 %v2169
    %v2309 = vunpack.c.l.b16 %v2170
    %v2310 = vunpack.c.h.b16 %v2170
    %v2311 = vunpack.c.l.b16 %v2171
    %v2312 = vunpack.c.h.b16 %v2171
    %v2313 = vunpack.c.l.b16 %v2172
    %v2314 = vunpack.c.h.b16 %v2172
    %v2315 = vunpack.c.l.b16 %v2173
    %v2316 = vunpack.c.h.b16 %v2173
    %v2317 = vunpack.c.l.b16 %v2174
    %v2318 = vunpack.c.h.b16 %v2174
    %v2319 = vunpack.c.l.b16 %v2175
    %v2320 = vunpack.c.h.b16 %v2175
    %v2321 = vunpack.c.l.b16 %v2176
    %v2322 = vunpack.c.h.b16 %v2176
    %v2323 = vunpack.c.l.b16 %v2177
    %v2324 = vunpack.c.h.b16 %v2177
    %v2325 = vunpack.c.l.b16 %v2178
    %v2326 = vunpack.c.h.b16 %v2178
    %v2327 = vunpack.c.l.b16 %v2179
    %v2328 = vunpack.c.h.b16 %v2179
    %v2329 = vunpack.c.l.b16 %v2180
    %v2330 = vunpack.c.h.b16 %v2180
    %v2331 = vunpack.c.l.b16 %v2181
    %v2332 = vunpack.c.h.b16 %v2181
    %v2333 = vunpack.c.l.b16 %v2182
    %v2334 = vunpack.c.h.b16 %v2182
    %v2335 = vunpack.c.l.b16 %v2183
    %v2336 = vunpack.c.h.b16 %v2183
    %v2337 = vunpack.c.l.b16 %v2184
    %v2338 = vunpack.c.h.b16 %v2184
    %v2339 = vunpack.c.l.b16 %v2185
    %v2340 = vunpack.c.h.b16 %v2185
    %v2341 = vunpack.c.l.b16 %v2186
    %v2342 = vunpack.c.h.b16 %v2186
    %v2343 = vunpack.c.l.b16 %v2187
    %v2344 = vunpack.c.h.b16 %v2187
    %v2345 = vunpack.c.l.b16 %v2188
    %v2346 = vunpack.c.h.b16 %v2188
    %v2347 = vunpack.c.l.b16 %v2189
    %v2348 = vunpack.c.h.b16 %v2189
    %v2349 = vunpack.c.l.b16 %v2190
    %v2350 = vunpack.c.h.b16 %v2190
    %v2351 = vunpack.c.l.b16 %v2191
    %v2352 = vunpack.c.h.b16 %v2191
    %v2353 = vunpack.c.l.b16 %v2192
    %v2354 = vunpack.c.h.b16 %v2192
    %v2355 = vunpack.c.l.b16 %v2193
    %v2356 = vunpack.c.h.b16 %v2193
    %v2357 = vunpack.c.l.b16 %v2194
    %v2358 = vunpack.c.h.b16 %v2194
    %v2359 = vunpack.c.l.b16 %v2195
    %v2360 = vunpack.c.h.b16 %v2195
    %v2361 = vunpack.c.l.b16 %v2196
    %v2362 = vunpack.c.h.b16 %v2196
    %v2363 = vunpack.c.l.b16 %v2197
    %v2364 = vunpack.c.h.b16 %v2197
    %v2365 = vunpack.c.l.b16 %v2198
    %v2366 = vunpack.c.h.b16 %v2198
    %v2367 = vunpack.c.l.b16 %v2199
    %v2368 = vunpack.c.h.b16 %v2199
    %v2369 = vunpack.c.l.b16 %v2200
    %v2370 = vunpack.c.h.b16 %v2200
    %v2371 = vunpack.c.l.b16 %v2201
    %v2372 = vunpack.c.h.b16 %v2201
    %v2373 = vunpack.c.l.b16 %v2202
    %v2374 = vunpack.c.h.b16 %v2202
    %v2375 = vunpack.c.l.b16 %v2203
    %v2376 = vunpack.c.h.b16 %v2203
    %v2377 = vunpack.c.l.b16 %v2204
    %v2378 = vunpack.c.h.b16 %v2204
    %v2379 = vunpack.c.l.b16 %v2205
    %v2380 = vunpack.c.h.b16 %v2205
    %v2381 = vunpack.c.l.b16 %v2206
    %v2382 = vunpack.c.h.b16 %v2206
    %v2383 = vunpack.c.l.b16 %v2207
    %v2384 = vunpack.c.h.b16 %v2207
    %v2385 = vunpack.c.l.b16 %v2208
    %v2386 = vunpack.c.h.b16 %v2208
    %v2387 = vunpack.c.l.b16 %v2209
    %v2388 = vunpack.c.h.b16 %v2209
    %v2389 = vunpack.c.l.b16 %v2210
    %v2390 = vunpack.c.h.b16 %v2210
    %v2391 = vunpack.c.l.b16 %v2211
    %v2392 = vunpack.c.h.b16 %v2211
    %v2393 = vunpack.c.l.b16 %v2212
    %v2394 = vunpack.c.h.b16 %v2212
    %v2395 = vunpack.c.l.b16 %v2213
    %v2396 = vunpack.c.h.b16 %v2213
    %v2397 = vunpack.c.l.b16 %v2214
    %v2398 = vunpack.c.h.b16 %v2214
    %v2399 = vunpack.c.l.b16 %v2215
    %v2400 = vunpack.c.h.b16 %v2215
    %v2401 = vunpack.c.l.b16 %v2216
    %v2402 = vunpack.c.h.b16 %v2216
    %v2403 = vunpack.c.l.b16 %v2217
    %v2404 = vunpack.c.h.b16 %v2217
    %v2405 = vunpack.c.l.b16 %v2218
    %v2406 = vunpack.c.h.b16 %v2218
    %v2407 = vunpack.c.l.b16 %v2219
    %v2408 = vunpack.c.h.b16 %v2219
    %v2409 = vunpack.c.l.b16 %v2220
    %v2410 = vunpack.c.h.b16 %v2220
    %v2411 = vunpack.c.l.b16 %v2221
    %v2412 = vunpack.c.h.b16 %v2221
    %v2413 = vunpack.c.l.b16 %v2222
    %v2414 = vunpack.c.h.b16 %v2222
    %v2415 = vpack.c.b16 %v2295, %v2287
    %v2416 = vpack.c.b16 %v2296, %v2288
    %v2417 = vpack.c.b16 %v2297, %v2289
    %v2418 = vpack.c.b16 %v2298, %v2290
    %v2419 = vpack.c.b16 %v2299, %v2291
    %v2420 = vpack.c.b16 %v2300, %v2292
    %v2421 = vpack.c.b16 %v2301, %v2293
    %v2422 = vpack.c.b16 %v2302, %v2294
    %v2423 = vpack.c.b16 %v2311, %v2303
    %v2424 = vpack.c.b16 %v2312, %v2304
    %v2425 = vpack.c.b16 %v2313, %v2305
    %v2426 = vpack.c.b16 %v2314, %v2306
    %v2427 = vpack.c.b16 %v2315, %v2307
    %v2428 = vpack.c.b16 %v2316, %v2308
    %v2429 = vpack.c.b16 %v2317, %v2309
    %v2430 = vpack.c.b16 %v2318, %v2310
    %v2431 = vpack.c.b16 %v2327, %v2319
    %v2432 = vpack.c.b16 %v2328, %v2320
    %v2433 = vpack.c.b16 %v2329, %v2321
    %v2434 = vpack.c.b16 %v2330, %v2322
    %v2435 = vpack.c.b16 %v2331, %v2323
    %v2436 = vpack.c.b16 %v2332, %v2324
    %v2437 = vpack.c.b16 %v2333, %v2325
    %v2438 = vpack.c.b16 %v2334, %v2326
    %v2439 = vpack.c.b16 %v2343, %v2335
    %v2440 = vpack.c.b16 %v2344, %v2336
    %v2441 = vpack.c.b16 %v2345, %v2337
    %v2442 = vpack.c.b16 %v2346, %v2338
    %v2443 = vpack.c.b16 %v2347, %v2339
    %v2444 = vpack.c.b16 %v2348, %v2340
    %v2445 = vpack.c.b16 %v2349, %v2341
    %v2446 = vpack.c.b16 %v2350, %v2342
    %v2447 = vpack.c.b16 %v2359, %v2351
    %v2448 = vpack.c.b16 %v2360, %v2352
    %v2449 = vpack.c.b16 %v2361, %v2353
    %v2450 = vpack.c.b16 %v2362, %v2354
    %v2451 = vpack.c.b16 %v2363, %v2355
    %v2452 = vpack.c.b16 %v2364, %v2356
    %v2453 = vpack.c.b16 %v2365, %v2357
    %v2454 = vpack.c.b16 %v2366, %v2358
    %v2455 = vpack.c.b16 %v2375, %v2367
    %v2456 = vpack.c.b16 %v2376, %v2368
    %v2457 = vpack.c.b16 %v2377, %v2369
    %v2458 = vpack.c.b16 %v2378, %v2370
    %v2459 = vpack.c.b16 %v2379, %v2371
    %v2460 = vpack.c.b16 %v2380, %v2372
    %v2461 = vpack.c.b16 %v2381, %v2373
    %v2462 = vpack.c.b16 %v2382, %v2374
    %v2463 = vpack.c.b16 %v2391, %v2383
    %v2464 = vpack.c.b16 %v2392, %v2384
    %v2465 = vpack.c.b16 %v2393, %v2385
    %v2466 = vpack.c.b16 %v2394, %v2386
    %v2467 = vpack.c.b16 %v2395, %v2387
    %v2468 = vpack.c.b16 %v2396, %v2388
    %v2469 = vpack.c.b16 %v2397, %v2389
    %v2470 = vpack.c.b16 %v2398, %v2390
    %v2471 = vpack.c.b16 %v2407, %v2399
    %v2472 = vpack.c.b16 %v2408, %v2400
    %v2473 = vpack.c.b16 %v2409, %v2401
    %v2474 = vpack.c.b16 %v2410, %v2402
    %v2475 = vpack.c.b16 %v2411, %v2403
    %v2476 = vpack.c.b16 %v2412, %v2404
    %v2477 = vpack.c.b16 %v2413, %v2405
    %v2478 = vpack.c.b16 %v2414, %v2406
    %2543 = vmatprep.subr.bf16.mxu0 %v2472
    %2544 = vmatpush1.bf16.msra.mxu0 %v2471
    %2545 = vmatprep.subr.bf16.mxu0 %v2464
    %2546 = vmatpush1.bf16.msra.mxu0 %v2463
    %2547 = vmatprep.subr.bf16.mxu0 %v2456
    %2548 = vmatpush1.bf16.msra.mxu0 %v2455
    %2549 = vmatprep.subr.bf16.mxu0 %v2448
    %2550 = vmatpush1.bf16.msra.mxu0 %v2447
    %2551 = vmatprep.subr.bf16.mxu0 %v2440
    %2552 = vmatpush1.bf16.msra.mxu0 %v2439
    %2553 = vmatprep.subr.bf16.mxu0 %v2432
    %2554 = vmatpush1.bf16.msra.mxu0 %v2431
    %2555 = vmatprep.subr.bf16.mxu0 %v2424
    %2556 = vmatpush1.bf16.msra.mxu0 %v2423
    %2557 = vmatprep.subr.bf16.mxu0 %v2416
    %2558 = vmatpush1.bf16.msra.mxu0 %v2415
    %2559 = vmatprep.subr.bf16.mxu0 0
    %2560 = vmatpush2.bf16.msra.mxu0 0
    %2561 = vmatprep.subr.bf16.mxu0 0
    %2562 = vmatpush2.bf16.msra.mxu0 0
    %2563 = vmatprep.subr.bf16.mxu0 0
    %2564 = vmatpush2.bf16.msra.mxu0 0
    %2565 = vmatprep.subr.bf16.mxu0 0
    %2566 = vmatpush2.bf16.msra.mxu0 0
    %2567 = vmatprep.subr.bf16.mxu0 0
    %2568 = vmatpush2.bf16.msra.mxu0 0
    %2569 = vmatprep.subr.bf16.mxu0 0
    %2570 = vmatpush2.bf16.msra.mxu0 0
    %2571 = vmatprep.subr.bf16.mxu0 0
    %2572 = vmatpush2.bf16.msra.mxu0 0
    %2573 = vmatprep.subr.bf16.mxu0 0
    %2574 = vmatpush2.bf16.msra.mxu0 0
    %2575 = vmatprep.mubr.bf16.mxu0 0
    %2576 = vmatmul.mubr.bf16.gmra.mxu0 %v2157
    %v2577 = vpop.f32.mrf.mxu0
    %v2578 = vadd.f32 0.0, %v2577
    %v2579 = vpop.f32.mrf.mxu0
    %v2580 = vadd.f32 0.0, %v2579
    %v2581 = vpop.f32.mrf.mxu0
    %v2582 = vpop.f32.mrf.mxu0
    %2583 = vdwg.mxu0
    %2584 = vmatprep.subr.bf16.mxu0 %v2474
    %2585 = vmatpush1.bf16.msra.mxu0 %v2473
    %2586 = vmatprep.subr.bf16.mxu0 %v2466
    %2587 = vmatpush1.bf16.msra.mxu0 %v2465
    %2588 = vmatprep.subr.bf16.mxu0 %v2458
    %2589 = vmatpush1.bf16.msra.mxu0 %v2457
    %2590 = vmatprep.subr.bf16.mxu0 %v2450
    %2591 = vmatpush1.bf16.msra.mxu0 %v2449
    %2592 = vmatprep.subr.bf16.mxu0 %v2442
    %2593 = vmatpush1.bf16.msra.mxu0 %v2441
    %2594 = vmatprep.subr.bf16.mxu0 %v2434
    %2595 = vmatpush1.bf16.msra.mxu0 %v2433
    %2596 = vmatprep.subr.bf16.mxu0 %v2426
    %2597 = vmatpush1.bf16.msra.mxu0 %v2425
    %2598 = vmatprep.subr.bf16.mxu0 %v2418
    %2599 = vmatpush1.bf16.msra.mxu0 %v2417
    %2600 = vmatprep.subr.bf16.mxu0 0
    %2601 = vmatpush2.bf16.msra.mxu0 0
    %2602 = vmatprep.subr.bf16.mxu0 0
    %2603 = vmatpush2.bf16.msra.mxu0 0
    %2604 = vmatprep.subr.bf16.mxu0 0
    %2605 = vmatpush2.bf16.msra.mxu0 0
    %2606 = vmatprep.subr.bf16.mxu0 0
    %2607 = vmatpush2.bf16.msra.mxu0 0
    %2608 = vmatprep.subr.bf16.mxu0 0
    %2609 = vmatpush2.bf16.msra.mxu0 0
    %2610 = vmatprep.subr.bf16.mxu0 0
    %2611 = vmatpush2.bf16.msra.mxu0 0
    %2612 = vmatprep.subr.bf16.mxu0 0
    %2613 = vmatpush2.bf16.msra.mxu0 0
    %2614 = vmatprep.subr.bf16.mxu0 0
    %2615 = vmatpush2.bf16.msra.mxu0 0
    %2616 = vmatprep.mubr.bf16.mxu0 0
    %2617 = vmatmul.mubr.bf16.gmra.mxu0 %v2157
    %v2618 = vpop.f32.mrf.mxu0
    %v2619 = vadd.f32 0.0, %v2618
    %v2620 = vpop.f32.mrf.mxu0
    %v2621 = vadd.f32 0.0, %v2620
    %v2622 = vpop.f32.mrf.mxu0
    %v2623 = vpop.f32.mrf.mxu0
    %2624 = vdwg.mxu0
    %2625 = vmatprep.subr.bf16.mxu0 %v2476
    %2626 = vmatpush1.bf16.msra.mxu0 %v2475
    %2627 = vmatprep.subr.bf16.mxu0 %v2468
    %2628 = vmatpush1.bf16.msra.mxu0 %v2467
    %2629 = vmatprep.subr.bf16.mxu0 %v2460
    %2630 = vmatpush1.bf16.msra.mxu0 %v2459
    %2631 = vmatprep.subr.bf16.mxu0 %v2452
    %2632 = vmatpush1.bf16.msra.mxu0 %v2451
    %2633 = vmatprep.subr.bf16.mxu0 %v2444
    %2634 = vmatpush1.bf16.msra.mxu0 %v2443
    %2635 = vmatprep.subr.bf16.mxu0 %v2436
    %2636 = vmatpush1.bf16.msra.mxu0 %v2435
    %2637 = vmatprep.subr.bf16.mxu0 %v2428
    %2638 = vmatpush1.bf16.msra.mxu0 %v2427
    %2639 = vmatprep.subr.bf16.mxu0 %v2420
    %2640 = vmatpush1.bf16.msra.mxu0 %v2419
    %2641 = vmatprep.subr.bf16.mxu0 0
    %2642 = vmatpush2.bf16.msra.mxu0 0
    %2643 = vmatprep.subr.bf16.mxu0 0
    %2644 = vmatpush2.bf16.msra.mxu0 0
    %2645 = vmatprep.subr.bf16.mxu0 0
    %2646 = vmatpush2.bf16.msra.mxu0 0
    %2647 = vmatprep.subr.bf16.mxu0 0
    %2648 = vmatpush2.bf16.msra.mxu0 0
    %2649 = vmatprep.subr.bf16.mxu0 0
    %2650 = vmatpush2.bf16.msra.mxu0 0
    %2651 = vmatprep.subr.bf16.mxu0 0
    %2652 = vmatpush2.bf16.msra.mxu0 0
    %2653 = vmatprep.subr.bf16.mxu0 0
    %2654 = vmatpush2.bf16.msra.mxu0 0
    %2655 = vmatprep.subr.bf16.mxu0 0
    %2656 = vmatpush2.bf16.msra.mxu0 0
    %2657 = vmatprep.mubr.bf16.mxu0 0
    %2658 = vmatmul.mubr.bf16.gmra.mxu0 %v2157
    %v2659 = vpop.f32.mrf.mxu0
    %v2660 = vadd.f32 0.0, %v2659
    %v2661 = vpop.f32.mrf.mxu0
    %v2662 = vadd.f32 0.0, %v2661
    %v2663 = vpop.f32.mrf.mxu0
    %v2664 = vpop.f32.mrf.mxu0
    %2665 = vdwg.mxu0
    %2666 = vmatprep.subr.bf16.mxu0 %v2478
    %2667 = vmatpush1.bf16.msra.mxu0 %v2477
    %2668 = vmatprep.subr.bf16.mxu0 %v2470
    %2669 = vmatpush1.bf16.msra.mxu0 %v2469
    %2670 = vmatprep.subr.bf16.mxu0 %v2462
    %2671 = vmatpush1.bf16.msra.mxu0 %v2461
    %2672 = vmatprep.subr.bf16.mxu0 %v2454
    %2673 = vmatpush1.bf16.msra.mxu0 %v2453
    %2674 = vmatprep.subr.bf16.mxu0 %v2446
    %2675 = vmatpush1.bf16.msra.mxu0 %v2445
    %2676 = vmatprep.subr.bf16.mxu0 %v2438
    %2677 = vmatpush1.bf16.msra.mxu0 %v2437
    %2678 = vmatprep.subr.bf16.mxu0 %v2430
    %2679 = vmatpush1.bf16.msra.mxu0 %v2429
    %2680 = vmatprep.subr.bf16.mxu0 %v2422
    %2681 = vmatpush1.bf16.msra.mxu0 %v2421
    %2682 = vmatprep.subr.bf16.mxu0 0
    %2683 = vmatpush2.bf16.msra.mxu0 0
    %2684 = vmatprep.subr.bf16.mxu0 0
    %2685 = vmatpush2.bf16.msra.mxu0 0
    %2686 = vmatprep.subr.bf16.mxu0 0
    %2687 = vmatpush2.bf16.msra.mxu0 0
    %2688 = vmatprep.subr.bf16.mxu0 0
    %2689 = vmatpush2.bf16.msra.mxu0 0
    %2690 = vmatprep.subr.bf16.mxu0 0
    %2691 = vmatpush2.bf16.msra.mxu0 0
    %2692 = vmatprep.subr.bf16.mxu0 0
    %2693 = vmatpush2.bf16.msra.mxu0 0
    %2694 = vmatprep.subr.bf16.mxu0 0
    %2695 = vmatpush2.bf16.msra.mxu0 0
    %2696 = vmatprep.subr.bf16.mxu0 0
    %2697 = vmatpush2.bf16.msra.mxu0 0
    %2698 = vmatprep.mubr.bf16.mxu0 0
    %2699 = vmatmul.mubr.bf16.gmra.mxu0 %v2157
    %v2700 = vpop.f32.mrf.mxu0
    %v2701 = vadd.f32 0.0, %v2700
    %v2702 = vpop.f32.mrf.mxu0
    %v2703 = vadd.f32 0.0, %v2702
    %v2704 = vpop.f32.mrf.mxu0
    %v2705 = vpop.f32.mrf.mxu0
    %2706 = vdwg.mxu0
    %v2707 = vadd.f32 %v2079, %v2578
    %v2708 = vadd.f32 %v2080, %v2580
    %v2709 = vadd.f32 %v2081, %v2619
    %v2710 = vadd.f32 %v2082, %v2621
    %v2711 = vadd.f32 %v2083, %v2660
    %v2712 = vadd.f32 %v2084, %v2662
    %v2713 = vadd.f32 %v2085, %v2701
    %v2714 = vadd.f32 %v2086, %v2703
    %v2715 = vadd.f32 %v169, %v171
    %v2716 = vsel %vm163, %v114, 0.0
    %v2717 = vadd.f32 %v2715, %v2716
    %v2718 = vsel %vm163, %v116, 0.0
    %v2719 = vadd.f32 %v2717, %v2718
    %v2720 = vsel %vm163, %v118, 0.0
    %v2721 = vadd.f32 %v2719, %v2720
    %v2722 = vadd.f32 %v179, %v181
    %v2723 = vsel %vm173, %v115, 0.0
    %v2724 = vadd.f32 %v2722, %v2723
    %v2725 = vsel %vm173, %v117, 0.0
    %v2726 = vadd.f32 %v2724, %v2725
    %v2727 = vsel %vm173, %v119, 0.0
    %v2728 = vadd.f32 %v2726, %v2727
    %v2729 = vadd.f32 %v188, %v190
    %v2730 = vsel %vm163, %v142, 0.0
    %v2731 = vadd.f32 %v2729, %v2730
    %v2732 = vsel %vm163, %v144, 0.0
    %v2733 = vadd.f32 %v2731, %v2732
    %v2734 = vsel %vm163, %v146, 0.0
    %v2735 = vadd.f32 %v2733, %v2734
    %v2736 = vadd.f32 %v197, %v199
    %v2737 = vsel %vm173, %v143, 0.0
    %v2738 = vadd.f32 %v2736, %v2737
    %v2739 = vsel %vm173, %v145, 0.0
    %v2740 = vadd.f32 %v2738, %v2739
    %v2741 = vsel %vm173, %v147, 0.0
    %v2742 = vadd.f32 %v2740, %v2741
    %v2743 = vsel %vm201, %v2721, 0.0
    %v2744 = vrot.slane %v2743, 4
    %v2745 = vadd.f32 %v2743, %v2744
    %v2746 = vrot.slane %v2745, 2
    %v2747 = vadd.f32 %v2745, %v2746
    %v2748 = vrot.slane %v2747, 1
    %v2749 = vadd.f32 %v2747, %v2748
    %v2750 = vsel %vm201, %v2735, 0.0
    %v2751 = vrot.slane %v2750, 4
    %v2752 = vadd.f32 %v2750, %v2751
    %v2753 = vrot.slane %v2752, 2
    %v2754 = vadd.f32 %v2752, %v2753
    %v2755 = vrot.slane %v2754, 1
    %v2756 = vadd.f32 %v2754, %v2755
    %v2757 = vpack.c.bf16 %v2749, %v2749
    %v2758 = vpack.c.bf16 %v2756, %v2756
    %v2761 = vunpack.c.l.b16 %v2757
    %v2762 = vunpack.c.l.b16 %v2758
    %v2763 = vsel %vm228, %v2762, %v2761
    %v2764 = vpack.c.b16 %v2763, %v2763
    %v2766 = vsel %vm163, %v2764, 0
    %2768 = vmatprep.subr.bf16.mxu0 0
    %2769 = vmatpush1.bf16.msra.mxu0 0
    %2770 = vmatprep.subr.bf16.mxu0 0
    %2771 = vmatpush1.bf16.msra.mxu0 0
    %2772 = vmatprep.subr.bf16.mxu0 0
    %2773 = vmatpush1.bf16.msra.mxu0 0
    %2774 = vmatprep.subr.bf16.mxu0 0
    %2775 = vmatpush1.bf16.msra.mxu0 0
    %2776 = vmatprep.subr.bf16.mxu0 0
    %2777 = vmatpush1.bf16.msra.mxu0 0
    %2778 = vmatprep.subr.bf16.mxu0 0
    %2779 = vmatpush1.bf16.msra.mxu0 0
    %2780 = vmatprep.subr.bf16.mxu0 0
    %2781 = vmatpush1.bf16.msra.mxu0 0
    %2782 = vmatprep.subr.bf16.mxu0 0
    %2783 = vmatpush1.bf16.msra.mxu0 %v235
    %2784 = vmatprep.subr.bf16.mxu0 0
    %2785 = vmatpush2.bf16.msra.mxu0 0
    %2786 = vmatprep.subr.bf16.mxu0 0
    %2787 = vmatpush2.bf16.msra.mxu0 0
    %2788 = vmatprep.subr.bf16.mxu0 0
    %2789 = vmatpush2.bf16.msra.mxu0 0
    %2790 = vmatprep.subr.bf16.mxu0 0
    %2791 = vmatpush2.bf16.msra.mxu0 0
    %2792 = vmatprep.subr.bf16.mxu0 0
    %2793 = vmatpush2.bf16.msra.mxu0 0
    %2794 = vmatprep.subr.bf16.mxu0 0
    %2795 = vmatpush2.bf16.msra.mxu0 0
    %2796 = vmatprep.subr.bf16.mxu0 0
    %2797 = vmatpush2.bf16.msra.mxu0 0
    %2798 = vmatprep.subr.bf16.mxu0 0
    %2799 = vmatpush2.bf16.msra.mxu0 0
    %2800 = vmatprep.mubr.bf16.mxu0 0
    %2801 = vmatmul.mubr.bf16.gmra.mxu0 %v2766
    %v2802 = vpop.f32.mrf.mxu0
    %v2803 = vadd.f32 %v222, %v2802
    %v2804 = vpop.f32.mrf.mxu0
    %v2805 = vpop.f32.mrf.mxu0
    %v2806 = vpop.f32.mrf.mxu0
    %2807 = vdwg.mxu0
    %v2808 = vmax.f32 %v2803, 0.0
    %v2809 = vpack.c.bf16 %v2808, %v2808
    %s2810 = scalar_lea.vmem [#allocation7], 2048
    %v2811 = vld [vmem:[%s2810] sm:$0xff]
    %v2812 = vld [vmem:[%s2810 + $0x8] sm:$0xff]
    %v2813 = vld [vmem:[%s2810 + $0x10] sm:$0xff]
    %v2814 = vld [vmem:[%s2810 + $0x18] sm:$0xff]
    %v2815 = vld [vmem:[%s2810 + $0x20] sm:$0xff]
    %v2816 = vld [vmem:[%s2810 + $0x28] sm:$0xff]
    %v2817 = vld [vmem:[%s2810 + $0x30] sm:$0xff]
    %v2818 = vld [vmem:[%s2810 + $0x38] sm:$0xff]
    %v2819 = vld [vmem:[%s2810 + $0x40] sm:$0xff]
    %v2820 = vld [vmem:[%s2810 + $0x48] sm:$0xff]
    %v2821 = vld [vmem:[%s2810 + $0x50] sm:$0xff]
    %v2822 = vld [vmem:[%s2810 + $0x58] sm:$0xff]
    %v2823 = vld [vmem:[%s2810 + $0x60] sm:$0xff]
    %v2824 = vld [vmem:[%s2810 + $0x68] sm:$0xff]
    %v2825 = vld [vmem:[%s2810 + $0x70] sm:$0xff]
    %v2826 = vld [vmem:[%s2810 + $0x78] sm:$0xff]
    %v2827 = vld [vmem:[%s2810 + $0x80] sm:$0xff]
    %v2828 = vld [vmem:[%s2810 + $0x88] sm:$0xff]
    %v2829 = vld [vmem:[%s2810 + $0x90] sm:$0xff]
    %v2830 = vld [vmem:[%s2810 + $0x98] sm:$0xff]
    %v2831 = vld [vmem:[%s2810 + $0xa0] sm:$0xff]
    %v2832 = vld [vmem:[%s2810 + $0xa8] sm:$0xff]
    %v2833 = vld [vmem:[%s2810 + $0xb0] sm:$0xff]
    %v2834 = vld [vmem:[%s2810 + $0xb8] sm:$0xff]
    %v2835 = vld [vmem:[%s2810 + $0xc0] sm:$0xff]
    %v2836 = vld [vmem:[%s2810 + $0xc8] sm:$0xff]
    %v2837 = vld [vmem:[%s2810 + $0xd0] sm:$0xff]
    %v2838 = vld [vmem:[%s2810 + $0xd8] sm:$0xff]
    %v2839 = vld [vmem:[%s2810 + $0xe0] sm:$0xff]
    %v2840 = vld [vmem:[%s2810 + $0xe8] sm:$0xff]
    %v2841 = vld [vmem:[%s2810 + $0xf0] sm:$0xff]
    %v2842 = vld [vmem:[%s2810 + $0xf8] sm:$0xff]
    %v2843 = vld [vmem:[%s2810 + $0x100] sm:$0xff]
    %v2844 = vld [vmem:[%s2810 + $0x108] sm:$0xff]
    %v2845 = vld [vmem:[%s2810 + $0x110] sm:$0xff]
    %v2846 = vld [vmem:[%s2810 + $0x118] sm:$0xff]
    %v2847 = vld [vmem:[%s2810 + $0x120] sm:$0xff]
    %v2848 = vld [vmem:[%s2810 + $0x128] sm:$0xff]
    %v2849 = vld [vmem:[%s2810 + $0x130] sm:$0xff]
    %v2850 = vld [vmem:[%s2810 + $0x138] sm:$0xff]
    %v2851 = vld [vmem:[%s2810 + $0x140] sm:$0xff]
    %v2852 = vld [vmem:[%s2810 + $0x148] sm:$0xff]
    %v2853 = vld [vmem:[%s2810 + $0x150] sm:$0xff]
    %v2854 = vld [vmem:[%s2810 + $0x158] sm:$0xff]
    %v2855 = vld [vmem:[%s2810 + $0x160] sm:$0xff]
    %v2856 = vld [vmem:[%s2810 + $0x168] sm:$0xff]
    %v2857 = vld [vmem:[%s2810 + $0x170] sm:$0xff]
    %v2858 = vld [vmem:[%s2810 + $0x178] sm:$0xff]
    %v2859 = vld [vmem:[%s2810 + $0x180] sm:$0xff]
    %v2860 = vld [vmem:[%s2810 + $0x188] sm:$0xff]
    %v2861 = vld [vmem:[%s2810 + $0x190] sm:$0xff]
    %v2862 = vld [vmem:[%s2810 + $0x198] sm:$0xff]
    %v2863 = vld [vmem:[%s2810 + $0x1a0] sm:$0xff]
    %v2864 = vld [vmem:[%s2810 + $0x1a8] sm:$0xff]
    %v2865 = vld [vmem:[%s2810 + $0x1b0] sm:$0xff]
    %v2866 = vld [vmem:[%s2810 + $0x1b8] sm:$0xff]
    %v2867 = vld [vmem:[%s2810 + $0x1c0] sm:$0xff]
    %v2868 = vld [vmem:[%s2810 + $0x1c8] sm:$0xff]
    %v2869 = vld [vmem:[%s2810 + $0x1d0] sm:$0xff]
    %v2870 = vld [vmem:[%s2810 + $0x1d8] sm:$0xff]
    %v2871 = vld [vmem:[%s2810 + $0x1e0] sm:$0xff]
    %v2872 = vld [vmem:[%s2810 + $0x1e8] sm:$0xff]
    %v2873 = vld [vmem:[%s2810 + $0x1f0] sm:$0xff]
    %v2874 = vld [vmem:[%s2810 + $0x1f8] sm:$0xff]
    %v2939 = vunpack.c.l.b16 %v2811
    %v2940 = vunpack.c.h.b16 %v2811
    %v2941 = vunpack.c.l.b16 %v2812
    %v2942 = vunpack.c.h.b16 %v2812
    %v2943 = vunpack.c.l.b16 %v2813
    %v2944 = vunpack.c.h.b16 %v2813
    %v2945 = vunpack.c.l.b16 %v2814
    %v2946 = vunpack.c.h.b16 %v2814
    %v2947 = vunpack.c.l.b16 %v2815
    %v2948 = vunpack.c.h.b16 %v2815
    %v2949 = vunpack.c.l.b16 %v2816
    %v2950 = vunpack.c.h.b16 %v2816
    %v2951 = vunpack.c.l.b16 %v2817
    %v2952 = vunpack.c.h.b16 %v2817
    %v2953 = vunpack.c.l.b16 %v2818
    %v2954 = vunpack.c.h.b16 %v2818
    %v2955 = vunpack.c.l.b16 %v2819
    %v2956 = vunpack.c.h.b16 %v2819
    %v2957 = vunpack.c.l.b16 %v2820
    %v2958 = vunpack.c.h.b16 %v2820
    %v2959 = vunpack.c.l.b16 %v2821
    %v2960 = vunpack.c.h.b16 %v2821
    %v2961 = vunpack.c.l.b16 %v2822
    %v2962 = vunpack.c.h.b16 %v2822
    %v2963 = vunpack.c.l.b16 %v2823
    %v2964 = vunpack.c.h.b16 %v2823
    %v2965 = vunpack.c.l.b16 %v2824
    %v2966 = vunpack.c.h.b16 %v2824
    %v2967 = vunpack.c.l.b16 %v2825
    %v2968 = vunpack.c.h.b16 %v2825
    %v2969 = vunpack.c.l.b16 %v2826
    %v2970 = vunpack.c.h.b16 %v2826
    %v2971 = vunpack.c.l.b16 %v2827
    %v2972 = vunpack.c.h.b16 %v2827
    %v2973 = vunpack.c.l.b16 %v2828
    %v2974 = vunpack.c.h.b16 %v2828
    %v2975 = vunpack.c.l.b16 %v2829
    %v2976 = vunpack.c.h.b16 %v2829
    %v2977 = vunpack.c.l.b16 %v2830
    %v2978 = vunpack.c.h.b16 %v2830
    %v2979 = vunpack.c.l.b16 %v2831
    %v2980 = vunpack.c.h.b16 %v2831
    %v2981 = vunpack.c.l.b16 %v2832
    %v2982 = vunpack.c.h.b16 %v2832
    %v2983 = vunpack.c.l.b16 %v2833
    %v2984 = vunpack.c.h.b16 %v2833
    %v2985 = vunpack.c.l.b16 %v2834
    %v2986 = vunpack.c.h.b16 %v2834
    %v2987 = vunpack.c.l.b16 %v2835
    %v2988 = vunpack.c.h.b16 %v2835
    %v2989 = vunpack.c.l.b16 %v2836
    %v2990 = vunpack.c.h.b16 %v2836
    %v2991 = vunpack.c.l.b16 %v2837
    %v2992 = vunpack.c.h.b16 %v2837
    %v2993 = vunpack.c.l.b16 %v2838
    %v2994 = vunpack.c.h.b16 %v2838
    %v2995 = vunpack.c.l.b16 %v2839
    %v2996 = vunpack.c.h.b16 %v2839
    %v2997 = vunpack.c.l.b16 %v2840
    %v2998 = vunpack.c.h.b16 %v2840
    %v2999 = vunpack.c.l.b16 %v2841
    %v3000 = vunpack.c.h.b16 %v2841
    %v3001 = vunpack.c.l.b16 %v2842
    %v3002 = vunpack.c.h.b16 %v2842
    %v3003 = vunpack.c.l.b16 %v2843
    %v3004 = vunpack.c.h.b16 %v2843
    %v3005 = vunpack.c.l.b16 %v2844
    %v3006 = vunpack.c.h.b16 %v2844
    %v3007 = vunpack.c.l.b16 %v2845
    %v3008 = vunpack.c.h.b16 %v2845
    %v3009 = vunpack.c.l.b16 %v2846
    %v3010 = vunpack.c.h.b16 %v2846
    %v3011 = vunpack.c.l.b16 %v2847
    %v3012 = vunpack.c.h.b16 %v2847
    %v3013 = vunpack.c.l.b16 %v2848
    %v3014 = vunpack.c.h.b16 %v2848
    %v3015 = vunpack.c.l.b16 %v2849
    %v3016 = vunpack.c.h.b16 %v2849
    %v3017 = vunpack.c.l.b16 %v2850
    %v3018 = vunpack.c.h.b16 %v2850
    %v3019 = vunpack.c.l.b16 %v2851
    %v3020 = vunpack.c.h.b16 %v2851
    %v3021 = vunpack.c.l.b16 %v2852
    %v3022 = vunpack.c.h.b16 %v2852
    %v3023 = vunpack.c.l.b16 %v2853
    %v3024 = vunpack.c.h.b16 %v2853
    %v3025 = vunpack.c.l.b16 %v2854
    %v3026 = vunpack.c.h.b16 %v2854
    %v3027 = vunpack.c.l.b16 %v2855
    %v3028 = vunpack.c.h.b16 %v2855
    %v3029 = vunpack.c.l.b16 %v2856
    %v3030 = vunpack.c.h.b16 %v2856
    %v3031 = vunpack.c.l.b16 %v2857
    %v3032 = vunpack.c.h.b16 %v2857
    %v3033 = vunpack.c.l.b16 %v2858
    %v3034 = vunpack.c.h.b16 %v2858
    %v3035 = vunpack.c.l.b16 %v2859
    %v3036 = vunpack.c.h.b16 %v2859
    %v3037 = vunpack.c.l.b16 %v2860
    %v3038 = vunpack.c.h.b16 %v2860
    %v3039 = vunpack.c.l.b16 %v2861
    %v3040 = vunpack.c.h.b16 %v2861
    %v3041 = vunpack.c.l.b16 %v2862
    %v3042 = vunpack.c.h.b16 %v2862
    %v3043 = vunpack.c.l.b16 %v2863
    %v3044 = vunpack.c.h.b16 %v2863
    %v3045 = vunpack.c.l.b16 %v2864
    %v3046 = vunpack.c.h.b16 %v2864
    %v3047 = vunpack.c.l.b16 %v2865
    %v3048 = vunpack.c.h.b16 %v2865
    %v3049 = vunpack.c.l.b16 %v2866
    %v3050 = vunpack.c.h.b16 %v2866
    %v3051 = vunpack.c.l.b16 %v2867
    %v3052 = vunpack.c.h.b16 %v2867
    %v3053 = vunpack.c.l.b16 %v2868
    %v3054 = vunpack.c.h.b16 %v2868
    %v3055 = vunpack.c.l.b16 %v2869
    %v3056 = vunpack.c.h.b16 %v2869
    %v3057 = vunpack.c.l.b16 %v2870
    %v3058 = vunpack.c.h.b16 %v2870
    %v3059 = vunpack.c.l.b16 %v2871
    %v3060 = vunpack.c.h.b16 %v2871
    %v3061 = vunpack.c.l.b16 %v2872
    %v3062 = vunpack.c.h.b16 %v2872
    %v3063 = vunpack.c.l.b16 %v2873
    %v3064 = vunpack.c.h.b16 %v2873
    %v3065 = vunpack.c.l.b16 %v2874
    %v3066 = vunpack.c.h.b16 %v2874
    %v3067 = vpack.c.b16 %v2947, %v2939
    %v3068 = vpack.c.b16 %v2948, %v2940
    %v3069 = vpack.c.b16 %v2949, %v2941
    %v3070 = vpack.c.b16 %v2950, %v2942
    %v3071 = vpack.c.b16 %v2951, %v2943
    %v3072 = vpack.c.b16 %v2952, %v2944
    %v3073 = vpack.c.b16 %v2953, %v2945
    %v3074 = vpack.c.b16 %v2954, %v2946
    %v3075 = vpack.c.b16 %v2963, %v2955
    %v3076 = vpack.c.b16 %v2964, %v2956
    %v3077 = vpack.c.b16 %v2965, %v2957
    %v3078 = vpack.c.b16 %v2966, %v2958
    %v3079 = vpack.c.b16 %v2967, %v2959
    %v3080 = vpack.c.b16 %v2968, %v2960
    %v3081 = vpack.c.b16 %v2969, %v2961
    %v3082 = vpack.c.b16 %v2970, %v2962
    %v3083 = vpack.c.b16 %v2979, %v2971
    %v3084 = vpack.c.b16 %v2980, %v2972
    %v3085 = vpack.c.b16 %v2981, %v2973
    %v3086 = vpack.c.b16 %v2982, %v2974
    %v3087 = vpack.c.b16 %v2983, %v2975
    %v3088 = vpack.c.b16 %v2984, %v2976
    %v3089 = vpack.c.b16 %v2985, %v2977
    %v3090 = vpack.c.b16 %v2986, %v2978
    %v3091 = vpack.c.b16 %v2995, %v2987
    %v3092 = vpack.c.b16 %v2996, %v2988
    %v3093 = vpack.c.b16 %v2997, %v2989
    %v3094 = vpack.c.b16 %v2998, %v2990
    %v3095 = vpack.c.b16 %v2999, %v2991
    %v3096 = vpack.c.b16 %v3000, %v2992
    %v3097 = vpack.c.b16 %v3001, %v2993
    %v3098 = vpack.c.b16 %v3002, %v2994
    %v3099 = vpack.c.b16 %v3011, %v3003
    %v3100 = vpack.c.b16 %v3012, %v3004
    %v3101 = vpack.c.b16 %v3013, %v3005
    %v3102 = vpack.c.b16 %v3014, %v3006
    %v3103 = vpack.c.b16 %v3015, %v3007
    %v3104 = vpack.c.b16 %v3016, %v3008
    %v3105 = vpack.c.b16 %v3017, %v3009
    %v3106 = vpack.c.b16 %v3018, %v3010
    %v3107 = vpack.c.b16 %v3027, %v3019
    %v3108 = vpack.c.b16 %v3028, %v3020
    %v3109 = vpack.c.b16 %v3029, %v3021
    %v3110 = vpack.c.b16 %v3030, %v3022
    %v3111 = vpack.c.b16 %v3031, %v3023
    %v3112 = vpack.c.b16 %v3032, %v3024
    %v3113 = vpack.c.b16 %v3033, %v3025
    %v3114 = vpack.c.b16 %v3034, %v3026
    %v3115 = vpack.c.b16 %v3043, %v3035
    %v3116 = vpack.c.b16 %v3044, %v3036
    %v3117 = vpack.c.b16 %v3045, %v3037
    %v3118 = vpack.c.b16 %v3046, %v3038
    %v3119 = vpack.c.b16 %v3047, %v3039
    %v3120 = vpack.c.b16 %v3048, %v3040
    %v3121 = vpack.c.b16 %v3049, %v3041
    %v3122 = vpack.c.b16 %v3050, %v3042
    %v3123 = vpack.c.b16 %v3059, %v3051
    %v3124 = vpack.c.b16 %v3060, %v3052
    %v3125 = vpack.c.b16 %v3061, %v3053
    %v3126 = vpack.c.b16 %v3062, %v3054
    %v3127 = vpack.c.b16 %v3063, %v3055
    %v3128 = vpack.c.b16 %v3064, %v3056
    %v3129 = vpack.c.b16 %v3065, %v3057
    %v3130 = vpack.c.b16 %v3066, %v3058
    %3195 = vmatprep.subr.bf16.mxu0 %v3124
    %3196 = vmatpush1.bf16.msra.mxu0 %v3123
    %3197 = vmatprep.subr.bf16.mxu0 %v3116
    %3198 = vmatpush1.bf16.msra.mxu0 %v3115
    %3199 = vmatprep.subr.bf16.mxu0 %v3108
    %3200 = vmatpush1.bf16.msra.mxu0 %v3107
    %3201 = vmatprep.subr.bf16.mxu0 %v3100
    %3202 = vmatpush1.bf16.msra.mxu0 %v3099
    %3203 = vmatprep.subr.bf16.mxu0 %v3092
    %3204 = vmatpush1.bf16.msra.mxu0 %v3091
    %3205 = vmatprep.subr.bf16.mxu0 %v3084
    %3206 = vmatpush1.bf16.msra.mxu0 %v3083
    %3207 = vmatprep.subr.bf16.mxu0 %v3076
    %3208 = vmatpush1.bf16.msra.mxu0 %v3075
    %3209 = vmatprep.subr.bf16.mxu0 %v3068
    %3210 = vmatpush1.bf16.msra.mxu0 %v3067
    %3211 = vmatprep.subr.bf16.mxu0 0
    %3212 = vmatpush2.bf16.msra.mxu0 0
    %3213 = vmatprep.subr.bf16.mxu0 0
    %3214 = vmatpush2.bf16.msra.mxu0 0
    %3215 = vmatprep.subr.bf16.mxu0 0
    %3216 = vmatpush2.bf16.msra.mxu0 0
    %3217 = vmatprep.subr.bf16.mxu0 0
    %3218 = vmatpush2.bf16.msra.mxu0 0
    %3219 = vmatprep.subr.bf16.mxu0 0
    %3220 = vmatpush2.bf16.msra.mxu0 0
    %3221 = vmatprep.subr.bf16.mxu0 0
    %3222 = vmatpush2.bf16.msra.mxu0 0
    %3223 = vmatprep.subr.bf16.mxu0 0
    %3224 = vmatpush2.bf16.msra.mxu0 0
    %3225 = vmatprep.subr.bf16.mxu0 0
    %3226 = vmatpush2.bf16.msra.mxu0 0
    %3227 = vmatprep.mubr.bf16.mxu0 0
    %3228 = vmatmul.mubr.bf16.gmra.mxu0 %v2809
    %v3229 = vpop.f32.mrf.mxu0
    %v3230 = vadd.f32 0.0, %v3229
    %v3231 = vpop.f32.mrf.mxu0
    %v3232 = vadd.f32 0.0, %v3231
    %v3233 = vpop.f32.mrf.mxu0
    %v3234 = vpop.f32.mrf.mxu0
    %3235 = vdwg.mxu0
    %3236 = vmatprep.subr.bf16.mxu0 %v3126
    %3237 = vmatpush1.bf16.msra.mxu0 %v3125
    %3238 = vmatprep.subr.bf16.mxu0 %v3118
    %3239 = vmatpush1.bf16.msra.mxu0 %v3117
    %3240 = vmatprep.subr.bf16.mxu0 %v3110
    %3241 = vmatpush1.bf16.msra.mxu0 %v3109
    %3242 = vmatprep.subr.bf16.mxu0 %v3102
    %3243 = vmatpush1.bf16.msra.mxu0 %v3101
    %3244 = vmatprep.subr.bf16.mxu0 %v3094
    %3245 = vmatpush1.bf16.msra.mxu0 %v3093
    %3246 = vmatprep.subr.bf16.mxu0 %v3086
    %3247 = vmatpush1.bf16.msra.mxu0 %v3085
    %3248 = vmatprep.subr.bf16.mxu0 %v3078
    %3249 = vmatpush1.bf16.msra.mxu0 %v3077
    %3250 = vmatprep.subr.bf16.mxu0 %v3070
    %3251 = vmatpush1.bf16.msra.mxu0 %v3069
    %3252 = vmatprep.subr.bf16.mxu0 0
    %3253 = vmatpush2.bf16.msra.mxu0 0
    %3254 = vmatprep.subr.bf16.mxu0 0
    %3255 = vmatpush2.bf16.msra.mxu0 0
    %3256 = vmatprep.subr.bf16.mxu0 0
    %3257 = vmatpush2.bf16.msra.mxu0 0
    %3258 = vmatprep.subr.bf16.mxu0 0
    %3259 = vmatpush2.bf16.msra.mxu0 0
    %3260 = vmatprep.subr.bf16.mxu0 0
    %3261 = vmatpush2.bf16.msra.mxu0 0
    %3262 = vmatprep.subr.bf16.mxu0 0
    %3263 = vmatpush2.bf16.msra.mxu0 0
    %3264 = vmatprep.subr.bf16.mxu0 0
    %3265 = vmatpush2.bf16.msra.mxu0 0
    %3266 = vmatprep.subr.bf16.mxu0 0
    %3267 = vmatpush2.bf16.msra.mxu0 0
    %3268 = vmatprep.mubr.bf16.mxu0 0
    %3269 = vmatmul.mubr.bf16.gmra.mxu0 %v2809
    %v3270 = vpop.f32.mrf.mxu0
    %v3271 = vadd.f32 0.0, %v3270
    %v3272 = vpop.f32.mrf.mxu0
    %v3273 = vadd.f32 0.0, %v3272
    %v3274 = vpop.f32.mrf.mxu0
    %v3275 = vpop.f32.mrf.mxu0
    %3276 = vdwg.mxu0
    %3277 = vmatprep.subr.bf16.mxu0 %v3128
    %3278 = vmatpush1.bf16.msra.mxu0 %v3127
    %3279 = vmatprep.subr.bf16.mxu0 %v3120
    %3280 = vmatpush1.bf16.msra.mxu0 %v3119
    %3281 = vmatprep.subr.bf16.mxu0 %v3112
    %3282 = vmatpush1.bf16.msra.mxu0 %v3111
    %3283 = vmatprep.subr.bf16.mxu0 %v3104
    %3284 = vmatpush1.bf16.msra.mxu0 %v3103
    %3285 = vmatprep.subr.bf16.mxu0 %v3096
    %3286 = vmatpush1.bf16.msra.mxu0 %v3095
    %3287 = vmatprep.subr.bf16.mxu0 %v3088
    %3288 = vmatpush1.bf16.msra.mxu0 %v3087
    %3289 = vmatprep.subr.bf16.mxu0 %v3080
    %3290 = vmatpush1.bf16.msra.mxu0 %v3079
    %3291 = vmatprep.subr.bf16.mxu0 %v3072
    %3292 = vmatpush1.bf16.msra.mxu0 %v3071
    %3293 = vmatprep.subr.bf16.mxu0 0
    %3294 = vmatpush2.bf16.msra.mxu0 0
    %3295 = vmatprep.subr.bf16.mxu0 0
    %3296 = vmatpush2.bf16.msra.mxu0 0
    %3297 = vmatprep.subr.bf16.mxu0 0
    %3298 = vmatpush2.bf16.msra.mxu0 0
    %3299 = vmatprep.subr.bf16.mxu0 0
    %3300 = vmatpush2.bf16.msra.mxu0 0
    %3301 = vmatprep.subr.bf16.mxu0 0
    %3302 = vmatpush2.bf16.msra.mxu0 0
    %3303 = vmatprep.subr.bf16.mxu0 0
    %3304 = vmatpush2.bf16.msra.mxu0 0
    %3305 = vmatprep.subr.bf16.mxu0 0
    %3306 = vmatpush2.bf16.msra.mxu0 0
    %3307 = vmatprep.subr.bf16.mxu0 0
    %3308 = vmatpush2.bf16.msra.mxu0 0
    %3309 = vmatprep.mubr.bf16.mxu0 0
    %3310 = vmatmul.mubr.bf16.gmra.mxu0 %v2809
    %v3311 = vpop.f32.mrf.mxu0
    %v3312 = vadd.f32 0.0, %v3311
    %v3313 = vpop.f32.mrf.mxu0
    %v3314 = vadd.f32 0.0, %v3313
    %v3315 = vpop.f32.mrf.mxu0
    %v3316 = vpop.f32.mrf.mxu0
    %3317 = vdwg.mxu0
    %3318 = vmatprep.subr.bf16.mxu0 %v3130
    %3319 = vmatpush1.bf16.msra.mxu0 %v3129
    %3320 = vmatprep.subr.bf16.mxu0 %v3122
    %3321 = vmatpush1.bf16.msra.mxu0 %v3121
    %3322 = vmatprep.subr.bf16.mxu0 %v3114
    %3323 = vmatpush1.bf16.msra.mxu0 %v3113
    %3324 = vmatprep.subr.bf16.mxu0 %v3106
    %3325 = vmatpush1.bf16.msra.mxu0 %v3105
    %3326 = vmatprep.subr.bf16.mxu0 %v3098
    %3327 = vmatpush1.bf16.msra.mxu0 %v3097
    %3328 = vmatprep.subr.bf16.mxu0 %v3090
    %3329 = vmatpush1.bf16.msra.mxu0 %v3089
    %3330 = vmatprep.subr.bf16.mxu0 %v3082
    %3331 = vmatpush1.bf16.msra.mxu0 %v3081
    %3332 = vmatprep.subr.bf16.mxu0 %v3074
    %3333 = vmatpush1.bf16.msra.mxu0 %v3073
    %3334 = vmatprep.subr.bf16.mxu0 0
    %3335 = vmatpush2.bf16.msra.mxu0 0
    %3336 = vmatprep.subr.bf16.mxu0 0
    %3337 = vmatpush2.bf16.msra.mxu0 0
    %3338 = vmatprep.subr.bf16.mxu0 0
    %3339 = vmatpush2.bf16.msra.mxu0 0
    %3340 = vmatprep.subr.bf16.mxu0 0
    %3341 = vmatpush2.bf16.msra.mxu0 0
    %3342 = vmatprep.subr.bf16.mxu0 0
    %3343 = vmatpush2.bf16.msra.mxu0 0
    %3344 = vmatprep.subr.bf16.mxu0 0
    %3345 = vmatpush2.bf16.msra.mxu0 0
    %3346 = vmatprep.subr.bf16.mxu0 0
    %3347 = vmatpush2.bf16.msra.mxu0 0
    %3348 = vmatprep.subr.bf16.mxu0 0
    %3349 = vmatpush2.bf16.msra.mxu0 0
    %3350 = vmatprep.mubr.bf16.mxu0 0
    %3351 = vmatmul.mubr.bf16.gmra.mxu0 %v2809
    %v3352 = vpop.f32.mrf.mxu0
    %v3353 = vadd.f32 0.0, %v3352
    %v3354 = vpop.f32.mrf.mxu0
    %v3355 = vadd.f32 0.0, %v3354
    %v3356 = vpop.f32.mrf.mxu0
    %v3357 = vpop.f32.mrf.mxu0
    %3358 = vdwg.mxu0
    %v3359 = vadd.f32 %v2707, %v3230
    %v3360 = vadd.f32 %v2708, %v3232
    %v3361 = vadd.f32 %v2709, %v3271
    %v3362 = vadd.f32 %v2710, %v3273
    %v3363 = vadd.f32 %v2711, %v3312
    %v3364 = vadd.f32 %v2712, %v3314
    %v3365 = vadd.f32 %v2713, %v3353
    %v3366 = vadd.f32 %v2714, %v3355
    %v3369 = vrot.slane %v2721, 3
    %v3370 = vrot.slane %v2735, 3
    %v3373 = vsel %vm201, %v3369, 0.0
    %v3374 = vrot.slane %v3373, 4
    %v3375 = vadd.f32 %v3373, %v3374
    %v3376 = vrot.slane %v3375, 2
    %v3377 = vadd.f32 %v3375, %v3376
    %v3378 = vrot.slane %v3377, 1
    %v3379 = vadd.f32 %v3377, %v3378
    %v3380 = vsel %vm201, %v3370, 0.0
    %v3381 = vrot.slane %v3380, 4
    %v3382 = vadd.f32 %v3380, %v3381
    %v3383 = vrot.slane %v3382, 2
    %v3384 = vadd.f32 %v3382, %v3383
    %v3385 = vrot.slane %v3384, 1
    %v3386 = vadd.f32 %v3384, %v3385
    %v3387 = vpack.c.bf16 %v3379, %v3379
    %v3388 = vpack.c.bf16 %v3386, %v3386
    %v3391 = vunpack.c.l.b16 %v3387
    %v3392 = vunpack.c.l.b16 %v3388
    %v3393 = vsel %vm228, %v3392, %v3391
    %v3394 = vpack.c.b16 %v3393, %v3393
    %v3396 = vsel %vm163, %v3394, 0
    %3398 = vmatprep.subr.bf16.mxu0 0
    %3399 = vmatpush1.bf16.msra.mxu0 0
    %3400 = vmatprep.subr.bf16.mxu0 0
    %3401 = vmatpush1.bf16.msra.mxu0 0
    %3402 = vmatprep.subr.bf16.mxu0 0
    %3403 = vmatpush1.bf16.msra.mxu0 0
    %3404 = vmatprep.subr.bf16.mxu0 0
    %3405 = vmatpush1.bf16.msra.mxu0 0
    %3406 = vmatprep.subr.bf16.mxu0 0
    %3407 = vmatpush1.bf16.msra.mxu0 0
    %3408 = vmatprep.subr.bf16.mxu0 0
    %3409 = vmatpush1.bf16.msra.mxu0 0
    %3410 = vmatprep.subr.bf16.mxu0 0
    %3411 = vmatpush1.bf16.msra.mxu0 0
    %3412 = vmatprep.subr.bf16.mxu0 0
    %3413 = vmatpush1.bf16.msra.mxu0 %v235
    %3414 = vmatprep.subr.bf16.mxu0 0
    %3415 = vmatpush2.bf16.msra.mxu0 0
    %3416 = vmatprep.subr.bf16.mxu0 0
    %3417 = vmatpush2.bf16.msra.mxu0 0
    %3418 = vmatprep.subr.bf16.mxu0 0
    %3419 = vmatpush2.bf16.msra.mxu0 0
    %3420 = vmatprep.subr.bf16.mxu0 0
    %3421 = vmatpush2.bf16.msra.mxu0 0
    %3422 = vmatprep.subr.bf16.mxu0 0
    %3423 = vmatpush2.bf16.msra.mxu0 0
    %3424 = vmatprep.subr.bf16.mxu0 0
    %3425 = vmatpush2.bf16.msra.mxu0 0
    %3426 = vmatprep.subr.bf16.mxu0 0
    %3427 = vmatpush2.bf16.msra.mxu0 0
    %3428 = vmatprep.subr.bf16.mxu0 0
    %3429 = vmatpush2.bf16.msra.mxu0 0
    %3430 = vmatprep.mubr.bf16.mxu0 0
    %3431 = vmatmul.mubr.bf16.gmra.mxu0 %v3396
    %v3432 = vpop.f32.mrf.mxu0
    %v3433 = vadd.f32 %v222, %v3432
    %v3434 = vpop.f32.mrf.mxu0
    %v3435 = vpop.f32.mrf.mxu0
    %v3436 = vpop.f32.mrf.mxu0
    %3437 = vdwg.mxu0
    %v3438 = vmax.f32 %v3433, 0.0
    %v3439 = vpack.c.bf16 %v3438, %v3438
    %s3440 = scalar_lea.vmem [#allocation7], 2560
    %v3441 = vld [vmem:[%s3440] sm:$0xff]
    %v3442 = vld [vmem:[%s3440 + $0x8] sm:$0xff]
    %v3443 = vld [vmem:[%s3440 + $0x10] sm:$0xff]
    %v3444 = vld [vmem:[%s3440 + $0x18] sm:$0xff]
    %v3445 = vld [vmem:[%s3440 + $0x20] sm:$0xff]
    %v3446 = vld [vmem:[%s3440 + $0x28] sm:$0xff]
    %v3447 = vld [vmem:[%s3440 + $0x30] sm:$0xff]
    %v3448 = vld [vmem:[%s3440 + $0x38] sm:$0xff]
    %v3449 = vld [vmem:[%s3440 + $0x40] sm:$0xff]
    %v3450 = vld [vmem:[%s3440 + $0x48] sm:$0xff]
    %v3451 = vld [vmem:[%s3440 + $0x50] sm:$0xff]
    %v3452 = vld [vmem:[%s3440 + $0x58] sm:$0xff]
    %v3453 = vld [vmem:[%s3440 + $0x60] sm:$0xff]
    %v3454 = vld [vmem:[%s3440 + $0x68] sm:$0xff]
    %v3455 = vld [vmem:[%s3440 + $0x70] sm:$0xff]
    %v3456 = vld [vmem:[%s3440 + $0x78] sm:$0xff]
    %v3457 = vld [vmem:[%s3440 + $0x80] sm:$0xff]
    %v3458 = vld [vmem:[%s3440 + $0x88] sm:$0xff]
    %v3459 = vld [vmem:[%s3440 + $0x90] sm:$0xff]
    %v3460 = vld [vmem:[%s3440 + $0x98] sm:$0xff]
    %v3461 = vld [vmem:[%s3440 + $0xa0] sm:$0xff]
    %v3462 = vld [vmem:[%s3440 + $0xa8] sm:$0xff]
    %v3463 = vld [vmem:[%s3440 + $0xb0] sm:$0xff]
    %v3464 = vld [vmem:[%s3440 + $0xb8] sm:$0xff]
    %v3465 = vld [vmem:[%s3440 + $0xc0] sm:$0xff]
    %v3466 = vld [vmem:[%s3440 + $0xc8] sm:$0xff]
    %v3467 = vld [vmem:[%s3440 + $0xd0] sm:$0xff]
    %v3468 = vld [vmem:[%s3440 + $0xd8] sm:$0xff]
    %v3469 = vld [vmem:[%s3440 + $0xe0] sm:$0xff]
    %v3470 = vld [vmem:[%s3440 + $0xe8] sm:$0xff]
    %v3471 = vld [vmem:[%s3440 + $0xf0] sm:$0xff]
    %v3472 = vld [vmem:[%s3440 + $0xf8] sm:$0xff]
    %v3473 = vld [vmem:[%s3440 + $0x100] sm:$0xff]
    %v3474 = vld [vmem:[%s3440 + $0x108] sm:$0xff]
    %v3475 = vld [vmem:[%s3440 + $0x110] sm:$0xff]
    %v3476 = vld [vmem:[%s3440 + $0x118] sm:$0xff]
    %v3477 = vld [vmem:[%s3440 + $0x120] sm:$0xff]
    %v3478 = vld [vmem:[%s3440 + $0x128] sm:$0xff]
    %v3479 = vld [vmem:[%s3440 + $0x130] sm:$0xff]
    %v3480 = vld [vmem:[%s3440 + $0x138] sm:$0xff]
    %v3481 = vld [vmem:[%s3440 + $0x140] sm:$0xff]
    %v3482 = vld [vmem:[%s3440 + $0x148] sm:$0xff]
    %v3483 = vld [vmem:[%s3440 + $0x150] sm:$0xff]
    %v3484 = vld [vmem:[%s3440 + $0x158] sm:$0xff]
    %v3485 = vld [vmem:[%s3440 + $0x160] sm:$0xff]
    %v3486 = vld [vmem:[%s3440 + $0x168] sm:$0xff]
    %v3487 = vld [vmem:[%s3440 + $0x170] sm:$0xff]
    %v3488 = vld [vmem:[%s3440 + $0x178] sm:$0xff]
    %v3489 = vld [vmem:[%s3440 + $0x180] sm:$0xff]
    %v3490 = vld [vmem:[%s3440 + $0x188] sm:$0xff]
    %v3491 = vld [vmem:[%s3440 + $0x190] sm:$0xff]
    %v3492 = vld [vmem:[%s3440 + $0x198] sm:$0xff]
    %v3493 = vld [vmem:[%s3440 + $0x1a0] sm:$0xff]
    %v3494 = vld [vmem:[%s3440 + $0x1a8] sm:$0xff]
    %v3495 = vld [vmem:[%s3440 + $0x1b0] sm:$0xff]
    %v3496 = vld [vmem:[%s3440 + $0x1b8] sm:$0xff]
    %v3497 = vld [vmem:[%s3440 + $0x1c0] sm:$0xff]
    %v3498 = vld [vmem:[%s3440 + $0x1c8] sm:$0xff]
    %v3499 = vld [vmem:[%s3440 + $0x1d0] sm:$0xff]
    %v3500 = vld [vmem:[%s3440 + $0x1d8] sm:$0xff]
    %v3501 = vld [vmem:[%s3440 + $0x1e0] sm:$0xff]
    %v3502 = vld [vmem:[%s3440 + $0x1e8] sm:$0xff]
    %v3503 = vld [vmem:[%s3440 + $0x1f0] sm:$0xff]
    %v3504 = vld [vmem:[%s3440 + $0x1f8] sm:$0xff]
    %v3569 = vunpack.c.l.b16 %v3441
    %v3570 = vunpack.c.h.b16 %v3441
    %v3571 = vunpack.c.l.b16 %v3442
    %v3572 = vunpack.c.h.b16 %v3442
    %v3573 = vunpack.c.l.b16 %v3443
    %v3574 = vunpack.c.h.b16 %v3443
    %v3575 = vunpack.c.l.b16 %v3444
    %v3576 = vunpack.c.h.b16 %v3444
    %v3577 = vunpack.c.l.b16 %v3445
    %v3578 = vunpack.c.h.b16 %v3445
    %v3579 = vunpack.c.l.b16 %v3446
    %v3580 = vunpack.c.h.b16 %v3446
    %v3581 = vunpack.c.l.b16 %v3447
    %v3582 = vunpack.c.h.b16 %v3447
    %v3583 = vunpack.c.l.b16 %v3448
    %v3584 = vunpack.c.h.b16 %v3448
    %v3585 = vunpack.c.l.b16 %v3449
    %v3586 = vunpack.c.h.b16 %v3449
    %v3587 = vunpack.c.l.b16 %v3450
    %v3588 = vunpack.c.h.b16 %v3450
    %v3589 = vunpack.c.l.b16 %v3451
    %v3590 = vunpack.c.h.b16 %v3451
    %v3591 = vunpack.c.l.b16 %v3452
    %v3592 = vunpack.c.h.b16 %v3452
    %v3593 = vunpack.c.l.b16 %v3453
    %v3594 = vunpack.c.h.b16 %v3453
    %v3595 = vunpack.c.l.b16 %v3454
    %v3596 = vunpack.c.h.b16 %v3454
    %v3597 = vunpack.c.l.b16 %v3455
    %v3598 = vunpack.c.h.b16 %v3455
    %v3599 = vunpack.c.l.b16 %v3456
    %v3600 = vunpack.c.h.b16 %v3456
    %v3601 = vunpack.c.l.b16 %v3457
    %v3602 = vunpack.c.h.b16 %v3457
    %v3603 = vunpack.c.l.b16 %v3458
    %v3604 = vunpack.c.h.b16 %v3458
    %v3605 = vunpack.c.l.b16 %v3459
    %v3606 = vunpack.c.h.b16 %v3459
    %v3607 = vunpack.c.l.b16 %v3460
    %v3608 = vunpack.c.h.b16 %v3460
    %v3609 = vunpack.c.l.b16 %v3461
    %v3610 = vunpack.c.h.b16 %v3461
    %v3611 = vunpack.c.l.b16 %v3462
    %v3612 = vunpack.c.h.b16 %v3462
    %v3613 = vunpack.c.l.b16 %v3463
    %v3614 = vunpack.c.h.b16 %v3463
    %v3615 = vunpack.c.l.b16 %v3464
    %v3616 = vunpack.c.h.b16 %v3464
    %v3617 = vunpack.c.l.b16 %v3465
    %v3618 = vunpack.c.h.b16 %v3465
    %v3619 = vunpack.c.l.b16 %v3466
    %v3620 = vunpack.c.h.b16 %v3466
    %v3621 = vunpack.c.l.b16 %v3467
    %v3622 = vunpack.c.h.b16 %v3467
    %v3623 = vunpack.c.l.b16 %v3468
    %v3624 = vunpack.c.h.b16 %v3468
    %v3625 = vunpack.c.l.b16 %v3469
    %v3626 = vunpack.c.h.b16 %v3469
    %v3627 = vunpack.c.l.b16 %v3470
    %v3628 = vunpack.c.h.b16 %v3470
    %v3629 = vunpack.c.l.b16 %v3471
    %v3630 = vunpack.c.h.b16 %v3471
    %v3631 = vunpack.c.l.b16 %v3472
    %v3632 = vunpack.c.h.b16 %v3472
    %v3633 = vunpack.c.l.b16 %v3473
    %v3634 = vunpack.c.h.b16 %v3473
    %v3635 = vunpack.c.l.b16 %v3474
    %v3636 = vunpack.c.h.b16 %v3474
    %v3637 = vunpack.c.l.b16 %v3475
    %v3638 = vunpack.c.h.b16 %v3475
    %v3639 = vunpack.c.l.b16 %v3476
    %v3640 = vunpack.c.h.b16 %v3476
    %v3641 = vunpack.c.l.b16 %v3477
    %v3642 = vunpack.c.h.b16 %v3477
    %v3643 = vunpack.c.l.b16 %v3478
    %v3644 = vunpack.c.h.b16 %v3478
    %v3645 = vunpack.c.l.b16 %v3479
    %v3646 = vunpack.c.h.b16 %v3479
    %v3647 = vunpack.c.l.b16 %v3480
    %v3648 = vunpack.c.h.b16 %v3480
    %v3649 = vunpack.c.l.b16 %v3481
    %v3650 = vunpack.c.h.b16 %v3481
    %v3651 = vunpack.c.l.b16 %v3482
    %v3652 = vunpack.c.h.b16 %v3482
    %v3653 = vunpack.c.l.b16 %v3483
    %v3654 = vunpack.c.h.b16 %v3483
    %v3655 = vunpack.c.l.b16 %v3484
    %v3656 = vunpack.c.h.b16 %v3484
    %v3657 = vunpack.c.l.b16 %v3485
    %v3658 = vunpack.c.h.b16 %v3485
    %v3659 = vunpack.c.l.b16 %v3486
    %v3660 = vunpack.c.h.b16 %v3486
    %v3661 = vunpack.c.l.b16 %v3487
    %v3662 = vunpack.c.h.b16 %v3487
    %v3663 = vunpack.c.l.b16 %v3488
    %v3664 = vunpack.c.h.b16 %v3488
    %v3665 = vunpack.c.l.b16 %v3489
    %v3666 = vunpack.c.h.b16 %v3489
    %v3667 = vunpack.c.l.b16 %v3490
    %v3668 = vunpack.c.h.b16 %v3490
    %v3669 = vunpack.c.l.b16 %v3491
    %v3670 = vunpack.c.h.b16 %v3491
    %v3671 = vunpack.c.l.b16 %v3492
    %v3672 = vunpack.c.h.b16 %v3492
    %v3673 = vunpack.c.l.b16 %v3493
    %v3674 = vunpack.c.h.b16 %v3493
    %v3675 = vunpack.c.l.b16 %v3494
    %v3676 = vunpack.c.h.b16 %v3494
    %v3677 = vunpack.c.l.b16 %v3495
    %v3678 = vunpack.c.h.b16 %v3495
    %v3679 = vunpack.c.l.b16 %v3496
    %v3680 = vunpack.c.h.b16 %v3496
    %v3681 = vunpack.c.l.b16 %v3497
    %v3682 = vunpack.c.h.b16 %v3497
    %v3683 = vunpack.c.l.b16 %v3498
    %v3684 = vunpack.c.h.b16 %v3498
    %v3685 = vunpack.c.l.b16 %v3499
    %v3686 = vunpack.c.h.b16 %v3499
    %v3687 = vunpack.c.l.b16 %v3500
    %v3688 = vunpack.c.h.b16 %v3500
    %v3689 = vunpack.c.l.b16 %v3501
    %v3690 = vunpack.c.h.b16 %v3501
    %v3691 = vunpack.c.l.b16 %v3502
    %v3692 = vunpack.c.h.b16 %v3502
    %v3693 = vunpack.c.l.b16 %v3503
    %v3694 = vunpack.c.h.b16 %v3503
    %v3695 = vunpack.c.l.b16 %v3504
    %v3696 = vunpack.c.h.b16 %v3504
    %v3697 = vpack.c.b16 %v3577, %v3569
    %v3698 = vpack.c.b16 %v3578, %v3570
    %v3699 = vpack.c.b16 %v3579, %v3571
    %v3700 = vpack.c.b16 %v3580, %v3572
    %v3701 = vpack.c.b16 %v3581, %v3573
    %v3702 = vpack.c.b16 %v3582, %v3574
    %v3703 = vpack.c.b16 %v3583, %v3575
    %v3704 = vpack.c.b16 %v3584, %v3576
    %v3705 = vpack.c.b16 %v3593, %v3585
    %v3706 = vpack.c.b16 %v3594, %v3586
    %v3707 = vpack.c.b16 %v3595, %v3587
    %v3708 = vpack.c.b16 %v3596, %v3588
    %v3709 = vpack.c.b16 %v3597, %v3589
    %v3710 = vpack.c.b16 %v3598, %v3590
    %v3711 = vpack.c.b16 %v3599, %v3591
    %v3712 = vpack.c.b16 %v3600, %v3592
    %v3713 = vpack.c.b16 %v3609, %v3601
    %v3714 = vpack.c.b16 %v3610, %v3602
    %v3715 = vpack.c.b16 %v3611, %v3603
    %v3716 = vpack.c.b16 %v3612, %v3604
    %v3717 = vpack.c.b16 %v3613, %v3605
    %v3718 = vpack.c.b16 %v3614, %v3606
    %v3719 = vpack.c.b16 %v3615, %v3607
    %v3720 = vpack.c.b16 %v3616, %v3608
    %v3721 = vpack.c.b16 %v3625, %v3617
    %v3722 = vpack.c.b16 %v3626, %v3618
    %v3723 = vpack.c.b16 %v3627, %v3619
    %v3724 = vpack.c.b16 %v3628, %v3620
    %v3725 = vpack.c.b16 %v3629, %v3621
    %v3726 = vpack.c.b16 %v3630, %v3622
    %v3727 = vpack.c.b16 %v3631, %v3623
    %v3728 = vpack.c.b16 %v3632, %v3624
    %v3729 = vpack.c.b16 %v3641, %v3633
    %v3730 = vpack.c.b16 %v3642, %v3634
    %v3731 = vpack.c.b16 %v3643, %v3635
    %v3732 = vpack.c.b16 %v3644, %v3636
    %v3733 = vpack.c.b16 %v3645, %v3637
    %v3734 = vpack.c.b16 %v3646, %v3638
    %v3735 = vpack.c.b16 %v3647, %v3639
    %v3736 = vpack.c.b16 %v3648, %v3640
    %v3737 = vpack.c.b16 %v3657, %v3649
    %v3738 = vpack.c.b16 %v3658, %v3650
    %v3739 = vpack.c.b16 %v3659, %v3651
    %v3740 = vpack.c.b16 %v3660, %v3652
    %v3741 = vpack.c.b16 %v3661, %v3653
    %v3742 = vpack.c.b16 %v3662, %v3654
    %v3743 = vpack.c.b16 %v3663, %v3655
    %v3744 = vpack.c.b16 %v3664, %v3656
    %v3745 = vpack.c.b16 %v3673, %v3665
    %v3746 = vpack.c.b16 %v3674, %v3666
    %v3747 = vpack.c.b16 %v3675, %v3667
    %v3748 = vpack.c.b16 %v3676, %v3668
    %v3749 = vpack.c.b16 %v3677, %v3669
    %v3750 = vpack.c.b16 %v3678, %v3670
    %v3751 = vpack.c.b16 %v3679, %v3671
    %v3752 = vpack.c.b16 %v3680, %v3672
    %v3753 = vpack.c.b16 %v3689, %v3681
    %v3754 = vpack.c.b16 %v3690, %v3682
    %v3755 = vpack.c.b16 %v3691, %v3683
    %v3756 = vpack.c.b16 %v3692, %v3684
    %v3757 = vpack.c.b16 %v3693, %v3685
    %v3758 = vpack.c.b16 %v3694, %v3686
    %v3759 = vpack.c.b16 %v3695, %v3687
    %v3760 = vpack.c.b16 %v3696, %v3688
    %3825 = vmatprep.subr.bf16.mxu0 %v3754
    %3826 = vmatpush1.bf16.msra.mxu0 %v3753
    %3827 = vmatprep.subr.bf16.mxu0 %v3746
    %3828 = vmatpush1.bf16.msra.mxu0 %v3745
    %3829 = vmatprep.subr.bf16.mxu0 %v3738
    %3830 = vmatpush1.bf16.msra.mxu0 %v3737
    %3831 = vmatprep.subr.bf16.mxu0 %v3730
    %3832 = vmatpush1.bf16.msra.mxu0 %v3729
    %3833 = vmatprep.subr.bf16.mxu0 %v3722
    %3834 = vmatpush1.bf16.msra.mxu0 %v3721
    %3835 = vmatprep.subr.bf16.mxu0 %v3714
    %3836 = vmatpush1.bf16.msra.mxu0 %v3713
    %3837 = vmatprep.subr.bf16.mxu0 %v3706
    %3838 = vmatpush1.bf16.msra.mxu0 %v3705
    %3839 = vmatprep.subr.bf16.mxu0 %v3698
    %3840 = vmatpush1.bf16.msra.mxu0 %v3697
    %3841 = vmatprep.subr.bf16.mxu0 0
    %3842 = vmatpush2.bf16.msra.mxu0 0
    %3843 = vmatprep.subr.bf16.mxu0 0
    %3844 = vmatpush2.bf16.msra.mxu0 0
    %3845 = vmatprep.subr.bf16.mxu0 0
    %3846 = vmatpush2.bf16.msra.mxu0 0
    %3847 = vmatprep.subr.bf16.mxu0 0
    %3848 = vmatpush2.bf16.msra.mxu0 0
    %3849 = vmatprep.subr.bf16.mxu0 0
    %3850 = vmatpush2.bf16.msra.mxu0 0
    %3851 = vmatprep.subr.bf16.mxu0 0
    %3852 = vmatpush2.bf16.msra.mxu0 0
    %3853 = vmatprep.subr.bf16.mxu0 0
    %3854 = vmatpush2.bf16.msra.mxu0 0
    %3855 = vmatprep.subr.bf16.mxu0 0
    %3856 = vmatpush2.bf16.msra.mxu0 0
    %3857 = vmatprep.mubr.bf16.mxu0 0
    %3858 = vmatmul.mubr.bf16.gmra.mxu0 %v3439
    %v3859 = vpop.f32.mrf.mxu0
    %v3860 = vadd.f32 0.0, %v3859
    %v3861 = vpop.f32.mrf.mxu0
    %v3862 = vadd.f32 0.0, %v3861
    %v3863 = vpop.f32.mrf.mxu0
    %v3864 = vpop.f32.mrf.mxu0
    %3865 = vdwg.mxu0
    %3866 = vmatprep.subr.bf16.mxu0 %v3756
    %3867 = vmatpush1.bf16.msra.mxu0 %v3755
    %3868 = vmatprep.subr.bf16.mxu0 %v3748
    %3869 = vmatpush1.bf16.msra.mxu0 %v3747
    %3870 = vmatprep.subr.bf16.mxu0 %v3740
    %3871 = vmatpush1.bf16.msra.mxu0 %v3739
    %3872 = vmatprep.subr.bf16.mxu0 %v3732
    %3873 = vmatpush1.bf16.msra.mxu0 %v3731
    %3874 = vmatprep.subr.bf16.mxu0 %v3724
    %3875 = vmatpush1.bf16.msra.mxu0 %v3723
    %3876 = vmatprep.subr.bf16.mxu0 %v3716
    %3877 = vmatpush1.bf16.msra.mxu0 %v3715
    %3878 = vmatprep.subr.bf16.mxu0 %v3708
    %3879 = vmatpush1.bf16.msra.mxu0 %v3707
    %3880 = vmatprep.subr.bf16.mxu0 %v3700
    %3881 = vmatpush1.bf16.msra.mxu0 %v3699
    %3882 = vmatprep.subr.bf16.mxu0 0
    %3883 = vmatpush2.bf16.msra.mxu0 0
    %3884 = vmatprep.subr.bf16.mxu0 0
    %3885 = vmatpush2.bf16.msra.mxu0 0
    %3886 = vmatprep.subr.bf16.mxu0 0
    %3887 = vmatpush2.bf16.msra.mxu0 0
    %3888 = vmatprep.subr.bf16.mxu0 0
    %3889 = vmatpush2.bf16.msra.mxu0 0
    %3890 = vmatprep.subr.bf16.mxu0 0
    %3891 = vmatpush2.bf16.msra.mxu0 0
    %3892 = vmatprep.subr.bf16.mxu0 0
    %3893 = vmatpush2.bf16.msra.mxu0 0
    %3894 = vmatprep.subr.bf16.mxu0 0
    %3895 = vmatpush2.bf16.msra.mxu0 0
    %3896 = vmatprep.subr.bf16.mxu0 0
    %3897 = vmatpush2.bf16.msra.mxu0 0
    %3898 = vmatprep.mubr.bf16.mxu0 0
    %3899 = vmatmul.mubr.bf16.gmra.mxu0 %v3439
    %v3900 = vpop.f32.mrf.mxu0
    %v3901 = vadd.f32 0.0, %v3900
    %v3902 = vpop.f32.mrf.mxu0
    %v3903 = vadd.f32 0.0, %v3902
    %v3904 = vpop.f32.mrf.mxu0
    %v3905 = vpop.f32.mrf.mxu0
    %3906 = vdwg.mxu0
    %3907 = vmatprep.subr.bf16.mxu0 %v3758
    %3908 = vmatpush1.bf16.msra.mxu0 %v3757
    %3909 = vmatprep.subr.bf16.mxu0 %v3750
    %3910 = vmatpush1.bf16.msra.mxu0 %v3749
    %3911 = vmatprep.subr.bf16.mxu0 %v3742
    %3912 = vmatpush1.bf16.msra.mxu0 %v3741
    %3913 = vmatprep.subr.bf16.mxu0 %v3734
    %3914 = vmatpush1.bf16.msra.mxu0 %v3733
    %3915 = vmatprep.subr.bf16.mxu0 %v3726
    %3916 = vmatpush1.bf16.msra.mxu0 %v3725
    %3917 = vmatprep.subr.bf16.mxu0 %v3718
    %3918 = vmatpush1.bf16.msra.mxu0 %v3717
    %3919 = vmatprep.subr.bf16.mxu0 %v3710
    %3920 = vmatpush1.bf16.msra.mxu0 %v3709
    %3921 = vmatprep.subr.bf16.mxu0 %v3702
    %3922 = vmatpush1.bf16.msra.mxu0 %v3701
    %3923 = vmatprep.subr.bf16.mxu0 0
    %3924 = vmatpush2.bf16.msra.mxu0 0
    %3925 = vmatprep.subr.bf16.mxu0 0
    %3926 = vmatpush2.bf16.msra.mxu0 0
    %3927 = vmatprep.subr.bf16.mxu0 0
    %3928 = vmatpush2.bf16.msra.mxu0 0
    %3929 = vmatprep.subr.bf16.mxu0 0
    %3930 = vmatpush2.bf16.msra.mxu0 0
    %3931 = vmatprep.subr.bf16.mxu0 0
    %3932 = vmatpush2.bf16.msra.mxu0 0
    %3933 = vmatprep.subr.bf16.mxu0 0
    %3934 = vmatpush2.bf16.msra.mxu0 0
    %3935 = vmatprep.subr.bf16.mxu0 0
    %3936 = vmatpush2.bf16.msra.mxu0 0
    %3937 = vmatprep.subr.bf16.mxu0 0
    %3938 = vmatpush2.bf16.msra.mxu0 0
    %3939 = vmatprep.mubr.bf16.mxu0 0
    %3940 = vmatmul.mubr.bf16.gmra.mxu0 %v3439
    %v3941 = vpop.f32.mrf.mxu0
    %v3942 = vadd.f32 0.0, %v3941
    %v3943 = vpop.f32.mrf.mxu0
    %v3944 = vadd.f32 0.0, %v3943
    %v3945 = vpop.f32.mrf.mxu0
    %v3946 = vpop.f32.mrf.mxu0
    %3947 = vdwg.mxu0
    %3948 = vmatprep.subr.bf16.mxu0 %v3760
    %3949 = vmatpush1.bf16.msra.mxu0 %v3759
    %3950 = vmatprep.subr.bf16.mxu0 %v3752
    %3951 = vmatpush1.bf16.msra.mxu0 %v3751
    %3952 = vmatprep.subr.bf16.mxu0 %v3744
    %3953 = vmatpush1.bf16.msra.mxu0 %v3743
    %3954 = vmatprep.subr.bf16.mxu0 %v3736
    %3955 = vmatpush1.bf16.msra.mxu0 %v3735
    %3956 = vmatprep.subr.bf16.mxu0 %v3728
    %3957 = vmatpush1.bf16.msra.mxu0 %v3727
    %3958 = vmatprep.subr.bf16.mxu0 %v3720
    %3959 = vmatpush1.bf16.msra.mxu0 %v3719
    %3960 = vmatprep.subr.bf16.mxu0 %v3712
    %3961 = vmatpush1.bf16.msra.mxu0 %v3711
    %3962 = vmatprep.subr.bf16.mxu0 %v3704
    %3963 = vmatpush1.bf16.msra.mxu0 %v3703
    %3964 = vmatprep.subr.bf16.mxu0 0
    %3965 = vmatpush2.bf16.msra.mxu0 0
    %3966 = vmatprep.subr.bf16.mxu0 0
    %3967 = vmatpush2.bf16.msra.mxu0 0
    %3968 = vmatprep.subr.bf16.mxu0 0
    %3969 = vmatpush2.bf16.msra.mxu0 0
    %3970 = vmatprep.subr.bf16.mxu0 0
    %3971 = vmatpush2.bf16.msra.mxu0 0
    %3972 = vmatprep.subr.bf16.mxu0 0
    %3973 = vmatpush2.bf16.msra.mxu0 0
    %3974 = vmatprep.subr.bf16.mxu0 0
    %3975 = vmatpush2.bf16.msra.mxu0 0
    %3976 = vmatprep.subr.bf16.mxu0 0
    %3977 = vmatpush2.bf16.msra.mxu0 0
    %3978 = vmatprep.subr.bf16.mxu0 0
    %3979 = vmatpush2.bf16.msra.mxu0 0
    %3980 = vmatprep.mubr.bf16.mxu0 0
    %3981 = vmatmul.mubr.bf16.gmra.mxu0 %v3439
    %v3982 = vpop.f32.mrf.mxu0
    %v3983 = vadd.f32 0.0, %v3982
    %v3984 = vpop.f32.mrf.mxu0
    %v3985 = vadd.f32 0.0, %v3984
    %v3986 = vpop.f32.mrf.mxu0
    %v3987 = vpop.f32.mrf.mxu0
    %3988 = vdwg.mxu0
    %v3989 = vadd.f32 %v3359, %v3860
    %v3990 = vadd.f32 %v3360, %v3862
    %v3991 = vadd.f32 %v3361, %v3901
    %v3992 = vadd.f32 %v3362, %v3903
    %v3993 = vadd.f32 %v3363, %v3942
    %v3994 = vadd.f32 %v3364, %v3944
    %v3995 = vadd.f32 %v3365, %v3983
    %v3996 = vadd.f32 %v3366, %v3985
    %v3999 = vrot.slane %v2721, 6
    %v4000 = vrot.slane %v2728, 6
    %v4001 = vsel %vm1454, %v3999, %v4000
    %v4002 = vrot.slane %v2735, 6
    %v4003 = vrot.slane %v2742, 6
    %v4004 = vsel %vm1454, %v4002, %v4003
    %v4007 = vsel %vm201, %v4001, 0.0
    %v4008 = vrot.slane %v4007, 4
    %v4009 = vadd.f32 %v4007, %v4008
    %v4010 = vrot.slane %v4009, 2
    %v4011 = vadd.f32 %v4009, %v4010
    %v4012 = vrot.slane %v4011, 1
    %v4013 = vadd.f32 %v4011, %v4012
    %v4014 = vsel %vm201, %v4004, 0.0
    %v4015 = vrot.slane %v4014, 4
    %v4016 = vadd.f32 %v4014, %v4015
    %v4017 = vrot.slane %v4016, 2
    %v4018 = vadd.f32 %v4016, %v4017
    %v4019 = vrot.slane %v4018, 1
    %v4020 = vadd.f32 %v4018, %v4019
    %v4021 = vpack.c.bf16 %v4013, %v4013
    %v4022 = vpack.c.bf16 %v4020, %v4020
    %v4025 = vunpack.c.l.b16 %v4021
    %v4026 = vunpack.c.l.b16 %v4022
    %v4027 = vsel %vm228, %v4026, %v4025
    %v4028 = vpack.c.b16 %v4027, %v4027
    %v4030 = vsel %vm163, %v4028, 0
    %4032 = vmatprep.subr.bf16.mxu0 0
    %4033 = vmatpush1.bf16.msra.mxu0 0
    %4034 = vmatprep.subr.bf16.mxu0 0
    %4035 = vmatpush1.bf16.msra.mxu0 0
    %4036 = vmatprep.subr.bf16.mxu0 0
    %4037 = vmatpush1.bf16.msra.mxu0 0
    %4038 = vmatprep.subr.bf16.mxu0 0
    %4039 = vmatpush1.bf16.msra.mxu0 0
    %4040 = vmatprep.subr.bf16.mxu0 0
    %4041 = vmatpush1.bf16.msra.mxu0 0
    %4042 = vmatprep.subr.bf16.mxu0 0
    %4043 = vmatpush1.bf16.msra.mxu0 0
    %4044 = vmatprep.subr.bf16.mxu0 0
    %4045 = vmatpush1.bf16.msra.mxu0 0
    %4046 = vmatprep.subr.bf16.mxu0 0
    %4047 = vmatpush1.bf16.msra.mxu0 %v235
    %4048 = vmatprep.subr.bf16.mxu0 0
    %4049 = vmatpush2.bf16.msra.mxu0 0
    %4050 = vmatprep.subr.bf16.mxu0 0
    %4051 = vmatpush2.bf16.msra.mxu0 0
    %4052 = vmatprep.subr.bf16.mxu0 0
    %4053 = vmatpush2.bf16.msra.mxu0 0
    %4054 = vmatprep.subr.bf16.mxu0 0
    %4055 = vmatpush2.bf16.msra.mxu0 0
    %4056 = vmatprep.subr.bf16.mxu0 0
    %4057 = vmatpush2.bf16.msra.mxu0 0
    %4058 = vmatprep.subr.bf16.mxu0 0
    %4059 = vmatpush2.bf16.msra.mxu0 0
    %4060 = vmatprep.subr.bf16.mxu0 0
    %4061 = vmatpush2.bf16.msra.mxu0 0
    %4062 = vmatprep.subr.bf16.mxu0 0
    %4063 = vmatpush2.bf16.msra.mxu0 0
    %4064 = vmatprep.mubr.bf16.mxu0 0
    %4065 = vmatmul.mubr.bf16.gmra.mxu0 %v4030
    %v4066 = vpop.f32.mrf.mxu0
    %v4067 = vadd.f32 %v222, %v4066
    %v4068 = vpop.f32.mrf.mxu0
    %v4069 = vpop.f32.mrf.mxu0
    %v4070 = vpop.f32.mrf.mxu0
    %4071 = vdwg.mxu0
    %v4072 = vmax.f32 %v4067, 0.0
    %v4073 = vpack.c.bf16 %v4072, %v4072
    %s4074 = scalar_lea.vmem [#allocation7], 3072
    %v4075 = vld [vmem:[%s4074] sm:$0xff]
    %v4076 = vld [vmem:[%s4074 + $0x8] sm:$0xff]
    %v4077 = vld [vmem:[%s4074 + $0x10] sm:$0xff]
    %v4078 = vld [vmem:[%s4074 + $0x18] sm:$0xff]
    %v4079 = vld [vmem:[%s4074 + $0x20] sm:$0xff]
    %v4080 = vld [vmem:[%s4074 + $0x28] sm:$0xff]
    %v4081 = vld [vmem:[%s4074 + $0x30] sm:$0xff]
    %v4082 = vld [vmem:[%s4074 + $0x38] sm:$0xff]
    %v4083 = vld [vmem:[%s4074 + $0x40] sm:$0xff]
    %v4084 = vld [vmem:[%s4074 + $0x48] sm:$0xff]
    %v4085 = vld [vmem:[%s4074 + $0x50] sm:$0xff]
    %v4086 = vld [vmem:[%s4074 + $0x58] sm:$0xff]
    %v4087 = vld [vmem:[%s4074 + $0x60] sm:$0xff]
    %v4088 = vld [vmem:[%s4074 + $0x68] sm:$0xff]
    %v4089 = vld [vmem:[%s4074 + $0x70] sm:$0xff]
    %v4090 = vld [vmem:[%s4074 + $0x78] sm:$0xff]
    %v4091 = vld [vmem:[%s4074 + $0x80] sm:$0xff]
    %v4092 = vld [vmem:[%s4074 + $0x88] sm:$0xff]
    %v4093 = vld [vmem:[%s4074 + $0x90] sm:$0xff]
    %v4094 = vld [vmem:[%s4074 + $0x98] sm:$0xff]
    %v4095 = vld [vmem:[%s4074 + $0xa0] sm:$0xff]
    %v4096 = vld [vmem:[%s4074 + $0xa8] sm:$0xff]
    %v4097 = vld [vmem:[%s4074 + $0xb0] sm:$0xff]
    %v4098 = vld [vmem:[%s4074 + $0xb8] sm:$0xff]
    %v4099 = vld [vmem:[%s4074 + $0xc0] sm:$0xff]
    %v4100 = vld [vmem:[%s4074 + $0xc8] sm:$0xff]
    %v4101 = vld [vmem:[%s4074 + $0xd0] sm:$0xff]
    %v4102 = vld [vmem:[%s4074 + $0xd8] sm:$0xff]
    %v4103 = vld [vmem:[%s4074 + $0xe0] sm:$0xff]
    %v4104 = vld [vmem:[%s4074 + $0xe8] sm:$0xff]
    %v4105 = vld [vmem:[%s4074 + $0xf0] sm:$0xff]
    %v4106 = vld [vmem:[%s4074 + $0xf8] sm:$0xff]
    %v4107 = vld [vmem:[%s4074 + $0x100] sm:$0xff]
    %v4108 = vld [vmem:[%s4074 + $0x108] sm:$0xff]
    %v4109 = vld [vmem:[%s4074 + $0x110] sm:$0xff]
    %v4110 = vld [vmem:[%s4074 + $0x118] sm:$0xff]
    %v4111 = vld [vmem:[%s4074 + $0x120] sm:$0xff]
    %v4112 = vld [vmem:[%s4074 + $0x128] sm:$0xff]
    %v4113 = vld [vmem:[%s4074 + $0x130] sm:$0xff]
    %v4114 = vld [vmem:[%s4074 + $0x138] sm:$0xff]
    %v4115 = vld [vmem:[%s4074 + $0x140] sm:$0xff]
    %v4116 = vld [vmem:[%s4074 + $0x148] sm:$0xff]
    %v4117 = vld [vmem:[%s4074 + $0x150] sm:$0xff]
    %v4118 = vld [vmem:[%s4074 + $0x158] sm:$0xff]
    %v4119 = vld [vmem:[%s4074 + $0x160] sm:$0xff]
    %v4120 = vld [vmem:[%s4074 + $0x168] sm:$0xff]
    %v4121 = vld [vmem:[%s4074 + $0x170] sm:$0xff]
    %v4122 = vld [vmem:[%s4074 + $0x178] sm:$0xff]
    %v4123 = vld [vmem:[%s4074 + $0x180] sm:$0xff]
    %v4124 = vld [vmem:[%s4074 + $0x188] sm:$0xff]
    %v4125 = vld [vmem:[%s4074 + $0x190] sm:$0xff]
    %v4126 = vld [vmem:[%s4074 + $0x198] sm:$0xff]
    %v4127 = vld [vmem:[%s4074 + $0x1a0] sm:$0xff]
    %v4128 = vld [vmem:[%s4074 + $0x1a8] sm:$0xff]
    %v4129 = vld [vmem:[%s4074 + $0x1b0] sm:$0xff]
    %v4130 = vld [vmem:[%s4074 + $0x1b8] sm:$0xff]
    %v4131 = vld [vmem:[%s4074 + $0x1c0] sm:$0xff]
    %v4132 = vld [vmem:[%s4074 + $0x1c8] sm:$0xff]
    %v4133 = vld [vmem:[%s4074 + $0x1d0] sm:$0xff]
    %v4134 = vld [vmem:[%s4074 + $0x1d8] sm:$0xff]
    %v4135 = vld [vmem:[%s4074 + $0x1e0] sm:$0xff]
    %v4136 = vld [vmem:[%s4074 + $0x1e8] sm:$0xff]
    %v4137 = vld [vmem:[%s4074 + $0x1f0] sm:$0xff]
    %v4138 = vld [vmem:[%s4074 + $0x1f8] sm:$0xff]
    %v4203 = vunpack.c.l.b16 %v4075
    %v4204 = vunpack.c.h.b16 %v4075
    %v4205 = vunpack.c.l.b16 %v4076
    %v4206 = vunpack.c.h.b16 %v4076
    %v4207 = vunpack.c.l.b16 %v4077
    %v4208 = vunpack.c.h.b16 %v4077
    %v4209 = vunpack.c.l.b16 %v4078
    %v4210 = vunpack.c.h.b16 %v4078
    %v4211 = vunpack.c.l.b16 %v4079
    %v4212 = vunpack.c.h.b16 %v4079
    %v4213 = vunpack.c.l.b16 %v4080
    %v4214 = vunpack.c.h.b16 %v4080
    %v4215 = vunpack.c.l.b16 %v4081
    %v4216 = vunpack.c.h.b16 %v4081
    %v4217 = vunpack.c.l.b16 %v4082
    %v4218 = vunpack.c.h.b16 %v4082
    %v4219 = vunpack.c.l.b16 %v4083
    %v4220 = vunpack.c.h.b16 %v4083
    %v4221 = vunpack.c.l.b16 %v4084
    %v4222 = vunpack.c.h.b16 %v4084
    %v4223 = vunpack.c.l.b16 %v4085
    %v4224 = vunpack.c.h.b16 %v4085
    %v4225 = vunpack.c.l.b16 %v4086
    %v4226 = vunpack.c.h.b16 %v4086
    %v4227 = vunpack.c.l.b16 %v4087
    %v4228 = vunpack.c.h.b16 %v4087
    %v4229 = vunpack.c.l.b16 %v4088
    %v4230 = vunpack.c.h.b16 %v4088
    %v4231 = vunpack.c.l.b16 %v4089
    %v4232 = vunpack.c.h.b16 %v4089
    %v4233 = vunpack.c.l.b16 %v4090
    %v4234 = vunpack.c.h.b16 %v4090
    %v4235 = vunpack.c.l.b16 %v4091
    %v4236 = vunpack.c.h.b16 %v4091
    %v4237 = vunpack.c.l.b16 %v4092
    %v4238 = vunpack.c.h.b16 %v4092
    %v4239 = vunpack.c.l.b16 %v4093
    %v4240 = vunpack.c.h.b16 %v4093
    %v4241 = vunpack.c.l.b16 %v4094
    %v4242 = vunpack.c.h.b16 %v4094
    %v4243 = vunpack.c.l.b16 %v4095
    %v4244 = vunpack.c.h.b16 %v4095
    %v4245 = vunpack.c.l.b16 %v4096
    %v4246 = vunpack.c.h.b16 %v4096
    %v4247 = vunpack.c.l.b16 %v4097
    %v4248 = vunpack.c.h.b16 %v4097
    %v4249 = vunpack.c.l.b16 %v4098
    %v4250 = vunpack.c.h.b16 %v4098
    %v4251 = vunpack.c.l.b16 %v4099
    %v4252 = vunpack.c.h.b16 %v4099
    %v4253 = vunpack.c.l.b16 %v4100
    %v4254 = vunpack.c.h.b16 %v4100
    %v4255 = vunpack.c.l.b16 %v4101
    %v4256 = vunpack.c.h.b16 %v4101
    %v4257 = vunpack.c.l.b16 %v4102
    %v4258 = vunpack.c.h.b16 %v4102
    %v4259 = vunpack.c.l.b16 %v4103
    %v4260 = vunpack.c.h.b16 %v4103
    %v4261 = vunpack.c.l.b16 %v4104
    %v4262 = vunpack.c.h.b16 %v4104
    %v4263 = vunpack.c.l.b16 %v4105
    %v4264 = vunpack.c.h.b16 %v4105
    %v4265 = vunpack.c.l.b16 %v4106
    %v4266 = vunpack.c.h.b16 %v4106
    %v4267 = vunpack.c.l.b16 %v4107
    %v4268 = vunpack.c.h.b16 %v4107
    %v4269 = vunpack.c.l.b16 %v4108
    %v4270 = vunpack.c.h.b16 %v4108
    %v4271 = vunpack.c.l.b16 %v4109
    %v4272 = vunpack.c.h.b16 %v4109
    %v4273 = vunpack.c.l.b16 %v4110
    %v4274 = vunpack.c.h.b16 %v4110
    %v4275 = vunpack.c.l.b16 %v4111
    %v4276 = vunpack.c.h.b16 %v4111
    %v4277 = vunpack.c.l.b16 %v4112
    %v4278 = vunpack.c.h.b16 %v4112
    %v4279 = vunpack.c.l.b16 %v4113
    %v4280 = vunpack.c.h.b16 %v4113
    %v4281 = vunpack.c.l.b16 %v4114
    %v4282 = vunpack.c.h.b16 %v4114
    %v4283 = vunpack.c.l.b16 %v4115
    %v4284 = vunpack.c.h.b16 %v4115
    %v4285 = vunpack.c.l.b16 %v4116
    %v4286 = vunpack.c.h.b16 %v4116
    %v4287 = vunpack.c.l.b16 %v4117
    %v4288 = vunpack.c.h.b16 %v4117
    %v4289 = vunpack.c.l.b16 %v4118
    %v4290 = vunpack.c.h.b16 %v4118
    %v4291 = vunpack.c.l.b16 %v4119
    %v4292 = vunpack.c.h.b16 %v4119
    %v4293 = vunpack.c.l.b16 %v4120
    %v4294 = vunpack.c.h.b16 %v4120
    %v4295 = vunpack.c.l.b16 %v4121
    %v4296 = vunpack.c.h.b16 %v4121
    %v4297 = vunpack.c.l.b16 %v4122
    %v4298 = vunpack.c.h.b16 %v4122
    %v4299 = vunpack.c.l.b16 %v4123
    %v4300 = vunpack.c.h.b16 %v4123
    %v4301 = vunpack.c.l.b16 %v4124
    %v4302 = vunpack.c.h.b16 %v4124
    %v4303 = vunpack.c.l.b16 %v4125
    %v4304 = vunpack.c.h.b16 %v4125
    %v4305 = vunpack.c.l.b16 %v4126
    %v4306 = vunpack.c.h.b16 %v4126
    %v4307 = vunpack.c.l.b16 %v4127
    %v4308 = vunpack.c.h.b16 %v4127
    %v4309 = vunpack.c.l.b16 %v4128
    %v4310 = vunpack.c.h.b16 %v4128
    %v4311 = vunpack.c.l.b16 %v4129
    %v4312 = vunpack.c.h.b16 %v4129
    %v4313 = vunpack.c.l.b16 %v4130
    %v4314 = vunpack.c.h.b16 %v4130
    %v4315 = vunpack.c.l.b16 %v4131
    %v4316 = vunpack.c.h.b16 %v4131
    %v4317 = vunpack.c.l.b16 %v4132
    %v4318 = vunpack.c.h.b16 %v4132
    %v4319 = vunpack.c.l.b16 %v4133
    %v4320 = vunpack.c.h.b16 %v4133
    %v4321 = vunpack.c.l.b16 %v4134
    %v4322 = vunpack.c.h.b16 %v4134
    %v4323 = vunpack.c.l.b16 %v4135
    %v4324 = vunpack.c.h.b16 %v4135
    %v4325 = vunpack.c.l.b16 %v4136
    %v4326 = vunpack.c.h.b16 %v4136
    %v4327 = vunpack.c.l.b16 %v4137
    %v4328 = vunpack.c.h.b16 %v4137
    %v4329 = vunpack.c.l.b16 %v4138
    %v4330 = vunpack.c.h.b16 %v4138
    %v4331 = vpack.c.b16 %v4211, %v4203
    %v4332 = vpack.c.b16 %v4212, %v4204
    %v4333 = vpack.c.b16 %v4213, %v4205
    %v4334 = vpack.c.b16 %v4214, %v4206
    %v4335 = vpack.c.b16 %v4215, %v4207
    %v4336 = vpack.c.b16 %v4216, %v4208
    %v4337 = vpack.c.b16 %v4217, %v4209
    %v4338 = vpack.c.b16 %v4218, %v4210
    %v4339 = vpack.c.b16 %v4227, %v4219
    %v4340 = vpack.c.b16 %v4228, %v4220
    %v4341 = vpack.c.b16 %v4229, %v4221
    %v4342 = vpack.c.b16 %v4230, %v4222
    %v4343 = vpack.c.b16 %v4231, %v4223
    %v4344 = vpack.c.b16 %v4232, %v4224
    %v4345 = vpack.c.b16 %v4233, %v4225
    %v4346 = vpack.c.b16 %v4234, %v4226
    %v4347 = vpack.c.b16 %v4243, %v4235
    %v4348 = vpack.c.b16 %v4244, %v4236
    %v4349 = vpack.c.b16 %v4245, %v4237
    %v4350 = vpack.c.b16 %v4246, %v4238
    %v4351 = vpack.c.b16 %v4247, %v4239
    %v4352 = vpack.c.b16 %v4248, %v4240
    %v4353 = vpack.c.b16 %v4249, %v4241
    %v4354 = vpack.c.b16 %v4250, %v4242
    %v4355 = vpack.c.b16 %v4259, %v4251
    %v4356 = vpack.c.b16 %v4260, %v4252
    %v4357 = vpack.c.b16 %v4261, %v4253
    %v4358 = vpack.c.b16 %v4262, %v4254
    %v4359 = vpack.c.b16 %v4263, %v4255
    %v4360 = vpack.c.b16 %v4264, %v4256
    %v4361 = vpack.c.b16 %v4265, %v4257
    %v4362 = vpack.c.b16 %v4266, %v4258
    %v4363 = vpack.c.b16 %v4275, %v4267
    %v4364 = vpack.c.b16 %v4276, %v4268
    %v4365 = vpack.c.b16 %v4277, %v4269
    %v4366 = vpack.c.b16 %v4278, %v4270
    %v4367 = vpack.c.b16 %v4279, %v4271
    %v4368 = vpack.c.b16 %v4280, %v4272
    %v4369 = vpack.c.b16 %v4281, %v4273
    %v4370 = vpack.c.b16 %v4282, %v4274
    %v4371 = vpack.c.b16 %v4291, %v4283
    %v4372 = vpack.c.b16 %v4292, %v4284
    %v4373 = vpack.c.b16 %v4293, %v4285
    %v4374 = vpack.c.b16 %v4294, %v4286
    %v4375 = vpack.c.b16 %v4295, %v4287
    %v4376 = vpack.c.b16 %v4296, %v4288
    %v4377 = vpack.c.b16 %v4297, %v4289
    %v4378 = vpack.c.b16 %v4298, %v4290
    %v4379 = vpack.c.b16 %v4307, %v4299
    %v4380 = vpack.c.b16 %v4308, %v4300
    %v4381 = vpack.c.b16 %v4309, %v4301
    %v4382 = vpack.c.b16 %v4310, %v4302
    %v4383 = vpack.c.b16 %v4311, %v4303
    %v4384 = vpack.c.b16 %v4312, %v4304
    %v4385 = vpack.c.b16 %v4313, %v4305
    %v4386 = vpack.c.b16 %v4314, %v4306
    %v4387 = vpack.c.b16 %v4323, %v4315
    %v4388 = vpack.c.b16 %v4324, %v4316
    %v4389 = vpack.c.b16 %v4325, %v4317
    %v4390 = vpack.c.b16 %v4326, %v4318
    %v4391 = vpack.c.b16 %v4327, %v4319
    %v4392 = vpack.c.b16 %v4328, %v4320
    %v4393 = vpack.c.b16 %v4329, %v4321
    %v4394 = vpack.c.b16 %v4330, %v4322
    %4459 = vmatprep.subr.bf16.mxu0 %v4388
    %4460 = vmatpush1.bf16.msra.mxu0 %v4387
    %4461 = vmatprep.subr.bf16.mxu0 %v4380
    %4462 = vmatpush1.bf16.msra.mxu0 %v4379
    %4463 = vmatprep.subr.bf16.mxu0 %v4372
    %4464 = vmatpush1.bf16.msra.mxu0 %v4371
    %4465 = vmatprep.subr.bf16.mxu0 %v4364
    %4466 = vmatpush1.bf16.msra.mxu0 %v4363
    %4467 = vmatprep.subr.bf16.mxu0 %v4356
    %4468 = vmatpush1.bf16.msra.mxu0 %v4355
    %4469 = vmatprep.subr.bf16.mxu0 %v4348
    %4470 = vmatpush1.bf16.msra.mxu0 %v4347
    %4471 = vmatprep.subr.bf16.mxu0 %v4340
    %4472 = vmatpush1.bf16.msra.mxu0 %v4339
    %4473 = vmatprep.subr.bf16.mxu0 %v4332
    %4474 = vmatpush1.bf16.msra.mxu0 %v4331
    %4475 = vmatprep.subr.bf16.mxu0 0
    %4476 = vmatpush2.bf16.msra.mxu0 0
    %4477 = vmatprep.subr.bf16.mxu0 0
    %4478 = vmatpush2.bf16.msra.mxu0 0
    %4479 = vmatprep.subr.bf16.mxu0 0
    %4480 = vmatpush2.bf16.msra.mxu0 0
    %4481 = vmatprep.subr.bf16.mxu0 0
    %4482 = vmatpush2.bf16.msra.mxu0 0
    %4483 = vmatprep.subr.bf16.mxu0 0
    %4484 = vmatpush2.bf16.msra.mxu0 0
    %4485 = vmatprep.subr.bf16.mxu0 0
    %4486 = vmatpush2.bf16.msra.mxu0 0
    %4487 = vmatprep.subr.bf16.mxu0 0
    %4488 = vmatpush2.bf16.msra.mxu0 0
    %4489 = vmatprep.subr.bf16.mxu0 0
    %4490 = vmatpush2.bf16.msra.mxu0 0
    %4491 = vmatprep.mubr.bf16.mxu0 0
    %4492 = vmatmul.mubr.bf16.gmra.mxu0 %v4073
    %v4493 = vpop.f32.mrf.mxu0
    %v4494 = vadd.f32 0.0, %v4493
    %v4495 = vpop.f32.mrf.mxu0
    %v4496 = vadd.f32 0.0, %v4495
    %v4497 = vpop.f32.mrf.mxu0
    %v4498 = vpop.f32.mrf.mxu0
    %4499 = vdwg.mxu0
    %4500 = vmatprep.subr.bf16.mxu0 %v4390
    %4501 = vmatpush1.bf16.msra.mxu0 %v4389
    %4502 = vmatprep.subr.bf16.mxu0 %v4382
    %4503 = vmatpush1.bf16.msra.mxu0 %v4381
    %4504 = vmatprep.subr.bf16.mxu0 %v4374
    %4505 = vmatpush1.bf16.msra.mxu0 %v4373
    %4506 = vmatprep.subr.bf16.mxu0 %v4366
    %4507 = vmatpush1.bf16.msra.mxu0 %v4365
    %4508 = vmatprep.subr.bf16.mxu0 %v4358
    %4509 = vmatpush1.bf16.msra.mxu0 %v4357
    %4510 = vmatprep.subr.bf16.mxu0 %v4350
    %4511 = vmatpush1.bf16.msra.mxu0 %v4349
    %4512 = vmatprep.subr.bf16.mxu0 %v4342
    %4513 = vmatpush1.bf16.msra.mxu0 %v4341
    %4514 = vmatprep.subr.bf16.mxu0 %v4334
    %4515 = vmatpush1.bf16.msra.mxu0 %v4333
    %4516 = vmatprep.subr.bf16.mxu0 0
    %4517 = vmatpush2.bf16.msra.mxu0 0
    %4518 = vmatprep.subr.bf16.mxu0 0
    %4519 = vmatpush2.bf16.msra.mxu0 0
    %4520 = vmatprep.subr.bf16.mxu0 0
    %4521 = vmatpush2.bf16.msra.mxu0 0
    %4522 = vmatprep.subr.bf16.mxu0 0
    %4523 = vmatpush2.bf16.msra.mxu0 0
    %4524 = vmatprep.subr.bf16.mxu0 0
    %4525 = vmatpush2.bf16.msra.mxu0 0
    %4526 = vmatprep.subr.bf16.mxu0 0
    %4527 = vmatpush2.bf16.msra.mxu0 0
    %4528 = vmatprep.subr.bf16.mxu0 0
    %4529 = vmatpush2.bf16.msra.mxu0 0
    %4530 = vmatprep.subr.bf16.mxu0 0
    %4531 = vmatpush2.bf16.msra.mxu0 0
    %4532 = vmatprep.mubr.bf16.mxu0 0
    %4533 = vmatmul.mubr.bf16.gmra.mxu0 %v4073
    %v4534 = vpop.f32.mrf.mxu0
    %v4535 = vadd.f32 0.0, %v4534
    %v4536 = vpop.f32.mrf.mxu0
    %v4537 = vadd.f32 0.0, %v4536
    %v4538 = vpop.f32.mrf.mxu0
    %v4539 = vpop.f32.mrf.mxu0
    %4540 = vdwg.mxu0
    %4541 = vmatprep.subr.bf16.mxu0 %v4392
    %4542 = vmatpush1.bf16.msra.mxu0 %v4391
    %4543 = vmatprep.subr.bf16.mxu0 %v4384
    %4544 = vmatpush1.bf16.msra.mxu0 %v4383
    %4545 = vmatprep.subr.bf16.mxu0 %v4376
    %4546 = vmatpush1.bf16.msra.mxu0 %v4375
    %4547 = vmatprep.subr.bf16.mxu0 %v4368
    %4548 = vmatpush1.bf16.msra.mxu0 %v4367
    %4549 = vmatprep.subr.bf16.mxu0 %v4360
    %4550 = vmatpush1.bf16.msra.mxu0 %v4359
    %4551 = vmatprep.subr.bf16.mxu0 %v4352
    %4552 = vmatpush1.bf16.msra.mxu0 %v4351
    %4553 = vmatprep.subr.bf16.mxu0 %v4344
    %4554 = vmatpush1.bf16.msra.mxu0 %v4343
    %4555 = vmatprep.subr.bf16.mxu0 %v4336
    %4556 = vmatpush1.bf16.msra.mxu0 %v4335
    %4557 = vmatprep.subr.bf16.mxu0 0
    %4558 = vmatpush2.bf16.msra.mxu0 0
    %4559 = vmatprep.subr.bf16.mxu0 0
    %4560 = vmatpush2.bf16.msra.mxu0 0
    %4561 = vmatprep.subr.bf16.mxu0 0
    %4562 = vmatpush2.bf16.msra.mxu0 0
    %4563 = vmatprep.subr.bf16.mxu0 0
    %4564 = vmatpush2.bf16.msra.mxu0 0
    %4565 = vmatprep.subr.bf16.mxu0 0
    %4566 = vmatpush2.bf16.msra.mxu0 0
    %4567 = vmatprep.subr.bf16.mxu0 0
    %4568 = vmatpush2.bf16.msra.mxu0 0
    %4569 = vmatprep.subr.bf16.mxu0 0
    %4570 = vmatpush2.bf16.msra.mxu0 0
    %4571 = vmatprep.subr.bf16.mxu0 0
    %4572 = vmatpush2.bf16.msra.mxu0 0
    %4573 = vmatprep.mubr.bf16.mxu0 0
    %4574 = vmatmul.mubr.bf16.gmra.mxu0 %v4073
    %v4575 = vpop.f32.mrf.mxu0
    %v4576 = vadd.f32 0.0, %v4575
    %v4577 = vpop.f32.mrf.mxu0
    %v4578 = vadd.f32 0.0, %v4577
    %v4579 = vpop.f32.mrf.mxu0
    %v4580 = vpop.f32.mrf.mxu0
    %4581 = vdwg.mxu0
    %4582 = vmatprep.subr.bf16.mxu0 %v4394
    %4583 = vmatpush1.bf16.msra.mxu0 %v4393
    %4584 = vmatprep.subr.bf16.mxu0 %v4386
    %4585 = vmatpush1.bf16.msra.mxu0 %v4385
    %4586 = vmatprep.subr.bf16.mxu0 %v4378
    %4587 = vmatpush1.bf16.msra.mxu0 %v4377
    %4588 = vmatprep.subr.bf16.mxu0 %v4370
    %4589 = vmatpush1.bf16.msra.mxu0 %v4369
    %4590 = vmatprep.subr.bf16.mxu0 %v4362
    %4591 = vmatpush1.bf16.msra.mxu0 %v4361
    %4592 = vmatprep.subr.bf16.mxu0 %v4354
    %4593 = vmatpush1.bf16.msra.mxu0 %v4353
    %4594 = vmatprep.subr.bf16.mxu0 %v4346
    %4595 = vmatpush1.bf16.msra.mxu0 %v4345
    %4596 = vmatprep.subr.bf16.mxu0 %v4338
    %4597 = vmatpush1.bf16.msra.mxu0 %v4337
    %4598 = vmatprep.subr.bf16.mxu0 0
    %4599 = vmatpush2.bf16.msra.mxu0 0
    %4600 = vmatprep.subr.bf16.mxu0 0
    %4601 = vmatpush2.bf16.msra.mxu0 0
    %4602 = vmatprep.subr.bf16.mxu0 0
    %4603 = vmatpush2.bf16.msra.mxu0 0
    %4604 = vmatprep.subr.bf16.mxu0 0
    %4605 = vmatpush2.bf16.msra.mxu0 0
    %4606 = vmatprep.subr.bf16.mxu0 0
    %4607 = vmatpush2.bf16.msra.mxu0 0
    %4608 = vmatprep.subr.bf16.mxu0 0
    %4609 = vmatpush2.bf16.msra.mxu0 0
    %4610 = vmatprep.subr.bf16.mxu0 0
    %4611 = vmatpush2.bf16.msra.mxu0 0
    %4612 = vmatprep.subr.bf16.mxu0 0
    %4613 = vmatpush2.bf16.msra.mxu0 0
    %4614 = vmatprep.mubr.bf16.mxu0 0
    %4615 = vmatmul.mubr.bf16.gmra.mxu0 %v4073
    %v4616 = vpop.f32.mrf.mxu0
    %v4617 = vadd.f32 0.0, %v4616
    %v4618 = vpop.f32.mrf.mxu0
    %v4619 = vadd.f32 0.0, %v4618
    %v4620 = vpop.f32.mrf.mxu0
    %v4621 = vpop.f32.mrf.mxu0
    %4622 = vdwg.mxu0
    %v4623 = vadd.f32 %v3989, %v4494
    %v4624 = vadd.f32 %v3990, %v4496
    %v4625 = vadd.f32 %v3991, %v4535
    %v4626 = vadd.f32 %v3992, %v4537
    %v4627 = vadd.f32 %v3993, %v4576
    %v4628 = vadd.f32 %v3994, %v4578
    %v4629 = vadd.f32 %v3995, %v4617
    %v4630 = vadd.f32 %v3996, %v4619
    %v4631 = vrot.slane %v2728, 1
    %v4632 = vrot.slane %v2742, 1
    %v4635 = vsel %vm201, %v4631, 0.0
    %v4636 = vrot.slane %v4635, 4
    %v4637 = vadd.f32 %v4635, %v4636
    %v4638 = vrot.slane %v4637, 2
    %v4639 = vadd.f32 %v4637, %v4638
    %v4640 = vrot.slane %v4639, 1
    %v4641 = vadd.f32 %v4639, %v4640
    %v4642 = vsel %vm201, %v4632, 0.0
    %v4643 = vrot.slane %v4642, 4
    %v4644 = vadd.f32 %v4642, %v4643
    %v4645 = vrot.slane %v4644, 2
    %v4646 = vadd.f32 %v4644, %v4645
    %v4647 = vrot.slane %v4646, 1
    %v4648 = vadd.f32 %v4646, %v4647
    %v4649 = vpack.c.bf16 %v4641, %v4641
    %v4650 = vpack.c.bf16 %v4648, %v4648
    %v4653 = vunpack.c.l.b16 %v4649
    %v4654 = vunpack.c.l.b16 %v4650
    %v4655 = vsel %vm228, %v4654, %v4653
    %v4656 = vpack.c.b16 %v4655, %v4655
    %v4658 = vsel %vm163, %v4656, 0
    %4660 = vmatprep.subr.bf16.mxu0 0
    %4661 = vmatpush1.bf16.msra.mxu0 0
    %4662 = vmatprep.subr.bf16.mxu0 0
    %4663 = vmatpush1.bf16.msra.mxu0 0
    %4664 = vmatprep.subr.bf16.mxu0 0
    %4665 = vmatpush1.bf16.msra.mxu0 0
    %4666 = vmatprep.subr.bf16.mxu0 0
    %4667 = vmatpush1.bf16.msra.mxu0 0
    %4668 = vmatprep.subr.bf16.mxu0 0
    %4669 = vmatpush1.bf16.msra.mxu0 0
    %4670 = vmatprep.subr.bf16.mxu0 0
    %4671 = vmatpush1.bf16.msra.mxu0 0
    %4672 = vmatprep.subr.bf16.mxu0 0
    %4673 = vmatpush1.bf16.msra.mxu0 0
    %4674 = vmatprep.subr.bf16.mxu0 0
    %4675 = vmatpush1.bf16.msra.mxu0 %v235
    %4676 = vmatprep.subr.bf16.mxu0 0
    %4677 = vmatpush2.bf16.msra.mxu0 0
    %4678 = vmatprep.subr.bf16.mxu0 0
    %4679 = vmatpush2.bf16.msra.mxu0 0
    %4680 = vmatprep.subr.bf16.mxu0 0
    %4681 = vmatpush2.bf16.msra.mxu0 0
    %4682 = vmatprep.subr.bf16.mxu0 0
    %4683 = vmatpush2.bf16.msra.mxu0 0
    %4684 = vmatprep.subr.bf16.mxu0 0
    %4685 = vmatpush2.bf16.msra.mxu0 0
    %4686 = vmatprep.subr.bf16.mxu0 0
    %4687 = vmatpush2.bf16.msra.mxu0 0
    %4688 = vmatprep.subr.bf16.mxu0 0
    %4689 = vmatpush2.bf16.msra.mxu0 0
    %4690 = vmatprep.subr.bf16.mxu0 0
    %4691 = vmatpush2.bf16.msra.mxu0 0
    %4692 = vmatprep.mubr.bf16.mxu0 0
    %4693 = vmatmul.mubr.bf16.gmra.mxu0 %v4658
    %v4694 = vpop.f32.mrf.mxu0
    %v4695 = vadd.f32 %v222, %v4694
    %v4696 = vpop.f32.mrf.mxu0
    %v4697 = vpop.f32.mrf.mxu0
    %v4698 = vpop.f32.mrf.mxu0
    %4699 = vdwg.mxu0
    %v4700 = vmax.f32 %v4695, 0.0
    %v4701 = vpack.c.bf16 %v4700, %v4700
    %s4702 = scalar_lea.vmem [#allocation7], 3584
    %v4703 = vld [vmem:[%s4702] sm:$0xff]
    %v4704 = vld [vmem:[%s4702 + $0x8] sm:$0xff]
    %v4705 = vld [vmem:[%s4702 + $0x10] sm:$0xff]
    %v4706 = vld [vmem:[%s4702 + $0x18] sm:$0xff]
    %v4707 = vld [vmem:[%s4702 + $0x20] sm:$0xff]
    %v4708 = vld [vmem:[%s4702 + $0x28] sm:$0xff]
    %v4709 = vld [vmem:[%s4702 + $0x30] sm:$0xff]
    %v4710 = vld [vmem:[%s4702 + $0x38] sm:$0xff]
    %v4711 = vld [vmem:[%s4702 + $0x40] sm:$0xff]
    %v4712 = vld [vmem:[%s4702 + $0x48] sm:$0xff]
    %v4713 = vld [vmem:[%s4702 + $0x50] sm:$0xff]
    %v4714 = vld [vmem:[%s4702 + $0x58] sm:$0xff]
    %v4715 = vld [vmem:[%s4702 + $0x60] sm:$0xff]
    %v4716 = vld [vmem:[%s4702 + $0x68] sm:$0xff]
    %v4717 = vld [vmem:[%s4702 + $0x70] sm:$0xff]
    %v4718 = vld [vmem:[%s4702 + $0x78] sm:$0xff]
    %v4719 = vld [vmem:[%s4702 + $0x80] sm:$0xff]
    %v4720 = vld [vmem:[%s4702 + $0x88] sm:$0xff]
    %v4721 = vld [vmem:[%s4702 + $0x90] sm:$0xff]
    %v4722 = vld [vmem:[%s4702 + $0x98] sm:$0xff]
    %v4723 = vld [vmem:[%s4702 + $0xa0] sm:$0xff]
    %v4724 = vld [vmem:[%s4702 + $0xa8] sm:$0xff]
    %v4725 = vld [vmem:[%s4702 + $0xb0] sm:$0xff]
    %v4726 = vld [vmem:[%s4702 + $0xb8] sm:$0xff]
    %v4727 = vld [vmem:[%s4702 + $0xc0] sm:$0xff]
    %v4728 = vld [vmem:[%s4702 + $0xc8] sm:$0xff]
    %v4729 = vld [vmem:[%s4702 + $0xd0] sm:$0xff]
    %v4730 = vld [vmem:[%s4702 + $0xd8] sm:$0xff]
    %v4731 = vld [vmem:[%s4702 + $0xe0] sm:$0xff]
    %v4732 = vld [vmem:[%s4702 + $0xe8] sm:$0xff]
    %v4733 = vld [vmem:[%s4702 + $0xf0] sm:$0xff]
    %v4734 = vld [vmem:[%s4702 + $0xf8] sm:$0xff]
    %v4735 = vld [vmem:[%s4702 + $0x100] sm:$0xff]
    %v4736 = vld [vmem:[%s4702 + $0x108] sm:$0xff]
    %v4737 = vld [vmem:[%s4702 + $0x110] sm:$0xff]
    %v4738 = vld [vmem:[%s4702 + $0x118] sm:$0xff]
    %v4739 = vld [vmem:[%s4702 + $0x120] sm:$0xff]
    %v4740 = vld [vmem:[%s4702 + $0x128] sm:$0xff]
    %v4741 = vld [vmem:[%s4702 + $0x130] sm:$0xff]
    %v4742 = vld [vmem:[%s4702 + $0x138] sm:$0xff]
    %v4743 = vld [vmem:[%s4702 + $0x140] sm:$0xff]
    %v4744 = vld [vmem:[%s4702 + $0x148] sm:$0xff]
    %v4745 = vld [vmem:[%s4702 + $0x150] sm:$0xff]
    %v4746 = vld [vmem:[%s4702 + $0x158] sm:$0xff]
    %v4747 = vld [vmem:[%s4702 + $0x160] sm:$0xff]
    %v4748 = vld [vmem:[%s4702 + $0x168] sm:$0xff]
    %v4749 = vld [vmem:[%s4702 + $0x170] sm:$0xff]
    %v4750 = vld [vmem:[%s4702 + $0x178] sm:$0xff]
    %v4751 = vld [vmem:[%s4702 + $0x180] sm:$0xff]
    %v4752 = vld [vmem:[%s4702 + $0x188] sm:$0xff]
    %v4753 = vld [vmem:[%s4702 + $0x190] sm:$0xff]
    %v4754 = vld [vmem:[%s4702 + $0x198] sm:$0xff]
    %v4755 = vld [vmem:[%s4702 + $0x1a0] sm:$0xff]
    %v4756 = vld [vmem:[%s4702 + $0x1a8] sm:$0xff]
    %v4757 = vld [vmem:[%s4702 + $0x1b0] sm:$0xff]
    %v4758 = vld [vmem:[%s4702 + $0x1b8] sm:$0xff]
    %v4759 = vld [vmem:[%s4702 + $0x1c0] sm:$0xff]
    %v4760 = vld [vmem:[%s4702 + $0x1c8] sm:$0xff]
    %v4761 = vld [vmem:[%s4702 + $0x1d0] sm:$0xff]
    %v4762 = vld [vmem:[%s4702 + $0x1d8] sm:$0xff]
    %v4763 = vld [vmem:[%s4702 + $0x1e0] sm:$0xff]
    %v4764 = vld [vmem:[%s4702 + $0x1e8] sm:$0xff]
    %v4765 = vld [vmem:[%s4702 + $0x1f0] sm:$0xff]
    %v4766 = vld [vmem:[%s4702 + $0x1f8] sm:$0xff]
    %v4831 = vunpack.c.l.b16 %v4703
    %v4832 = vunpack.c.h.b16 %v4703
    %v4833 = vunpack.c.l.b16 %v4704
    %v4834 = vunpack.c.h.b16 %v4704
    %v4835 = vunpack.c.l.b16 %v4705
    %v4836 = vunpack.c.h.b16 %v4705
    %v4837 = vunpack.c.l.b16 %v4706
    %v4838 = vunpack.c.h.b16 %v4706
    %v4839 = vunpack.c.l.b16 %v4707
    %v4840 = vunpack.c.h.b16 %v4707
    %v4841 = vunpack.c.l.b16 %v4708
    %v4842 = vunpack.c.h.b16 %v4708
    %v4843 = vunpack.c.l.b16 %v4709
    %v4844 = vunpack.c.h.b16 %v4709
    %v4845 = vunpack.c.l.b16 %v4710
    %v4846 = vunpack.c.h.b16 %v4710
    %v4847 = vunpack.c.l.b16 %v4711
    %v4848 = vunpack.c.h.b16 %v4711
    %v4849 = vunpack.c.l.b16 %v4712
    %v4850 = vunpack.c.h.b16 %v4712
    %v4851 = vunpack.c.l.b16 %v4713
    %v4852 = vunpack.c.h.b16 %v4713
    %v4853 = vunpack.c.l.b16 %v4714
    %v4854 = vunpack.c.h.b16 %v4714
    %v4855 = vunpack.c.l.b16 %v4715
    %v4856 = vunpack.c.h.b16 %v4715
    %v4857 = vunpack.c.l.b16 %v4716
    %v4858 = vunpack.c.h.b16 %v4716
    %v4859 = vunpack.c.l.b16 %v4717
    %v4860 = vunpack.c.h.b16 %v4717
    %v4861 = vunpack.c.l.b16 %v4718
    %v4862 = vunpack.c.h.b16 %v4718
    %v4863 = vunpack.c.l.b16 %v4719
    %v4864 = vunpack.c.h.b16 %v4719
    %v4865 = vunpack.c.l.b16 %v4720
    %v4866 = vunpack.c.h.b16 %v4720
    %v4867 = vunpack.c.l.b16 %v4721
    %v4868 = vunpack.c.h.b16 %v4721
    %v4869 = vunpack.c.l.b16 %v4722
    %v4870 = vunpack.c.h.b16 %v4722
    %v4871 = vunpack.c.l.b16 %v4723
    %v4872 = vunpack.c.h.b16 %v4723
    %v4873 = vunpack.c.l.b16 %v4724
    %v4874 = vunpack.c.h.b16 %v4724
    %v4875 = vunpack.c.l.b16 %v4725
    %v4876 = vunpack.c.h.b16 %v4725
    %v4877 = vunpack.c.l.b16 %v4726
    %v4878 = vunpack.c.h.b16 %v4726
    %v4879 = vunpack.c.l.b16 %v4727
    %v4880 = vunpack.c.h.b16 %v4727
    %v4881 = vunpack.c.l.b16 %v4728
    %v4882 = vunpack.c.h.b16 %v4728
    %v4883 = vunpack.c.l.b16 %v4729
    %v4884 = vunpack.c.h.b16 %v4729
    %v4885 = vunpack.c.l.b16 %v4730
    %v4886 = vunpack.c.h.b16 %v4730
    %v4887 = vunpack.c.l.b16 %v4731
    %v4888 = vunpack.c.h.b16 %v4731
    %v4889 = vunpack.c.l.b16 %v4732
    %v4890 = vunpack.c.h.b16 %v4732
    %v4891 = vunpack.c.l.b16 %v4733
    %v4892 = vunpack.c.h.b16 %v4733
    %v4893 = vunpack.c.l.b16 %v4734
    %v4894 = vunpack.c.h.b16 %v4734
    %v4895 = vunpack.c.l.b16 %v4735
    %v4896 = vunpack.c.h.b16 %v4735
    %v4897 = vunpack.c.l.b16 %v4736
    %v4898 = vunpack.c.h.b16 %v4736
    %v4899 = vunpack.c.l.b16 %v4737
    %v4900 = vunpack.c.h.b16 %v4737
    %v4901 = vunpack.c.l.b16 %v4738
    %v4902 = vunpack.c.h.b16 %v4738
    %v4903 = vunpack.c.l.b16 %v4739
    %v4904 = vunpack.c.h.b16 %v4739
    %v4905 = vunpack.c.l.b16 %v4740
    %v4906 = vunpack.c.h.b16 %v4740
    %v4907 = vunpack.c.l.b16 %v4741
    %v4908 = vunpack.c.h.b16 %v4741
    %v4909 = vunpack.c.l.b16 %v4742
    %v4910 = vunpack.c.h.b16 %v4742
    %v4911 = vunpack.c.l.b16 %v4743
    %v4912 = vunpack.c.h.b16 %v4743
    %v4913 = vunpack.c.l.b16 %v4744
    %v4914 = vunpack.c.h.b16 %v4744
    %v4915 = vunpack.c.l.b16 %v4745
    %v4916 = vunpack.c.h.b16 %v4745
    %v4917 = vunpack.c.l.b16 %v4746
    %v4918 = vunpack.c.h.b16 %v4746
    %v4919 = vunpack.c.l.b16 %v4747
    %v4920 = vunpack.c.h.b16 %v4747
    %v4921 = vunpack.c.l.b16 %v4748
    %v4922 = vunpack.c.h.b16 %v4748
    %v4923 = vunpack.c.l.b16 %v4749
    %v4924 = vunpack.c.h.b16 %v4749
    %v4925 = vunpack.c.l.b16 %v4750
    %v4926 = vunpack.c.h.b16 %v4750
    %v4927 = vunpack.c.l.b16 %v4751
    %v4928 = vunpack.c.h.b16 %v4751
    %v4929 = vunpack.c.l.b16 %v4752
    %v4930 = vunpack.c.h.b16 %v4752
    %v4931 = vunpack.c.l.b16 %v4753
    %v4932 = vunpack.c.h.b16 %v4753
    %v4933 = vunpack.c.l.b16 %v4754
    %v4934 = vunpack.c.h.b16 %v4754
    %v4935 = vunpack.c.l.b16 %v4755
    %v4936 = vunpack.c.h.b16 %v4755
    %v4937 = vunpack.c.l.b16 %v4756
    %v4938 = vunpack.c.h.b16 %v4756
    %v4939 = vunpack.c.l.b16 %v4757
    %v4940 = vunpack.c.h.b16 %v4757
    %v4941 = vunpack.c.l.b16 %v4758
    %v4942 = vunpack.c.h.b16 %v4758
    %v4943 = vunpack.c.l.b16 %v4759
    %v4944 = vunpack.c.h.b16 %v4759
    %v4945 = vunpack.c.l.b16 %v4760
    %v4946 = vunpack.c.h.b16 %v4760
    %v4947 = vunpack.c.l.b16 %v4761
    %v4948 = vunpack.c.h.b16 %v4761
    %v4949 = vunpack.c.l.b16 %v4762
    %v4950 = vunpack.c.h.b16 %v4762
    %v4951 = vunpack.c.l.b16 %v4763
    %v4952 = vunpack.c.h.b16 %v4763
    %v4953 = vunpack.c.l.b16 %v4764
    %v4954 = vunpack.c.h.b16 %v4764
    %v4955 = vunpack.c.l.b16 %v4765
    %v4956 = vunpack.c.h.b16 %v4765
    %v4957 = vunpack.c.l.b16 %v4766
    %v4958 = vunpack.c.h.b16 %v4766
    %v4959 = vpack.c.b16 %v4839, %v4831
    %v4960 = vpack.c.b16 %v4840, %v4832
    %v4961 = vpack.c.b16 %v4841, %v4833
    %v4962 = vpack.c.b16 %v4842, %v4834
    %v4963 = vpack.c.b16 %v4843, %v4835
    %v4964 = vpack.c.b16 %v4844, %v4836
    %v4965 = vpack.c.b16 %v4845, %v4837
    %v4966 = vpack.c.b16 %v4846, %v4838
    %v4967 = vpack.c.b16 %v4855, %v4847
    %v4968 = vpack.c.b16 %v4856, %v4848
    %v4969 = vpack.c.b16 %v4857, %v4849
    %v4970 = vpack.c.b16 %v4858, %v4850
    %v4971 = vpack.c.b16 %v4859, %v4851
    %v4972 = vpack.c.b16 %v4860, %v4852
    %v4973 = vpack.c.b16 %v4861, %v4853
    %v4974 = vpack.c.b16 %v4862, %v4854
    %v4975 = vpack.c.b16 %v4871, %v4863
    %v4976 = vpack.c.b16 %v4872, %v4864
    %v4977 = vpack.c.b16 %v4873, %v4865
    %v4978 = vpack.c.b16 %v4874, %v4866
    %v4979 = vpack.c.b16 %v4875, %v4867
    %v4980 = vpack.c.b16 %v4876, %v4868
    %v4981 = vpack.c.b16 %v4877, %v4869
    %v4982 = vpack.c.b16 %v4878, %v4870
    %v4983 = vpack.c.b16 %v4887, %v4879
    %v4984 = vpack.c.b16 %v4888, %v4880
    %v4985 = vpack.c.b16 %v4889, %v4881
    %v4986 = vpack.c.b16 %v4890, %v4882
    %v4987 = vpack.c.b16 %v4891, %v4883
    %v4988 = vpack.c.b16 %v4892, %v4884
    %v4989 = vpack.c.b16 %v4893, %v4885
    %v4990 = vpack.c.b16 %v4894, %v4886
    %v4991 = vpack.c.b16 %v4903, %v4895
    %v4992 = vpack.c.b16 %v4904, %v4896
    %v4993 = vpack.c.b16 %v4905, %v4897
    %v4994 = vpack.c.b16 %v4906, %v4898
    %v4995 = vpack.c.b16 %v4907, %v4899
    %v4996 = vpack.c.b16 %v4908, %v4900
    %v4997 = vpack.c.b16 %v4909, %v4901
    %v4998 = vpack.c.b16 %v4910, %v4902
    %v4999 = vpack.c.b16 %v4919, %v4911
    %v5000 = vpack.c.b16 %v4920, %v4912
    %v5001 = vpack.c.b16 %v4921, %v4913
    %v5002 = vpack.c.b16 %v4922, %v4914
    %v5003 = vpack.c.b16 %v4923, %v4915
    %v5004 = vpack.c.b16 %v4924, %v4916
    %v5005 = vpack.c.b16 %v4925, %v4917
    %v5006 = vpack.c.b16 %v4926, %v4918
    %v5007 = vpack.c.b16 %v4935, %v4927
    %v5008 = vpack.c.b16 %v4936, %v4928
    %v5009 = vpack.c.b16 %v4937, %v4929
    %v5010 = vpack.c.b16 %v4938, %v4930
    %v5011 = vpack.c.b16 %v4939, %v4931
    %v5012 = vpack.c.b16 %v4940, %v4932
    %v5013 = vpack.c.b16 %v4941, %v4933
    %v5014 = vpack.c.b16 %v4942, %v4934
    %v5015 = vpack.c.b16 %v4951, %v4943
    %v5016 = vpack.c.b16 %v4952, %v4944
    %v5017 = vpack.c.b16 %v4953, %v4945
    %v5018 = vpack.c.b16 %v4954, %v4946
    %v5019 = vpack.c.b16 %v4955, %v4947
    %v5020 = vpack.c.b16 %v4956, %v4948
    %v5021 = vpack.c.b16 %v4957, %v4949
    %v5022 = vpack.c.b16 %v4958, %v4950
    %5087 = vmatprep.subr.bf16.mxu0 %v5016
    %5088 = vmatpush1.bf16.msra.mxu0 %v5015
    %5089 = vmatprep.subr.bf16.mxu0 %v5008
    %5090 = vmatpush1.bf16.msra.mxu0 %v5007
    %5091 = vmatprep.subr.bf16.mxu0 %v5000
    %5092 = vmatpush1.bf16.msra.mxu0 %v4999
    %5093 = vmatprep.subr.bf16.mxu0 %v4992
    %5094 = vmatpush1.bf16.msra.mxu0 %v4991
    %5095 = vmatprep.subr.bf16.mxu0 %v4984
    %5096 = vmatpush1.bf16.msra.mxu0 %v4983
    %5097 = vmatprep.subr.bf16.mxu0 %v4976
    %5098 = vmatpush1.bf16.msra.mxu0 %v4975
    %5099 = vmatprep.subr.bf16.mxu0 %v4968
    %5100 = vmatpush1.bf16.msra.mxu0 %v4967
    %5101 = vmatprep.subr.bf16.mxu0 %v4960
    %5102 = vmatpush1.bf16.msra.mxu0 %v4959
    %5103 = vmatprep.subr.bf16.mxu0 0
    %5104 = vmatpush2.bf16.msra.mxu0 0
    %5105 = vmatprep.subr.bf16.mxu0 0
    %5106 = vmatpush2.bf16.msra.mxu0 0
    %5107 = vmatprep.subr.bf16.mxu0 0
    %5108 = vmatpush2.bf16.msra.mxu0 0
    %5109 = vmatprep.subr.bf16.mxu0 0
    %5110 = vmatpush2.bf16.msra.mxu0 0
    %5111 = vmatprep.subr.bf16.mxu0 0
    %5112 = vmatpush2.bf16.msra.mxu0 0
    %5113 = vmatprep.subr.bf16.mxu0 0
    %5114 = vmatpush2.bf16.msra.mxu0 0
    %5115 = vmatprep.subr.bf16.mxu0 0
    %5116 = vmatpush2.bf16.msra.mxu0 0
    %5117 = vmatprep.subr.bf16.mxu0 0
    %5118 = vmatpush2.bf16.msra.mxu0 0
    %5119 = vmatprep.mubr.bf16.mxu0 0
    %5120 = vmatmul.mubr.bf16.gmra.mxu0 %v4701
    %v5121 = vpop.f32.mrf.mxu0
    %v5122 = vadd.f32 0.0, %v5121
    %v5123 = vpop.f32.mrf.mxu0
    %v5124 = vadd.f32 0.0, %v5123
    %v5125 = vpop.f32.mrf.mxu0
    %v5126 = vpop.f32.mrf.mxu0
    %5127 = vdwg.mxu0
    %5128 = vmatprep.subr.bf16.mxu0 %v5018
    %5129 = vmatpush1.bf16.msra.mxu0 %v5017
    %5130 = vmatprep.subr.bf16.mxu0 %v5010
    %5131 = vmatpush1.bf16.msra.mxu0 %v5009
    %5132 = vmatprep.subr.bf16.mxu0 %v5002
    %5133 = vmatpush1.bf16.msra.mxu0 %v5001
    %5134 = vmatprep.subr.bf16.mxu0 %v4994
    %5135 = vmatpush1.bf16.msra.mxu0 %v4993
    %5136 = vmatprep.subr.bf16.mxu0 %v4986
    %5137 = vmatpush1.bf16.msra.mxu0 %v4985
    %5138 = vmatprep.subr.bf16.mxu0 %v4978
    %5139 = vmatpush1.bf16.msra.mxu0 %v4977
    %5140 = vmatprep.subr.bf16.mxu0 %v4970
    %5141 = vmatpush1.bf16.msra.mxu0 %v4969
    %5142 = vmatprep.subr.bf16.mxu0 %v4962
    %5143 = vmatpush1.bf16.msra.mxu0 %v4961
    %5144 = vmatprep.subr.bf16.mxu0 0
    %5145 = vmatpush2.bf16.msra.mxu0 0
    %5146 = vmatprep.subr.bf16.mxu0 0
    %5147 = vmatpush2.bf16.msra.mxu0 0
    %5148 = vmatprep.subr.bf16.mxu0 0
    %5149 = vmatpush2.bf16.msra.mxu0 0
    %5150 = vmatprep.subr.bf16.mxu0 0
    %5151 = vmatpush2.bf16.msra.mxu0 0
    %5152 = vmatprep.subr.bf16.mxu0 0
    %5153 = vmatpush2.bf16.msra.mxu0 0
    %5154 = vmatprep.subr.bf16.mxu0 0
    %5155 = vmatpush2.bf16.msra.mxu0 0
    %5156 = vmatprep.subr.bf16.mxu0 0
    %5157 = vmatpush2.bf16.msra.mxu0 0
    %5158 = vmatprep.subr.bf16.mxu0 0
    %5159 = vmatpush2.bf16.msra.mxu0 0
    %5160 = vmatprep.mubr.bf16.mxu0 0
    %5161 = vmatmul.mubr.bf16.gmra.mxu0 %v4701
    %v5162 = vpop.f32.mrf.mxu0
    %v5163 = vadd.f32 0.0, %v5162
    %v5164 = vpop.f32.mrf.mxu0
    %v5165 = vadd.f32 0.0, %v5164
    %v5166 = vpop.f32.mrf.mxu0
    %v5167 = vpop.f32.mrf.mxu0
    %5168 = vdwg.mxu0
    %5169 = vmatprep.subr.bf16.mxu0 %v5020
    %5170 = vmatpush1.bf16.msra.mxu0 %v5019
    %5171 = vmatprep.subr.bf16.mxu0 %v5012
    %5172 = vmatpush1.bf16.msra.mxu0 %v5011
    %5173 = vmatprep.subr.bf16.mxu0 %v5004
    %5174 = vmatpush1.bf16.msra.mxu0 %v5003
    %5175 = vmatprep.subr.bf16.mxu0 %v4996
    %5176 = vmatpush1.bf16.msra.mxu0 %v4995
    %5177 = vmatprep.subr.bf16.mxu0 %v4988
    %5178 = vmatpush1.bf16.msra.mxu0 %v4987
    %5179 = vmatprep.subr.bf16.mxu0 %v4980
    %5180 = vmatpush1.bf16.msra.mxu0 %v4979
    %5181 = vmatprep.subr.bf16.mxu0 %v4972
    %5182 = vmatpush1.bf16.msra.mxu0 %v4971
    %5183 = vmatprep.subr.bf16.mxu0 %v4964
    %5184 = vmatpush1.bf16.msra.mxu0 %v4963
    %5185 = vmatprep.subr.bf16.mxu0 0
    %5186 = vmatpush2.bf16.msra.mxu0 0
    %5187 = vmatprep.subr.bf16.mxu0 0
    %5188 = vmatpush2.bf16.msra.mxu0 0
    %5189 = vmatprep.subr.bf16.mxu0 0
    %5190 = vmatpush2.bf16.msra.mxu0 0
    %5191 = vmatprep.subr.bf16.mxu0 0
    %5192 = vmatpush2.bf16.msra.mxu0 0
    %5193 = vmatprep.subr.bf16.mxu0 0
    %5194 = vmatpush2.bf16.msra.mxu0 0
    %5195 = vmatprep.subr.bf16.mxu0 0
    %5196 = vmatpush2.bf16.msra.mxu0 0
    %5197 = vmatprep.subr.bf16.mxu0 0
    %5198 = vmatpush2.bf16.msra.mxu0 0
    %5199 = vmatprep.subr.bf16.mxu0 0
    %5200 = vmatpush2.bf16.msra.mxu0 0
    %5201 = vmatprep.mubr.bf16.mxu0 0
    %5202 = vmatmul.mubr.bf16.gmra.mxu0 %v4701
    %v5203 = vpop.f32.mrf.mxu0
    %v5204 = vadd.f32 0.0, %v5203
    %v5205 = vpop.f32.mrf.mxu0
    %v5206 = vadd.f32 0.0, %v5205
    %v5207 = vpop.f32.mrf.mxu0
    %v5208 = vpop.f32.mrf.mxu0
    %5209 = vdwg.mxu0
    %5210 = vmatprep.subr.bf16.mxu0 %v5022
    %5211 = vmatpush1.bf16.msra.mxu0 %v5021
    %5212 = vmatprep.subr.bf16.mxu0 %v5014
    %5213 = vmatpush1.bf16.msra.mxu0 %v5013
    %5214 = vmatprep.subr.bf16.mxu0 %v5006
    %5215 = vmatpush1.bf16.msra.mxu0 %v5005
    %5216 = vmatprep.subr.bf16.mxu0 %v4998
    %5217 = vmatpush1.bf16.msra.mxu0 %v4997
    %5218 = vmatprep.subr.bf16.mxu0 %v4990
    %5219 = vmatpush1.bf16.msra.mxu0 %v4989
    %5220 = vmatprep.subr.bf16.mxu0 %v4982
    %5221 = vmatpush1.bf16.msra.mxu0 %v4981
    %5222 = vmatprep.subr.bf16.mxu0 %v4974
    %5223 = vmatpush1.bf16.msra.mxu0 %v4973
    %5224 = vmatprep.subr.bf16.mxu0 %v4966
    %5225 = vmatpush1.bf16.msra.mxu0 %v4965
    %5226 = vmatprep.subr.bf16.mxu0 0
    %5227 = vmatpush2.bf16.msra.mxu0 0
    %5228 = vmatprep.subr.bf16.mxu0 0
    %5229 = vmatpush2.bf16.msra.mxu0 0
    %5230 = vmatprep.subr.bf16.mxu0 0
    %5231 = vmatpush2.bf16.msra.mxu0 0
    %5232 = vmatprep.subr.bf16.mxu0 0
    %5233 = vmatpush2.bf16.msra.mxu0 0
    %5234 = vmatprep.subr.bf16.mxu0 0
    %5235 = vmatpush2.bf16.msra.mxu0 0
    %5236 = vmatprep.subr.bf16.mxu0 0
    %5237 = vmatpush2.bf16.msra.mxu0 0
    %5238 = vmatprep.subr.bf16.mxu0 0
    %5239 = vmatpush2.bf16.msra.mxu0 0
    %5240 = vmatprep.subr.bf16.mxu0 0
    %5241 = vmatpush2.bf16.msra.mxu0 0
    %5242 = vmatprep.mubr.bf16.mxu0 0
    %5243 = vmatmul.mubr.bf16.gmra.mxu0 %v4701
    %v5244 = vpop.f32.mrf.mxu0
    %v5245 = vadd.f32 0.0, %v5244
    %v5246 = vpop.f32.mrf.mxu0
    %v5247 = vadd.f32 0.0, %v5246
    %v5248 = vpop.f32.mrf.mxu0
    %v5249 = vpop.f32.mrf.mxu0
    %5250 = vdwg.mxu0
    %v5251 = vadd.f32 %v4623, %v5122
    %v5252 = vadd.f32 %v4624, %v5124
    %v5253 = vadd.f32 %v4625, %v5163
    %v5254 = vadd.f32 %v4626, %v5165
    %v5255 = vadd.f32 %v4627, %v5204
    %v5256 = vadd.f32 %v4628, %v5206
    %v5257 = vadd.f32 %v4629, %v5245
    %v5258 = vadd.f32 %v4630, %v5247
    %v5259 = vadd.f32 %v2718, %v2720
    %v5260 = vsel %vm163, %v120, 0.0
    %v5261 = vadd.f32 %v5259, %v5260
    %v5262 = vsel %vm163, %v122, 0.0
    %v5263 = vadd.f32 %v5261, %v5262
    %v5264 = vsel %vm163, %v124, 0.0
    %v5265 = vadd.f32 %v5263, %v5264
    %v5266 = vadd.f32 %v2725, %v2727
    %v5267 = vsel %vm173, %v121, 0.0
    %v5268 = vadd.f32 %v5266, %v5267
    %v5269 = vsel %vm173, %v123, 0.0
    %v5270 = vadd.f32 %v5268, %v5269
    %v5271 = vsel %vm173, %v125, 0.0
    %v5272 = vadd.f32 %v5270, %v5271
    %v5273 = vadd.f32 %v2732, %v2734
    %v5274 = vsel %vm163, %v148, 0.0
    %v5275 = vadd.f32 %v5273, %v5274
    %v5276 = vsel %vm163, %v150, 0.0
    %v5277 = vadd.f32 %v5275, %v5276
    %v5278 = vsel %vm163, %v152, 0.0
    %v5279 = vadd.f32 %v5277, %v5278
    %v5280 = vadd.f32 %v2739, %v2741
    %v5281 = vsel %vm173, %v149, 0.0
    %v5282 = vadd.f32 %v5280, %v5281
    %v5283 = vsel %vm173, %v151, 0.0
    %v5284 = vadd.f32 %v5282, %v5283
    %v5285 = vsel %vm173, %v153, 0.0
    %v5286 = vadd.f32 %v5284, %v5285
    %v5287 = vsel %vm201, %v5265, 0.0
    %v5288 = vrot.slane %v5287, 4
    %v5289 = vadd.f32 %v5287, %v5288
    %v5290 = vrot.slane %v5289, 2
    %v5291 = vadd.f32 %v5289, %v5290
    %v5292 = vrot.slane %v5291, 1
    %v5293 = vadd.f32 %v5291, %v5292
    %v5294 = vsel %vm201, %v5279, 0.0
    %v5295 = vrot.slane %v5294, 4
    %v5296 = vadd.f32 %v5294, %v5295
    %v5297 = vrot.slane %v5296, 2
    %v5298 = vadd.f32 %v5296, %v5297
    %v5299 = vrot.slane %v5298, 1
    %v5300 = vadd.f32 %v5298, %v5299
    %v5301 = vpack.c.bf16 %v5293, %v5293
    %v5302 = vpack.c.bf16 %v5300, %v5300
    %v5305 = vunpack.c.l.b16 %v5301
    %v5306 = vunpack.c.l.b16 %v5302
    %v5307 = vsel %vm228, %v5306, %v5305
    %v5308 = vpack.c.b16 %v5307, %v5307
    %v5310 = vsel %vm163, %v5308, 0
    %5312 = vmatprep.subr.bf16.mxu0 0
    %5313 = vmatpush1.bf16.msra.mxu0 0
    %5314 = vmatprep.subr.bf16.mxu0 0
    %5315 = vmatpush1.bf16.msra.mxu0 0
    %5316 = vmatprep.subr.bf16.mxu0 0
    %5317 = vmatpush1.bf16.msra.mxu0 0
    %5318 = vmatprep.subr.bf16.mxu0 0
    %5319 = vmatpush1.bf16.msra.mxu0 0
    %5320 = vmatprep.subr.bf16.mxu0 0
    %5321 = vmatpush1.bf16.msra.mxu0 0
    %5322 = vmatprep.subr.bf16.mxu0 0
    %5323 = vmatpush1.bf16.msra.mxu0 0
    %5324 = vmatprep.subr.bf16.mxu0 0
    %5325 = vmatpush1.bf16.msra.mxu0 0
    %5326 = vmatprep.subr.bf16.mxu0 0
    %5327 = vmatpush1.bf16.msra.mxu0 %v235
    %5328 = vmatprep.subr.bf16.mxu0 0
    %5329 = vmatpush2.bf16.msra.mxu0 0
    %5330 = vmatprep.subr.bf16.mxu0 0
    %5331 = vmatpush2.bf16.msra.mxu0 0
    %5332 = vmatprep.subr.bf16.mxu0 0
    %5333 = vmatpush2.bf16.msra.mxu0 0
    %5334 = vmatprep.subr.bf16.mxu0 0
    %5335 = vmatpush2.bf16.msra.mxu0 0
    %5336 = vmatprep.subr.bf16.mxu0 0
    %5337 = vmatpush2.bf16.msra.mxu0 0
    %5338 = vmatprep.subr.bf16.mxu0 0
    %5339 = vmatpush2.bf16.msra.mxu0 0
    %5340 = vmatprep.subr.bf16.mxu0 0
    %5341 = vmatpush2.bf16.msra.mxu0 0
    %5342 = vmatprep.subr.bf16.mxu0 0
    %5343 = vmatpush2.bf16.msra.mxu0 0
    %5344 = vmatprep.mubr.bf16.mxu0 0
    %5345 = vmatmul.mubr.bf16.gmra.mxu0 %v5310
    %v5346 = vpop.f32.mrf.mxu0
    %v5347 = vadd.f32 %v222, %v5346
    %v5348 = vpop.f32.mrf.mxu0
    %v5349 = vpop.f32.mrf.mxu0
    %v5350 = vpop.f32.mrf.mxu0
    %5351 = vdwg.mxu0
    %v5352 = vmax.f32 %v5347, 0.0
    %v5353 = vpack.c.bf16 %v5352, %v5352
    %s5354 = scalar_lea.vmem [#allocation7], 4096
    %v5355 = vld [vmem:[%s5354] sm:$0xff]
    %v5356 = vld [vmem:[%s5354 + $0x8] sm:$0xff]
    %v5357 = vld [vmem:[%s5354 + $0x10] sm:$0xff]
    %v5358 = vld [vmem:[%s5354 + $0x18] sm:$0xff]
    %v5359 = vld [vmem:[%s5354 + $0x20] sm:$0xff]
    %v5360 = vld [vmem:[%s5354 + $0x28] sm:$0xff]
    %v5361 = vld [vmem:[%s5354 + $0x30] sm:$0xff]
    %v5362 = vld [vmem:[%s5354 + $0x38] sm:$0xff]
    %v5363 = vld [vmem:[%s5354 + $0x40] sm:$0xff]
    %v5364 = vld [vmem:[%s5354 + $0x48] sm:$0xff]
    %v5365 = vld [vmem:[%s5354 + $0x50] sm:$0xff]
    %v5366 = vld [vmem:[%s5354 + $0x58] sm:$0xff]
    %v5367 = vld [vmem:[%s5354 + $0x60] sm:$0xff]
    %v5368 = vld [vmem:[%s5354 + $0x68] sm:$0xff]
    %v5369 = vld [vmem:[%s5354 + $0x70] sm:$0xff]
    %v5370 = vld [vmem:[%s5354 + $0x78] sm:$0xff]
    %v5371 = vld [vmem:[%s5354 + $0x80] sm:$0xff]
    %v5372 = vld [vmem:[%s5354 + $0x88] sm:$0xff]
    %v5373 = vld [vmem:[%s5354 + $0x90] sm:$0xff]
    %v5374 = vld [vmem:[%s5354 + $0x98] sm:$0xff]
    %v5375 = vld [vmem:[%s5354 + $0xa0] sm:$0xff]
    %v5376 = vld [vmem:[%s5354 + $0xa8] sm:$0xff]
    %v5377 = vld [vmem:[%s5354 + $0xb0] sm:$0xff]
    %v5378 = vld [vmem:[%s5354 + $0xb8] sm:$0xff]
    %v5379 = vld [vmem:[%s5354 + $0xc0] sm:$0xff]
    %v5380 = vld [vmem:[%s5354 + $0xc8] sm:$0xff]
    %v5381 = vld [vmem:[%s5354 + $0xd0] sm:$0xff]
    %v5382 = vld [vmem:[%s5354 + $0xd8] sm:$0xff]
    %v5383 = vld [vmem:[%s5354 + $0xe0] sm:$0xff]
    %v5384 = vld [vmem:[%s5354 + $0xe8] sm:$0xff]
    %v5385 = vld [vmem:[%s5354 + $0xf0] sm:$0xff]
    %v5386 = vld [vmem:[%s5354 + $0xf8] sm:$0xff]
    %v5387 = vld [vmem:[%s5354 + $0x100] sm:$0xff]
    %v5388 = vld [vmem:[%s5354 + $0x108] sm:$0xff]
    %v5389 = vld [vmem:[%s5354 + $0x110] sm:$0xff]
    %v5390 = vld [vmem:[%s5354 + $0x118] sm:$0xff]
    %v5391 = vld [vmem:[%s5354 + $0x120] sm:$0xff]
    %v5392 = vld [vmem:[%s5354 + $0x128] sm:$0xff]
    %v5393 = vld [vmem:[%s5354 + $0x130] sm:$0xff]
    %v5394 = vld [vmem:[%s5354 + $0x138] sm:$0xff]
    %v5395 = vld [vmem:[%s5354 + $0x140] sm:$0xff]
    %v5396 = vld [vmem:[%s5354 + $0x148] sm:$0xff]
    %v5397 = vld [vmem:[%s5354 + $0x150] sm:$0xff]
    %v5398 = vld [vmem:[%s5354 + $0x158] sm:$0xff]
    %v5399 = vld [vmem:[%s5354 + $0x160] sm:$0xff]
    %v5400 = vld [vmem:[%s5354 + $0x168] sm:$0xff]
    %v5401 = vld [vmem:[%s5354 + $0x170] sm:$0xff]
    %v5402 = vld [vmem:[%s5354 + $0x178] sm:$0xff]
    %v5403 = vld [vmem:[%s5354 + $0x180] sm:$0xff]
    %v5404 = vld [vmem:[%s5354 + $0x188] sm:$0xff]
    %v5405 = vld [vmem:[%s5354 + $0x190] sm:$0xff]
    %v5406 = vld [vmem:[%s5354 + $0x198] sm:$0xff]
    %v5407 = vld [vmem:[%s5354 + $0x1a0] sm:$0xff]
    %v5408 = vld [vmem:[%s5354 + $0x1a8] sm:$0xff]
    %v5409 = vld [vmem:[%s5354 + $0x1b0] sm:$0xff]
    %v5410 = vld [vmem:[%s5354 + $0x1b8] sm:$0xff]
    %v5411 = vld [vmem:[%s5354 + $0x1c0] sm:$0xff]
    %v5412 = vld [vmem:[%s5354 + $0x1c8] sm:$0xff]
    %v5413 = vld [vmem:[%s5354 + $0x1d0] sm:$0xff]
    %v5414 = vld [vmem:[%s5354 + $0x1d8] sm:$0xff]
    %v5415 = vld [vmem:[%s5354 + $0x1e0] sm:$0xff]
    %v5416 = vld [vmem:[%s5354 + $0x1e8] sm:$0xff]
    %v5417 = vld [vmem:[%s5354 + $0x1f0] sm:$0xff]
    %v5418 = vld [vmem:[%s5354 + $0x1f8] sm:$0xff]
    %v5483 = vunpack.c.l.b16 %v5355
    %v5484 = vunpack.c.h.b16 %v5355
    %v5485 = vunpack.c.l.b16 %v5356
    %v5486 = vunpack.c.h.b16 %v5356
    %v5487 = vunpack.c.l.b16 %v5357
    %v5488 = vunpack.c.h.b16 %v5357
    %v5489 = vunpack.c.l.b16 %v5358
    %v5490 = vunpack.c.h.b16 %v5358
    %v5491 = vunpack.c.l.b16 %v5359
    %v5492 = vunpack.c.h.b16 %v5359
    %v5493 = vunpack.c.l.b16 %v5360
    %v5494 = vunpack.c.h.b16 %v5360
    %v5495 = vunpack.c.l.b16 %v5361
    %v5496 = vunpack.c.h.b16 %v5361
    %v5497 = vunpack.c.l.b16 %v5362
    %v5498 = vunpack.c.h.b16 %v5362
    %v5499 = vunpack.c.l.b16 %v5363
    %v5500 = vunpack.c.h.b16 %v5363
    %v5501 = vunpack.c.l.b16 %v5364
    %v5502 = vunpack.c.h.b16 %v5364
    %v5503 = vunpack.c.l.b16 %v5365
    %v5504 = vunpack.c.h.b16 %v5365
    %v5505 = vunpack.c.l.b16 %v5366
    %v5506 = vunpack.c.h.b16 %v5366
    %v5507 = vunpack.c.l.b16 %v5367
    %v5508 = vunpack.c.h.b16 %v5367
    %v5509 = vunpack.c.l.b16 %v5368
    %v5510 = vunpack.c.h.b16 %v5368
    %v5511 = vunpack.c.l.b16 %v5369
    %v5512 = vunpack.c.h.b16 %v5369
    %v5513 = vunpack.c.l.b16 %v5370
    %v5514 = vunpack.c.h.b16 %v5370
    %v5515 = vunpack.c.l.b16 %v5371
    %v5516 = vunpack.c.h.b16 %v5371
    %v5517 = vunpack.c.l.b16 %v5372
    %v5518 = vunpack.c.h.b16 %v5372
    %v5519 = vunpack.c.l.b16 %v5373
    %v5520 = vunpack.c.h.b16 %v5373
    %v5521 = vunpack.c.l.b16 %v5374
    %v5522 = vunpack.c.h.b16 %v5374
    %v5523 = vunpack.c.l.b16 %v5375
    %v5524 = vunpack.c.h.b16 %v5375
    %v5525 = vunpack.c.l.b16 %v5376
    %v5526 = vunpack.c.h.b16 %v5376
    %v5527 = vunpack.c.l.b16 %v5377
    %v5528 = vunpack.c.h.b16 %v5377
    %v5529 = vunpack.c.l.b16 %v5378
    %v5530 = vunpack.c.h.b16 %v5378
    %v5531 = vunpack.c.l.b16 %v5379
    %v5532 = vunpack.c.h.b16 %v5379
    %v5533 = vunpack.c.l.b16 %v5380
    %v5534 = vunpack.c.h.b16 %v5380
    %v5535 = vunpack.c.l.b16 %v5381
    %v5536 = vunpack.c.h.b16 %v5381
    %v5537 = vunpack.c.l.b16 %v5382
    %v5538 = vunpack.c.h.b16 %v5382
    %v5539 = vunpack.c.l.b16 %v5383
    %v5540 = vunpack.c.h.b16 %v5383
    %v5541 = vunpack.c.l.b16 %v5384
    %v5542 = vunpack.c.h.b16 %v5384
    %v5543 = vunpack.c.l.b16 %v5385
    %v5544 = vunpack.c.h.b16 %v5385
    %v5545 = vunpack.c.l.b16 %v5386
    %v5546 = vunpack.c.h.b16 %v5386
    %v5547 = vunpack.c.l.b16 %v5387
    %v5548 = vunpack.c.h.b16 %v5387
    %v5549 = vunpack.c.l.b16 %v5388
    %v5550 = vunpack.c.h.b16 %v5388
    %v5551 = vunpack.c.l.b16 %v5389
    %v5552 = vunpack.c.h.b16 %v5389
    %v5553 = vunpack.c.l.b16 %v5390
    %v5554 = vunpack.c.h.b16 %v5390
    %v5555 = vunpack.c.l.b16 %v5391
    %v5556 = vunpack.c.h.b16 %v5391
    %v5557 = vunpack.c.l.b16 %v5392
    %v5558 = vunpack.c.h.b16 %v5392
    %v5559 = vunpack.c.l.b16 %v5393
    %v5560 = vunpack.c.h.b16 %v5393
    %v5561 = vunpack.c.l.b16 %v5394
    %v5562 = vunpack.c.h.b16 %v5394
    %v5563 = vunpack.c.l.b16 %v5395
    %v5564 = vunpack.c.h.b16 %v5395
    %v5565 = vunpack.c.l.b16 %v5396
    %v5566 = vunpack.c.h.b16 %v5396
    %v5567 = vunpack.c.l.b16 %v5397
    %v5568 = vunpack.c.h.b16 %v5397
    %v5569 = vunpack.c.l.b16 %v5398
    %v5570 = vunpack.c.h.b16 %v5398
    %v5571 = vunpack.c.l.b16 %v5399
    %v5572 = vunpack.c.h.b16 %v5399
    %v5573 = vunpack.c.l.b16 %v5400
    %v5574 = vunpack.c.h.b16 %v5400
    %v5575 = vunpack.c.l.b16 %v5401
    %v5576 = vunpack.c.h.b16 %v5401
    %v5577 = vunpack.c.l.b16 %v5402
    %v5578 = vunpack.c.h.b16 %v5402
    %v5579 = vunpack.c.l.b16 %v5403
    %v5580 = vunpack.c.h.b16 %v5403
    %v5581 = vunpack.c.l.b16 %v5404
    %v5582 = vunpack.c.h.b16 %v5404
    %v5583 = vunpack.c.l.b16 %v5405
    %v5584 = vunpack.c.h.b16 %v5405
    %v5585 = vunpack.c.l.b16 %v5406
    %v5586 = vunpack.c.h.b16 %v5406
    %v5587 = vunpack.c.l.b16 %v5407
    %v5588 = vunpack.c.h.b16 %v5407
    %v5589 = vunpack.c.l.b16 %v5408
    %v5590 = vunpack.c.h.b16 %v5408
    %v5591 = vunpack.c.l.b16 %v5409
    %v5592 = vunpack.c.h.b16 %v5409
    %v5593 = vunpack.c.l.b16 %v5410
    %v5594 = vunpack.c.h.b16 %v5410
    %v5595 = vunpack.c.l.b16 %v5411
    %v5596 = vunpack.c.h.b16 %v5411
    %v5597 = vunpack.c.l.b16 %v5412
    %v5598 = vunpack.c.h.b16 %v5412
    %v5599 = vunpack.c.l.b16 %v5413
    %v5600 = vunpack.c.h.b16 %v5413
    %v5601 = vunpack.c.l.b16 %v5414
    %v5602 = vunpack.c.h.b16 %v5414
    %v5603 = vunpack.c.l.b16 %v5415
    %v5604 = vunpack.c.h.b16 %v5415
    %v5605 = vunpack.c.l.b16 %v5416
    %v5606 = vunpack.c.h.b16 %v5416
    %v5607 = vunpack.c.l.b16 %v5417
    %v5608 = vunpack.c.h.b16 %v5417
    %v5609 = vunpack.c.l.b16 %v5418
    %v5610 = vunpack.c.h.b16 %v5418
    %v5611 = vpack.c.b16 %v5491, %v5483
    %v5612 = vpack.c.b16 %v5492, %v5484
    %v5613 = vpack.c.b16 %v5493, %v5485
    %v5614 = vpack.c.b16 %v5494, %v5486
    %v5615 = vpack.c.b16 %v5495, %v5487
    %v5616 = vpack.c.b16 %v5496, %v5488
    %v5617 = vpack.c.b16 %v5497, %v5489
    %v5618 = vpack.c.b16 %v5498, %v5490
    %v5619 = vpack.c.b16 %v5507, %v5499
    %v5620 = vpack.c.b16 %v5508, %v5500
    %v5621 = vpack.c.b16 %v5509, %v5501
    %v5622 = vpack.c.b16 %v5510, %v5502
    %v5623 = vpack.c.b16 %v5511, %v5503
    %v5624 = vpack.c.b16 %v5512, %v5504
    %v5625 = vpack.c.b16 %v5513, %v5505
    %v5626 = vpack.c.b16 %v5514, %v5506
    %v5627 = vpack.c.b16 %v5523, %v5515
    %v5628 = vpack.c.b16 %v5524, %v5516
    %v5629 = vpack.c.b16 %v5525, %v5517
    %v5630 = vpack.c.b16 %v5526, %v5518
    %v5631 = vpack.c.b16 %v5527, %v5519
    %v5632 = vpack.c.b16 %v5528, %v5520
    %v5633 = vpack.c.b16 %v5529, %v5521
    %v5634 = vpack.c.b16 %v5530, %v5522
    %v5635 = vpack.c.b16 %v5539, %v5531
    %v5636 = vpack.c.b16 %v5540, %v5532
    %v5637 = vpack.c.b16 %v5541, %v5533
    %v5638 = vpack.c.b16 %v5542, %v5534
    %v5639 = vpack.c.b16 %v5543, %v5535
    %v5640 = vpack.c.b16 %v5544, %v5536
    %v5641 = vpack.c.b16 %v5545, %v5537
    %v5642 = vpack.c.b16 %v5546, %v5538
    %v5643 = vpack.c.b16 %v5555, %v5547
    %v5644 = vpack.c.b16 %v5556, %v5548
    %v5645 = vpack.c.b16 %v5557, %v5549
    %v5646 = vpack.c.b16 %v5558, %v5550
    %v5647 = vpack.c.b16 %v5559, %v5551
    %v5648 = vpack.c.b16 %v5560, %v5552
    %v5649 = vpack.c.b16 %v5561, %v5553
    %v5650 = vpack.c.b16 %v5562, %v5554
    %v5651 = vpack.c.b16 %v5571, %v5563
    %v5652 = vpack.c.b16 %v5572, %v5564
    %v5653 = vpack.c.b16 %v5573, %v5565
    %v5654 = vpack.c.b16 %v5574, %v5566
    %v5655 = vpack.c.b16 %v5575, %v5567
    %v5656 = vpack.c.b16 %v5576, %v5568
    %v5657 = vpack.c.b16 %v5577, %v5569
    %v5658 = vpack.c.b16 %v5578, %v5570
    %v5659 = vpack.c.b16 %v5587, %v5579
    %v5660 = vpack.c.b16 %v5588, %v5580
    %v5661 = vpack.c.b16 %v5589, %v5581
    %v5662 = vpack.c.b16 %v5590, %v5582
    %v5663 = vpack.c.b16 %v5591, %v5583
    %v5664 = vpack.c.b16 %v5592, %v5584
    %v5665 = vpack.c.b16 %v5593, %v5585
    %v5666 = vpack.c.b16 %v5594, %v5586
    %v5667 = vpack.c.b16 %v5603, %v5595
    %v5668 = vpack.c.b16 %v5604, %v5596
    %v5669 = vpack.c.b16 %v5605, %v5597
    %v5670 = vpack.c.b16 %v5606, %v5598
    %v5671 = vpack.c.b16 %v5607, %v5599
    %v5672 = vpack.c.b16 %v5608, %v5600
    %v5673 = vpack.c.b16 %v5609, %v5601
    %v5674 = vpack.c.b16 %v5610, %v5602
    %5739 = vmatprep.subr.bf16.mxu0 %v5668
    %5740 = vmatpush1.bf16.msra.mxu0 %v5667
    %5741 = vmatprep.subr.bf16.mxu0 %v5660
    %5742 = vmatpush1.bf16.msra.mxu0 %v5659
    %5743 = vmatprep.subr.bf16.mxu0 %v5652
    %5744 = vmatpush1.bf16.msra.mxu0 %v5651
    %5745 = vmatprep.subr.bf16.mxu0 %v5644
    %5746 = vmatpush1.bf16.msra.mxu0 %v5643
    %5747 = vmatprep.subr.bf16.mxu0 %v5636
    %5748 = vmatpush1.bf16.msra.mxu0 %v5635
    %5749 = vmatprep.subr.bf16.mxu0 %v5628
    %5750 = vmatpush1.bf16.msra.mxu0 %v5627
    %5751 = vmatprep.subr.bf16.mxu0 %v5620
    %5752 = vmatpush1.bf16.msra.mxu0 %v5619
    %5753 = vmatprep.subr.bf16.mxu0 %v5612
    %5754 = vmatpush1.bf16.msra.mxu0 %v5611
    %5755 = vmatprep.subr.bf16.mxu0 0
    %5756 = vmatpush2.bf16.msra.mxu0 0
    %5757 = vmatprep.subr.bf16.mxu0 0
    %5758 = vmatpush2.bf16.msra.mxu0 0
    %5759 = vmatprep.subr.bf16.mxu0 0
    %5760 = vmatpush2.bf16.msra.mxu0 0
    %5761 = vmatprep.subr.bf16.mxu0 0
    %5762 = vmatpush2.bf16.msra.mxu0 0
    %5763 = vmatprep.subr.bf16.mxu0 0
    %5764 = vmatpush2.bf16.msra.mxu0 0
    %5765 = vmatprep.subr.bf16.mxu0 0
    %5766 = vmatpush2.bf16.msra.mxu0 0
    %5767 = vmatprep.subr.bf16.mxu0 0
    %5768 = vmatpush2.bf16.msra.mxu0 0
    %5769 = vmatprep.subr.bf16.mxu0 0
    %5770 = vmatpush2.bf16.msra.mxu0 0
    %5771 = vmatprep.mubr.bf16.mxu0 0
    %5772 = vmatmul.mubr.bf16.gmra.mxu0 %v5353
    %v5773 = vpop.f32.mrf.mxu0
    %v5774 = vadd.f32 0.0, %v5773
    %v5775 = vpop.f32.mrf.mxu0
    %v5776 = vadd.f32 0.0, %v5775
    %v5777 = vpop.f32.mrf.mxu0
    %v5778 = vpop.f32.mrf.mxu0
    %5779 = vdwg.mxu0
    %5780 = vmatprep.subr.bf16.mxu0 %v5670
    %5781 = vmatpush1.bf16.msra.mxu0 %v5669
    %5782 = vmatprep.subr.bf16.mxu0 %v5662
    %5783 = vmatpush1.bf16.msra.mxu0 %v5661
    %5784 = vmatprep.subr.bf16.mxu0 %v5654
    %5785 = vmatpush1.bf16.msra.mxu0 %v5653
    %5786 = vmatprep.subr.bf16.mxu0 %v5646
    %5787 = vmatpush1.bf16.msra.mxu0 %v5645
    %5788 = vmatprep.subr.bf16.mxu0 %v5638
    %5789 = vmatpush1.bf16.msra.mxu0 %v5637
    %5790 = vmatprep.subr.bf16.mxu0 %v5630
    %5791 = vmatpush1.bf16.msra.mxu0 %v5629
    %5792 = vmatprep.subr.bf16.mxu0 %v5622
    %5793 = vmatpush1.bf16.msra.mxu0 %v5621
    %5794 = vmatprep.subr.bf16.mxu0 %v5614
    %5795 = vmatpush1.bf16.msra.mxu0 %v5613
    %5796 = vmatprep.subr.bf16.mxu0 0
    %5797 = vmatpush2.bf16.msra.mxu0 0
    %5798 = vmatprep.subr.bf16.mxu0 0
    %5799 = vmatpush2.bf16.msra.mxu0 0
    %5800 = vmatprep.subr.bf16.mxu0 0
    %5801 = vmatpush2.bf16.msra.mxu0 0
    %5802 = vmatprep.subr.bf16.mxu0 0
    %5803 = vmatpush2.bf16.msra.mxu0 0
    %5804 = vmatprep.subr.bf16.mxu0 0
    %5805 = vmatpush2.bf16.msra.mxu0 0
    %5806 = vmatprep.subr.bf16.mxu0 0
    %5807 = vmatpush2.bf16.msra.mxu0 0
    %5808 = vmatprep.subr.bf16.mxu0 0
    %5809 = vmatpush2.bf16.msra.mxu0 0
    %5810 = vmatprep.subr.bf16.mxu0 0
    %5811 = vmatpush2.bf16.msra.mxu0 0
    %5812 = vmatprep.mubr.bf16.mxu0 0
    %5813 = vmatmul.mubr.bf16.gmra.mxu0 %v5353
    %v5814 = vpop.f32.mrf.mxu0
    %v5815 = vadd.f32 0.0, %v5814
    %v5816 = vpop.f32.mrf.mxu0
    %v5817 = vadd.f32 0.0, %v5816
    %v5818 = vpop.f32.mrf.mxu0
    %v5819 = vpop.f32.mrf.mxu0
    %5820 = vdwg.mxu0
    %5821 = vmatprep.subr.bf16.mxu0 %v5672
    %5822 = vmatpush1.bf16.msra.mxu0 %v5671
    %5823 = vmatprep.subr.bf16.mxu0 %v5664
    %5824 = vmatpush1.bf16.msra.mxu0 %v5663
    %5825 = vmatprep.subr.bf16.mxu0 %v5656
    %5826 = vmatpush1.bf16.msra.mxu0 %v5655
    %5827 = vmatprep.subr.bf16.mxu0 %v5648
    %5828 = vmatpush1.bf16.msra.mxu0 %v5647
    %5829 = vmatprep.subr.bf16.mxu0 %v5640
    %5830 = vmatpush1.bf16.msra.mxu0 %v5639
    %5831 = vmatprep.subr.bf16.mxu0 %v5632
    %5832 = vmatpush1.bf16.msra.mxu0 %v5631
    %5833 = vmatprep.subr.bf16.mxu0 %v5624
    %5834 = vmatpush1.bf16.msra.mxu0 %v5623
    %5835 = vmatprep.subr.bf16.mxu0 %v5616
    %5836 = vmatpush1.bf16.msra.mxu0 %v5615
    %5837 = vmatprep.subr.bf16.mxu0 0
    %5838 = vmatpush2.bf16.msra.mxu0 0
    %5839 = vmatprep.subr.bf16.mxu0 0
    %5840 = vmatpush2.bf16.msra.mxu0 0
    %5841 = vmatprep.subr.bf16.mxu0 0
    %5842 = vmatpush2.bf16.msra.mxu0 0
    %5843 = vmatprep.subr.bf16.mxu0 0
    %5844 = vmatpush2.bf16.msra.mxu0 0
    %5845 = vmatprep.subr.bf16.mxu0 0
    %5846 = vmatpush2.bf16.msra.mxu0 0
    %5847 = vmatprep.subr.bf16.mxu0 0
    %5848 = vmatpush2.bf16.msra.mxu0 0
    %5849 = vmatprep.subr.bf16.mxu0 0
    %5850 = vmatpush2.bf16.msra.mxu0 0
    %5851 = vmatprep.subr.bf16.mxu0 0
    %5852 = vmatpush2.bf16.msra.mxu0 0
    %5853 = vmatprep.mubr.bf16.mxu0 0
    %5854 = vmatmul.mubr.bf16.gmra.mxu0 %v5353
    %v5855 = vpop.f32.mrf.mxu0
    %v5856 = vadd.f32 0.0, %v5855
    %v5857 = vpop.f32.mrf.mxu0
    %v5858 = vadd.f32 0.0, %v5857
    %v5859 = vpop.f32.mrf.mxu0
    %v5860 = vpop.f32.mrf.mxu0
    %5861 = vdwg.mxu0
    %5862 = vmatprep.subr.bf16.mxu0 %v5674
    %5863 = vmatpush1.bf16.msra.mxu0 %v5673
    %5864 = vmatprep.subr.bf16.mxu0 %v5666
    %5865 = vmatpush1.bf16.msra.mxu0 %v5665
    %5866 = vmatprep.subr.bf16.mxu0 %v5658
    %5867 = vmatpush1.bf16.msra.mxu0 %v5657
    %5868 = vmatprep.subr.bf16.mxu0 %v5650
    %5869 = vmatpush1.bf16.msra.mxu0 %v5649
    %5870 = vmatprep.subr.bf16.mxu0 %v5642
    %5871 = vmatpush1.bf16.msra.mxu0 %v5641
    %5872 = vmatprep.subr.bf16.mxu0 %v5634
    %5873 = vmatpush1.bf16.msra.mxu0 %v5633
    %5874 = vmatprep.subr.bf16.mxu0 %v5626
    %5875 = vmatpush1.bf16.msra.mxu0 %v5625
    %5876 = vmatprep.subr.bf16.mxu0 %v5618
    %5877 = vmatpush1.bf16.msra.mxu0 %v5617
    %5878 = vmatprep.subr.bf16.mxu0 0
    %5879 = vmatpush2.bf16.msra.mxu0 0
    %5880 = vmatprep.subr.bf16.mxu0 0
    %5881 = vmatpush2.bf16.msra.mxu0 0
    %5882 = vmatprep.subr.bf16.mxu0 0
    %5883 = vmatpush2.bf16.msra.mxu0 0
    %5884 = vmatprep.subr.bf16.mxu0 0
    %5885 = vmatpush2.bf16.msra.mxu0 0
    %5886 = vmatprep.subr.bf16.mxu0 0
    %5887 = vmatpush2.bf16.msra.mxu0 0
    %5888 = vmatprep.subr.bf16.mxu0 0
    %5889 = vmatpush2.bf16.msra.mxu0 0
    %5890 = vmatprep.subr.bf16.mxu0 0
    %5891 = vmatpush2.bf16.msra.mxu0 0
    %5892 = vmatprep.subr.bf16.mxu0 0
    %5893 = vmatpush2.bf16.msra.mxu0 0
    %5894 = vmatprep.mubr.bf16.mxu0 0
    %5895 = vmatmul.mubr.bf16.gmra.mxu0 %v5353
    %v5896 = vpop.f32.mrf.mxu0
    %v5897 = vadd.f32 0.0, %v5896
    %v5898 = vpop.f32.mrf.mxu0
    %v5899 = vadd.f32 0.0, %v5898
    %v5900 = vpop.f32.mrf.mxu0
    %v5901 = vpop.f32.mrf.mxu0
    %5902 = vdwg.mxu0
    %v5903 = vadd.f32 %v5251, %v5774
    %v5904 = vadd.f32 %v5252, %v5776
    %v5905 = vadd.f32 %v5253, %v5815
    %v5906 = vadd.f32 %v5254, %v5817
    %v5907 = vadd.f32 %v5255, %v5856
    %v5908 = vadd.f32 %v5256, %v5858
    %v5909 = vadd.f32 %v5257, %v5897
    %v5910 = vadd.f32 %v5258, %v5899
    %v5913 = vrot.slane %v5265, 3
    %v5914 = vrot.slane %v5279, 3
    %v5917 = vsel %vm201, %v5913, 0.0
    %v5918 = vrot.slane %v5917, 4
    %v5919 = vadd.f32 %v5917, %v5918
    %v5920 = vrot.slane %v5919, 2
    %v5921 = vadd.f32 %v5919, %v5920
    %v5922 = vrot.slane %v5921, 1
    %v5923 = vadd.f32 %v5921, %v5922
    %v5924 = vsel %vm201, %v5914, 0.0
    %v5925 = vrot.slane %v5924, 4
    %v5926 = vadd.f32 %v5924, %v5925
    %v5927 = vrot.slane %v5926, 2
    %v5928 = vadd.f32 %v5926, %v5927
    %v5929 = vrot.slane %v5928, 1
    %v5930 = vadd.f32 %v5928, %v5929
    %v5931 = vpack.c.bf16 %v5923, %v5923
    %v5932 = vpack.c.bf16 %v5930, %v5930
    %v5935 = vunpack.c.l.b16 %v5931
    %v5936 = vunpack.c.l.b16 %v5932
    %v5937 = vsel %vm228, %v5936, %v5935
    %v5938 = vpack.c.b16 %v5937, %v5937
    %v5940 = vsel %vm163, %v5938, 0
    %5942 = vmatprep.subr.bf16.mxu0 0
    %5943 = vmatpush1.bf16.msra.mxu0 0
    %5944 = vmatprep.subr.bf16.mxu0 0
    %5945 = vmatpush1.bf16.msra.mxu0 0
    %5946 = vmatprep.subr.bf16.mxu0 0
    %5947 = vmatpush1.bf16.msra.mxu0 0
    %5948 = vmatprep.subr.bf16.mxu0 0
    %5949 = vmatpush1.bf16.msra.mxu0 0
    %5950 = vmatprep.subr.bf16.mxu0 0
    %5951 = vmatpush1.bf16.msra.mxu0 0
    %5952 = vmatprep.subr.bf16.mxu0 0
    %5953 = vmatpush1.bf16.msra.mxu0 0
    %5954 = vmatprep.subr.bf16.mxu0 0
    %5955 = vmatpush1.bf16.msra.mxu0 0
    %5956 = vmatprep.subr.bf16.mxu0 0
    %5957 = vmatpush1.bf16.msra.mxu0 %v235
    %5958 = vmatprep.subr.bf16.mxu0 0
    %5959 = vmatpush2.bf16.msra.mxu0 0
    %5960 = vmatprep.subr.bf16.mxu0 0
    %5961 = vmatpush2.bf16.msra.mxu0 0
    %5962 = vmatprep.subr.bf16.mxu0 0
    %5963 = vmatpush2.bf16.msra.mxu0 0
    %5964 = vmatprep.subr.bf16.mxu0 0
    %5965 = vmatpush2.bf16.msra.mxu0 0
    %5966 = vmatprep.subr.bf16.mxu0 0
    %5967 = vmatpush2.bf16.msra.mxu0 0
    %5968 = vmatprep.subr.bf16.mxu0 0
    %5969 = vmatpush2.bf16.msra.mxu0 0
    %5970 = vmatprep.subr.bf16.mxu0 0
    %5971 = vmatpush2.bf16.msra.mxu0 0
    %5972 = vmatprep.subr.bf16.mxu0 0
    %5973 = vmatpush2.bf16.msra.mxu0 0
    %5974 = vmatprep.mubr.bf16.mxu0 0
    %5975 = vmatmul.mubr.bf16.gmra.mxu0 %v5940
    %v5976 = vpop.f32.mrf.mxu0
    %v5977 = vadd.f32 %v222, %v5976
    %v5978 = vpop.f32.mrf.mxu0
    %v5979 = vpop.f32.mrf.mxu0
    %v5980 = vpop.f32.mrf.mxu0
    %5981 = vdwg.mxu0
    %v5982 = vmax.f32 %v5977, 0.0
    %v5983 = vpack.c.bf16 %v5982, %v5982
    %s5984 = scalar_lea.vmem [#allocation7], 4608
    %v5985 = vld [vmem:[%s5984] sm:$0xff]
    %v5986 = vld [vmem:[%s5984 + $0x8] sm:$0xff]
    %v5987 = vld [vmem:[%s5984 + $0x10] sm:$0xff]
    %v5988 = vld [vmem:[%s5984 + $0x18] sm:$0xff]
    %v5989 = vld [vmem:[%s5984 + $0x20] sm:$0xff]
    %v5990 = vld [vmem:[%s5984 + $0x28] sm:$0xff]
    %v5991 = vld [vmem:[%s5984 + $0x30] sm:$0xff]
    %v5992 = vld [vmem:[%s5984 + $0x38] sm:$0xff]
    %v5993 = vld [vmem:[%s5984 + $0x40] sm:$0xff]
    %v5994 = vld [vmem:[%s5984 + $0x48] sm:$0xff]
    %v5995 = vld [vmem:[%s5984 + $0x50] sm:$0xff]
    %v5996 = vld [vmem:[%s5984 + $0x58] sm:$0xff]
    %v5997 = vld [vmem:[%s5984 + $0x60] sm:$0xff]
    %v5998 = vld [vmem:[%s5984 + $0x68] sm:$0xff]
    %v5999 = vld [vmem:[%s5984 + $0x70] sm:$0xff]
    %v6000 = vld [vmem:[%s5984 + $0x78] sm:$0xff]
    %v6001 = vld [vmem:[%s5984 + $0x80] sm:$0xff]
    %v6002 = vld [vmem:[%s5984 + $0x88] sm:$0xff]
    %v6003 = vld [vmem:[%s5984 + $0x90] sm:$0xff]
    %v6004 = vld [vmem:[%s5984 + $0x98] sm:$0xff]
    %v6005 = vld [vmem:[%s5984 + $0xa0] sm:$0xff]
    %v6006 = vld [vmem:[%s5984 + $0xa8] sm:$0xff]
    %v6007 = vld [vmem:[%s5984 + $0xb0] sm:$0xff]
    %v6008 = vld [vmem:[%s5984 + $0xb8] sm:$0xff]
    %v6009 = vld [vmem:[%s5984 + $0xc0] sm:$0xff]
    %v6010 = vld [vmem:[%s5984 + $0xc8] sm:$0xff]
    %v6011 = vld [vmem:[%s5984 + $0xd0] sm:$0xff]
    %v6012 = vld [vmem:[%s5984 + $0xd8] sm:$0xff]
    %v6013 = vld [vmem:[%s5984 + $0xe0] sm:$0xff]
    %v6014 = vld [vmem:[%s5984 + $0xe8] sm:$0xff]
    %v6015 = vld [vmem:[%s5984 + $0xf0] sm:$0xff]
    %v6016 = vld [vmem:[%s5984 + $0xf8] sm:$0xff]
    %v6017 = vld [vmem:[%s5984 + $0x100] sm:$0xff]
    %v6018 = vld [vmem:[%s5984 + $0x108] sm:$0xff]
    %v6019 = vld [vmem:[%s5984 + $0x110] sm:$0xff]
    %v6020 = vld [vmem:[%s5984 + $0x118] sm:$0xff]
    %v6021 = vld [vmem:[%s5984 + $0x120] sm:$0xff]
    %v6022 = vld [vmem:[%s5984 + $0x128] sm:$0xff]
    %v6023 = vld [vmem:[%s5984 + $0x130] sm:$0xff]
    %v6024 = vld [vmem:[%s5984 + $0x138] sm:$0xff]
    %v6025 = vld [vmem:[%s5984 + $0x140] sm:$0xff]
    %v6026 = vld [vmem:[%s5984 + $0x148] sm:$0xff]
    %v6027 = vld [vmem:[%s5984 + $0x150] sm:$0xff]
    %v6028 = vld [vmem:[%s5984 + $0x158] sm:$0xff]
    %v6029 = vld [vmem:[%s5984 + $0x160] sm:$0xff]
    %v6030 = vld [vmem:[%s5984 + $0x168] sm:$0xff]
    %v6031 = vld [vmem:[%s5984 + $0x170] sm:$0xff]
    %v6032 = vld [vmem:[%s5984 + $0x178] sm:$0xff]
    %v6033 = vld [vmem:[%s5984 + $0x180] sm:$0xff]
    %v6034 = vld [vmem:[%s5984 + $0x188] sm:$0xff]
    %v6035 = vld [vmem:[%s5984 + $0x190] sm:$0xff]
    %v6036 = vld [vmem:[%s5984 + $0x198] sm:$0xff]
    %v6037 = vld [vmem:[%s5984 + $0x1a0] sm:$0xff]
    %v6038 = vld [vmem:[%s5984 + $0x1a8] sm:$0xff]
    %v6039 = vld [vmem:[%s5984 + $0x1b0] sm:$0xff]
    %v6040 = vld [vmem:[%s5984 + $0x1b8] sm:$0xff]
    %v6041 = vld [vmem:[%s5984 + $0x1c0] sm:$0xff]
    %v6042 = vld [vmem:[%s5984 + $0x1c8] sm:$0xff]
    %v6043 = vld [vmem:[%s5984 + $0x1d0] sm:$0xff]
    %v6044 = vld [vmem:[%s5984 + $0x1d8] sm:$0xff]
    %v6045 = vld [vmem:[%s5984 + $0x1e0] sm:$0xff]
    %v6046 = vld [vmem:[%s5984 + $0x1e8] sm:$0xff]
    %v6047 = vld [vmem:[%s5984 + $0x1f0] sm:$0xff]
    %v6048 = vld [vmem:[%s5984 + $0x1f8] sm:$0xff]
    %v6113 = vunpack.c.l.b16 %v5985
    %v6114 = vunpack.c.h.b16 %v5985
    %v6115 = vunpack.c.l.b16 %v5986
    %v6116 = vunpack.c.h.b16 %v5986
    %v6117 = vunpack.c.l.b16 %v5987
    %v6118 = vunpack.c.h.b16 %v5987
    %v6119 = vunpack.c.l.b16 %v5988
    %v6120 = vunpack.c.h.b16 %v5988
    %v6121 = vunpack.c.l.b16 %v5989
    %v6122 = vunpack.c.h.b16 %v5989
    %v6123 = vunpack.c.l.b16 %v5990
    %v6124 = vunpack.c.h.b16 %v5990
    %v6125 = vunpack.c.l.b16 %v5991
    %v6126 = vunpack.c.h.b16 %v5991
    %v6127 = vunpack.c.l.b16 %v5992
    %v6128 = vunpack.c.h.b16 %v5992
    %v6129 = vunpack.c.l.b16 %v5993
    %v6130 = vunpack.c.h.b16 %v5993
    %v6131 = vunpack.c.l.b16 %v5994
    %v6132 = vunpack.c.h.b16 %v5994
    %v6133 = vunpack.c.l.b16 %v5995
    %v6134 = vunpack.c.h.b16 %v5995
    %v6135 = vunpack.c.l.b16 %v5996
    %v6136 = vunpack.c.h.b16 %v5996
    %v6137 = vunpack.c.l.b16 %v5997
    %v6138 = vunpack.c.h.b16 %v5997
    %v6139 = vunpack.c.l.b16 %v5998
    %v6140 = vunpack.c.h.b16 %v5998
    %v6141 = vunpack.c.l.b16 %v5999
    %v6142 = vunpack.c.h.b16 %v5999
    %v6143 = vunpack.c.l.b16 %v6000
    %v6144 = vunpack.c.h.b16 %v6000
    %v6145 = vunpack.c.l.b16 %v6001
    %v6146 = vunpack.c.h.b16 %v6001
    %v6147 = vunpack.c.l.b16 %v6002
    %v6148 = vunpack.c.h.b16 %v6002
    %v6149 = vunpack.c.l.b16 %v6003
    %v6150 = vunpack.c.h.b16 %v6003
    %v6151 = vunpack.c.l.b16 %v6004
    %v6152 = vunpack.c.h.b16 %v6004
    %v6153 = vunpack.c.l.b16 %v6005
    %v6154 = vunpack.c.h.b16 %v6005
    %v6155 = vunpack.c.l.b16 %v6006
    %v6156 = vunpack.c.h.b16 %v6006
    %v6157 = vunpack.c.l.b16 %v6007
    %v6158 = vunpack.c.h.b16 %v6007
    %v6159 = vunpack.c.l.b16 %v6008
    %v6160 = vunpack.c.h.b16 %v6008
    %v6161 = vunpack.c.l.b16 %v6009
    %v6162 = vunpack.c.h.b16 %v6009
    %v6163 = vunpack.c.l.b16 %v6010
    %v6164 = vunpack.c.h.b16 %v6010
    %v6165 = vunpack.c.l.b16 %v6011
    %v6166 = vunpack.c.h.b16 %v6011
    %v6167 = vunpack.c.l.b16 %v6012
    %v6168 = vunpack.c.h.b16 %v6012
    %v6169 = vunpack.c.l.b16 %v6013
    %v6170 = vunpack.c.h.b16 %v6013
    %v6171 = vunpack.c.l.b16 %v6014
    %v6172 = vunpack.c.h.b16 %v6014
    %v6173 = vunpack.c.l.b16 %v6015
    %v6174 = vunpack.c.h.b16 %v6015
    %v6175 = vunpack.c.l.b16 %v6016
    %v6176 = vunpack.c.h.b16 %v6016
    %v6177 = vunpack.c.l.b16 %v6017
    %v6178 = vunpack.c.h.b16 %v6017
    %v6179 = vunpack.c.l.b16 %v6018
    %v6180 = vunpack.c.h.b16 %v6018
    %v6181 = vunpack.c.l.b16 %v6019
    %v6182 = vunpack.c.h.b16 %v6019
    %v6183 = vunpack.c.l.b16 %v6020
    %v6184 = vunpack.c.h.b16 %v6020
    %v6185 = vunpack.c.l.b16 %v6021
    %v6186 = vunpack.c.h.b16 %v6021
    %v6187 = vunpack.c.l.b16 %v6022
    %v6188 = vunpack.c.h.b16 %v6022
    %v6189 = vunpack.c.l.b16 %v6023
    %v6190 = vunpack.c.h.b16 %v6023
    %v6191 = vunpack.c.l.b16 %v6024
    %v6192 = vunpack.c.h.b16 %v6024
    %v6193 = vunpack.c.l.b16 %v6025
    %v6194 = vunpack.c.h.b16 %v6025
    %v6195 = vunpack.c.l.b16 %v6026
    %v6196 = vunpack.c.h.b16 %v6026
    %v6197 = vunpack.c.l.b16 %v6027
    %v6198 = vunpack.c.h.b16 %v6027
    %v6199 = vunpack.c.l.b16 %v6028
    %v6200 = vunpack.c.h.b16 %v6028
    %v6201 = vunpack.c.l.b16 %v6029
    %v6202 = vunpack.c.h.b16 %v6029
    %v6203 = vunpack.c.l.b16 %v6030
    %v6204 = vunpack.c.h.b16 %v6030
    %v6205 = vunpack.c.l.b16 %v6031
    %v6206 = vunpack.c.h.b16 %v6031
    %v6207 = vunpack.c.l.b16 %v6032
    %v6208 = vunpack.c.h.b16 %v6032
    %v6209 = vunpack.c.l.b16 %v6033
    %v6210 = vunpack.c.h.b16 %v6033
    %v6211 = vunpack.c.l.b16 %v6034
    %v6212 = vunpack.c.h.b16 %v6034
    %v6213 = vunpack.c.l.b16 %v6035
    %v6214 = vunpack.c.h.b16 %v6035
    %v6215 = vunpack.c.l.b16 %v6036
    %v6216 = vunpack.c.h.b16 %v6036
    %v6217 = vunpack.c.l.b16 %v6037
    %v6218 = vunpack.c.h.b16 %v6037
    %v6219 = vunpack.c.l.b16 %v6038
    %v6220 = vunpack.c.h.b16 %v6038
    %v6221 = vunpack.c.l.b16 %v6039
    %v6222 = vunpack.c.h.b16 %v6039
    %v6223 = vunpack.c.l.b16 %v6040
    %v6224 = vunpack.c.h.b16 %v6040
    %v6225 = vunpack.c.l.b16 %v6041
    %v6226 = vunpack.c.h.b16 %v6041
    %v6227 = vunpack.c.l.b16 %v6042
    %v6228 = vunpack.c.h.b16 %v6042
    %v6229 = vunpack.c.l.b16 %v6043
    %v6230 = vunpack.c.h.b16 %v6043
    %v6231 = vunpack.c.l.b16 %v6044
    %v6232 = vunpack.c.h.b16 %v6044
    %v6233 = vunpack.c.l.b16 %v6045
    %v6234 = vunpack.c.h.b16 %v6045
    %v6235 = vunpack.c.l.b16 %v6046
    %v6236 = vunpack.c.h.b16 %v6046
    %v6237 = vunpack.c.l.b16 %v6047
    %v6238 = vunpack.c.h.b16 %v6047
    %v6239 = vunpack.c.l.b16 %v6048
    %v6240 = vunpack.c.h.b16 %v6048
    %v6241 = vpack.c.b16 %v6121, %v6113
    %v6242 = vpack.c.b16 %v6122, %v6114
    %v6243 = vpack.c.b16 %v6123, %v6115
    %v6244 = vpack.c.b16 %v6124, %v6116
    %v6245 = vpack.c.b16 %v6125, %v6117
    %v6246 = vpack.c.b16 %v6126, %v6118
    %v6247 = vpack.c.b16 %v6127, %v6119
    %v6248 = vpack.c.b16 %v6128, %v6120
    %v6249 = vpack.c.b16 %v6137, %v6129
    %v6250 = vpack.c.b16 %v6138, %v6130
    %v6251 = vpack.c.b16 %v6139, %v6131
    %v6252 = vpack.c.b16 %v6140, %v6132
    %v6253 = vpack.c.b16 %v6141, %v6133
    %v6254 = vpack.c.b16 %v6142, %v6134
    %v6255 = vpack.c.b16 %v6143, %v6135
    %v6256 = vpack.c.b16 %v6144, %v6136
    %v6257 = vpack.c.b16 %v6153, %v6145
    %v6258 = vpack.c.b16 %v6154, %v6146
    %v6259 = vpack.c.b16 %v6155, %v6147
    %v6260 = vpack.c.b16 %v6156, %v6148
    %v6261 = vpack.c.b16 %v6157, %v6149
    %v6262 = vpack.c.b16 %v6158, %v6150
    %v6263 = vpack.c.b16 %v6159, %v6151
    %v6264 = vpack.c.b16 %v6160, %v6152
    %v6265 = vpack.c.b16 %v6169, %v6161
    %v6266 = vpack.c.b16 %v6170, %v6162
    %v6267 = vpack.c.b16 %v6171, %v6163
    %v6268 = vpack.c.b16 %v6172, %v6164
    %v6269 = vpack.c.b16 %v6173, %v6165
    %v6270 = vpack.c.b16 %v6174, %v6166
    %v6271 = vpack.c.b16 %v6175, %v6167
    %v6272 = vpack.c.b16 %v6176, %v6168
    %v6273 = vpack.c.b16 %v6185, %v6177
    %v6274 = vpack.c.b16 %v6186, %v6178
    %v6275 = vpack.c.b16 %v6187, %v6179
    %v6276 = vpack.c.b16 %v6188, %v6180
    %v6277 = vpack.c.b16 %v6189, %v6181
    %v6278 = vpack.c.b16 %v6190, %v6182
    %v6279 = vpack.c.b16 %v6191, %v6183
    %v6280 = vpack.c.b16 %v6192, %v6184
    %v6281 = vpack.c.b16 %v6201, %v6193
    %v6282 = vpack.c.b16 %v6202, %v6194
    %v6283 = vpack.c.b16 %v6203, %v6195
    %v6284 = vpack.c.b16 %v6204, %v6196
    %v6285 = vpack.c.b16 %v6205, %v6197
    %v6286 = vpack.c.b16 %v6206, %v6198
    %v6287 = vpack.c.b16 %v6207, %v6199
    %v6288 = vpack.c.b16 %v6208, %v6200
    %v6289 = vpack.c.b16 %v6217, %v6209
    %v6290 = vpack.c.b16 %v6218, %v6210
    %v6291 = vpack.c.b16 %v6219, %v6211
    %v6292 = vpack.c.b16 %v6220, %v6212
    %v6293 = vpack.c.b16 %v6221, %v6213
    %v6294 = vpack.c.b16 %v6222, %v6214
    %v6295 = vpack.c.b16 %v6223, %v6215
    %v6296 = vpack.c.b16 %v6224, %v6216
    %v6297 = vpack.c.b16 %v6233, %v6225
    %v6298 = vpack.c.b16 %v6234, %v6226
    %v6299 = vpack.c.b16 %v6235, %v6227
    %v6300 = vpack.c.b16 %v6236, %v6228
    %v6301 = vpack.c.b16 %v6237, %v6229
    %v6302 = vpack.c.b16 %v6238, %v6230
    %v6303 = vpack.c.b16 %v6239, %v6231
    %v6304 = vpack.c.b16 %v6240, %v6232
    %6369 = vmatprep.subr.bf16.mxu0 %v6298
    %6370 = vmatpush1.bf16.msra.mxu0 %v6297
    %6371 = vmatprep.subr.bf16.mxu0 %v6290
    %6372 = vmatpush1.bf16.msra.mxu0 %v6289
    %6373 = vmatprep.subr.bf16.mxu0 %v6282
    %6374 = vmatpush1.bf16.msra.mxu0 %v6281
    %6375 = vmatprep.subr.bf16.mxu0 %v6274
    %6376 = vmatpush1.bf16.msra.mxu0 %v6273
    %6377 = vmatprep.subr.bf16.mxu0 %v6266
    %6378 = vmatpush1.bf16.msra.mxu0 %v6265
    %6379 = vmatprep.subr.bf16.mxu0 %v6258
    %6380 = vmatpush1.bf16.msra.mxu0 %v6257
    %6381 = vmatprep.subr.bf16.mxu0 %v6250
    %6382 = vmatpush1.bf16.msra.mxu0 %v6249
    %6383 = vmatprep.subr.bf16.mxu0 %v6242
    %6384 = vmatpush1.bf16.msra.mxu0 %v6241
    %6385 = vmatprep.subr.bf16.mxu0 0
    %6386 = vmatpush2.bf16.msra.mxu0 0
    %6387 = vmatprep.subr.bf16.mxu0 0
    %6388 = vmatpush2.bf16.msra.mxu0 0
    %6389 = vmatprep.subr.bf16.mxu0 0
    %6390 = vmatpush2.bf16.msra.mxu0 0
    %6391 = vmatprep.subr.bf16.mxu0 0
    %6392 = vmatpush2.bf16.msra.mxu0 0
    %6393 = vmatprep.subr.bf16.mxu0 0
    %6394 = vmatpush2.bf16.msra.mxu0 0
    %6395 = vmatprep.subr.bf16.mxu0 0
    %6396 = vmatpush2.bf16.msra.mxu0 0
    %6397 = vmatprep.subr.bf16.mxu0 0
    %6398 = vmatpush2.bf16.msra.mxu0 0
    %6399 = vmatprep.subr.bf16.mxu0 0
    %6400 = vmatpush2.bf16.msra.mxu0 0
    %6401 = vmatprep.mubr.bf16.mxu0 0
    %6402 = vmatmul.mubr.bf16.gmra.mxu0 %v5983
    %v6403 = vpop.f32.mrf.mxu0
    %v6404 = vadd.f32 0.0, %v6403
    %v6405 = vpop.f32.mrf.mxu0
    %v6406 = vadd.f32 0.0, %v6405
    %v6407 = vpop.f32.mrf.mxu0
    %v6408 = vpop.f32.mrf.mxu0
    %6409 = vdwg.mxu0
    %6410 = vmatprep.subr.bf16.mxu0 %v6300
    %6411 = vmatpush1.bf16.msra.mxu0 %v6299
    %6412 = vmatprep.subr.bf16.mxu0 %v6292
    %6413 = vmatpush1.bf16.msra.mxu0 %v6291
    %6414 = vmatprep.subr.bf16.mxu0 %v6284
    %6415 = vmatpush1.bf16.msra.mxu0 %v6283
    %6416 = vmatprep.subr.bf16.mxu0 %v6276
    %6417 = vmatpush1.bf16.msra.mxu0 %v6275
    %6418 = vmatprep.subr.bf16.mxu0 %v6268
    %6419 = vmatpush1.bf16.msra.mxu0 %v6267
    %6420 = vmatprep.subr.bf16.mxu0 %v6260
    %6421 = vmatpush1.bf16.msra.mxu0 %v6259
    %6422 = vmatprep.subr.bf16.mxu0 %v6252
    %6423 = vmatpush1.bf16.msra.mxu0 %v6251
    %6424 = vmatprep.subr.bf16.mxu0 %v6244
    %6425 = vmatpush1.bf16.msra.mxu0 %v6243
    %6426 = vmatprep.subr.bf16.mxu0 0
    %6427 = vmatpush2.bf16.msra.mxu0 0
    %6428 = vmatprep.subr.bf16.mxu0 0
    %6429 = vmatpush2.bf16.msra.mxu0 0
    %6430 = vmatprep.subr.bf16.mxu0 0
    %6431 = vmatpush2.bf16.msra.mxu0 0
    %6432 = vmatprep.subr.bf16.mxu0 0
    %6433 = vmatpush2.bf16.msra.mxu0 0
    %6434 = vmatprep.subr.bf16.mxu0 0
    %6435 = vmatpush2.bf16.msra.mxu0 0
    %6436 = vmatprep.subr.bf16.mxu0 0
    %6437 = vmatpush2.bf16.msra.mxu0 0
    %6438 = vmatprep.subr.bf16.mxu0 0
    %6439 = vmatpush2.bf16.msra.mxu0 0
    %6440 = vmatprep.subr.bf16.mxu0 0
    %6441 = vmatpush2.bf16.msra.mxu0 0
    %6442 = vmatprep.mubr.bf16.mxu0 0
    %6443 = vmatmul.mubr.bf16.gmra.mxu0 %v5983
    %v6444 = vpop.f32.mrf.mxu0
    %v6445 = vadd.f32 0.0, %v6444
    %v6446 = vpop.f32.mrf.mxu0
    %v6447 = vadd.f32 0.0, %v6446
    %v6448 = vpop.f32.mrf.mxu0
    %v6449 = vpop.f32.mrf.mxu0
    %6450 = vdwg.mxu0
    %6451 = vmatprep.subr.bf16.mxu0 %v6302
    %6452 = vmatpush1.bf16.msra.mxu0 %v6301
    %6453 = vmatprep.subr.bf16.mxu0 %v6294
    %6454 = vmatpush1.bf16.msra.mxu0 %v6293
    %6455 = vmatprep.subr.bf16.mxu0 %v6286
    %6456 = vmatpush1.bf16.msra.mxu0 %v6285
    %6457 = vmatprep.subr.bf16.mxu0 %v6278
    %6458 = vmatpush1.bf16.msra.mxu0 %v6277
    %6459 = vmatprep.subr.bf16.mxu0 %v6270
    %6460 = vmatpush1.bf16.msra.mxu0 %v6269
    %6461 = vmatprep.subr.bf16.mxu0 %v6262
    %6462 = vmatpush1.bf16.msra.mxu0 %v6261
    %6463 = vmatprep.subr.bf16.mxu0 %v6254
    %6464 = vmatpush1.bf16.msra.mxu0 %v6253
    %6465 = vmatprep.subr.bf16.mxu0 %v6246
    %6466 = vmatpush1.bf16.msra.mxu0 %v6245
    %6467 = vmatprep.subr.bf16.mxu0 0
    %6468 = vmatpush2.bf16.msra.mxu0 0
    %6469 = vmatprep.subr.bf16.mxu0 0
    %6470 = vmatpush2.bf16.msra.mxu0 0
    %6471 = vmatprep.subr.bf16.mxu0 0
    %6472 = vmatpush2.bf16.msra.mxu0 0
    %6473 = vmatprep.subr.bf16.mxu0 0
    %6474 = vmatpush2.bf16.msra.mxu0 0
    %6475 = vmatprep.subr.bf16.mxu0 0
    %6476 = vmatpush2.bf16.msra.mxu0 0
    %6477 = vmatprep.subr.bf16.mxu0 0
    %6478 = vmatpush2.bf16.msra.mxu0 0
    %6479 = vmatprep.subr.bf16.mxu0 0
    %6480 = vmatpush2.bf16.msra.mxu0 0
    %6481 = vmatprep.subr.bf16.mxu0 0
    %6482 = vmatpush2.bf16.msra.mxu0 0
    %6483 = vmatprep.mubr.bf16.mxu0 0
    %6484 = vmatmul.mubr.bf16.gmra.mxu0 %v5983
    %v6485 = vpop.f32.mrf.mxu0
    %v6486 = vadd.f32 0.0, %v6485
    %v6487 = vpop.f32.mrf.mxu0
    %v6488 = vadd.f32 0.0, %v6487
    %v6489 = vpop.f32.mrf.mxu0
    %v6490 = vpop.f32.mrf.mxu0
    %6491 = vdwg.mxu0
    %6492 = vmatprep.subr.bf16.mxu0 %v6304
    %6493 = vmatpush1.bf16.msra.mxu0 %v6303
    %6494 = vmatprep.subr.bf16.mxu0 %v6296
    %6495 = vmatpush1.bf16.msra.mxu0 %v6295
    %6496 = vmatprep.subr.bf16.mxu0 %v6288
    %6497 = vmatpush1.bf16.msra.mxu0 %v6287
    %6498 = vmatprep.subr.bf16.mxu0 %v6280
    %6499 = vmatpush1.bf16.msra.mxu0 %v6279
    %6500 = vmatprep.subr.bf16.mxu0 %v6272
    %6501 = vmatpush1.bf16.msra.mxu0 %v6271
    %6502 = vmatprep.subr.bf16.mxu0 %v6264
    %6503 = vmatpush1.bf16.msra.mxu0 %v6263
    %6504 = vmatprep.subr.bf16.mxu0 %v6256
    %6505 = vmatpush1.bf16.msra.mxu0 %v6255
    %6506 = vmatprep.subr.bf16.mxu0 %v6248
    %6507 = vmatpush1.bf16.msra.mxu0 %v6247
    %6508 = vmatprep.subr.bf16.mxu0 0
    %6509 = vmatpush2.bf16.msra.mxu0 0
    %6510 = vmatprep.subr.bf16.mxu0 0
    %6511 = vmatpush2.bf16.msra.mxu0 0
    %6512 = vmatprep.subr.bf16.mxu0 0
    %6513 = vmatpush2.bf16.msra.mxu0 0
    %6514 = vmatprep.subr.bf16.mxu0 0
    %6515 = vmatpush2.bf16.msra.mxu0 0
    %6516 = vmatprep.subr.bf16.mxu0 0
    %6517 = vmatpush2.bf16.msra.mxu0 0
    %6518 = vmatprep.subr.bf16.mxu0 0
    %6519 = vmatpush2.bf16.msra.mxu0 0
    %6520 = vmatprep.subr.bf16.mxu0 0
    %6521 = vmatpush2.bf16.msra.mxu0 0
    %6522 = vmatprep.subr.bf16.mxu0 0
    %6523 = vmatpush2.bf16.msra.mxu0 0
    %6524 = vmatprep.mubr.bf16.mxu0 0
    %6525 = vmatmul.mubr.bf16.gmra.mxu0 %v5983
    %v6526 = vpop.f32.mrf.mxu0
    %v6527 = vadd.f32 0.0, %v6526
    %v6528 = vpop.f32.mrf.mxu0
    %v6529 = vadd.f32 0.0, %v6528
    %v6530 = vpop.f32.mrf.mxu0
    %v6531 = vpop.f32.mrf.mxu0
    %6532 = vdwg.mxu0
    %v6533 = vadd.f32 %v5903, %v6404
    %v6534 = vadd.f32 %v5904, %v6406
    %v6535 = vadd.f32 %v5905, %v6445
    %v6536 = vadd.f32 %v5906, %v6447
    %v6537 = vadd.f32 %v5907, %v6486
    %v6538 = vadd.f32 %v5908, %v6488
    %v6539 = vadd.f32 %v5909, %v6527
    %v6540 = vadd.f32 %v5910, %v6529
    %v6543 = vrot.slane %v5265, 6
    %v6544 = vrot.slane %v5272, 6
    %v6545 = vsel %vm1454, %v6543, %v6544
    %v6546 = vrot.slane %v5279, 6
    %v6547 = vrot.slane %v5286, 6
    %v6548 = vsel %vm1454, %v6546, %v6547
    %v6551 = vsel %vm201, %v6545, 0.0
    %v6552 = vrot.slane %v6551, 4
    %v6553 = vadd.f32 %v6551, %v6552
    %v6554 = vrot.slane %v6553, 2
    %v6555 = vadd.f32 %v6553, %v6554
    %v6556 = vrot.slane %v6555, 1
    %v6557 = vadd.f32 %v6555, %v6556
    %v6558 = vsel %vm201, %v6548, 0.0
    %v6559 = vrot.slane %v6558, 4
    %v6560 = vadd.f32 %v6558, %v6559
    %v6561 = vrot.slane %v6560, 2
    %v6562 = vadd.f32 %v6560, %v6561
    %v6563 = vrot.slane %v6562, 1
    %v6564 = vadd.f32 %v6562, %v6563
    %v6565 = vpack.c.bf16 %v6557, %v6557
    %v6566 = vpack.c.bf16 %v6564, %v6564
    %v6569 = vunpack.c.l.b16 %v6565
    %v6570 = vunpack.c.l.b16 %v6566
    %v6571 = vsel %vm228, %v6570, %v6569
    %v6572 = vpack.c.b16 %v6571, %v6571
    %v6574 = vsel %vm163, %v6572, 0
    %6576 = vmatprep.subr.bf16.mxu0 0
    %6577 = vmatpush1.bf16.msra.mxu0 0
    %6578 = vmatprep.subr.bf16.mxu0 0
    %6579 = vmatpush1.bf16.msra.mxu0 0
    %6580 = vmatprep.subr.bf16.mxu0 0
    %6581 = vmatpush1.bf16.msra.mxu0 0
    %6582 = vmatprep.subr.bf16.mxu0 0
    %6583 = vmatpush1.bf16.msra.mxu0 0
    %6584 = vmatprep.subr.bf16.mxu0 0
    %6585 = vmatpush1.bf16.msra.mxu0 0
    %6586 = vmatprep.subr.bf16.mxu0 0
    %6587 = vmatpush1.bf16.msra.mxu0 0
    %6588 = vmatprep.subr.bf16.mxu0 0
    %6589 = vmatpush1.bf16.msra.mxu0 0
    %6590 = vmatprep.subr.bf16.mxu0 0
    %6591 = vmatpush1.bf16.msra.mxu0 %v235
    %6592 = vmatprep.subr.bf16.mxu0 0
    %6593 = vmatpush2.bf16.msra.mxu0 0
    %6594 = vmatprep.subr.bf16.mxu0 0
    %6595 = vmatpush2.bf16.msra.mxu0 0
    %6596 = vmatprep.subr.bf16.mxu0 0
    %6597 = vmatpush2.bf16.msra.mxu0 0
    %6598 = vmatprep.subr.bf16.mxu0 0
    %6599 = vmatpush2.bf16.msra.mxu0 0
    %6600 = vmatprep.subr.bf16.mxu0 0
    %6601 = vmatpush2.bf16.msra.mxu0 0
    %6602 = vmatprep.subr.bf16.mxu0 0
    %6603 = vmatpush2.bf16.msra.mxu0 0
    %6604 = vmatprep.subr.bf16.mxu0 0
    %6605 = vmatpush2.bf16.msra.mxu0 0
    %6606 = vmatprep.subr.bf16.mxu0 0
    %6607 = vmatpush2.bf16.msra.mxu0 0
    %6608 = vmatprep.mubr.bf16.mxu0 0
    %6609 = vmatmul.mubr.bf16.gmra.mxu0 %v6574
    %v6610 = vpop.f32.mrf.mxu0
    %v6611 = vadd.f32 %v222, %v6610
    %v6612 = vpop.f32.mrf.mxu0
    %v6613 = vpop.f32.mrf.mxu0
    %v6614 = vpop.f32.mrf.mxu0
    %6615 = vdwg.mxu0
    %v6616 = vmax.f32 %v6611, 0.0
    %v6617 = vpack.c.bf16 %v6616, %v6616
    %s6618 = scalar_lea.vmem [#allocation7], 5120
    %v6619 = vld [vmem:[%s6618] sm:$0xff]
    %v6620 = vld [vmem:[%s6618 + $0x8] sm:$0xff]
    %v6621 = vld [vmem:[%s6618 + $0x10] sm:$0xff]
    %v6622 = vld [vmem:[%s6618 + $0x18] sm:$0xff]
    %v6623 = vld [vmem:[%s6618 + $0x20] sm:$0xff]
    %v6624 = vld [vmem:[%s6618 + $0x28] sm:$0xff]
    %v6625 = vld [vmem:[%s6618 + $0x30] sm:$0xff]
    %v6626 = vld [vmem:[%s6618 + $0x38] sm:$0xff]
    %v6627 = vld [vmem:[%s6618 + $0x40] sm:$0xff]
    %v6628 = vld [vmem:[%s6618 + $0x48] sm:$0xff]
    %v6629 = vld [vmem:[%s6618 + $0x50] sm:$0xff]
    %v6630 = vld [vmem:[%s6618 + $0x58] sm:$0xff]
    %v6631 = vld [vmem:[%s6618 + $0x60] sm:$0xff]
    %v6632 = vld [vmem:[%s6618 + $0x68] sm:$0xff]
    %v6633 = vld [vmem:[%s6618 + $0x70] sm:$0xff]
    %v6634 = vld [vmem:[%s6618 + $0x78] sm:$0xff]
    %v6635 = vld [vmem:[%s6618 + $0x80] sm:$0xff]
    %v6636 = vld [vmem:[%s6618 + $0x88] sm:$0xff]
    %v6637 = vld [vmem:[%s6618 + $0x90] sm:$0xff]
    %v6638 = vld [vmem:[%s6618 + $0x98] sm:$0xff]
    %v6639 = vld [vmem:[%s6618 + $0xa0] sm:$0xff]
    %v6640 = vld [vmem:[%s6618 + $0xa8] sm:$0xff]
    %v6641 = vld [vmem:[%s6618 + $0xb0] sm:$0xff]
    %v6642 = vld [vmem:[%s6618 + $0xb8] sm:$0xff]
    %v6643 = vld [vmem:[%s6618 + $0xc0] sm:$0xff]
    %v6644 = vld [vmem:[%s6618 + $0xc8] sm:$0xff]
    %v6645 = vld [vmem:[%s6618 + $0xd0] sm:$0xff]
    %v6646 = vld [vmem:[%s6618 + $0xd8] sm:$0xff]
    %v6647 = vld [vmem:[%s6618 + $0xe0] sm:$0xff]
    %v6648 = vld [vmem:[%s6618 + $0xe8] sm:$0xff]
    %v6649 = vld [vmem:[%s6618 + $0xf0] sm:$0xff]
    %v6650 = vld [vmem:[%s6618 + $0xf8] sm:$0xff]
    %v6651 = vld [vmem:[%s6618 + $0x100] sm:$0xff]
    %v6652 = vld [vmem:[%s6618 + $0x108] sm:$0xff]
    %v6653 = vld [vmem:[%s6618 + $0x110] sm:$0xff]
    %v6654 = vld [vmem:[%s6618 + $0x118] sm:$0xff]
    %v6655 = vld [vmem:[%s6618 + $0x120] sm:$0xff]
    %v6656 = vld [vmem:[%s6618 + $0x128] sm:$0xff]
    %v6657 = vld [vmem:[%s6618 + $0x130] sm:$0xff]
    %v6658 = vld [vmem:[%s6618 + $0x138] sm:$0xff]
    %v6659 = vld [vmem:[%s6618 + $0x140] sm:$0xff]
    %v6660 = vld [vmem:[%s6618 + $0x148] sm:$0xff]
    %v6661 = vld [vmem:[%s6618 + $0x150] sm:$0xff]
    %v6662 = vld [vmem:[%s6618 + $0x158] sm:$0xff]
    %v6663 = vld [vmem:[%s6618 + $0x160] sm:$0xff]
    %v6664 = vld [vmem:[%s6618 + $0x168] sm:$0xff]
    %v6665 = vld [vmem:[%s6618 + $0x170] sm:$0xff]
    %v6666 = vld [vmem:[%s6618 + $0x178] sm:$0xff]
    %v6667 = vld [vmem:[%s6618 + $0x180] sm:$0xff]
    %v6668 = vld [vmem:[%s6618 + $0x188] sm:$0xff]
    %v6669 = vld [vmem:[%s6618 + $0x190] sm:$0xff]
    %v6670 = vld [vmem:[%s6618 + $0x198] sm:$0xff]
    %v6671 = vld [vmem:[%s6618 + $0x1a0] sm:$0xff]
    %v6672 = vld [vmem:[%s6618 + $0x1a8] sm:$0xff]
    %v6673 = vld [vmem:[%s6618 + $0x1b0] sm:$0xff]
    %v6674 = vld [vmem:[%s6618 + $0x1b8] sm:$0xff]
    %v6675 = vld [vmem:[%s6618 + $0x1c0] sm:$0xff]
    %v6676 = vld [vmem:[%s6618 + $0x1c8] sm:$0xff]
    %v6677 = vld [vmem:[%s6618 + $0x1d0] sm:$0xff]
    %v6678 = vld [vmem:[%s6618 + $0x1d8] sm:$0xff]
    %v6679 = vld [vmem:[%s6618 + $0x1e0] sm:$0xff]
    %v6680 = vld [vmem:[%s6618 + $0x1e8] sm:$0xff]
    %v6681 = vld [vmem:[%s6618 + $0x1f0] sm:$0xff]
    %v6682 = vld [vmem:[%s6618 + $0x1f8] sm:$0xff]
    %v6747 = vunpack.c.l.b16 %v6619
    %v6748 = vunpack.c.h.b16 %v6619
    %v6749 = vunpack.c.l.b16 %v6620
    %v6750 = vunpack.c.h.b16 %v6620
    %v6751 = vunpack.c.l.b16 %v6621
    %v6752 = vunpack.c.h.b16 %v6621
    %v6753 = vunpack.c.l.b16 %v6622
    %v6754 = vunpack.c.h.b16 %v6622
    %v6755 = vunpack.c.l.b16 %v6623
    %v6756 = vunpack.c.h.b16 %v6623
    %v6757 = vunpack.c.l.b16 %v6624
    %v6758 = vunpack.c.h.b16 %v6624
    %v6759 = vunpack.c.l.b16 %v6625
    %v6760 = vunpack.c.h.b16 %v6625
    %v6761 = vunpack.c.l.b16 %v6626
    %v6762 = vunpack.c.h.b16 %v6626
    %v6763 = vunpack.c.l.b16 %v6627
    %v6764 = vunpack.c.h.b16 %v6627
    %v6765 = vunpack.c.l.b16 %v6628
    %v6766 = vunpack.c.h.b16 %v6628
    %v6767 = vunpack.c.l.b16 %v6629
    %v6768 = vunpack.c.h.b16 %v6629
    %v6769 = vunpack.c.l.b16 %v6630
    %v6770 = vunpack.c.h.b16 %v6630
    %v6771 = vunpack.c.l.b16 %v6631
    %v6772 = vunpack.c.h.b16 %v6631
    %v6773 = vunpack.c.l.b16 %v6632
    %v6774 = vunpack.c.h.b16 %v6632
    %v6775 = vunpack.c.l.b16 %v6633
    %v6776 = vunpack.c.h.b16 %v6633
    %v6777 = vunpack.c.l.b16 %v6634
    %v6778 = vunpack.c.h.b16 %v6634
    %v6779 = vunpack.c.l.b16 %v6635
    %v6780 = vunpack.c.h.b16 %v6635
    %v6781 = vunpack.c.l.b16 %v6636
    %v6782 = vunpack.c.h.b16 %v6636
    %v6783 = vunpack.c.l.b16 %v6637
    %v6784 = vunpack.c.h.b16 %v6637
    %v6785 = vunpack.c.l.b16 %v6638
    %v6786 = vunpack.c.h.b16 %v6638
    %v6787 = vunpack.c.l.b16 %v6639
    %v6788 = vunpack.c.h.b16 %v6639
    %v6789 = vunpack.c.l.b16 %v6640
    %v6790 = vunpack.c.h.b16 %v6640
    %v6791 = vunpack.c.l.b16 %v6641
    %v6792 = vunpack.c.h.b16 %v6641
    %v6793 = vunpack.c.l.b16 %v6642
    %v6794 = vunpack.c.h.b16 %v6642
    %v6795 = vunpack.c.l.b16 %v6643
    %v6796 = vunpack.c.h.b16 %v6643
    %v6797 = vunpack.c.l.b16 %v6644
    %v6798 = vunpack.c.h.b16 %v6644
    %v6799 = vunpack.c.l.b16 %v6645
    %v6800 = vunpack.c.h.b16 %v6645
    %v6801 = vunpack.c.l.b16 %v6646
    %v6802 = vunpack.c.h.b16 %v6646
    %v6803 = vunpack.c.l.b16 %v6647
    %v6804 = vunpack.c.h.b16 %v6647
    %v6805 = vunpack.c.l.b16 %v6648
    %v6806 = vunpack.c.h.b16 %v6648
    %v6807 = vunpack.c.l.b16 %v6649
    %v6808 = vunpack.c.h.b16 %v6649
    %v6809 = vunpack.c.l.b16 %v6650
    %v6810 = vunpack.c.h.b16 %v6650
    %v6811 = vunpack.c.l.b16 %v6651
    %v6812 = vunpack.c.h.b16 %v6651
    %v6813 = vunpack.c.l.b16 %v6652
    %v6814 = vunpack.c.h.b16 %v6652
    %v6815 = vunpack.c.l.b16 %v6653
    %v6816 = vunpack.c.h.b16 %v6653
    %v6817 = vunpack.c.l.b16 %v6654
    %v6818 = vunpack.c.h.b16 %v6654
    %v6819 = vunpack.c.l.b16 %v6655
    %v6820 = vunpack.c.h.b16 %v6655
    %v6821 = vunpack.c.l.b16 %v6656
    %v6822 = vunpack.c.h.b16 %v6656
    %v6823 = vunpack.c.l.b16 %v6657
    %v6824 = vunpack.c.h.b16 %v6657
    %v6825 = vunpack.c.l.b16 %v6658
    %v6826 = vunpack.c.h.b16 %v6658
    %v6827 = vunpack.c.l.b16 %v6659
    %v6828 = vunpack.c.h.b16 %v6659
    %v6829 = vunpack.c.l.b16 %v6660
    %v6830 = vunpack.c.h.b16 %v6660
    %v6831 = vunpack.c.l.b16 %v6661
    %v6832 = vunpack.c.h.b16 %v6661
    %v6833 = vunpack.c.l.b16 %v6662
    %v6834 = vunpack.c.h.b16 %v6662
    %v6835 = vunpack.c.l.b16 %v6663
    %v6836 = vunpack.c.h.b16 %v6663
    %v6837 = vunpack.c.l.b16 %v6664
    %v6838 = vunpack.c.h.b16 %v6664
    %v6839 = vunpack.c.l.b16 %v6665
    %v6840 = vunpack.c.h.b16 %v6665
    %v6841 = vunpack.c.l.b16 %v6666
    %v6842 = vunpack.c.h.b16 %v6666
    %v6843 = vunpack.c.l.b16 %v6667
    %v6844 = vunpack.c.h.b16 %v6667
    %v6845 = vunpack.c.l.b16 %v6668
    %v6846 = vunpack.c.h.b16 %v6668
    %v6847 = vunpack.c.l.b16 %v6669
    %v6848 = vunpack.c.h.b16 %v6669
    %v6849 = vunpack.c.l.b16 %v6670
    %v6850 = vunpack.c.h.b16 %v6670
    %v6851 = vunpack.c.l.b16 %v6671
    %v6852 = vunpack.c.h.b16 %v6671
    %v6853 = vunpack.c.l.b16 %v6672
    %v6854 = vunpack.c.h.b16 %v6672
    %v6855 = vunpack.c.l.b16 %v6673
    %v6856 = vunpack.c.h.b16 %v6673
    %v6857 = vunpack.c.l.b16 %v6674
    %v6858 = vunpack.c.h.b16 %v6674
    %v6859 = vunpack.c.l.b16 %v6675
    %v6860 = vunpack.c.h.b16 %v6675
    %v6861 = vunpack.c.l.b16 %v6676
    %v6862 = vunpack.c.h.b16 %v6676
    %v6863 = vunpack.c.l.b16 %v6677
    %v6864 = vunpack.c.h.b16 %v6677
    %v6865 = vunpack.c.l.b16 %v6678
    %v6866 = vunpack.c.h.b16 %v6678
    %v6867 = vunpack.c.l.b16 %v6679
    %v6868 = vunpack.c.h.b16 %v6679
    %v6869 = vunpack.c.l.b16 %v6680
    %v6870 = vunpack.c.h.b16 %v6680
    %v6871 = vunpack.c.l.b16 %v6681
    %v6872 = vunpack.c.h.b16 %v6681
    %v6873 = vunpack.c.l.b16 %v6682
    %v6874 = vunpack.c.h.b16 %v6682
    %v6875 = vpack.c.b16 %v6755, %v6747
    %v6876 = vpack.c.b16 %v6756, %v6748
    %v6877 = vpack.c.b16 %v6757, %v6749
    %v6878 = vpack.c.b16 %v6758, %v6750
    %v6879 = vpack.c.b16 %v6759, %v6751
    %v6880 = vpack.c.b16 %v6760, %v6752
    %v6881 = vpack.c.b16 %v6761, %v6753
    %v6882 = vpack.c.b16 %v6762, %v6754
    %v6883 = vpack.c.b16 %v6771, %v6763
    %v6884 = vpack.c.b16 %v6772, %v6764
    %v6885 = vpack.c.b16 %v6773, %v6765
    %v6886 = vpack.c.b16 %v6774, %v6766
    %v6887 = vpack.c.b16 %v6775, %v6767
    %v6888 = vpack.c.b16 %v6776, %v6768
    %v6889 = vpack.c.b16 %v6777, %v6769
    %v6890 = vpack.c.b16 %v6778, %v6770
    %v6891 = vpack.c.b16 %v6787, %v6779
    %v6892 = vpack.c.b16 %v6788, %v6780
    %v6893 = vpack.c.b16 %v6789, %v6781
    %v6894 = vpack.c.b16 %v6790, %v6782
    %v6895 = vpack.c.b16 %v6791, %v6783
    %v6896 = vpack.c.b16 %v6792, %v6784
    %v6897 = vpack.c.b16 %v6793, %v6785
    %v6898 = vpack.c.b16 %v6794, %v6786
    %v6899 = vpack.c.b16 %v6803, %v6795
    %v6900 = vpack.c.b16 %v6804, %v6796
    %v6901 = vpack.c.b16 %v6805, %v6797
    %v6902 = vpack.c.b16 %v6806, %v6798
    %v6903 = vpack.c.b16 %v6807, %v6799
    %v6904 = vpack.c.b16 %v6808, %v6800
    %v6905 = vpack.c.b16 %v6809, %v6801
    %v6906 = vpack.c.b16 %v6810, %v6802
    %v6907 = vpack.c.b16 %v6819, %v6811
    %v6908 = vpack.c.b16 %v6820, %v6812
    %v6909 = vpack.c.b16 %v6821, %v6813
    %v6910 = vpack.c.b16 %v6822, %v6814
    %v6911 = vpack.c.b16 %v6823, %v6815
    %v6912 = vpack.c.b16 %v6824, %v6816
    %v6913 = vpack.c.b16 %v6825, %v6817
    %v6914 = vpack.c.b16 %v6826, %v6818
    %v6915 = vpack.c.b16 %v6835, %v6827
    %v6916 = vpack.c.b16 %v6836, %v6828
    %v6917 = vpack.c.b16 %v6837, %v6829
    %v6918 = vpack.c.b16 %v6838, %v6830
    %v6919 = vpack.c.b16 %v6839, %v6831
    %v6920 = vpack.c.b16 %v6840, %v6832
    %v6921 = vpack.c.b16 %v6841, %v6833
    %v6922 = vpack.c.b16 %v6842, %v6834
    %v6923 = vpack.c.b16 %v6851, %v6843
    %v6924 = vpack.c.b16 %v6852, %v6844
    %v6925 = vpack.c.b16 %v6853, %v6845
    %v6926 = vpack.c.b16 %v6854, %v6846
    %v6927 = vpack.c.b16 %v6855, %v6847
    %v6928 = vpack.c.b16 %v6856, %v6848
    %v6929 = vpack.c.b16 %v6857, %v6849
    %v6930 = vpack.c.b16 %v6858, %v6850
    %v6931 = vpack.c.b16 %v6867, %v6859
    %v6932 = vpack.c.b16 %v6868, %v6860
    %v6933 = vpack.c.b16 %v6869, %v6861
    %v6934 = vpack.c.b16 %v6870, %v6862
    %v6935 = vpack.c.b16 %v6871, %v6863
    %v6936 = vpack.c.b16 %v6872, %v6864
    %v6937 = vpack.c.b16 %v6873, %v6865
    %v6938 = vpack.c.b16 %v6874, %v6866
    %7003 = vmatprep.subr.bf16.mxu0 %v6932
    %7004 = vmatpush1.bf16.msra.mxu0 %v6931
    %7005 = vmatprep.subr.bf16.mxu0 %v6924
    %7006 = vmatpush1.bf16.msra.mxu0 %v6923
    %7007 = vmatprep.subr.bf16.mxu0 %v6916
    %7008 = vmatpush1.bf16.msra.mxu0 %v6915
    %7009 = vmatprep.subr.bf16.mxu0 %v6908
    %7010 = vmatpush1.bf16.msra.mxu0 %v6907
    %7011 = vmatprep.subr.bf16.mxu0 %v6900
    %7012 = vmatpush1.bf16.msra.mxu0 %v6899
    %7013 = vmatprep.subr.bf16.mxu0 %v6892
    %7014 = vmatpush1.bf16.msra.mxu0 %v6891
    %7015 = vmatprep.subr.bf16.mxu0 %v6884
    %7016 = vmatpush1.bf16.msra.mxu0 %v6883
    %7017 = vmatprep.subr.bf16.mxu0 %v6876
    %7018 = vmatpush1.bf16.msra.mxu0 %v6875
    %7019 = vmatprep.subr.bf16.mxu0 0
    %7020 = vmatpush2.bf16.msra.mxu0 0
    %7021 = vmatprep.subr.bf16.mxu0 0
    %7022 = vmatpush2.bf16.msra.mxu0 0
    %7023 = vmatprep.subr.bf16.mxu0 0
    %7024 = vmatpush2.bf16.msra.mxu0 0
    %7025 = vmatprep.subr.bf16.mxu0 0
    %7026 = vmatpush2.bf16.msra.mxu0 0
    %7027 = vmatprep.subr.bf16.mxu0 0
    %7028 = vmatpush2.bf16.msra.mxu0 0
    %7029 = vmatprep.subr.bf16.mxu0 0
    %7030 = vmatpush2.bf16.msra.mxu0 0
    %7031 = vmatprep.subr.bf16.mxu0 0
    %7032 = vmatpush2.bf16.msra.mxu0 0
    %7033 = vmatprep.subr.bf16.mxu0 0
    %7034 = vmatpush2.bf16.msra.mxu0 0
    %7035 = vmatprep.mubr.bf16.mxu0 0
    %7036 = vmatmul.mubr.bf16.gmra.mxu0 %v6617
    %v7037 = vpop.f32.mrf.mxu0
    %v7038 = vadd.f32 0.0, %v7037
    %v7039 = vpop.f32.mrf.mxu0
    %v7040 = vadd.f32 0.0, %v7039
    %v7041 = vpop.f32.mrf.mxu0
    %v7042 = vpop.f32.mrf.mxu0
    %7043 = vdwg.mxu0
    %7044 = vmatprep.subr.bf16.mxu0 %v6934
    %7045 = vmatpush1.bf16.msra.mxu0 %v6933
    %7046 = vmatprep.subr.bf16.mxu0 %v6926
    %7047 = vmatpush1.bf16.msra.mxu0 %v6925
    %7048 = vmatprep.subr.bf16.mxu0 %v6918
    %7049 = vmatpush1.bf16.msra.mxu0 %v6917
    %7050 = vmatprep.subr.bf16.mxu0 %v6910
    %7051 = vmatpush1.bf16.msra.mxu0 %v6909
    %7052 = vmatprep.subr.bf16.mxu0 %v6902
    %7053 = vmatpush1.bf16.msra.mxu0 %v6901
    %7054 = vmatprep.subr.bf16.mxu0 %v6894
    %7055 = vmatpush1.bf16.msra.mxu0 %v6893
    %7056 = vmatprep.subr.bf16.mxu0 %v6886
    %7057 = vmatpush1.bf16.msra.mxu0 %v6885
    %7058 = vmatprep.subr.bf16.mxu0 %v6878
    %7059 = vmatpush1.bf16.msra.mxu0 %v6877
    %7060 = vmatprep.subr.bf16.mxu0 0
    %7061 = vmatpush2.bf16.msra.mxu0 0
    %7062 = vmatprep.subr.bf16.mxu0 0
    %7063 = vmatpush2.bf16.msra.mxu0 0
    %7064 = vmatprep.subr.bf16.mxu0 0
    %7065 = vmatpush2.bf16.msra.mxu0 0
    %7066 = vmatprep.subr.bf16.mxu0 0
    %7067 = vmatpush2.bf16.msra.mxu0 0
    %7068 = vmatprep.subr.bf16.mxu0 0
    %7069 = vmatpush2.bf16.msra.mxu0 0
    %7070 = vmatprep.subr.bf16.mxu0 0
    %7071 = vmatpush2.bf16.msra.mxu0 0
    %7072 = vmatprep.subr.bf16.mxu0 0
    %7073 = vmatpush2.bf16.msra.mxu0 0
    %7074 = vmatprep.subr.bf16.mxu0 0
    %7075 = vmatpush2.bf16.msra.mxu0 0
    %7076 = vmatprep.mubr.bf16.mxu0 0
    %7077 = vmatmul.mubr.bf16.gmra.mxu0 %v6617
    %v7078 = vpop.f32.mrf.mxu0
    %v7079 = vadd.f32 0.0, %v7078
    %v7080 = vpop.f32.mrf.mxu0
    %v7081 = vadd.f32 0.0, %v7080
    %v7082 = vpop.f32.mrf.mxu0
    %v7083 = vpop.f32.mrf.mxu0
    %7084 = vdwg.mxu0
    %7085 = vmatprep.subr.bf16.mxu0 %v6936
    %7086 = vmatpush1.bf16.msra.mxu0 %v6935
    %7087 = vmatprep.subr.bf16.mxu0 %v6928
    %7088 = vmatpush1.bf16.msra.mxu0 %v6927
    %7089 = vmatprep.subr.bf16.mxu0 %v6920
    %7090 = vmatpush1.bf16.msra.mxu0 %v6919
    %7091 = vmatprep.subr.bf16.mxu0 %v6912
    %7092 = vmatpush1.bf16.msra.mxu0 %v6911
    %7093 = vmatprep.subr.bf16.mxu0 %v6904
    %7094 = vmatpush1.bf16.msra.mxu0 %v6903
    %7095 = vmatprep.subr.bf16.mxu0 %v6896
    %7096 = vmatpush1.bf16.msra.mxu0 %v6895
    %7097 = vmatprep.subr.bf16.mxu0 %v6888
    %7098 = vmatpush1.bf16.msra.mxu0 %v6887
    %7099 = vmatprep.subr.bf16.mxu0 %v6880
    %7100 = vmatpush1.bf16.msra.mxu0 %v6879
    %7101 = vmatprep.subr.bf16.mxu0 0
    %7102 = vmatpush2.bf16.msra.mxu0 0
    %7103 = vmatprep.subr.bf16.mxu0 0
    %7104 = vmatpush2.bf16.msra.mxu0 0
    %7105 = vmatprep.subr.bf16.mxu0 0
    %7106 = vmatpush2.bf16.msra.mxu0 0
    %7107 = vmatprep.subr.bf16.mxu0 0
    %7108 = vmatpush2.bf16.msra.mxu0 0
    %7109 = vmatprep.subr.bf16.mxu0 0
    %7110 = vmatpush2.bf16.msra.mxu0 0
    %7111 = vmatprep.subr.bf16.mxu0 0
    %7112 = vmatpush2.bf16.msra.mxu0 0
    %7113 = vmatprep.subr.bf16.mxu0 0
    %7114 = vmatpush2.bf16.msra.mxu0 0
    %7115 = vmatprep.subr.bf16.mxu0 0
    %7116 = vmatpush2.bf16.msra.mxu0 0
    %7117 = vmatprep.mubr.bf16.mxu0 0
    %7118 = vmatmul.mubr.bf16.gmra.mxu0 %v6617
    %v7119 = vpop.f32.mrf.mxu0
    %v7120 = vadd.f32 0.0, %v7119
    %v7121 = vpop.f32.mrf.mxu0
    %v7122 = vadd.f32 0.0, %v7121
    %v7123 = vpop.f32.mrf.mxu0
    %v7124 = vpop.f32.mrf.mxu0
    %7125 = vdwg.mxu0
    %7126 = vmatprep.subr.bf16.mxu0 %v6938
    %7127 = vmatpush1.bf16.msra.mxu0 %v6937
    %7128 = vmatprep.subr.bf16.mxu0 %v6930
    %7129 = vmatpush1.bf16.msra.mxu0 %v6929
    %7130 = vmatprep.subr.bf16.mxu0 %v6922
    %7131 = vmatpush1.bf16.msra.mxu0 %v6921
    %7132 = vmatprep.subr.bf16.mxu0 %v6914
    %7133 = vmatpush1.bf16.msra.mxu0 %v6913
    %7134 = vmatprep.subr.bf16.mxu0 %v6906
    %7135 = vmatpush1.bf16.msra.mxu0 %v6905
    %7136 = vmatprep.subr.bf16.mxu0 %v6898
    %7137 = vmatpush1.bf16.msra.mxu0 %v6897
    %7138 = vmatprep.subr.bf16.mxu0 %v6890
    %7139 = vmatpush1.bf16.msra.mxu0 %v6889
    %7140 = vmatprep.subr.bf16.mxu0 %v6882
    %7141 = vmatpush1.bf16.msra.mxu0 %v6881
    %7142 = vmatprep.subr.bf16.mxu0 0
    %7143 = vmatpush2.bf16.msra.mxu0 0
    %7144 = vmatprep.subr.bf16.mxu0 0
    %7145 = vmatpush2.bf16.msra.mxu0 0
    %7146 = vmatprep.subr.bf16.mxu0 0
    %7147 = vmatpush2.bf16.msra.mxu0 0
    %7148 = vmatprep.subr.bf16.mxu0 0
    %7149 = vmatpush2.bf16.msra.mxu0 0
    %7150 = vmatprep.subr.bf16.mxu0 0
    %7151 = vmatpush2.bf16.msra.mxu0 0
    %7152 = vmatprep.subr.bf16.mxu0 0
    %7153 = vmatpush2.bf16.msra.mxu0 0
    %7154 = vmatprep.subr.bf16.mxu0 0
    %7155 = vmatpush2.bf16.msra.mxu0 0
    %7156 = vmatprep.subr.bf16.mxu0 0
    %7157 = vmatpush2.bf16.msra.mxu0 0
    %7158 = vmatprep.mubr.bf16.mxu0 0
    %7159 = vmatmul.mubr.bf16.gmra.mxu0 %v6617
    %v7160 = vpop.f32.mrf.mxu0
    %v7161 = vadd.f32 0.0, %v7160
    %v7162 = vpop.f32.mrf.mxu0
    %v7163 = vadd.f32 0.0, %v7162
    %v7164 = vpop.f32.mrf.mxu0
    %v7165 = vpop.f32.mrf.mxu0
    %7166 = vdwg.mxu0
    %v7167 = vadd.f32 %v6533, %v7038
    %v7168 = vadd.f32 %v6534, %v7040
    %v7169 = vadd.f32 %v6535, %v7079
    %v7170 = vadd.f32 %v6536, %v7081
    %v7171 = vadd.f32 %v6537, %v7120
    %v7172 = vadd.f32 %v6538, %v7122
    %v7173 = vadd.f32 %v6539, %v7161
    %v7174 = vadd.f32 %v6540, %v7163
    %v7175 = vrot.slane %v5272, 1
    %v7176 = vrot.slane %v5286, 1
    %v7179 = vsel %vm201, %v7175, 0.0
    %v7180 = vrot.slane %v7179, 4
    %v7181 = vadd.f32 %v7179, %v7180
    %v7182 = vrot.slane %v7181, 2
    %v7183 = vadd.f32 %v7181, %v7182
    %v7184 = vrot.slane %v7183, 1
    %v7185 = vadd.f32 %v7183, %v7184
    %v7186 = vsel %vm201, %v7176, 0.0
    %v7187 = vrot.slane %v7186, 4
    %v7188 = vadd.f32 %v7186, %v7187
    %v7189 = vrot.slane %v7188, 2
    %v7190 = vadd.f32 %v7188, %v7189
    %v7191 = vrot.slane %v7190, 1
    %v7192 = vadd.f32 %v7190, %v7191
    %v7193 = vpack.c.bf16 %v7185, %v7185
    %v7194 = vpack.c.bf16 %v7192, %v7192
    %v7197 = vunpack.c.l.b16 %v7193
    %v7198 = vunpack.c.l.b16 %v7194
    %v7199 = vsel %vm228, %v7198, %v7197
    %v7200 = vpack.c.b16 %v7199, %v7199
    %v7202 = vsel %vm163, %v7200, 0
    %7204 = vmatprep.subr.bf16.mxu0 0
    %7205 = vmatpush1.bf16.msra.mxu0 0
    %7206 = vmatprep.subr.bf16.mxu0 0
    %7207 = vmatpush1.bf16.msra.mxu0 0
    %7208 = vmatprep.subr.bf16.mxu0 0
    %7209 = vmatpush1.bf16.msra.mxu0 0
    %7210 = vmatprep.subr.bf16.mxu0 0
    %7211 = vmatpush1.bf16.msra.mxu0 0
    %7212 = vmatprep.subr.bf16.mxu0 0
    %7213 = vmatpush1.bf16.msra.mxu0 0
    %7214 = vmatprep.subr.bf16.mxu0 0
    %7215 = vmatpush1.bf16.msra.mxu0 0
    %7216 = vmatprep.subr.bf16.mxu0 0
    %7217 = vmatpush1.bf16.msra.mxu0 0
    %7218 = vmatprep.subr.bf16.mxu0 0
    %7219 = vmatpush1.bf16.msra.mxu0 %v235
    %7220 = vmatprep.subr.bf16.mxu0 0
    %7221 = vmatpush2.bf16.msra.mxu0 0
    %7222 = vmatprep.subr.bf16.mxu0 0
    %7223 = vmatpush2.bf16.msra.mxu0 0
    %7224 = vmatprep.subr.bf16.mxu0 0
    %7225 = vmatpush2.bf16.msra.mxu0 0
    %7226 = vmatprep.subr.bf16.mxu0 0
    %7227 = vmatpush2.bf16.msra.mxu0 0
    %7228 = vmatprep.subr.bf16.mxu0 0
    %7229 = vmatpush2.bf16.msra.mxu0 0
    %7230 = vmatprep.subr.bf16.mxu0 0
    %7231 = vmatpush2.bf16.msra.mxu0 0
    %7232 = vmatprep.subr.bf16.mxu0 0
    %7233 = vmatpush2.bf16.msra.mxu0 0
    %7234 = vmatprep.subr.bf16.mxu0 0
    %7235 = vmatpush2.bf16.msra.mxu0 0
    %7236 = vmatprep.mubr.bf16.mxu0 0
    %7237 = vmatmul.mubr.bf16.gmra.mxu0 %v7202
    %v7238 = vpop.f32.mrf.mxu0
    %v7239 = vadd.f32 %v222, %v7238
    %v7240 = vpop.f32.mrf.mxu0
    %v7241 = vpop.f32.mrf.mxu0
    %v7242 = vpop.f32.mrf.mxu0
    %7243 = vdwg.mxu0
    %v7244 = vmax.f32 %v7239, 0.0
    %v7245 = vpack.c.bf16 %v7244, %v7244
    %s7246 = scalar_lea.vmem [#allocation7], 5632
    %v7247 = vld [vmem:[%s7246] sm:$0xff]
    %v7248 = vld [vmem:[%s7246 + $0x8] sm:$0xff]
    %v7249 = vld [vmem:[%s7246 + $0x10] sm:$0xff]
    %v7250 = vld [vmem:[%s7246 + $0x18] sm:$0xff]
    %v7251 = vld [vmem:[%s7246 + $0x20] sm:$0xff]
    %v7252 = vld [vmem:[%s7246 + $0x28] sm:$0xff]
    %v7253 = vld [vmem:[%s7246 + $0x30] sm:$0xff]
    %v7254 = vld [vmem:[%s7246 + $0x38] sm:$0xff]
    %v7255 = vld [vmem:[%s7246 + $0x40] sm:$0xff]
    %v7256 = vld [vmem:[%s7246 + $0x48] sm:$0xff]
    %v7257 = vld [vmem:[%s7246 + $0x50] sm:$0xff]
    %v7258 = vld [vmem:[%s7246 + $0x58] sm:$0xff]
    %v7259 = vld [vmem:[%s7246 + $0x60] sm:$0xff]
    %v7260 = vld [vmem:[%s7246 + $0x68] sm:$0xff]
    %v7261 = vld [vmem:[%s7246 + $0x70] sm:$0xff]
    %v7262 = vld [vmem:[%s7246 + $0x78] sm:$0xff]
    %v7263 = vld [vmem:[%s7246 + $0x80] sm:$0xff]
    %v7264 = vld [vmem:[%s7246 + $0x88] sm:$0xff]
    %v7265 = vld [vmem:[%s7246 + $0x90] sm:$0xff]
    %v7266 = vld [vmem:[%s7246 + $0x98] sm:$0xff]
    %v7267 = vld [vmem:[%s7246 + $0xa0] sm:$0xff]
    %v7268 = vld [vmem:[%s7246 + $0xa8] sm:$0xff]
    %v7269 = vld [vmem:[%s7246 + $0xb0] sm:$0xff]
    %v7270 = vld [vmem:[%s7246 + $0xb8] sm:$0xff]
    %v7271 = vld [vmem:[%s7246 + $0xc0] sm:$0xff]
    %v7272 = vld [vmem:[%s7246 + $0xc8] sm:$0xff]
    %v7273 = vld [vmem:[%s7246 + $0xd0] sm:$0xff]
    %v7274 = vld [vmem:[%s7246 + $0xd8] sm:$0xff]
    %v7275 = vld [vmem:[%s7246 + $0xe0] sm:$0xff]
    %v7276 = vld [vmem:[%s7246 + $0xe8] sm:$0xff]
    %v7277 = vld [vmem:[%s7246 + $0xf0] sm:$0xff]
    %v7278 = vld [vmem:[%s7246 + $0xf8] sm:$0xff]
    %v7279 = vld [vmem:[%s7246 + $0x100] sm:$0xff]
    %v7280 = vld [vmem:[%s7246 + $0x108] sm:$0xff]
    %v7281 = vld [vmem:[%s7246 + $0x110] sm:$0xff]
    %v7282 = vld [vmem:[%s7246 + $0x118] sm:$0xff]
    %v7283 = vld [vmem:[%s7246 + $0x120] sm:$0xff]
    %v7284 = vld [vmem:[%s7246 + $0x128] sm:$0xff]
    %v7285 = vld [vmem:[%s7246 + $0x130] sm:$0xff]
    %v7286 = vld [vmem:[%s7246 + $0x138] sm:$0xff]
    %v7287 = vld [vmem:[%s7246 + $0x140] sm:$0xff]
    %v7288 = vld [vmem:[%s7246 + $0x148] sm:$0xff]
    %v7289 = vld [vmem:[%s7246 + $0x150] sm:$0xff]
    %v7290 = vld [vmem:[%s7246 + $0x158] sm:$0xff]
    %v7291 = vld [vmem:[%s7246 + $0x160] sm:$0xff]
    %v7292 = vld [vmem:[%s7246 + $0x168] sm:$0xff]
    %v7293 = vld [vmem:[%s7246 + $0x170] sm:$0xff]
    %v7294 = vld [vmem:[%s7246 + $0x178] sm:$0xff]
    %v7295 = vld [vmem:[%s7246 + $0x180] sm:$0xff]
    %v7296 = vld [vmem:[%s7246 + $0x188] sm:$0xff]
    %v7297 = vld [vmem:[%s7246 + $0x190] sm:$0xff]
    %v7298 = vld [vmem:[%s7246 + $0x198] sm:$0xff]
    %v7299 = vld [vmem:[%s7246 + $0x1a0] sm:$0xff]
    %v7300 = vld [vmem:[%s7246 + $0x1a8] sm:$0xff]
    %v7301 = vld [vmem:[%s7246 + $0x1b0] sm:$0xff]
    %v7302 = vld [vmem:[%s7246 + $0x1b8] sm:$0xff]
    %v7303 = vld [vmem:[%s7246 + $0x1c0] sm:$0xff]
    %v7304 = vld [vmem:[%s7246 + $0x1c8] sm:$0xff]
    %v7305 = vld [vmem:[%s7246 + $0x1d0] sm:$0xff]
    %v7306 = vld [vmem:[%s7246 + $0x1d8] sm:$0xff]
    %v7307 = vld [vmem:[%s7246 + $0x1e0] sm:$0xff]
    %v7308 = vld [vmem:[%s7246 + $0x1e8] sm:$0xff]
    %v7309 = vld [vmem:[%s7246 + $0x1f0] sm:$0xff]
    %v7310 = vld [vmem:[%s7246 + $0x1f8] sm:$0xff]
    %v7375 = vunpack.c.l.b16 %v7247
    %v7376 = vunpack.c.h.b16 %v7247
    %v7377 = vunpack.c.l.b16 %v7248
    %v7378 = vunpack.c.h.b16 %v7248
    %v7379 = vunpack.c.l.b16 %v7249
    %v7380 = vunpack.c.h.b16 %v7249
    %v7381 = vunpack.c.l.b16 %v7250
    %v7382 = vunpack.c.h.b16 %v7250
    %v7383 = vunpack.c.l.b16 %v7251
    %v7384 = vunpack.c.h.b16 %v7251
    %v7385 = vunpack.c.l.b16 %v7252
    %v7386 = vunpack.c.h.b16 %v7252
    %v7387 = vunpack.c.l.b16 %v7253
    %v7388 = vunpack.c.h.b16 %v7253
    %v7389 = vunpack.c.l.b16 %v7254
    %v7390 = vunpack.c.h.b16 %v7254
    %v7391 = vunpack.c.l.b16 %v7255
    %v7392 = vunpack.c.h.b16 %v7255
    %v7393 = vunpack.c.l.b16 %v7256
    %v7394 = vunpack.c.h.b16 %v7256
    %v7395 = vunpack.c.l.b16 %v7257
    %v7396 = vunpack.c.h.b16 %v7257
    %v7397 = vunpack.c.l.b16 %v7258
    %v7398 = vunpack.c.h.b16 %v7258
    %v7399 = vunpack.c.l.b16 %v7259
    %v7400 = vunpack.c.h.b16 %v7259
    %v7401 = vunpack.c.l.b16 %v7260
    %v7402 = vunpack.c.h.b16 %v7260
    %v7403 = vunpack.c.l.b16 %v7261
    %v7404 = vunpack.c.h.b16 %v7261
    %v7405 = vunpack.c.l.b16 %v7262
    %v7406 = vunpack.c.h.b16 %v7262
    %v7407 = vunpack.c.l.b16 %v7263
    %v7408 = vunpack.c.h.b16 %v7263
    %v7409 = vunpack.c.l.b16 %v7264
    %v7410 = vunpack.c.h.b16 %v7264
    %v7411 = vunpack.c.l.b16 %v7265
    %v7412 = vunpack.c.h.b16 %v7265
    %v7413 = vunpack.c.l.b16 %v7266
    %v7414 = vunpack.c.h.b16 %v7266
    %v7415 = vunpack.c.l.b16 %v7267
    %v7416 = vunpack.c.h.b16 %v7267
    %v7417 = vunpack.c.l.b16 %v7268
    %v7418 = vunpack.c.h.b16 %v7268
    %v7419 = vunpack.c.l.b16 %v7269
    %v7420 = vunpack.c.h.b16 %v7269
    %v7421 = vunpack.c.l.b16 %v7270
    %v7422 = vunpack.c.h.b16 %v7270
    %v7423 = vunpack.c.l.b16 %v7271
    %v7424 = vunpack.c.h.b16 %v7271
    %v7425 = vunpack.c.l.b16 %v7272
    %v7426 = vunpack.c.h.b16 %v7272
    %v7427 = vunpack.c.l.b16 %v7273
    %v7428 = vunpack.c.h.b16 %v7273
    %v7429 = vunpack.c.l.b16 %v7274
    %v7430 = vunpack.c.h.b16 %v7274
    %v7431 = vunpack.c.l.b16 %v7275
    %v7432 = vunpack.c.h.b16 %v7275
    %v7433 = vunpack.c.l.b16 %v7276
    %v7434 = vunpack.c.h.b16 %v7276
    %v7435 = vunpack.c.l.b16 %v7277
    %v7436 = vunpack.c.h.b16 %v7277
    %v7437 = vunpack.c.l.b16 %v7278
    %v7438 = vunpack.c.h.b16 %v7278
    %v7439 = vunpack.c.l.b16 %v7279
    %v7440 = vunpack.c.h.b16 %v7279
    %v7441 = vunpack.c.l.b16 %v7280
    %v7442 = vunpack.c.h.b16 %v7280
    %v7443 = vunpack.c.l.b16 %v7281
    %v7444 = vunpack.c.h.b16 %v7281
    %v7445 = vunpack.c.l.b16 %v7282
    %v7446 = vunpack.c.h.b16 %v7282
    %v7447 = vunpack.c.l.b16 %v7283
    %v7448 = vunpack.c.h.b16 %v7283
    %v7449 = vunpack.c.l.b16 %v7284
    %v7450 = vunpack.c.h.b16 %v7284
    %v7451 = vunpack.c.l.b16 %v7285
    %v7452 = vunpack.c.h.b16 %v7285
    %v7453 = vunpack.c.l.b16 %v7286
    %v7454 = vunpack.c.h.b16 %v7286
    %v7455 = vunpack.c.l.b16 %v7287
    %v7456 = vunpack.c.h.b16 %v7287
    %v7457 = vunpack.c.l.b16 %v7288
    %v7458 = vunpack.c.h.b16 %v7288
    %v7459 = vunpack.c.l.b16 %v7289
    %v7460 = vunpack.c.h.b16 %v7289
    %v7461 = vunpack.c.l.b16 %v7290
    %v7462 = vunpack.c.h.b16 %v7290
    %v7463 = vunpack.c.l.b16 %v7291
    %v7464 = vunpack.c.h.b16 %v7291
    %v7465 = vunpack.c.l.b16 %v7292
    %v7466 = vunpack.c.h.b16 %v7292
    %v7467 = vunpack.c.l.b16 %v7293
    %v7468 = vunpack.c.h.b16 %v7293
    %v7469 = vunpack.c.l.b16 %v7294
    %v7470 = vunpack.c.h.b16 %v7294
    %v7471 = vunpack.c.l.b16 %v7295
    %v7472 = vunpack.c.h.b16 %v7295
    %v7473 = vunpack.c.l.b16 %v7296
    %v7474 = vunpack.c.h.b16 %v7296
    %v7475 = vunpack.c.l.b16 %v7297
    %v7476 = vunpack.c.h.b16 %v7297
    %v7477 = vunpack.c.l.b16 %v7298
    %v7478 = vunpack.c.h.b16 %v7298
    %v7479 = vunpack.c.l.b16 %v7299
    %v7480 = vunpack.c.h.b16 %v7299
    %v7481 = vunpack.c.l.b16 %v7300
    %v7482 = vunpack.c.h.b16 %v7300
    %v7483 = vunpack.c.l.b16 %v7301
    %v7484 = vunpack.c.h.b16 %v7301
    %v7485 = vunpack.c.l.b16 %v7302
    %v7486 = vunpack.c.h.b16 %v7302
    %v7487 = vunpack.c.l.b16 %v7303
    %v7488 = vunpack.c.h.b16 %v7303
    %v7489 = vunpack.c.l.b16 %v7304
    %v7490 = vunpack.c.h.b16 %v7304
    %v7491 = vunpack.c.l.b16 %v7305
    %v7492 = vunpack.c.h.b16 %v7305
    %v7493 = vunpack.c.l.b16 %v7306
    %v7494 = vunpack.c.h.b16 %v7306
    %v7495 = vunpack.c.l.b16 %v7307
    %v7496 = vunpack.c.h.b16 %v7307
    %v7497 = vunpack.c.l.b16 %v7308
    %v7498 = vunpack.c.h.b16 %v7308
    %v7499 = vunpack.c.l.b16 %v7309
    %v7500 = vunpack.c.h.b16 %v7309
    %v7501 = vunpack.c.l.b16 %v7310
    %v7502 = vunpack.c.h.b16 %v7310
    %v7503 = vpack.c.b16 %v7383, %v7375
    %v7504 = vpack.c.b16 %v7384, %v7376
    %v7505 = vpack.c.b16 %v7385, %v7377
    %v7506 = vpack.c.b16 %v7386, %v7378
    %v7507 = vpack.c.b16 %v7387, %v7379
    %v7508 = vpack.c.b16 %v7388, %v7380
    %v7509 = vpack.c.b16 %v7389, %v7381
    %v7510 = vpack.c.b16 %v7390, %v7382
    %v7511 = vpack.c.b16 %v7399, %v7391
    %v7512 = vpack.c.b16 %v7400, %v7392
    %v7513 = vpack.c.b16 %v7401, %v7393
    %v7514 = vpack.c.b16 %v7402, %v7394
    %v7515 = vpack.c.b16 %v7403, %v7395
    %v7516 = vpack.c.b16 %v7404, %v7396
    %v7517 = vpack.c.b16 %v7405, %v7397
    %v7518 = vpack.c.b16 %v7406, %v7398
    %v7519 = vpack.c.b16 %v7415, %v7407
    %v7520 = vpack.c.b16 %v7416, %v7408
    %v7521 = vpack.c.b16 %v7417, %v7409
    %v7522 = vpack.c.b16 %v7418, %v7410
    %v7523 = vpack.c.b16 %v7419, %v7411
    %v7524 = vpack.c.b16 %v7420, %v7412
    %v7525 = vpack.c.b16 %v7421, %v7413
    %v7526 = vpack.c.b16 %v7422, %v7414
    %v7527 = vpack.c.b16 %v7431, %v7423
    %v7528 = vpack.c.b16 %v7432, %v7424
    %v7529 = vpack.c.b16 %v7433, %v7425
    %v7530 = vpack.c.b16 %v7434, %v7426
    %v7531 = vpack.c.b16 %v7435, %v7427
    %v7532 = vpack.c.b16 %v7436, %v7428
    %v7533 = vpack.c.b16 %v7437, %v7429
    %v7534 = vpack.c.b16 %v7438, %v7430
    %v7535 = vpack.c.b16 %v7447, %v7439
    %v7536 = vpack.c.b16 %v7448, %v7440
    %v7537 = vpack.c.b16 %v7449, %v7441
    %v7538 = vpack.c.b16 %v7450, %v7442
    %v7539 = vpack.c.b16 %v7451, %v7443
    %v7540 = vpack.c.b16 %v7452, %v7444
    %v7541 = vpack.c.b16 %v7453, %v7445
    %v7542 = vpack.c.b16 %v7454, %v7446
    %v7543 = vpack.c.b16 %v7463, %v7455
    %v7544 = vpack.c.b16 %v7464, %v7456
    %v7545 = vpack.c.b16 %v7465, %v7457
    %v7546 = vpack.c.b16 %v7466, %v7458
    %v7547 = vpack.c.b16 %v7467, %v7459
    %v7548 = vpack.c.b16 %v7468, %v7460
    %v7549 = vpack.c.b16 %v7469, %v7461
    %v7550 = vpack.c.b16 %v7470, %v7462
    %v7551 = vpack.c.b16 %v7479, %v7471
    %v7552 = vpack.c.b16 %v7480, %v7472
    %v7553 = vpack.c.b16 %v7481, %v7473
    %v7554 = vpack.c.b16 %v7482, %v7474
    %v7555 = vpack.c.b16 %v7483, %v7475
    %v7556 = vpack.c.b16 %v7484, %v7476
    %v7557 = vpack.c.b16 %v7485, %v7477
    %v7558 = vpack.c.b16 %v7486, %v7478
    %v7559 = vpack.c.b16 %v7495, %v7487
    %v7560 = vpack.c.b16 %v7496, %v7488
    %v7561 = vpack.c.b16 %v7497, %v7489
    %v7562 = vpack.c.b16 %v7498, %v7490
    %v7563 = vpack.c.b16 %v7499, %v7491
    %v7564 = vpack.c.b16 %v7500, %v7492
    %v7565 = vpack.c.b16 %v7501, %v7493
    %v7566 = vpack.c.b16 %v7502, %v7494
    %7631 = vmatprep.subr.bf16.mxu0 %v7560
    %7632 = vmatpush1.bf16.msra.mxu0 %v7559
    %7633 = vmatprep.subr.bf16.mxu0 %v7552
    %7634 = vmatpush1.bf16.msra.mxu0 %v7551
    %7635 = vmatprep.subr.bf16.mxu0 %v7544
    %7636 = vmatpush1.bf16.msra.mxu0 %v7543
    %7637 = vmatprep.subr.bf16.mxu0 %v7536
    %7638 = vmatpush1.bf16.msra.mxu0 %v7535
    %7639 = vmatprep.subr.bf16.mxu0 %v7528
    %7640 = vmatpush1.bf16.msra.mxu0 %v7527
    %7641 = vmatprep.subr.bf16.mxu0 %v7520
    %7642 = vmatpush1.bf16.msra.mxu0 %v7519
    %7643 = vmatprep.subr.bf16.mxu0 %v7512
    %7644 = vmatpush1.bf16.msra.mxu0 %v7511
    %7645 = vmatprep.subr.bf16.mxu0 %v7504
    %7646 = vmatpush1.bf16.msra.mxu0 %v7503
    %7647 = vmatprep.subr.bf16.mxu0 0
    %7648 = vmatpush2.bf16.msra.mxu0 0
    %7649 = vmatprep.subr.bf16.mxu0 0
    %7650 = vmatpush2.bf16.msra.mxu0 0
    %7651 = vmatprep.subr.bf16.mxu0 0
    %7652 = vmatpush2.bf16.msra.mxu0 0
    %7653 = vmatprep.subr.bf16.mxu0 0
    %7654 = vmatpush2.bf16.msra.mxu0 0
    %7655 = vmatprep.subr.bf16.mxu0 0
    %7656 = vmatpush2.bf16.msra.mxu0 0
    %7657 = vmatprep.subr.bf16.mxu0 0
    %7658 = vmatpush2.bf16.msra.mxu0 0
    %7659 = vmatprep.subr.bf16.mxu0 0
    %7660 = vmatpush2.bf16.msra.mxu0 0
    %7661 = vmatprep.subr.bf16.mxu0 0
    %7662 = vmatpush2.bf16.msra.mxu0 0
    %7663 = vmatprep.mubr.bf16.mxu0 0
    %7664 = vmatmul.mubr.bf16.gmra.mxu0 %v7245
    %v7665 = vpop.f32.mrf.mxu0
    %v7666 = vadd.f32 0.0, %v7665
    %v7667 = vpop.f32.mrf.mxu0
    %v7668 = vadd.f32 0.0, %v7667
    %v7669 = vpop.f32.mrf.mxu0
    %v7670 = vpop.f32.mrf.mxu0
    %7671 = vdwg.mxu0
    %7672 = vmatprep.subr.bf16.mxu0 %v7562
    %7673 = vmatpush1.bf16.msra.mxu0 %v7561
    %7674 = vmatprep.subr.bf16.mxu0 %v7554
    %7675 = vmatpush1.bf16.msra.mxu0 %v7553
    %7676 = vmatprep.subr.bf16.mxu0 %v7546
    %7677 = vmatpush1.bf16.msra.mxu0 %v7545
    %7678 = vmatprep.subr.bf16.mxu0 %v7538
    %7679 = vmatpush1.bf16.msra.mxu0 %v7537
    %7680 = vmatprep.subr.bf16.mxu0 %v7530
    %7681 = vmatpush1.bf16.msra.mxu0 %v7529
    %7682 = vmatprep.subr.bf16.mxu0 %v7522
    %7683 = vmatpush1.bf16.msra.mxu0 %v7521
    %7684 = vmatprep.subr.bf16.mxu0 %v7514
    %7685 = vmatpush1.bf16.msra.mxu0 %v7513
    %7686 = vmatprep.subr.bf16.mxu0 %v7506
    %7687 = vmatpush1.bf16.msra.mxu0 %v7505
    %7688 = vmatprep.subr.bf16.mxu0 0
    %7689 = vmatpush2.bf16.msra.mxu0 0
    %7690 = vmatprep.subr.bf16.mxu0 0
    %7691 = vmatpush2.bf16.msra.mxu0 0
    %7692 = vmatprep.subr.bf16.mxu0 0
    %7693 = vmatpush2.bf16.msra.mxu0 0
    %7694 = vmatprep.subr.bf16.mxu0 0
    %7695 = vmatpush2.bf16.msra.mxu0 0
    %7696 = vmatprep.subr.bf16.mxu0 0
    %7697 = vmatpush2.bf16.msra.mxu0 0
    %7698 = vmatprep.subr.bf16.mxu0 0
    %7699 = vmatpush2.bf16.msra.mxu0 0
    %7700 = vmatprep.subr.bf16.mxu0 0
    %7701 = vmatpush2.bf16.msra.mxu0 0
    %7702 = vmatprep.subr.bf16.mxu0 0
    %7703 = vmatpush2.bf16.msra.mxu0 0
    %7704 = vmatprep.mubr.bf16.mxu0 0
    %7705 = vmatmul.mubr.bf16.gmra.mxu0 %v7245
    %v7706 = vpop.f32.mrf.mxu0
    %v7707 = vadd.f32 0.0, %v7706
    %v7708 = vpop.f32.mrf.mxu0
    %v7709 = vadd.f32 0.0, %v7708
    %v7710 = vpop.f32.mrf.mxu0
    %v7711 = vpop.f32.mrf.mxu0
    %7712 = vdwg.mxu0
    %7713 = vmatprep.subr.bf16.mxu0 %v7564
    %7714 = vmatpush1.bf16.msra.mxu0 %v7563
    %7715 = vmatprep.subr.bf16.mxu0 %v7556
    %7716 = vmatpush1.bf16.msra.mxu0 %v7555
    %7717 = vmatprep.subr.bf16.mxu0 %v7548
    %7718 = vmatpush1.bf16.msra.mxu0 %v7547
    %7719 = vmatprep.subr.bf16.mxu0 %v7540
    %7720 = vmatpush1.bf16.msra.mxu0 %v7539
    %7721 = vmatprep.subr.bf16.mxu0 %v7532
    %7722 = vmatpush1.bf16.msra.mxu0 %v7531
    %7723 = vmatprep.subr.bf16.mxu0 %v7524
    %7724 = vmatpush1.bf16.msra.mxu0 %v7523
    %7725 = vmatprep.subr.bf16.mxu0 %v7516
    %7726 = vmatpush1.bf16.msra.mxu0 %v7515
    %7727 = vmatprep.subr.bf16.mxu0 %v7508
    %7728 = vmatpush1.bf16.msra.mxu0 %v7507
    %7729 = vmatprep.subr.bf16.mxu0 0
    %7730 = vmatpush2.bf16.msra.mxu0 0
    %7731 = vmatprep.subr.bf16.mxu0 0
    %7732 = vmatpush2.bf16.msra.mxu0 0
    %7733 = vmatprep.subr.bf16.mxu0 0
    %7734 = vmatpush2.bf16.msra.mxu0 0
    %7735 = vmatprep.subr.bf16.mxu0 0
    %7736 = vmatpush2.bf16.msra.mxu0 0
    %7737 = vmatprep.subr.bf16.mxu0 0
    %7738 = vmatpush2.bf16.msra.mxu0 0
    %7739 = vmatprep.subr.bf16.mxu0 0
    %7740 = vmatpush2.bf16.msra.mxu0 0
    %7741 = vmatprep.subr.bf16.mxu0 0
    %7742 = vmatpush2.bf16.msra.mxu0 0
    %7743 = vmatprep.subr.bf16.mxu0 0
    %7744 = vmatpush2.bf16.msra.mxu0 0
    %7745 = vmatprep.mubr.bf16.mxu0 0
    %7746 = vmatmul.mubr.bf16.gmra.mxu0 %v7245
    %v7747 = vpop.f32.mrf.mxu0
    %v7748 = vadd.f32 0.0, %v7747
    %v7749 = vpop.f32.mrf.mxu0
    %v7750 = vadd.f32 0.0, %v7749
    %v7751 = vpop.f32.mrf.mxu0
    %v7752 = vpop.f32.mrf.mxu0
    %7753 = vdwg.mxu0
    %7754 = vmatprep.subr.bf16.mxu0 %v7566
    %7755 = vmatpush1.bf16.msra.mxu0 %v7565
    %7756 = vmatprep.subr.bf16.mxu0 %v7558
    %7757 = vmatpush1.bf16.msra.mxu0 %v7557
    %7758 = vmatprep.subr.bf16.mxu0 %v7550
    %7759 = vmatpush1.bf16.msra.mxu0 %v7549
    %7760 = vmatprep.subr.bf16.mxu0 %v7542
    %7761 = vmatpush1.bf16.msra.mxu0 %v7541
    %7762 = vmatprep.subr.bf16.mxu0 %v7534
    %7763 = vmatpush1.bf16.msra.mxu0 %v7533
    %7764 = vmatprep.subr.bf16.mxu0 %v7526
    %7765 = vmatpush1.bf16.msra.mxu0 %v7525
    %7766 = vmatprep.subr.bf16.mxu0 %v7518
    %7767 = vmatpush1.bf16.msra.mxu0 %v7517
    %7768 = vmatprep.subr.bf16.mxu0 %v7510
    %7769 = vmatpush1.bf16.msra.mxu0 %v7509
    %7770 = vmatprep.subr.bf16.mxu0 0
    %7771 = vmatpush2.bf16.msra.mxu0 0
    %7772 = vmatprep.subr.bf16.mxu0 0
    %7773 = vmatpush2.bf16.msra.mxu0 0
    %7774 = vmatprep.subr.bf16.mxu0 0
    %7775 = vmatpush2.bf16.msra.mxu0 0
    %7776 = vmatprep.subr.bf16.mxu0 0
    %7777 = vmatpush2.bf16.msra.mxu0 0
    %7778 = vmatprep.subr.bf16.mxu0 0
    %7779 = vmatpush2.bf16.msra.mxu0 0
    %7780 = vmatprep.subr.bf16.mxu0 0
    %7781 = vmatpush2.bf16.msra.mxu0 0
    %7782 = vmatprep.subr.bf16.mxu0 0
    %7783 = vmatpush2.bf16.msra.mxu0 0
    %7784 = vmatprep.subr.bf16.mxu0 0
    %7785 = vmatpush2.bf16.msra.mxu0 0
    %7786 = vmatprep.mubr.bf16.mxu0 0
    %7787 = vmatmul.mubr.bf16.gmra.mxu0 %v7245
    %v7788 = vpop.f32.mrf.mxu0
    %v7789 = vadd.f32 0.0, %v7788
    %v7790 = vpop.f32.mrf.mxu0
    %v7791 = vadd.f32 0.0, %v7790
    %v7792 = vpop.f32.mrf.mxu0
    %v7793 = vpop.f32.mrf.mxu0
    %7794 = vdwg.mxu0
    %v7795 = vadd.f32 %v7167, %v7666
    %v7796 = vadd.f32 %v7168, %v7668
    %v7797 = vadd.f32 %v7169, %v7707
    %v7798 = vadd.f32 %v7170, %v7709
    %v7799 = vadd.f32 %v7171, %v7748
    %v7800 = vadd.f32 %v7172, %v7750
    %v7801 = vadd.f32 %v7173, %v7789
    %v7802 = vadd.f32 %v7174, %v7791
    %v7803 = vadd.f32 %v5262, %v5264
    %v7804 = vsel %vm163, %v126, 0.0
    %v7805 = vadd.f32 %v7803, %v7804
    %v7806 = vsel %vm163, %v128, 0.0
    %v7807 = vadd.f32 %v7805, %v7806
    %v7808 = vsel %vm163, %v130, 0.0
    %v7809 = vadd.f32 %v7807, %v7808
    %v7810 = vadd.f32 %v5269, %v5271
    %v7811 = vsel %vm173, %v127, 0.0
    %v7812 = vadd.f32 %v7810, %v7811
    %v7813 = vsel %vm173, %v129, 0.0
    %v7814 = vadd.f32 %v7812, %v7813
    %v7815 = vsel %vm173, %v131, 0.0
    %v7816 = vadd.f32 %v7814, %v7815
    %v7817 = vadd.f32 %v5276, %v5278
    %v7818 = vsel %vm163, %v154, 0.0
    %v7819 = vadd.f32 %v7817, %v7818
    %v7820 = vsel %vm163, %v156, 0.0
    %v7821 = vadd.f32 %v7819, %v7820
    %v7822 = vsel %vm163, %v158, 0.0
    %v7823 = vadd.f32 %v7821, %v7822
    %v7824 = vadd.f32 %v5283, %v5285
    %v7825 = vsel %vm173, %v155, 0.0
    %v7826 = vadd.f32 %v7824, %v7825
    %v7827 = vsel %vm173, %v157, 0.0
    %v7828 = vadd.f32 %v7826, %v7827
    %v7829 = vsel %vm173, %v159, 0.0
    %v7830 = vadd.f32 %v7828, %v7829
    %v7831 = vsel %vm201, %v7809, 0.0
    %v7832 = vrot.slane %v7831, 4
    %v7833 = vadd.f32 %v7831, %v7832
    %v7834 = vrot.slane %v7833, 2
    %v7835 = vadd.f32 %v7833, %v7834
    %v7836 = vrot.slane %v7835, 1
    %v7837 = vadd.f32 %v7835, %v7836
    %v7838 = vsel %vm201, %v7823, 0.0
    %v7839 = vrot.slane %v7838, 4
    %v7840 = vadd.f32 %v7838, %v7839
    %v7841 = vrot.slane %v7840, 2
    %v7842 = vadd.f32 %v7840, %v7841
    %v7843 = vrot.slane %v7842, 1
    %v7844 = vadd.f32 %v7842, %v7843
    %v7845 = vpack.c.bf16 %v7837, %v7837
    %v7846 = vpack.c.bf16 %v7844, %v7844
    %v7849 = vunpack.c.l.b16 %v7845
    %v7850 = vunpack.c.l.b16 %v7846
    %v7851 = vsel %vm228, %v7850, %v7849
    %v7852 = vpack.c.b16 %v7851, %v7851
    %v7854 = vsel %vm163, %v7852, 0
    %7856 = vmatprep.subr.bf16.mxu0 0
    %7857 = vmatpush1.bf16.msra.mxu0 0
    %7858 = vmatprep.subr.bf16.mxu0 0
    %7859 = vmatpush1.bf16.msra.mxu0 0
    %7860 = vmatprep.subr.bf16.mxu0 0
    %7861 = vmatpush1.bf16.msra.mxu0 0
    %7862 = vmatprep.subr.bf16.mxu0 0
    %7863 = vmatpush1.bf16.msra.mxu0 0
    %7864 = vmatprep.subr.bf16.mxu0 0
    %7865 = vmatpush1.bf16.msra.mxu0 0
    %7866 = vmatprep.subr.bf16.mxu0 0
    %7867 = vmatpush1.bf16.msra.mxu0 0
    %7868 = vmatprep.subr.bf16.mxu0 0
    %7869 = vmatpush1.bf16.msra.mxu0 0
    %7870 = vmatprep.subr.bf16.mxu0 0
    %7871 = vmatpush1.bf16.msra.mxu0 %v235
    %7872 = vmatprep.subr.bf16.mxu0 0
    %7873 = vmatpush2.bf16.msra.mxu0 0
    %7874 = vmatprep.subr.bf16.mxu0 0
    %7875 = vmatpush2.bf16.msra.mxu0 0
    %7876 = vmatprep.subr.bf16.mxu0 0
    %7877 = vmatpush2.bf16.msra.mxu0 0
    %7878 = vmatprep.subr.bf16.mxu0 0
    %7879 = vmatpush2.bf16.msra.mxu0 0
    %7880 = vmatprep.subr.bf16.mxu0 0
    %7881 = vmatpush2.bf16.msra.mxu0 0
    %7882 = vmatprep.subr.bf16.mxu0 0
    %7883 = vmatpush2.bf16.msra.mxu0 0
    %7884 = vmatprep.subr.bf16.mxu0 0
    %7885 = vmatpush2.bf16.msra.mxu0 0
    %7886 = vmatprep.subr.bf16.mxu0 0
    %7887 = vmatpush2.bf16.msra.mxu0 0
    %7888 = vmatprep.mubr.bf16.mxu0 0
    %7889 = vmatmul.mubr.bf16.gmra.mxu0 %v7854
    %v7890 = vpop.f32.mrf.mxu0
    %v7891 = vadd.f32 %v222, %v7890
    %v7892 = vpop.f32.mrf.mxu0
    %v7893 = vpop.f32.mrf.mxu0
    %v7894 = vpop.f32.mrf.mxu0
    %7895 = vdwg.mxu0
    %v7896 = vmax.f32 %v7891, 0.0
    %v7897 = vpack.c.bf16 %v7896, %v7896
    %s7898 = scalar_lea.vmem [#allocation7], 6144
    %v7899 = vld [vmem:[%s7898] sm:$0xff]
    %v7900 = vld [vmem:[%s7898 + $0x8] sm:$0xff]
    %v7901 = vld [vmem:[%s7898 + $0x10] sm:$0xff]
    %v7902 = vld [vmem:[%s7898 + $0x18] sm:$0xff]
    %v7903 = vld [vmem:[%s7898 + $0x20] sm:$0xff]
    %v7904 = vld [vmem:[%s7898 + $0x28] sm:$0xff]
    %v7905 = vld [vmem:[%s7898 + $0x30] sm:$0xff]
    %v7906 = vld [vmem:[%s7898 + $0x38] sm:$0xff]
    %v7907 = vld [vmem:[%s7898 + $0x40] sm:$0xff]
    %v7908 = vld [vmem:[%s7898 + $0x48] sm:$0xff]
    %v7909 = vld [vmem:[%s7898 + $0x50] sm:$0xff]
    %v7910 = vld [vmem:[%s7898 + $0x58] sm:$0xff]
    %v7911 = vld [vmem:[%s7898 + $0x60] sm:$0xff]
    %v7912 = vld [vmem:[%s7898 + $0x68] sm:$0xff]
    %v7913 = vld [vmem:[%s7898 + $0x70] sm:$0xff]
    %v7914 = vld [vmem:[%s7898 + $0x78] sm:$0xff]
    %v7915 = vld [vmem:[%s7898 + $0x80] sm:$0xff]
    %v7916 = vld [vmem:[%s7898 + $0x88] sm:$0xff]
    %v7917 = vld [vmem:[%s7898 + $0x90] sm:$0xff]
    %v7918 = vld [vmem:[%s7898 + $0x98] sm:$0xff]
    %v7919 = vld [vmem:[%s7898 + $0xa0] sm:$0xff]
    %v7920 = vld [vmem:[%s7898 + $0xa8] sm:$0xff]
    %v7921 = vld [vmem:[%s7898 + $0xb0] sm:$0xff]
    %v7922 = vld [vmem:[%s7898 + $0xb8] sm:$0xff]
    %v7923 = vld [vmem:[%s7898 + $0xc0] sm:$0xff]
    %v7924 = vld [vmem:[%s7898 + $0xc8] sm:$0xff]
    %v7925 = vld [vmem:[%s7898 + $0xd0] sm:$0xff]
    %v7926 = vld [vmem:[%s7898 + $0xd8] sm:$0xff]
    %v7927 = vld [vmem:[%s7898 + $0xe0] sm:$0xff]
    %v7928 = vld [vmem:[%s7898 + $0xe8] sm:$0xff]
    %v7929 = vld [vmem:[%s7898 + $0xf0] sm:$0xff]
    %v7930 = vld [vmem:[%s7898 + $0xf8] sm:$0xff]
    %v7931 = vld [vmem:[%s7898 + $0x100] sm:$0xff]
    %v7932 = vld [vmem:[%s7898 + $0x108] sm:$0xff]
    %v7933 = vld [vmem:[%s7898 + $0x110] sm:$0xff]
    %v7934 = vld [vmem:[%s7898 + $0x118] sm:$0xff]
    %v7935 = vld [vmem:[%s7898 + $0x120] sm:$0xff]
    %v7936 = vld [vmem:[%s7898 + $0x128] sm:$0xff]
    %v7937 = vld [vmem:[%s7898 + $0x130] sm:$0xff]
    %v7938 = vld [vmem:[%s7898 + $0x138] sm:$0xff]
    %v7939 = vld [vmem:[%s7898 + $0x140] sm:$0xff]
    %v7940 = vld [vmem:[%s7898 + $0x148] sm:$0xff]
    %v7941 = vld [vmem:[%s7898 + $0x150] sm:$0xff]
    %v7942 = vld [vmem:[%s7898 + $0x158] sm:$0xff]
    %v7943 = vld [vmem:[%s7898 + $0x160] sm:$0xff]
    %v7944 = vld [vmem:[%s7898 + $0x168] sm:$0xff]
    %v7945 = vld [vmem:[%s7898 + $0x170] sm:$0xff]
    %v7946 = vld [vmem:[%s7898 + $0x178] sm:$0xff]
    %v7947 = vld [vmem:[%s7898 + $0x180] sm:$0xff]
    %v7948 = vld [vmem:[%s7898 + $0x188] sm:$0xff]
    %v7949 = vld [vmem:[%s7898 + $0x190] sm:$0xff]
    %v7950 = vld [vmem:[%s7898 + $0x198] sm:$0xff]
    %v7951 = vld [vmem:[%s7898 + $0x1a0] sm:$0xff]
    %v7952 = vld [vmem:[%s7898 + $0x1a8] sm:$0xff]
    %v7953 = vld [vmem:[%s7898 + $0x1b0] sm:$0xff]
    %v7954 = vld [vmem:[%s7898 + $0x1b8] sm:$0xff]
    %v7955 = vld [vmem:[%s7898 + $0x1c0] sm:$0xff]
    %v7956 = vld [vmem:[%s7898 + $0x1c8] sm:$0xff]
    %v7957 = vld [vmem:[%s7898 + $0x1d0] sm:$0xff]
    %v7958 = vld [vmem:[%s7898 + $0x1d8] sm:$0xff]
    %v7959 = vld [vmem:[%s7898 + $0x1e0] sm:$0xff]
    %v7960 = vld [vmem:[%s7898 + $0x1e8] sm:$0xff]
    %v7961 = vld [vmem:[%s7898 + $0x1f0] sm:$0xff]
    %v7962 = vld [vmem:[%s7898 + $0x1f8] sm:$0xff]
    %v8027 = vunpack.c.l.b16 %v7899
    %v8028 = vunpack.c.h.b16 %v7899
    %v8029 = vunpack.c.l.b16 %v7900
    %v8030 = vunpack.c.h.b16 %v7900
    %v8031 = vunpack.c.l.b16 %v7901
    %v8032 = vunpack.c.h.b16 %v7901
    %v8033 = vunpack.c.l.b16 %v7902
    %v8034 = vunpack.c.h.b16 %v7902
    %v8035 = vunpack.c.l.b16 %v7903
    %v8036 = vunpack.c.h.b16 %v7903
    %v8037 = vunpack.c.l.b16 %v7904
    %v8038 = vunpack.c.h.b16 %v7904
    %v8039 = vunpack.c.l.b16 %v7905
    %v8040 = vunpack.c.h.b16 %v7905
    %v8041 = vunpack.c.l.b16 %v7906
    %v8042 = vunpack.c.h.b16 %v7906
    %v8043 = vunpack.c.l.b16 %v7907
    %v8044 = vunpack.c.h.b16 %v7907
    %v8045 = vunpack.c.l.b16 %v7908
    %v8046 = vunpack.c.h.b16 %v7908
    %v8047 = vunpack.c.l.b16 %v7909
    %v8048 = vunpack.c.h.b16 %v7909
    %v8049 = vunpack.c.l.b16 %v7910
    %v8050 = vunpack.c.h.b16 %v7910
    %v8051 = vunpack.c.l.b16 %v7911
    %v8052 = vunpack.c.h.b16 %v7911
    %v8053 = vunpack.c.l.b16 %v7912
    %v8054 = vunpack.c.h.b16 %v7912
    %v8055 = vunpack.c.l.b16 %v7913
    %v8056 = vunpack.c.h.b16 %v7913
    %v8057 = vunpack.c.l.b16 %v7914
    %v8058 = vunpack.c.h.b16 %v7914
    %v8059 = vunpack.c.l.b16 %v7915
    %v8060 = vunpack.c.h.b16 %v7915
    %v8061 = vunpack.c.l.b16 %v7916
    %v8062 = vunpack.c.h.b16 %v7916
    %v8063 = vunpack.c.l.b16 %v7917
    %v8064 = vunpack.c.h.b16 %v7917
    %v8065 = vunpack.c.l.b16 %v7918
    %v8066 = vunpack.c.h.b16 %v7918
    %v8067 = vunpack.c.l.b16 %v7919
    %v8068 = vunpack.c.h.b16 %v7919
    %v8069 = vunpack.c.l.b16 %v7920
    %v8070 = vunpack.c.h.b16 %v7920
    %v8071 = vunpack.c.l.b16 %v7921
    %v8072 = vunpack.c.h.b16 %v7921
    %v8073 = vunpack.c.l.b16 %v7922
    %v8074 = vunpack.c.h.b16 %v7922
    %v8075 = vunpack.c.l.b16 %v7923
    %v8076 = vunpack.c.h.b16 %v7923
    %v8077 = vunpack.c.l.b16 %v7924
    %v8078 = vunpack.c.h.b16 %v7924
    %v8079 = vunpack.c.l.b16 %v7925
    %v8080 = vunpack.c.h.b16 %v7925
    %v8081 = vunpack.c.l.b16 %v7926
    %v8082 = vunpack.c.h.b16 %v7926
    %v8083 = vunpack.c.l.b16 %v7927
    %v8084 = vunpack.c.h.b16 %v7927
    %v8085 = vunpack.c.l.b16 %v7928
    %v8086 = vunpack.c.h.b16 %v7928
    %v8087 = vunpack.c.l.b16 %v7929
    %v8088 = vunpack.c.h.b16 %v7929
    %v8089 = vunpack.c.l.b16 %v7930
    %v8090 = vunpack.c.h.b16 %v7930
    %v8091 = vunpack.c.l.b16 %v7931
    %v8092 = vunpack.c.h.b16 %v7931
    %v8093 = vunpack.c.l.b16 %v7932
    %v8094 = vunpack.c.h.b16 %v7932
    %v8095 = vunpack.c.l.b16 %v7933
    %v8096 = vunpack.c.h.b16 %v7933
    %v8097 = vunpack.c.l.b16 %v7934
    %v8098 = vunpack.c.h.b16 %v7934
    %v8099 = vunpack.c.l.b16 %v7935
    %v8100 = vunpack.c.h.b16 %v7935
    %v8101 = vunpack.c.l.b16 %v7936
    %v8102 = vunpack.c.h.b16 %v7936
    %v8103 = vunpack.c.l.b16 %v7937
    %v8104 = vunpack.c.h.b16 %v7937
    %v8105 = vunpack.c.l.b16 %v7938
    %v8106 = vunpack.c.h.b16 %v7938
    %v8107 = vunpack.c.l.b16 %v7939
    %v8108 = vunpack.c.h.b16 %v7939
    %v8109 = vunpack.c.l.b16 %v7940
    %v8110 = vunpack.c.h.b16 %v7940
    %v8111 = vunpack.c.l.b16 %v7941
    %v8112 = vunpack.c.h.b16 %v7941
    %v8113 = vunpack.c.l.b16 %v7942
    %v8114 = vunpack.c.h.b16 %v7942
    %v8115 = vunpack.c.l.b16 %v7943
    %v8116 = vunpack.c.h.b16 %v7943
    %v8117 = vunpack.c.l.b16 %v7944
    %v8118 = vunpack.c.h.b16 %v7944
    %v8119 = vunpack.c.l.b16 %v7945
    %v8120 = vunpack.c.h.b16 %v7945
    %v8121 = vunpack.c.l.b16 %v7946
    %v8122 = vunpack.c.h.b16 %v7946
    %v8123 = vunpack.c.l.b16 %v7947
    %v8124 = vunpack.c.h.b16 %v7947
    %v8125 = vunpack.c.l.b16 %v7948
    %v8126 = vunpack.c.h.b16 %v7948
    %v8127 = vunpack.c.l.b16 %v7949
    %v8128 = vunpack.c.h.b16 %v7949
    %v8129 = vunpack.c.l.b16 %v7950
    %v8130 = vunpack.c.h.b16 %v7950
    %v8131 = vunpack.c.l.b16 %v7951
    %v8132 = vunpack.c.h.b16 %v7951
    %v8133 = vunpack.c.l.b16 %v7952
    %v8134 = vunpack.c.h.b16 %v7952
    %v8135 = vunpack.c.l.b16 %v7953
    %v8136 = vunpack.c.h.b16 %v7953
    %v8137 = vunpack.c.l.b16 %v7954
    %v8138 = vunpack.c.h.b16 %v7954
    %v8139 = vunpack.c.l.b16 %v7955
    %v8140 = vunpack.c.h.b16 %v7955
    %v8141 = vunpack.c.l.b16 %v7956
    %v8142 = vunpack.c.h.b16 %v7956
    %v8143 = vunpack.c.l.b16 %v7957
    %v8144 = vunpack.c.h.b16 %v7957
    %v8145 = vunpack.c.l.b16 %v7958
    %v8146 = vunpack.c.h.b16 %v7958
    %v8147 = vunpack.c.l.b16 %v7959
    %v8148 = vunpack.c.h.b16 %v7959
    %v8149 = vunpack.c.l.b16 %v7960
    %v8150 = vunpack.c.h.b16 %v7960
    %v8151 = vunpack.c.l.b16 %v7961
    %v8152 = vunpack.c.h.b16 %v7961
    %v8153 = vunpack.c.l.b16 %v7962
    %v8154 = vunpack.c.h.b16 %v7962
    %v8155 = vpack.c.b16 %v8035, %v8027
    %v8156 = vpack.c.b16 %v8036, %v8028
    %v8157 = vpack.c.b16 %v8037, %v8029
    %v8158 = vpack.c.b16 %v8038, %v8030
    %v8159 = vpack.c.b16 %v8039, %v8031
    %v8160 = vpack.c.b16 %v8040, %v8032
    %v8161 = vpack.c.b16 %v8041, %v8033
    %v8162 = vpack.c.b16 %v8042, %v8034
    %v8163 = vpack.c.b16 %v8051, %v8043
    %v8164 = vpack.c.b16 %v8052, %v8044
    %v8165 = vpack.c.b16 %v8053, %v8045
    %v8166 = vpack.c.b16 %v8054, %v8046
    %v8167 = vpack.c.b16 %v8055, %v8047
    %v8168 = vpack.c.b16 %v8056, %v8048
    %v8169 = vpack.c.b16 %v8057, %v8049
    %v8170 = vpack.c.b16 %v8058, %v8050
    %v8171 = vpack.c.b16 %v8067, %v8059
    %v8172 = vpack.c.b16 %v8068, %v8060
    %v8173 = vpack.c.b16 %v8069, %v8061
    %v8174 = vpack.c.b16 %v8070, %v8062
    %v8175 = vpack.c.b16 %v8071, %v8063
    %v8176 = vpack.c.b16 %v8072, %v8064
    %v8177 = vpack.c.b16 %v8073, %v8065
    %v8178 = vpack.c.b16 %v8074, %v8066
    %v8179 = vpack.c.b16 %v8083, %v8075
    %v8180 = vpack.c.b16 %v8084, %v8076
    %v8181 = vpack.c.b16 %v8085, %v8077
    %v8182 = vpack.c.b16 %v8086, %v8078
    %v8183 = vpack.c.b16 %v8087, %v8079
    %v8184 = vpack.c.b16 %v8088, %v8080
    %v8185 = vpack.c.b16 %v8089, %v8081
    %v8186 = vpack.c.b16 %v8090, %v8082
    %v8187 = vpack.c.b16 %v8099, %v8091
    %v8188 = vpack.c.b16 %v8100, %v8092
    %v8189 = vpack.c.b16 %v8101, %v8093
    %v8190 = vpack.c.b16 %v8102, %v8094
    %v8191 = vpack.c.b16 %v8103, %v8095
    %v8192 = vpack.c.b16 %v8104, %v8096
    %v8193 = vpack.c.b16 %v8105, %v8097
    %v8194 = vpack.c.b16 %v8106, %v8098
    %v8195 = vpack.c.b16 %v8115, %v8107
    %v8196 = vpack.c.b16 %v8116, %v8108
    %v8197 = vpack.c.b16 %v8117, %v8109
    %v8198 = vpack.c.b16 %v8118, %v8110
    %v8199 = vpack.c.b16 %v8119, %v8111
    %v8200 = vpack.c.b16 %v8120, %v8112
    %v8201 = vpack.c.b16 %v8121, %v8113
    %v8202 = vpack.c.b16 %v8122, %v8114
    %v8203 = vpack.c.b16 %v8131, %v8123
    %v8204 = vpack.c.b16 %v8132, %v8124
    %v8205 = vpack.c.b16 %v8133, %v8125
    %v8206 = vpack.c.b16 %v8134, %v8126
    %v8207 = vpack.c.b16 %v8135, %v8127
    %v8208 = vpack.c.b16 %v8136, %v8128
    %v8209 = vpack.c.b16 %v8137, %v8129
    %v8210 = vpack.c.b16 %v8138, %v8130
    %v8211 = vpack.c.b16 %v8147, %v8139
    %v8212 = vpack.c.b16 %v8148, %v8140
    %v8213 = vpack.c.b16 %v8149, %v8141
    %v8214 = vpack.c.b16 %v8150, %v8142
    %v8215 = vpack.c.b16 %v8151, %v8143
    %v8216 = vpack.c.b16 %v8152, %v8144
    %v8217 = vpack.c.b16 %v8153, %v8145
    %v8218 = vpack.c.b16 %v8154, %v8146
    %8283 = vmatprep.subr.bf16.mxu0 %v8212
    %8284 = vmatpush1.bf16.msra.mxu0 %v8211
    %8285 = vmatprep.subr.bf16.mxu0 %v8204
    %8286 = vmatpush1.bf16.msra.mxu0 %v8203
    %8287 = vmatprep.subr.bf16.mxu0 %v8196
    %8288 = vmatpush1.bf16.msra.mxu0 %v8195
    %8289 = vmatprep.subr.bf16.mxu0 %v8188
    %8290 = vmatpush1.bf16.msra.mxu0 %v8187
    %8291 = vmatprep.subr.bf16.mxu0 %v8180
    %8292 = vmatpush1.bf16.msra.mxu0 %v8179
    %8293 = vmatprep.subr.bf16.mxu0 %v8172
    %8294 = vmatpush1.bf16.msra.mxu0 %v8171
    %8295 = vmatprep.subr.bf16.mxu0 %v8164
    %8296 = vmatpush1.bf16.msra.mxu0 %v8163
    %8297 = vmatprep.subr.bf16.mxu0 %v8156
    %8298 = vmatpush1.bf16.msra.mxu0 %v8155
    %8299 = vmatprep.subr.bf16.mxu0 0
    %8300 = vmatpush2.bf16.msra.mxu0 0
    %8301 = vmatprep.subr.bf16.mxu0 0
    %8302 = vmatpush2.bf16.msra.mxu0 0
    %8303 = vmatprep.subr.bf16.mxu0 0
    %8304 = vmatpush2.bf16.msra.mxu0 0
    %8305 = vmatprep.subr.bf16.mxu0 0
    %8306 = vmatpush2.bf16.msra.mxu0 0
    %8307 = vmatprep.subr.bf16.mxu0 0
    %8308 = vmatpush2.bf16.msra.mxu0 0
    %8309 = vmatprep.subr.bf16.mxu0 0
    %8310 = vmatpush2.bf16.msra.mxu0 0
    %8311 = vmatprep.subr.bf16.mxu0 0
    %8312 = vmatpush2.bf16.msra.mxu0 0
    %8313 = vmatprep.subr.bf16.mxu0 0
    %8314 = vmatpush2.bf16.msra.mxu0 0
    %8315 = vmatprep.mubr.bf16.mxu0 0
    %8316 = vmatmul.mubr.bf16.gmra.mxu0 %v7897
    %v8317 = vpop.f32.mrf.mxu0
    %v8318 = vadd.f32 0.0, %v8317
    %v8319 = vpop.f32.mrf.mxu0
    %v8320 = vadd.f32 0.0, %v8319
    %v8321 = vpop.f32.mrf.mxu0
    %v8322 = vpop.f32.mrf.mxu0
    %8323 = vdwg.mxu0
    %8324 = vmatprep.subr.bf16.mxu0 %v8214
    %8325 = vmatpush1.bf16.msra.mxu0 %v8213
    %8326 = vmatprep.subr.bf16.mxu0 %v8206
    %8327 = vmatpush1.bf16.msra.mxu0 %v8205
    %8328 = vmatprep.subr.bf16.mxu0 %v8198
    %8329 = vmatpush1.bf16.msra.mxu0 %v8197
    %8330 = vmatprep.subr.bf16.mxu0 %v8190
    %8331 = vmatpush1.bf16.msra.mxu0 %v8189
    %8332 = vmatprep.subr.bf16.mxu0 %v8182
    %8333 = vmatpush1.bf16.msra.mxu0 %v8181
    %8334 = vmatprep.subr.bf16.mxu0 %v8174
    %8335 = vmatpush1.bf16.msra.mxu0 %v8173
    %8336 = vmatprep.subr.bf16.mxu0 %v8166
    %8337 = vmatpush1.bf16.msra.mxu0 %v8165
    %8338 = vmatprep.subr.bf16.mxu0 %v8158
    %8339 = vmatpush1.bf16.msra.mxu0 %v8157
    %8340 = vmatprep.subr.bf16.mxu0 0
    %8341 = vmatpush2.bf16.msra.mxu0 0
    %8342 = vmatprep.subr.bf16.mxu0 0
    %8343 = vmatpush2.bf16.msra.mxu0 0
    %8344 = vmatprep.subr.bf16.mxu0 0
    %8345 = vmatpush2.bf16.msra.mxu0 0
    %8346 = vmatprep.subr.bf16.mxu0 0
    %8347 = vmatpush2.bf16.msra.mxu0 0
    %8348 = vmatprep.subr.bf16.mxu0 0
    %8349 = vmatpush2.bf16.msra.mxu0 0
    %8350 = vmatprep.subr.bf16.mxu0 0
    %8351 = vmatpush2.bf16.msra.mxu0 0
    %8352 = vmatprep.subr.bf16.mxu0 0
    %8353 = vmatpush2.bf16.msra.mxu0 0
    %8354 = vmatprep.subr.bf16.mxu0 0
    %8355 = vmatpush2.bf16.msra.mxu0 0
    %8356 = vmatprep.mubr.bf16.mxu0 0
    %8357 = vmatmul.mubr.bf16.gmra.mxu0 %v7897
    %v8358 = vpop.f32.mrf.mxu0
    %v8359 = vadd.f32 0.0, %v8358
    %v8360 = vpop.f32.mrf.mxu0
    %v8361 = vadd.f32 0.0, %v8360
    %v8362 = vpop.f32.mrf.mxu0
    %v8363 = vpop.f32.mrf.mxu0
    %8364 = vdwg.mxu0
    %8365 = vmatprep.subr.bf16.mxu0 %v8216
    %8366 = vmatpush1.bf16.msra.mxu0 %v8215
    %8367 = vmatprep.subr.bf16.mxu0 %v8208
    %8368 = vmatpush1.bf16.msra.mxu0 %v8207
    %8369 = vmatprep.subr.bf16.mxu0 %v8200
    %8370 = vmatpush1.bf16.msra.mxu0 %v8199
    %8371 = vmatprep.subr.bf16.mxu0 %v8192
    %8372 = vmatpush1.bf16.msra.mxu0 %v8191
    %8373 = vmatprep.subr.bf16.mxu0 %v8184
    %8374 = vmatpush1.bf16.msra.mxu0 %v8183
    %8375 = vmatprep.subr.bf16.mxu0 %v8176
    %8376 = vmatpush1.bf16.msra.mxu0 %v8175
    %8377 = vmatprep.subr.bf16.mxu0 %v8168
    %8378 = vmatpush1.bf16.msra.mxu0 %v8167
    %8379 = vmatprep.subr.bf16.mxu0 %v8160
    %8380 = vmatpush1.bf16.msra.mxu0 %v8159
    %8381 = vmatprep.subr.bf16.mxu0 0
    %8382 = vmatpush2.bf16.msra.mxu0 0
    %8383 = vmatprep.subr.bf16.mxu0 0
    %8384 = vmatpush2.bf16.msra.mxu0 0
    %8385 = vmatprep.subr.bf16.mxu0 0
    %8386 = vmatpush2.bf16.msra.mxu0 0
    %8387 = vmatprep.subr.bf16.mxu0 0
    %8388 = vmatpush2.bf16.msra.mxu0 0
    %8389 = vmatprep.subr.bf16.mxu0 0
    %8390 = vmatpush2.bf16.msra.mxu0 0
    %8391 = vmatprep.subr.bf16.mxu0 0
    %8392 = vmatpush2.bf16.msra.mxu0 0
    %8393 = vmatprep.subr.bf16.mxu0 0
    %8394 = vmatpush2.bf16.msra.mxu0 0
    %8395 = vmatprep.subr.bf16.mxu0 0
    %8396 = vmatpush2.bf16.msra.mxu0 0
    %8397 = vmatprep.mubr.bf16.mxu0 0
    %8398 = vmatmul.mubr.bf16.gmra.mxu0 %v7897
    %v8399 = vpop.f32.mrf.mxu0
    %v8400 = vadd.f32 0.0, %v8399
    %v8401 = vpop.f32.mrf.mxu0
    %v8402 = vadd.f32 0.0, %v8401
    %v8403 = vpop.f32.mrf.mxu0
    %v8404 = vpop.f32.mrf.mxu0
    %8405 = vdwg.mxu0
    %8406 = vmatprep.subr.bf16.mxu0 %v8218
    %8407 = vmatpush1.bf16.msra.mxu0 %v8217
    %8408 = vmatprep.subr.bf16.mxu0 %v8210
    %8409 = vmatpush1.bf16.msra.mxu0 %v8209
    %8410 = vmatprep.subr.bf16.mxu0 %v8202
    %8411 = vmatpush1.bf16.msra.mxu0 %v8201
    %8412 = vmatprep.subr.bf16.mxu0 %v8194
    %8413 = vmatpush1.bf16.msra.mxu0 %v8193
    %8414 = vmatprep.subr.bf16.mxu0 %v8186
    %8415 = vmatpush1.bf16.msra.mxu0 %v8185
    %8416 = vmatprep.subr.bf16.mxu0 %v8178
    %8417 = vmatpush1.bf16.msra.mxu0 %v8177
    %8418 = vmatprep.subr.bf16.mxu0 %v8170
    %8419 = vmatpush1.bf16.msra.mxu0 %v8169
    %8420 = vmatprep.subr.bf16.mxu0 %v8162
    %8421 = vmatpush1.bf16.msra.mxu0 %v8161
    %8422 = vmatprep.subr.bf16.mxu0 0
    %8423 = vmatpush2.bf16.msra.mxu0 0
    %8424 = vmatprep.subr.bf16.mxu0 0
    %8425 = vmatpush2.bf16.msra.mxu0 0
    %8426 = vmatprep.subr.bf16.mxu0 0
    %8427 = vmatpush2.bf16.msra.mxu0 0
    %8428 = vmatprep.subr.bf16.mxu0 0
    %8429 = vmatpush2.bf16.msra.mxu0 0
    %8430 = vmatprep.subr.bf16.mxu0 0
    %8431 = vmatpush2.bf16.msra.mxu0 0
    %8432 = vmatprep.subr.bf16.mxu0 0
    %8433 = vmatpush2.bf16.msra.mxu0 0
    %8434 = vmatprep.subr.bf16.mxu0 0
    %8435 = vmatpush2.bf16.msra.mxu0 0
    %8436 = vmatprep.subr.bf16.mxu0 0
    %8437 = vmatpush2.bf16.msra.mxu0 0
    %8438 = vmatprep.mubr.bf16.mxu0 0
    %8439 = vmatmul.mubr.bf16.gmra.mxu0 %v7897
    %v8440 = vpop.f32.mrf.mxu0
    %v8441 = vadd.f32 0.0, %v8440
    %v8442 = vpop.f32.mrf.mxu0
    %v8443 = vadd.f32 0.0, %v8442
    %v8444 = vpop.f32.mrf.mxu0
    %v8445 = vpop.f32.mrf.mxu0
    %8446 = vdwg.mxu0
    %v8447 = vadd.f32 %v7795, %v8318
    %v8448 = vadd.f32 %v7796, %v8320
    %v8449 = vadd.f32 %v7797, %v8359
    %v8450 = vadd.f32 %v7798, %v8361
    %v8451 = vadd.f32 %v7799, %v8400
    %v8452 = vadd.f32 %v7800, %v8402
    %v8453 = vadd.f32 %v7801, %v8441
    %v8454 = vadd.f32 %v7802, %v8443
    %v8457 = vrot.slane %v7809, 3
    %v8458 = vrot.slane %v7823, 3
    %v8461 = vsel %vm201, %v8457, 0.0
    %v8462 = vrot.slane %v8461, 4
    %v8463 = vadd.f32 %v8461, %v8462
    %v8464 = vrot.slane %v8463, 2
    %v8465 = vadd.f32 %v8463, %v8464
    %v8466 = vrot.slane %v8465, 1
    %v8467 = vadd.f32 %v8465, %v8466
    %v8468 = vsel %vm201, %v8458, 0.0
    %v8469 = vrot.slane %v8468, 4
    %v8470 = vadd.f32 %v8468, %v8469
    %v8471 = vrot.slane %v8470, 2
    %v8472 = vadd.f32 %v8470, %v8471
    %v8473 = vrot.slane %v8472, 1
    %v8474 = vadd.f32 %v8472, %v8473
    %v8475 = vpack.c.bf16 %v8467, %v8467
    %v8476 = vpack.c.bf16 %v8474, %v8474
    %v8479 = vunpack.c.l.b16 %v8475
    %v8480 = vunpack.c.l.b16 %v8476
    %v8481 = vsel %vm228, %v8480, %v8479
    %v8482 = vpack.c.b16 %v8481, %v8481
    %v8484 = vsel %vm163, %v8482, 0
    %8486 = vmatprep.subr.bf16.mxu0 0
    %8487 = vmatpush1.bf16.msra.mxu0 0
    %8488 = vmatprep.subr.bf16.mxu0 0
    %8489 = vmatpush1.bf16.msra.mxu0 0
    %8490 = vmatprep.subr.bf16.mxu0 0
    %8491 = vmatpush1.bf16.msra.mxu0 0
    %8492 = vmatprep.subr.bf16.mxu0 0
    %8493 = vmatpush1.bf16.msra.mxu0 0
    %8494 = vmatprep.subr.bf16.mxu0 0
    %8495 = vmatpush1.bf16.msra.mxu0 0
    %8496 = vmatprep.subr.bf16.mxu0 0
    %8497 = vmatpush1.bf16.msra.mxu0 0
    %8498 = vmatprep.subr.bf16.mxu0 0
    %8499 = vmatpush1.bf16.msra.mxu0 0
    %8500 = vmatprep.subr.bf16.mxu0 0
    %8501 = vmatpush1.bf16.msra.mxu0 %v235
    %8502 = vmatprep.subr.bf16.mxu0 0
    %8503 = vmatpush2.bf16.msra.mxu0 0
    %8504 = vmatprep.subr.bf16.mxu0 0
    %8505 = vmatpush2.bf16.msra.mxu0 0
    %8506 = vmatprep.subr.bf16.mxu0 0
    %8507 = vmatpush2.bf16.msra.mxu0 0
    %8508 = vmatprep.subr.bf16.mxu0 0
    %8509 = vmatpush2.bf16.msra.mxu0 0
    %8510 = vmatprep.subr.bf16.mxu0 0
    %8511 = vmatpush2.bf16.msra.mxu0 0
    %8512 = vmatprep.subr.bf16.mxu0 0
    %8513 = vmatpush2.bf16.msra.mxu0 0
    %8514 = vmatprep.subr.bf16.mxu0 0
    %8515 = vmatpush2.bf16.msra.mxu0 0
    %8516 = vmatprep.subr.bf16.mxu0 0
    %8517 = vmatpush2.bf16.msra.mxu0 0
    %8518 = vmatprep.mubr.bf16.mxu0 0
    %8519 = vmatmul.mubr.bf16.gmra.mxu0 %v8484
    %v8520 = vpop.f32.mrf.mxu0
    %v8521 = vadd.f32 %v222, %v8520
    %v8522 = vpop.f32.mrf.mxu0
    %v8523 = vpop.f32.mrf.mxu0
    %v8524 = vpop.f32.mrf.mxu0
    %8525 = vdwg.mxu0
    %v8526 = vmax.f32 %v8521, 0.0
    %v8527 = vpack.c.bf16 %v8526, %v8526
    %s8528 = scalar_lea.vmem [#allocation7], 6656
    %v8529 = vld [vmem:[%s8528] sm:$0xff]
    %v8530 = vld [vmem:[%s8528 + $0x8] sm:$0xff]
    %v8531 = vld [vmem:[%s8528 + $0x10] sm:$0xff]
    %v8532 = vld [vmem:[%s8528 + $0x18] sm:$0xff]
    %v8533 = vld [vmem:[%s8528 + $0x20] sm:$0xff]
    %v8534 = vld [vmem:[%s8528 + $0x28] sm:$0xff]
    %v8535 = vld [vmem:[%s8528 + $0x30] sm:$0xff]
    %v8536 = vld [vmem:[%s8528 + $0x38] sm:$0xff]
    %v8537 = vld [vmem:[%s8528 + $0x40] sm:$0xff]
    %v8538 = vld [vmem:[%s8528 + $0x48] sm:$0xff]
    %v8539 = vld [vmem:[%s8528 + $0x50] sm:$0xff]
    %v8540 = vld [vmem:[%s8528 + $0x58] sm:$0xff]
    %v8541 = vld [vmem:[%s8528 + $0x60] sm:$0xff]
    %v8542 = vld [vmem:[%s8528 + $0x68] sm:$0xff]
    %v8543 = vld [vmem:[%s8528 + $0x70] sm:$0xff]
    %v8544 = vld [vmem:[%s8528 + $0x78] sm:$0xff]
    %v8545 = vld [vmem:[%s8528 + $0x80] sm:$0xff]
    %v8546 = vld [vmem:[%s8528 + $0x88] sm:$0xff]
    %v8547 = vld [vmem:[%s8528 + $0x90] sm:$0xff]
    %v8548 = vld [vmem:[%s8528 + $0x98] sm:$0xff]
    %v8549 = vld [vmem:[%s8528 + $0xa0] sm:$0xff]
    %v8550 = vld [vmem:[%s8528 + $0xa8] sm:$0xff]
    %v8551 = vld [vmem:[%s8528 + $0xb0] sm:$0xff]
    %v8552 = vld [vmem:[%s8528 + $0xb8] sm:$0xff]
    %v8553 = vld [vmem:[%s8528 + $0xc0] sm:$0xff]
    %v8554 = vld [vmem:[%s8528 + $0xc8] sm:$0xff]
    %v8555 = vld [vmem:[%s8528 + $0xd0] sm:$0xff]
    %v8556 = vld [vmem:[%s8528 + $0xd8] sm:$0xff]
    %v8557 = vld [vmem:[%s8528 + $0xe0] sm:$0xff]
    %v8558 = vld [vmem:[%s8528 + $0xe8] sm:$0xff]
    %v8559 = vld [vmem:[%s8528 + $0xf0] sm:$0xff]
    %v8560 = vld [vmem:[%s8528 + $0xf8] sm:$0xff]
    %v8561 = vld [vmem:[%s8528 + $0x100] sm:$0xff]
    %v8562 = vld [vmem:[%s8528 + $0x108] sm:$0xff]
    %v8563 = vld [vmem:[%s8528 + $0x110] sm:$0xff]
    %v8564 = vld [vmem:[%s8528 + $0x118] sm:$0xff]
    %v8565 = vld [vmem:[%s8528 + $0x120] sm:$0xff]
    %v8566 = vld [vmem:[%s8528 + $0x128] sm:$0xff]
    %v8567 = vld [vmem:[%s8528 + $0x130] sm:$0xff]
    %v8568 = vld [vmem:[%s8528 + $0x138] sm:$0xff]
    %v8569 = vld [vmem:[%s8528 + $0x140] sm:$0xff]
    %v8570 = vld [vmem:[%s8528 + $0x148] sm:$0xff]
    %v8571 = vld [vmem:[%s8528 + $0x150] sm:$0xff]
    %v8572 = vld [vmem:[%s8528 + $0x158] sm:$0xff]
    %v8573 = vld [vmem:[%s8528 + $0x160] sm:$0xff]
    %v8574 = vld [vmem:[%s8528 + $0x168] sm:$0xff]
    %v8575 = vld [vmem:[%s8528 + $0x170] sm:$0xff]
    %v8576 = vld [vmem:[%s8528 + $0x178] sm:$0xff]
    %v8577 = vld [vmem:[%s8528 + $0x180] sm:$0xff]
    %v8578 = vld [vmem:[%s8528 + $0x188] sm:$0xff]
    %v8579 = vld [vmem:[%s8528 + $0x190] sm:$0xff]
    %v8580 = vld [vmem:[%s8528 + $0x198] sm:$0xff]
    %v8581 = vld [vmem:[%s8528 + $0x1a0] sm:$0xff]
    %v8582 = vld [vmem:[%s8528 + $0x1a8] sm:$0xff]
    %v8583 = vld [vmem:[%s8528 + $0x1b0] sm:$0xff]
    %v8584 = vld [vmem:[%s8528 + $0x1b8] sm:$0xff]
    %v8585 = vld [vmem:[%s8528 + $0x1c0] sm:$0xff]
    %v8586 = vld [vmem:[%s8528 + $0x1c8] sm:$0xff]
    %v8587 = vld [vmem:[%s8528 + $0x1d0] sm:$0xff]
    %v8588 = vld [vmem:[%s8528 + $0x1d8] sm:$0xff]
    %v8589 = vld [vmem:[%s8528 + $0x1e0] sm:$0xff]
    %v8590 = vld [vmem:[%s8528 + $0x1e8] sm:$0xff]
    %v8591 = vld [vmem:[%s8528 + $0x1f0] sm:$0xff]
    %v8592 = vld [vmem:[%s8528 + $0x1f8] sm:$0xff]
    %v8657 = vunpack.c.l.b16 %v8529
    %v8658 = vunpack.c.h.b16 %v8529
    %v8659 = vunpack.c.l.b16 %v8530
    %v8660 = vunpack.c.h.b16 %v8530
    %v8661 = vunpack.c.l.b16 %v8531
    %v8662 = vunpack.c.h.b16 %v8531
    %v8663 = vunpack.c.l.b16 %v8532
    %v8664 = vunpack.c.h.b16 %v8532
    %v8665 = vunpack.c.l.b16 %v8533
    %v8666 = vunpack.c.h.b16 %v8533
    %v8667 = vunpack.c.l.b16 %v8534
    %v8668 = vunpack.c.h.b16 %v8534
    %v8669 = vunpack.c.l.b16 %v8535
    %v8670 = vunpack.c.h.b16 %v8535
    %v8671 = vunpack.c.l.b16 %v8536
    %v8672 = vunpack.c.h.b16 %v8536
    %v8673 = vunpack.c.l.b16 %v8537
    %v8674 = vunpack.c.h.b16 %v8537
    %v8675 = vunpack.c.l.b16 %v8538
    %v8676 = vunpack.c.h.b16 %v8538
    %v8677 = vunpack.c.l.b16 %v8539
    %v8678 = vunpack.c.h.b16 %v8539
    %v8679 = vunpack.c.l.b16 %v8540
    %v8680 = vunpack.c.h.b16 %v8540
    %v8681 = vunpack.c.l.b16 %v8541
    %v8682 = vunpack.c.h.b16 %v8541
    %v8683 = vunpack.c.l.b16 %v8542
    %v8684 = vunpack.c.h.b16 %v8542
    %v8685 = vunpack.c.l.b16 %v8543
    %v8686 = vunpack.c.h.b16 %v8543
    %v8687 = vunpack.c.l.b16 %v8544
    %v8688 = vunpack.c.h.b16 %v8544
    %v8689 = vunpack.c.l.b16 %v8545
    %v8690 = vunpack.c.h.b16 %v8545
    %v8691 = vunpack.c.l.b16 %v8546
    %v8692 = vunpack.c.h.b16 %v8546
    %v8693 = vunpack.c.l.b16 %v8547
    %v8694 = vunpack.c.h.b16 %v8547
    %v8695 = vunpack.c.l.b16 %v8548
    %v8696 = vunpack.c.h.b16 %v8548
    %v8697 = vunpack.c.l.b16 %v8549
    %v8698 = vunpack.c.h.b16 %v8549
    %v8699 = vunpack.c.l.b16 %v8550
    %v8700 = vunpack.c.h.b16 %v8550
    %v8701 = vunpack.c.l.b16 %v8551
    %v8702 = vunpack.c.h.b16 %v8551
    %v8703 = vunpack.c.l.b16 %v8552
    %v8704 = vunpack.c.h.b16 %v8552
    %v8705 = vunpack.c.l.b16 %v8553
    %v8706 = vunpack.c.h.b16 %v8553
    %v8707 = vunpack.c.l.b16 %v8554
    %v8708 = vunpack.c.h.b16 %v8554
    %v8709 = vunpack.c.l.b16 %v8555
    %v8710 = vunpack.c.h.b16 %v8555
    %v8711 = vunpack.c.l.b16 %v8556
    %v8712 = vunpack.c.h.b16 %v8556
    %v8713 = vunpack.c.l.b16 %v8557
    %v8714 = vunpack.c.h.b16 %v8557
    %v8715 = vunpack.c.l.b16 %v8558
    %v8716 = vunpack.c.h.b16 %v8558
    %v8717 = vunpack.c.l.b16 %v8559
    %v8718 = vunpack.c.h.b16 %v8559
    %v8719 = vunpack.c.l.b16 %v8560
    %v8720 = vunpack.c.h.b16 %v8560
    %v8721 = vunpack.c.l.b16 %v8561
    %v8722 = vunpack.c.h.b16 %v8561
    %v8723 = vunpack.c.l.b16 %v8562
    %v8724 = vunpack.c.h.b16 %v8562
    %v8725 = vunpack.c.l.b16 %v8563
    %v8726 = vunpack.c.h.b16 %v8563
    %v8727 = vunpack.c.l.b16 %v8564
    %v8728 = vunpack.c.h.b16 %v8564
    %v8729 = vunpack.c.l.b16 %v8565
    %v8730 = vunpack.c.h.b16 %v8565
    %v8731 = vunpack.c.l.b16 %v8566
    %v8732 = vunpack.c.h.b16 %v8566
    %v8733 = vunpack.c.l.b16 %v8567
    %v8734 = vunpack.c.h.b16 %v8567
    %v8735 = vunpack.c.l.b16 %v8568
    %v8736 = vunpack.c.h.b16 %v8568
    %v8737 = vunpack.c.l.b16 %v8569
    %v8738 = vunpack.c.h.b16 %v8569
    %v8739 = vunpack.c.l.b16 %v8570
    %v8740 = vunpack.c.h.b16 %v8570
    %v8741 = vunpack.c.l.b16 %v8571
    %v8742 = vunpack.c.h.b16 %v8571
    %v8743 = vunpack.c.l.b16 %v8572
    %v8744 = vunpack.c.h.b16 %v8572
    %v8745 = vunpack.c.l.b16 %v8573
    %v8746 = vunpack.c.h.b16 %v8573
    %v8747 = vunpack.c.l.b16 %v8574
    %v8748 = vunpack.c.h.b16 %v8574
    %v8749 = vunpack.c.l.b16 %v8575
    %v8750 = vunpack.c.h.b16 %v8575
    %v8751 = vunpack.c.l.b16 %v8576
    %v8752 = vunpack.c.h.b16 %v8576
    %v8753 = vunpack.c.l.b16 %v8577
    %v8754 = vunpack.c.h.b16 %v8577
    %v8755 = vunpack.c.l.b16 %v8578
    %v8756 = vunpack.c.h.b16 %v8578
    %v8757 = vunpack.c.l.b16 %v8579
    %v8758 = vunpack.c.h.b16 %v8579
    %v8759 = vunpack.c.l.b16 %v8580
    %v8760 = vunpack.c.h.b16 %v8580
    %v8761 = vunpack.c.l.b16 %v8581
    %v8762 = vunpack.c.h.b16 %v8581
    %v8763 = vunpack.c.l.b16 %v8582
    %v8764 = vunpack.c.h.b16 %v8582
    %v8765 = vunpack.c.l.b16 %v8583
    %v8766 = vunpack.c.h.b16 %v8583
    %v8767 = vunpack.c.l.b16 %v8584
    %v8768 = vunpack.c.h.b16 %v8584
    %v8769 = vunpack.c.l.b16 %v8585
    %v8770 = vunpack.c.h.b16 %v8585
    %v8771 = vunpack.c.l.b16 %v8586
    %v8772 = vunpack.c.h.b16 %v8586
    %v8773 = vunpack.c.l.b16 %v8587
    %v8774 = vunpack.c.h.b16 %v8587
    %v8775 = vunpack.c.l.b16 %v8588
    %v8776 = vunpack.c.h.b16 %v8588
    %v8777 = vunpack.c.l.b16 %v8589
    %v8778 = vunpack.c.h.b16 %v8589
    %v8779 = vunpack.c.l.b16 %v8590
    %v8780 = vunpack.c.h.b16 %v8590
    %v8781 = vunpack.c.l.b16 %v8591
    %v8782 = vunpack.c.h.b16 %v8591
    %v8783 = vunpack.c.l.b16 %v8592
    %v8784 = vunpack.c.h.b16 %v8592
    %v8785 = vpack.c.b16 %v8665, %v8657
    %v8786 = vpack.c.b16 %v8666, %v8658
    %v8787 = vpack.c.b16 %v8667, %v8659
    %v8788 = vpack.c.b16 %v8668, %v8660
    %v8789 = vpack.c.b16 %v8669, %v8661
    %v8790 = vpack.c.b16 %v8670, %v8662
    %v8791 = vpack.c.b16 %v8671, %v8663
    %v8792 = vpack.c.b16 %v8672, %v8664
    %v8793 = vpack.c.b16 %v8681, %v8673
    %v8794 = vpack.c.b16 %v8682, %v8674
    %v8795 = vpack.c.b16 %v8683, %v8675
    %v8796 = vpack.c.b16 %v8684, %v8676
    %v8797 = vpack.c.b16 %v8685, %v8677
    %v8798 = vpack.c.b16 %v8686, %v8678
    %v8799 = vpack.c.b16 %v8687, %v8679
    %v8800 = vpack.c.b16 %v8688, %v8680
    %v8801 = vpack.c.b16 %v8697, %v8689
    %v8802 = vpack.c.b16 %v8698, %v8690
    %v8803 = vpack.c.b16 %v8699, %v8691
    %v8804 = vpack.c.b16 %v8700, %v8692
    %v8805 = vpack.c.b16 %v8701, %v8693
    %v8806 = vpack.c.b16 %v8702, %v8694
    %v8807 = vpack.c.b16 %v8703, %v8695
    %v8808 = vpack.c.b16 %v8704, %v8696
    %v8809 = vpack.c.b16 %v8713, %v8705
    %v8810 = vpack.c.b16 %v8714, %v8706
    %v8811 = vpack.c.b16 %v8715, %v8707
    %v8812 = vpack.c.b16 %v8716, %v8708
    %v8813 = vpack.c.b16 %v8717, %v8709
    %v8814 = vpack.c.b16 %v8718, %v8710
    %v8815 = vpack.c.b16 %v8719, %v8711
    %v8816 = vpack.c.b16 %v8720, %v8712
    %v8817 = vpack.c.b16 %v8729, %v8721
    %v8818 = vpack.c.b16 %v8730, %v8722
    %v8819 = vpack.c.b16 %v8731, %v8723
    %v8820 = vpack.c.b16 %v8732, %v8724
    %v8821 = vpack.c.b16 %v8733, %v8725
    %v8822 = vpack.c.b16 %v8734, %v8726
    %v8823 = vpack.c.b16 %v8735, %v8727
    %v8824 = vpack.c.b16 %v8736, %v8728
    %v8825 = vpack.c.b16 %v8745, %v8737
    %v8826 = vpack.c.b16 %v8746, %v8738
    %v8827 = vpack.c.b16 %v8747, %v8739
    %v8828 = vpack.c.b16 %v8748, %v8740
    %v8829 = vpack.c.b16 %v8749, %v8741
    %v8830 = vpack.c.b16 %v8750, %v8742
    %v8831 = vpack.c.b16 %v8751, %v8743
    %v8832 = vpack.c.b16 %v8752, %v8744
    %v8833 = vpack.c.b16 %v8761, %v8753
    %v8834 = vpack.c.b16 %v8762, %v8754
    %v8835 = vpack.c.b16 %v8763, %v8755
    %v8836 = vpack.c.b16 %v8764, %v8756
    %v8837 = vpack.c.b16 %v8765, %v8757
    %v8838 = vpack.c.b16 %v8766, %v8758
    %v8839 = vpack.c.b16 %v8767, %v8759
    %v8840 = vpack.c.b16 %v8768, %v8760
    %v8841 = vpack.c.b16 %v8777, %v8769
    %v8842 = vpack.c.b16 %v8778, %v8770
    %v8843 = vpack.c.b16 %v8779, %v8771
    %v8844 = vpack.c.b16 %v8780, %v8772
    %v8845 = vpack.c.b16 %v8781, %v8773
    %v8846 = vpack.c.b16 %v8782, %v8774
    %v8847 = vpack.c.b16 %v8783, %v8775
    %v8848 = vpack.c.b16 %v8784, %v8776
    %8913 = vmatprep.subr.bf16.mxu0 %v8842
    %8914 = vmatpush1.bf16.msra.mxu0 %v8841
    %8915 = vmatprep.subr.bf16.mxu0 %v8834
    %8916 = vmatpush1.bf16.msra.mxu0 %v8833
    %8917 = vmatprep.subr.bf16.mxu0 %v8826
    %8918 = vmatpush1.bf16.msra.mxu0 %v8825
    %8919 = vmatprep.subr.bf16.mxu0 %v8818
    %8920 = vmatpush1.bf16.msra.mxu0 %v8817
    %8921 = vmatprep.subr.bf16.mxu0 %v8810
    %8922 = vmatpush1.bf16.msra.mxu0 %v8809
    %8923 = vmatprep.subr.bf16.mxu0 %v8802
    %8924 = vmatpush1.bf16.msra.mxu0 %v8801
    %8925 = vmatprep.subr.bf16.mxu0 %v8794
    %8926 = vmatpush1.bf16.msra.mxu0 %v8793
    %8927 = vmatprep.subr.bf16.mxu0 %v8786
    %8928 = vmatpush1.bf16.msra.mxu0 %v8785
    %8929 = vmatprep.subr.bf16.mxu0 0
    %8930 = vmatpush2.bf16.msra.mxu0 0
    %8931 = vmatprep.subr.bf16.mxu0 0
    %8932 = vmatpush2.bf16.msra.mxu0 0
    %8933 = vmatprep.subr.bf16.mxu0 0
    %8934 = vmatpush2.bf16.msra.mxu0 0
    %8935 = vmatprep.subr.bf16.mxu0 0
    %8936 = vmatpush2.bf16.msra.mxu0 0
    %8937 = vmatprep.subr.bf16.mxu0 0
    %8938 = vmatpush2.bf16.msra.mxu0 0
    %8939 = vmatprep.subr.bf16.mxu0 0
    %8940 = vmatpush2.bf16.msra.mxu0 0
    %8941 = vmatprep.subr.bf16.mxu0 0
    %8942 = vmatpush2.bf16.msra.mxu0 0
    %8943 = vmatprep.subr.bf16.mxu0 0
    %8944 = vmatpush2.bf16.msra.mxu0 0
    %8945 = vmatprep.mubr.bf16.mxu0 0
    %8946 = vmatmul.mubr.bf16.gmra.mxu0 %v8527
    %v8947 = vpop.f32.mrf.mxu0
    %v8948 = vadd.f32 0.0, %v8947
    %v8949 = vpop.f32.mrf.mxu0
    %v8950 = vadd.f32 0.0, %v8949
    %v8951 = vpop.f32.mrf.mxu0
    %v8952 = vpop.f32.mrf.mxu0
    %8953 = vdwg.mxu0
    %8954 = vmatprep.subr.bf16.mxu0 %v8844
    %8955 = vmatpush1.bf16.msra.mxu0 %v8843
    %8956 = vmatprep.subr.bf16.mxu0 %v8836
    %8957 = vmatpush1.bf16.msra.mxu0 %v8835
    %8958 = vmatprep.subr.bf16.mxu0 %v8828
    %8959 = vmatpush1.bf16.msra.mxu0 %v8827
    %8960 = vmatprep.subr.bf16.mxu0 %v8820
    %8961 = vmatpush1.bf16.msra.mxu0 %v8819
    %8962 = vmatprep.subr.bf16.mxu0 %v8812
    %8963 = vmatpush1.bf16.msra.mxu0 %v8811
    %8964 = vmatprep.subr.bf16.mxu0 %v8804
    %8965 = vmatpush1.bf16.msra.mxu0 %v8803
    %8966 = vmatprep.subr.bf16.mxu0 %v8796
    %8967 = vmatpush1.bf16.msra.mxu0 %v8795
    %8968 = vmatprep.subr.bf16.mxu0 %v8788
    %8969 = vmatpush1.bf16.msra.mxu0 %v8787
    %8970 = vmatprep.subr.bf16.mxu0 0
    %8971 = vmatpush2.bf16.msra.mxu0 0
    %8972 = vmatprep.subr.bf16.mxu0 0
    %8973 = vmatpush2.bf16.msra.mxu0 0
    %8974 = vmatprep.subr.bf16.mxu0 0
    %8975 = vmatpush2.bf16.msra.mxu0 0
    %8976 = vmatprep.subr.bf16.mxu0 0
    %8977 = vmatpush2.bf16.msra.mxu0 0
    %8978 = vmatprep.subr.bf16.mxu0 0
    %8979 = vmatpush2.bf16.msra.mxu0 0
    %8980 = vmatprep.subr.bf16.mxu0 0
    %8981 = vmatpush2.bf16.msra.mxu0 0
    %8982 = vmatprep.subr.bf16.mxu0 0
    %8983 = vmatpush2.bf16.msra.mxu0 0
    %8984 = vmatprep.subr.bf16.mxu0 0
    %8985 = vmatpush2.bf16.msra.mxu0 0
    %8986 = vmatprep.mubr.bf16.mxu0 0
    %8987 = vmatmul.mubr.bf16.gmra.mxu0 %v8527
    %v8988 = vpop.f32.mrf.mxu0
    %v8989 = vadd.f32 0.0, %v8988
    %v8990 = vpop.f32.mrf.mxu0
    %v8991 = vadd.f32 0.0, %v8990
    %v8992 = vpop.f32.mrf.mxu0
    %v8993 = vpop.f32.mrf.mxu0
    %8994 = vdwg.mxu0
    %8995 = vmatprep.subr.bf16.mxu0 %v8846
    %8996 = vmatpush1.bf16.msra.mxu0 %v8845
    %8997 = vmatprep.subr.bf16.mxu0 %v8838
    %8998 = vmatpush1.bf16.msra.mxu0 %v8837
    %8999 = vmatprep.subr.bf16.mxu0 %v8830
    %9000 = vmatpush1.bf16.msra.mxu0 %v8829
    %9001 = vmatprep.subr.bf16.mxu0 %v8822
    %9002 = vmatpush1.bf16.msra.mxu0 %v8821
    %9003 = vmatprep.subr.bf16.mxu0 %v8814
    %9004 = vmatpush1.bf16.msra.mxu0 %v8813
    %9005 = vmatprep.subr.bf16.mxu0 %v8806
    %9006 = vmatpush1.bf16.msra.mxu0 %v8805
    %9007 = vmatprep.subr.bf16.mxu0 %v8798
    %9008 = vmatpush1.bf16.msra.mxu0 %v8797
    %9009 = vmatprep.subr.bf16.mxu0 %v8790
    %9010 = vmatpush1.bf16.msra.mxu0 %v8789
    %9011 = vmatprep.subr.bf16.mxu0 0
    %9012 = vmatpush2.bf16.msra.mxu0 0
    %9013 = vmatprep.subr.bf16.mxu0 0
    %9014 = vmatpush2.bf16.msra.mxu0 0
    %9015 = vmatprep.subr.bf16.mxu0 0
    %9016 = vmatpush2.bf16.msra.mxu0 0
    %9017 = vmatprep.subr.bf16.mxu0 0
    %9018 = vmatpush2.bf16.msra.mxu0 0
    %9019 = vmatprep.subr.bf16.mxu0 0
    %9020 = vmatpush2.bf16.msra.mxu0 0
    %9021 = vmatprep.subr.bf16.mxu0 0
    %9022 = vmatpush2.bf16.msra.mxu0 0
    %9023 = vmatprep.subr.bf16.mxu0 0
    %9024 = vmatpush2.bf16.msra.mxu0 0
    %9025 = vmatprep.subr.bf16.mxu0 0
    %9026 = vmatpush2.bf16.msra.mxu0 0
    %9027 = vmatprep.mubr.bf16.mxu0 0
    %9028 = vmatmul.mubr.bf16.gmra.mxu0 %v8527
    %v9029 = vpop.f32.mrf.mxu0
    %v9030 = vadd.f32 0.0, %v9029
    %v9031 = vpop.f32.mrf.mxu0
    %v9032 = vadd.f32 0.0, %v9031
    %v9033 = vpop.f32.mrf.mxu0
    %v9034 = vpop.f32.mrf.mxu0
    %9035 = vdwg.mxu0
    %9036 = vmatprep.subr.bf16.mxu0 %v8848
    %9037 = vmatpush1.bf16.msra.mxu0 %v8847
    %9038 = vmatprep.subr.bf16.mxu0 %v8840
    %9039 = vmatpush1.bf16.msra.mxu0 %v8839
    %9040 = vmatprep.subr.bf16.mxu0 %v8832
    %9041 = vmatpush1.bf16.msra.mxu0 %v8831
    %9042 = vmatprep.subr.bf16.mxu0 %v8824
    %9043 = vmatpush1.bf16.msra.mxu0 %v8823
    %9044 = vmatprep.subr.bf16.mxu0 %v8816
    %9045 = vmatpush1.bf16.msra.mxu0 %v8815
    %9046 = vmatprep.subr.bf16.mxu0 %v8808
    %9047 = vmatpush1.bf16.msra.mxu0 %v8807
    %9048 = vmatprep.subr.bf16.mxu0 %v8800
    %9049 = vmatpush1.bf16.msra.mxu0 %v8799
    %9050 = vmatprep.subr.bf16.mxu0 %v8792
    %9051 = vmatpush1.bf16.msra.mxu0 %v8791
    %9052 = vmatprep.subr.bf16.mxu0 0
    %9053 = vmatpush2.bf16.msra.mxu0 0
    %9054 = vmatprep.subr.bf16.mxu0 0
    %9055 = vmatpush2.bf16.msra.mxu0 0
    %9056 = vmatprep.subr.bf16.mxu0 0
    %9057 = vmatpush2.bf16.msra.mxu0 0
    %9058 = vmatprep.subr.bf16.mxu0 0
    %9059 = vmatpush2.bf16.msra.mxu0 0
    %9060 = vmatprep.subr.bf16.mxu0 0
    %9061 = vmatpush2.bf16.msra.mxu0 0
    %9062 = vmatprep.subr.bf16.mxu0 0
    %9063 = vmatpush2.bf16.msra.mxu0 0
    %9064 = vmatprep.subr.bf16.mxu0 0
    %9065 = vmatpush2.bf16.msra.mxu0 0
    %9066 = vmatprep.subr.bf16.mxu0 0
    %9067 = vmatpush2.bf16.msra.mxu0 0
    %9068 = vmatprep.mubr.bf16.mxu0 0
    %9069 = vmatmul.mubr.bf16.gmra.mxu0 %v8527
    %v9070 = vpop.f32.mrf.mxu0
    %v9071 = vadd.f32 0.0, %v9070
    %v9072 = vpop.f32.mrf.mxu0
    %v9073 = vadd.f32 0.0, %v9072
    %v9074 = vpop.f32.mrf.mxu0
    %v9075 = vpop.f32.mrf.mxu0
    %9076 = vdwg.mxu0
    %v9077 = vadd.f32 %v8447, %v8948
    %v9078 = vadd.f32 %v8448, %v8950
    %v9079 = vadd.f32 %v8449, %v8989
    %v9080 = vadd.f32 %v8450, %v8991
    %v9081 = vadd.f32 %v8451, %v9030
    %v9082 = vadd.f32 %v8452, %v9032
    %v9083 = vadd.f32 %v8453, %v9071
    %v9084 = vadd.f32 %v8454, %v9073
    %v9087 = vrot.slane %v7809, 6
    %v9088 = vrot.slane %v7816, 6
    %v9089 = vsel %vm1454, %v9087, %v9088
    %v9090 = vrot.slane %v7823, 6
    %v9091 = vrot.slane %v7830, 6
    %v9092 = vsel %vm1454, %v9090, %v9091
    %v9095 = vsel %vm201, %v9089, 0.0
    %v9096 = vrot.slane %v9095, 4
    %v9097 = vadd.f32 %v9095, %v9096
    %v9098 = vrot.slane %v9097, 2
    %v9099 = vadd.f32 %v9097, %v9098
    %v9100 = vrot.slane %v9099, 1
    %v9101 = vadd.f32 %v9099, %v9100
    %v9102 = vsel %vm201, %v9092, 0.0
    %v9103 = vrot.slane %v9102, 4
    %v9104 = vadd.f32 %v9102, %v9103
    %v9105 = vrot.slane %v9104, 2
    %v9106 = vadd.f32 %v9104, %v9105
    %v9107 = vrot.slane %v9106, 1
    %v9108 = vadd.f32 %v9106, %v9107
    %v9109 = vpack.c.bf16 %v9101, %v9101
    %v9110 = vpack.c.bf16 %v9108, %v9108
    %v9113 = vunpack.c.l.b16 %v9109
    %v9114 = vunpack.c.l.b16 %v9110
    %v9115 = vsel %vm228, %v9114, %v9113
    %v9116 = vpack.c.b16 %v9115, %v9115
    %v9118 = vsel %vm163, %v9116, 0
    %9120 = vmatprep.subr.bf16.mxu0 0
    %9121 = vmatpush1.bf16.msra.mxu0 0
    %9122 = vmatprep.subr.bf16.mxu0 0
    %9123 = vmatpush1.bf16.msra.mxu0 0
    %9124 = vmatprep.subr.bf16.mxu0 0
    %9125 = vmatpush1.bf16.msra.mxu0 0
    %9126 = vmatprep.subr.bf16.mxu0 0
    %9127 = vmatpush1.bf16.msra.mxu0 0
    %9128 = vmatprep.subr.bf16.mxu0 0
    %9129 = vmatpush1.bf16.msra.mxu0 0
    %9130 = vmatprep.subr.bf16.mxu0 0
    %9131 = vmatpush1.bf16.msra.mxu0 0
    %9132 = vmatprep.subr.bf16.mxu0 0
    %9133 = vmatpush1.bf16.msra.mxu0 0
    %9134 = vmatprep.subr.bf16.mxu0 0
    %9135 = vmatpush1.bf16.msra.mxu0 %v235
    %9136 = vmatprep.subr.bf16.mxu0 0
    %9137 = vmatpush2.bf16.msra.mxu0 0
    %9138 = vmatprep.subr.bf16.mxu0 0
    %9139 = vmatpush2.bf16.msra.mxu0 0
    %9140 = vmatprep.subr.bf16.mxu0 0
    %9141 = vmatpush2.bf16.msra.mxu0 0
    %9142 = vmatprep.subr.bf16.mxu0 0
    %9143 = vmatpush2.bf16.msra.mxu0 0
    %9144 = vmatprep.subr.bf16.mxu0 0
    %9145 = vmatpush2.bf16.msra.mxu0 0
    %9146 = vmatprep.subr.bf16.mxu0 0
    %9147 = vmatpush2.bf16.msra.mxu0 0
    %9148 = vmatprep.subr.bf16.mxu0 0
    %9149 = vmatpush2.bf16.msra.mxu0 0
    %9150 = vmatprep.subr.bf16.mxu0 0
    %9151 = vmatpush2.bf16.msra.mxu0 0
    %9152 = vmatprep.mubr.bf16.mxu0 0
    %9153 = vmatmul.mubr.bf16.gmra.mxu0 %v9118
    %v9154 = vpop.f32.mrf.mxu0
    %v9155 = vadd.f32 %v222, %v9154
    %v9156 = vpop.f32.mrf.mxu0
    %v9157 = vpop.f32.mrf.mxu0
    %v9158 = vpop.f32.mrf.mxu0
    %9159 = vdwg.mxu0
    %v9160 = vmax.f32 %v9155, 0.0
    %v9161 = vpack.c.bf16 %v9160, %v9160
    %s9162 = scalar_lea.vmem [#allocation7], 7168
    %v9163 = vld [vmem:[%s9162] sm:$0xff]
    %v9164 = vld [vmem:[%s9162 + $0x8] sm:$0xff]
    %v9165 = vld [vmem:[%s9162 + $0x10] sm:$0xff]
    %v9166 = vld [vmem:[%s9162 + $0x18] sm:$0xff]
    %v9167 = vld [vmem:[%s9162 + $0x20] sm:$0xff]
    %v9168 = vld [vmem:[%s9162 + $0x28] sm:$0xff]
    %v9169 = vld [vmem:[%s9162 + $0x30] sm:$0xff]
    %v9170 = vld [vmem:[%s9162 + $0x38] sm:$0xff]
    %v9171 = vld [vmem:[%s9162 + $0x40] sm:$0xff]
    %v9172 = vld [vmem:[%s9162 + $0x48] sm:$0xff]
    %v9173 = vld [vmem:[%s9162 + $0x50] sm:$0xff]
    %v9174 = vld [vmem:[%s9162 + $0x58] sm:$0xff]
    %v9175 = vld [vmem:[%s9162 + $0x60] sm:$0xff]
    %v9176 = vld [vmem:[%s9162 + $0x68] sm:$0xff]
    %v9177 = vld [vmem:[%s9162 + $0x70] sm:$0xff]
    %v9178 = vld [vmem:[%s9162 + $0x78] sm:$0xff]
    %v9179 = vld [vmem:[%s9162 + $0x80] sm:$0xff]
    %v9180 = vld [vmem:[%s9162 + $0x88] sm:$0xff]
    %v9181 = vld [vmem:[%s9162 + $0x90] sm:$0xff]
    %v9182 = vld [vmem:[%s9162 + $0x98] sm:$0xff]
    %v9183 = vld [vmem:[%s9162 + $0xa0] sm:$0xff]
    %v9184 = vld [vmem:[%s9162 + $0xa8] sm:$0xff]
    %v9185 = vld [vmem:[%s9162 + $0xb0] sm:$0xff]
    %v9186 = vld [vmem:[%s9162 + $0xb8] sm:$0xff]
    %v9187 = vld [vmem:[%s9162 + $0xc0] sm:$0xff]
    %v9188 = vld [vmem:[%s9162 + $0xc8] sm:$0xff]
    %v9189 = vld [vmem:[%s9162 + $0xd0] sm:$0xff]
    %v9190 = vld [vmem:[%s9162 + $0xd8] sm:$0xff]
    %v9191 = vld [vmem:[%s9162 + $0xe0] sm:$0xff]
    %v9192 = vld [vmem:[%s9162 + $0xe8] sm:$0xff]
    %v9193 = vld [vmem:[%s9162 + $0xf0] sm:$0xff]
    %v9194 = vld [vmem:[%s9162 + $0xf8] sm:$0xff]
    %v9195 = vld [vmem:[%s9162 + $0x100] sm:$0xff]
    %v9196 = vld [vmem:[%s9162 + $0x108] sm:$0xff]
    %v9197 = vld [vmem:[%s9162 + $0x110] sm:$0xff]
    %v9198 = vld [vmem:[%s9162 + $0x118] sm:$0xff]
    %v9199 = vld [vmem:[%s9162 + $0x120] sm:$0xff]
    %v9200 = vld [vmem:[%s9162 + $0x128] sm:$0xff]
    %v9201 = vld [vmem:[%s9162 + $0x130] sm:$0xff]
    %v9202 = vld [vmem:[%s9162 + $0x138] sm:$0xff]
    %v9203 = vld [vmem:[%s9162 + $0x140] sm:$0xff]
    %v9204 = vld [vmem:[%s9162 + $0x148] sm:$0xff]
    %v9205 = vld [vmem:[%s9162 + $0x150] sm:$0xff]
    %v9206 = vld [vmem:[%s9162 + $0x158] sm:$0xff]
    %v9207 = vld [vmem:[%s9162 + $0x160] sm:$0xff]
    %v9208 = vld [vmem:[%s9162 + $0x168] sm:$0xff]
    %v9209 = vld [vmem:[%s9162 + $0x170] sm:$0xff]
    %v9210 = vld [vmem:[%s9162 + $0x178] sm:$0xff]
    %v9211 = vld [vmem:[%s9162 + $0x180] sm:$0xff]
    %v9212 = vld [vmem:[%s9162 + $0x188] sm:$0xff]
    %v9213 = vld [vmem:[%s9162 + $0x190] sm:$0xff]
    %v9214 = vld [vmem:[%s9162 + $0x198] sm:$0xff]
    %v9215 = vld [vmem:[%s9162 + $0x1a0] sm:$0xff]
    %v9216 = vld [vmem:[%s9162 + $0x1a8] sm:$0xff]
    %v9217 = vld [vmem:[%s9162 + $0x1b0] sm:$0xff]
    %v9218 = vld [vmem:[%s9162 + $0x1b8] sm:$0xff]
    %v9219 = vld [vmem:[%s9162 + $0x1c0] sm:$0xff]
    %v9220 = vld [vmem:[%s9162 + $0x1c8] sm:$0xff]
    %v9221 = vld [vmem:[%s9162 + $0x1d0] sm:$0xff]
    %v9222 = vld [vmem:[%s9162 + $0x1d8] sm:$0xff]
    %v9223 = vld [vmem:[%s9162 + $0x1e0] sm:$0xff]
    %v9224 = vld [vmem:[%s9162 + $0x1e8] sm:$0xff]
    %v9225 = vld [vmem:[%s9162 + $0x1f0] sm:$0xff]
    %v9226 = vld [vmem:[%s9162 + $0x1f8] sm:$0xff]
    %v9291 = vunpack.c.l.b16 %v9163
    %v9292 = vunpack.c.h.b16 %v9163
    %v9293 = vunpack.c.l.b16 %v9164
    %v9294 = vunpack.c.h.b16 %v9164
    %v9295 = vunpack.c.l.b16 %v9165
    %v9296 = vunpack.c.h.b16 %v9165
    %v9297 = vunpack.c.l.b16 %v9166
    %v9298 = vunpack.c.h.b16 %v9166
    %v9299 = vunpack.c.l.b16 %v9167
    %v9300 = vunpack.c.h.b16 %v9167
    %v9301 = vunpack.c.l.b16 %v9168
    %v9302 = vunpack.c.h.b16 %v9168
    %v9303 = vunpack.c.l.b16 %v9169
    %v9304 = vunpack.c.h.b16 %v9169
    %v9305 = vunpack.c.l.b16 %v9170
    %v9306 = vunpack.c.h.b16 %v9170
    %v9307 = vunpack.c.l.b16 %v9171
    %v9308 = vunpack.c.h.b16 %v9171
    %v9309 = vunpack.c.l.b16 %v9172
    %v9310 = vunpack.c.h.b16 %v9172
    %v9311 = vunpack.c.l.b16 %v9173
    %v9312 = vunpack.c.h.b16 %v9173
    %v9313 = vunpack.c.l.b16 %v9174
    %v9314 = vunpack.c.h.b16 %v9174
    %v9315 = vunpack.c.l.b16 %v9175
    %v9316 = vunpack.c.h.b16 %v9175
    %v9317 = vunpack.c.l.b16 %v9176
    %v9318 = vunpack.c.h.b16 %v9176
    %v9319 = vunpack.c.l.b16 %v9177
    %v9320 = vunpack.c.h.b16 %v9177
    %v9321 = vunpack.c.l.b16 %v9178
    %v9322 = vunpack.c.h.b16 %v9178
    %v9323 = vunpack.c.l.b16 %v9179
    %v9324 = vunpack.c.h.b16 %v9179
    %v9325 = vunpack.c.l.b16 %v9180
    %v9326 = vunpack.c.h.b16 %v9180
    %v9327 = vunpack.c.l.b16 %v9181
    %v9328 = vunpack.c.h.b16 %v9181
    %v9329 = vunpack.c.l.b16 %v9182
    %v9330 = vunpack.c.h.b16 %v9182
    %v9331 = vunpack.c.l.b16 %v9183
    %v9332 = vunpack.c.h.b16 %v9183
    %v9333 = vunpack.c.l.b16 %v9184
    %v9334 = vunpack.c.h.b16 %v9184
    %v9335 = vunpack.c.l.b16 %v9185
    %v9336 = vunpack.c.h.b16 %v9185
    %v9337 = vunpack.c.l.b16 %v9186
    %v9338 = vunpack.c.h.b16 %v9186
    %v9339 = vunpack.c.l.b16 %v9187
    %v9340 = vunpack.c.h.b16 %v9187
    %v9341 = vunpack.c.l.b16 %v9188
    %v9342 = vunpack.c.h.b16 %v9188
    %v9343 = vunpack.c.l.b16 %v9189
    %v9344 = vunpack.c.h.b16 %v9189
    %v9345 = vunpack.c.l.b16 %v9190
    %v9346 = vunpack.c.h.b16 %v9190
    %v9347 = vunpack.c.l.b16 %v9191
    %v9348 = vunpack.c.h.b16 %v9191
    %v9349 = vunpack.c.l.b16 %v9192
    %v9350 = vunpack.c.h.b16 %v9192
    %v9351 = vunpack.c.l.b16 %v9193
    %v9352 = vunpack.c.h.b16 %v9193
    %v9353 = vunpack.c.l.b16 %v9194
    %v9354 = vunpack.c.h.b16 %v9194
    %v9355 = vunpack.c.l.b16 %v9195
    %v9356 = vunpack.c.h.b16 %v9195
    %v9357 = vunpack.c.l.b16 %v9196
    %v9358 = vunpack.c.h.b16 %v9196
    %v9359 = vunpack.c.l.b16 %v9197
    %v9360 = vunpack.c.h.b16 %v9197
    %v9361 = vunpack.c.l.b16 %v9198
    %v9362 = vunpack.c.h.b16 %v9198
    %v9363 = vunpack.c.l.b16 %v9199
    %v9364 = vunpack.c.h.b16 %v9199
    %v9365 = vunpack.c.l.b16 %v9200
    %v9366 = vunpack.c.h.b16 %v9200
    %v9367 = vunpack.c.l.b16 %v9201
    %v9368 = vunpack.c.h.b16 %v9201
    %v9369 = vunpack.c.l.b16 %v9202
    %v9370 = vunpack.c.h.b16 %v9202
    %v9371 = vunpack.c.l.b16 %v9203
    %v9372 = vunpack.c.h.b16 %v9203
    %v9373 = vunpack.c.l.b16 %v9204
    %v9374 = vunpack.c.h.b16 %v9204
    %v9375 = vunpack.c.l.b16 %v9205
    %v9376 = vunpack.c.h.b16 %v9205
    %v9377 = vunpack.c.l.b16 %v9206
    %v9378 = vunpack.c.h.b16 %v9206
    %v9379 = vunpack.c.l.b16 %v9207
    %v9380 = vunpack.c.h.b16 %v9207
    %v9381 = vunpack.c.l.b16 %v9208
    %v9382 = vunpack.c.h.b16 %v9208
    %v9383 = vunpack.c.l.b16 %v9209
    %v9384 = vunpack.c.h.b16 %v9209
    %v9385 = vunpack.c.l.b16 %v9210
    %v9386 = vunpack.c.h.b16 %v9210
    %v9387 = vunpack.c.l.b16 %v9211
    %v9388 = vunpack.c.h.b16 %v9211
    %v9389 = vunpack.c.l.b16 %v9212
    %v9390 = vunpack.c.h.b16 %v9212
    %v9391 = vunpack.c.l.b16 %v9213
    %v9392 = vunpack.c.h.b16 %v9213
    %v9393 = vunpack.c.l.b16 %v9214
    %v9394 = vunpack.c.h.b16 %v9214
    %v9395 = vunpack.c.l.b16 %v9215
    %v9396 = vunpack.c.h.b16 %v9215
    %v9397 = vunpack.c.l.b16 %v9216
    %v9398 = vunpack.c.h.b16 %v9216
    %v9399 = vunpack.c.l.b16 %v9217
    %v9400 = vunpack.c.h.b16 %v9217
    %v9401 = vunpack.c.l.b16 %v9218
    %v9402 = vunpack.c.h.b16 %v9218
    %v9403 = vunpack.c.l.b16 %v9219
    %v9404 = vunpack.c.h.b16 %v9219
    %v9405 = vunpack.c.l.b16 %v9220
    %v9406 = vunpack.c.h.b16 %v9220
    %v9407 = vunpack.c.l.b16 %v9221
    %v9408 = vunpack.c.h.b16 %v9221
    %v9409 = vunpack.c.l.b16 %v9222
    %v9410 = vunpack.c.h.b16 %v9222
    %v9411 = vunpack.c.l.b16 %v9223
    %v9412 = vunpack.c.h.b16 %v9223
    %v9413 = vunpack.c.l.b16 %v9224
    %v9414 = vunpack.c.h.b16 %v9224
    %v9415 = vunpack.c.l.b16 %v9225
    %v9416 = vunpack.c.h.b16 %v9225
    %v9417 = vunpack.c.l.b16 %v9226
    %v9418 = vunpack.c.h.b16 %v9226
    %v9419 = vpack.c.b16 %v9299, %v9291
    %v9420 = vpack.c.b16 %v9300, %v9292
    %v9421 = vpack.c.b16 %v9301, %v9293
    %v9422 = vpack.c.b16 %v9302, %v9294
    %v9423 = vpack.c.b16 %v9303, %v9295
    %v9424 = vpack.c.b16 %v9304, %v9296
    %v9425 = vpack.c.b16 %v9305, %v9297
    %v9426 = vpack.c.b16 %v9306, %v9298
    %v9427 = vpack.c.b16 %v9315, %v9307
    %v9428 = vpack.c.b16 %v9316, %v9308
    %v9429 = vpack.c.b16 %v9317, %v9309
    %v9430 = vpack.c.b16 %v9318, %v9310
    %v9431 = vpack.c.b16 %v9319, %v9311
    %v9432 = vpack.c.b16 %v9320, %v9312
    %v9433 = vpack.c.b16 %v9321, %v9313
    %v9434 = vpack.c.b16 %v9322, %v9314
    %v9435 = vpack.c.b16 %v9331, %v9323
    %v9436 = vpack.c.b16 %v9332, %v9324
    %v9437 = vpack.c.b16 %v9333, %v9325
    %v9438 = vpack.c.b16 %v9334, %v9326
    %v9439 = vpack.c.b16 %v9335, %v9327
    %v9440 = vpack.c.b16 %v9336, %v9328
    %v9441 = vpack.c.b16 %v9337, %v9329
    %v9442 = vpack.c.b16 %v9338, %v9330
    %v9443 = vpack.c.b16 %v9347, %v9339
    %v9444 = vpack.c.b16 %v9348, %v9340
    %v9445 = vpack.c.b16 %v9349, %v9341
    %v9446 = vpack.c.b16 %v9350, %v9342
    %v9447 = vpack.c.b16 %v9351, %v9343
    %v9448 = vpack.c.b16 %v9352, %v9344
    %v9449 = vpack.c.b16 %v9353, %v9345
    %v9450 = vpack.c.b16 %v9354, %v9346
    %v9451 = vpack.c.b16 %v9363, %v9355
    %v9452 = vpack.c.b16 %v9364, %v9356
    %v9453 = vpack.c.b16 %v9365, %v9357
    %v9454 = vpack.c.b16 %v9366, %v9358
    %v9455 = vpack.c.b16 %v9367, %v9359
    %v9456 = vpack.c.b16 %v9368, %v9360
    %v9457 = vpack.c.b16 %v9369, %v9361
    %v9458 = vpack.c.b16 %v9370, %v9362
    %v9459 = vpack.c.b16 %v9379, %v9371
    %v9460 = vpack.c.b16 %v9380, %v9372
    %v9461 = vpack.c.b16 %v9381, %v9373
    %v9462 = vpack.c.b16 %v9382, %v9374
    %v9463 = vpack.c.b16 %v9383, %v9375
    %v9464 = vpack.c.b16 %v9384, %v9376
    %v9465 = vpack.c.b16 %v9385, %v9377
    %v9466 = vpack.c.b16 %v9386, %v9378
    %v9467 = vpack.c.b16 %v9395, %v9387
    %v9468 = vpack.c.b16 %v9396, %v9388
    %v9469 = vpack.c.b16 %v9397, %v9389
    %v9470 = vpack.c.b16 %v9398, %v9390
    %v9471 = vpack.c.b16 %v9399, %v9391
    %v9472 = vpack.c.b16 %v9400, %v9392
    %v9473 = vpack.c.b16 %v9401, %v9393
    %v9474 = vpack.c.b16 %v9402, %v9394
    %v9475 = vpack.c.b16 %v9411, %v9403
    %v9476 = vpack.c.b16 %v9412, %v9404
    %v9477 = vpack.c.b16 %v9413, %v9405
    %v9478 = vpack.c.b16 %v9414, %v9406
    %v9479 = vpack.c.b16 %v9415, %v9407
    %v9480 = vpack.c.b16 %v9416, %v9408
    %v9481 = vpack.c.b16 %v9417, %v9409
    %v9482 = vpack.c.b16 %v9418, %v9410
    %9547 = vmatprep.subr.bf16.mxu0 %v9476
    %9548 = vmatpush1.bf16.msra.mxu0 %v9475
    %9549 = vmatprep.subr.bf16.mxu0 %v9468
    %9550 = vmatpush1.bf16.msra.mxu0 %v9467
    %9551 = vmatprep.subr.bf16.mxu0 %v9460
    %9552 = vmatpush1.bf16.msra.mxu0 %v9459
    %9553 = vmatprep.subr.bf16.mxu0 %v9452
    %9554 = vmatpush1.bf16.msra.mxu0 %v9451
    %9555 = vmatprep.subr.bf16.mxu0 %v9444
    %9556 = vmatpush1.bf16.msra.mxu0 %v9443
    %9557 = vmatprep.subr.bf16.mxu0 %v9436
    %9558 = vmatpush1.bf16.msra.mxu0 %v9435
    %9559 = vmatprep.subr.bf16.mxu0 %v9428
    %9560 = vmatpush1.bf16.msra.mxu0 %v9427
    %9561 = vmatprep.subr.bf16.mxu0 %v9420
    %9562 = vmatpush1.bf16.msra.mxu0 %v9419
    %9563 = vmatprep.subr.bf16.mxu0 0
    %9564 = vmatpush2.bf16.msra.mxu0 0
    %9565 = vmatprep.subr.bf16.mxu0 0
    %9566 = vmatpush2.bf16.msra.mxu0 0
    %9567 = vmatprep.subr.bf16.mxu0 0
    %9568 = vmatpush2.bf16.msra.mxu0 0
    %9569 = vmatprep.subr.bf16.mxu0 0
    %9570 = vmatpush2.bf16.msra.mxu0 0
    %9571 = vmatprep.subr.bf16.mxu0 0
    %9572 = vmatpush2.bf16.msra.mxu0 0
    %9573 = vmatprep.subr.bf16.mxu0 0
    %9574 = vmatpush2.bf16.msra.mxu0 0
    %9575 = vmatprep.subr.bf16.mxu0 0
    %9576 = vmatpush2.bf16.msra.mxu0 0
    %9577 = vmatprep.subr.bf16.mxu0 0
    %9578 = vmatpush2.bf16.msra.mxu0 0
    %9579 = vmatprep.mubr.bf16.mxu0 0
    %9580 = vmatmul.mubr.bf16.gmra.mxu0 %v9161
    %v9581 = vpop.f32.mrf.mxu0
    %v9582 = vadd.f32 0.0, %v9581
    %v9583 = vpop.f32.mrf.mxu0
    %v9584 = vadd.f32 0.0, %v9583
    %v9585 = vpop.f32.mrf.mxu0
    %v9586 = vpop.f32.mrf.mxu0
    %9587 = vdwg.mxu0
    %9588 = vmatprep.subr.bf16.mxu0 %v9478
    %9589 = vmatpush1.bf16.msra.mxu0 %v9477
    %9590 = vmatprep.subr.bf16.mxu0 %v9470
    %9591 = vmatpush1.bf16.msra.mxu0 %v9469
    %9592 = vmatprep.subr.bf16.mxu0 %v9462
    %9593 = vmatpush1.bf16.msra.mxu0 %v9461
    %9594 = vmatprep.subr.bf16.mxu0 %v9454
    %9595 = vmatpush1.bf16.msra.mxu0 %v9453
    %9596 = vmatprep.subr.bf16.mxu0 %v9446
    %9597 = vmatpush1.bf16.msra.mxu0 %v9445
    %9598 = vmatprep.subr.bf16.mxu0 %v9438
    %9599 = vmatpush1.bf16.msra.mxu0 %v9437
    %9600 = vmatprep.subr.bf16.mxu0 %v9430
    %9601 = vmatpush1.bf16.msra.mxu0 %v9429
    %9602 = vmatprep.subr.bf16.mxu0 %v9422
    %9603 = vmatpush1.bf16.msra.mxu0 %v9421
    %9604 = vmatprep.subr.bf16.mxu0 0
    %9605 = vmatpush2.bf16.msra.mxu0 0
    %9606 = vmatprep.subr.bf16.mxu0 0
    %9607 = vmatpush2.bf16.msra.mxu0 0
    %9608 = vmatprep.subr.bf16.mxu0 0
    %9609 = vmatpush2.bf16.msra.mxu0 0
    %9610 = vmatprep.subr.bf16.mxu0 0
    %9611 = vmatpush2.bf16.msra.mxu0 0
    %9612 = vmatprep.subr.bf16.mxu0 0
    %9613 = vmatpush2.bf16.msra.mxu0 0
    %9614 = vmatprep.subr.bf16.mxu0 0
    %9615 = vmatpush2.bf16.msra.mxu0 0
    %9616 = vmatprep.subr.bf16.mxu0 0
    %9617 = vmatpush2.bf16.msra.mxu0 0
    %9618 = vmatprep.subr.bf16.mxu0 0
    %9619 = vmatpush2.bf16.msra.mxu0 0
    %9620 = vmatprep.mubr.bf16.mxu0 0
    %9621 = vmatmul.mubr.bf16.gmra.mxu0 %v9161
    %v9622 = vpop.f32.mrf.mxu0
    %v9623 = vadd.f32 0.0, %v9622
    %v9624 = vpop.f32.mrf.mxu0
    %v9625 = vadd.f32 0.0, %v9624
    %v9626 = vpop.f32.mrf.mxu0
    %v9627 = vpop.f32.mrf.mxu0
    %9628 = vdwg.mxu0
    %9629 = vmatprep.subr.bf16.mxu0 %v9480
    %9630 = vmatpush1.bf16.msra.mxu0 %v9479
    %9631 = vmatprep.subr.bf16.mxu0 %v9472
    %9632 = vmatpush1.bf16.msra.mxu0 %v9471
    %9633 = vmatprep.subr.bf16.mxu0 %v9464
    %9634 = vmatpush1.bf16.msra.mxu0 %v9463
    %9635 = vmatprep.subr.bf16.mxu0 %v9456
    %9636 = vmatpush1.bf16.msra.mxu0 %v9455
    %9637 = vmatprep.subr.bf16.mxu0 %v9448
    %9638 = vmatpush1.bf16.msra.mxu0 %v9447
    %9639 = vmatprep.subr.bf16.mxu0 %v9440
    %9640 = vmatpush1.bf16.msra.mxu0 %v9439
    %9641 = vmatprep.subr.bf16.mxu0 %v9432
    %9642 = vmatpush1.bf16.msra.mxu0 %v9431
    %9643 = vmatprep.subr.bf16.mxu0 %v9424
    %9644 = vmatpush1.bf16.msra.mxu0 %v9423
    %9645 = vmatprep.subr.bf16.mxu0 0
    %9646 = vmatpush2.bf16.msra.mxu0 0
    %9647 = vmatprep.subr.bf16.mxu0 0
    %9648 = vmatpush2.bf16.msra.mxu0 0
    %9649 = vmatprep.subr.bf16.mxu0 0
    %9650 = vmatpush2.bf16.msra.mxu0 0
    %9651 = vmatprep.subr.bf16.mxu0 0
    %9652 = vmatpush2.bf16.msra.mxu0 0
    %9653 = vmatprep.subr.bf16.mxu0 0
    %9654 = vmatpush2.bf16.msra.mxu0 0
    %9655 = vmatprep.subr.bf16.mxu0 0
    %9656 = vmatpush2.bf16.msra.mxu0 0
    %9657 = vmatprep.subr.bf16.mxu0 0
    %9658 = vmatpush2.bf16.msra.mxu0 0
    %9659 = vmatprep.subr.bf16.mxu0 0
    %9660 = vmatpush2.bf16.msra.mxu0 0
    %9661 = vmatprep.mubr.bf16.mxu0 0
    %9662 = vmatmul.mubr.bf16.gmra.mxu0 %v9161
    %v9663 = vpop.f32.mrf.mxu0
    %v9664 = vadd.f32 0.0, %v9663
    %v9665 = vpop.f32.mrf.mxu0
    %v9666 = vadd.f32 0.0, %v9665
    %v9667 = vpop.f32.mrf.mxu0
    %v9668 = vpop.f32.mrf.mxu0
    %9669 = vdwg.mxu0
    %9670 = vmatprep.subr.bf16.mxu0 %v9482
    %9671 = vmatpush1.bf16.msra.mxu0 %v9481
    %9672 = vmatprep.subr.bf16.mxu0 %v9474
    %9673 = vmatpush1.bf16.msra.mxu0 %v9473
    %9674 = vmatprep.subr.bf16.mxu0 %v9466
    %9675 = vmatpush1.bf16.msra.mxu0 %v9465
    %9676 = vmatprep.subr.bf16.mxu0 %v9458
    %9677 = vmatpush1.bf16.msra.mxu0 %v9457
    %9678 = vmatprep.subr.bf16.mxu0 %v9450
    %9679 = vmatpush1.bf16.msra.mxu0 %v9449
    %9680 = vmatprep.subr.bf16.mxu0 %v9442
    %9681 = vmatpush1.bf16.msra.mxu0 %v9441
    %9682 = vmatprep.subr.bf16.mxu0 %v9434
    %9683 = vmatpush1.bf16.msra.mxu0 %v9433
    %9684 = vmatprep.subr.bf16.mxu0 %v9426
    %9685 = vmatpush1.bf16.msra.mxu0 %v9425
    %9686 = vmatprep.subr.bf16.mxu0 0
    %9687 = vmatpush2.bf16.msra.mxu0 0
    %9688 = vmatprep.subr.bf16.mxu0 0
    %9689 = vmatpush2.bf16.msra.mxu0 0
    %9690 = vmatprep.subr.bf16.mxu0 0
    %9691 = vmatpush2.bf16.msra.mxu0 0
    %9692 = vmatprep.subr.bf16.mxu0 0
    %9693 = vmatpush2.bf16.msra.mxu0 0
    %9694 = vmatprep.subr.bf16.mxu0 0
    %9695 = vmatpush2.bf16.msra.mxu0 0
    %9696 = vmatprep.subr.bf16.mxu0 0
    %9697 = vmatpush2.bf16.msra.mxu0 0
    %9698 = vmatprep.subr.bf16.mxu0 0
    %9699 = vmatpush2.bf16.msra.mxu0 0
    %9700 = vmatprep.subr.bf16.mxu0 0
    %9701 = vmatpush2.bf16.msra.mxu0 0
    %9702 = vmatprep.mubr.bf16.mxu0 0
    %9703 = vmatmul.mubr.bf16.gmra.mxu0 %v9161
    %v9704 = vpop.f32.mrf.mxu0
    %v9705 = vadd.f32 0.0, %v9704
    %v9706 = vpop.f32.mrf.mxu0
    %v9707 = vadd.f32 0.0, %v9706
    %v9708 = vpop.f32.mrf.mxu0
    %v9709 = vpop.f32.mrf.mxu0
    %9710 = vdwg.mxu0
    %v9711 = vadd.f32 %v9077, %v9582
    %v9712 = vadd.f32 %v9078, %v9584
    %v9713 = vadd.f32 %v9079, %v9623
    %v9714 = vadd.f32 %v9080, %v9625
    %v9715 = vadd.f32 %v9081, %v9664
    %v9716 = vadd.f32 %v9082, %v9666
    %v9717 = vadd.f32 %v9083, %v9705
    %v9718 = vadd.f32 %v9084, %v9707
    %v9719 = vrot.slane %v7816, 1
    %v9720 = vrot.slane %v7830, 1
    %v9723 = vsel %vm201, %v9719, 0.0
    %v9724 = vrot.slane %v9723, 4
    %v9725 = vadd.f32 %v9723, %v9724
    %v9726 = vrot.slane %v9725, 2
    %v9727 = vadd.f32 %v9725, %v9726
    %v9728 = vrot.slane %v9727, 1
    %v9729 = vadd.f32 %v9727, %v9728
    %v9730 = vsel %vm201, %v9720, 0.0
    %v9731 = vrot.slane %v9730, 4
    %v9732 = vadd.f32 %v9730, %v9731
    %v9733 = vrot.slane %v9732, 2
    %v9734 = vadd.f32 %v9732, %v9733
    %v9735 = vrot.slane %v9734, 1
    %v9736 = vadd.f32 %v9734, %v9735
    %v9737 = vpack.c.bf16 %v9729, %v9729
    %v9738 = vpack.c.bf16 %v9736, %v9736
    %v9741 = vunpack.c.l.b16 %v9737
    %v9742 = vunpack.c.l.b16 %v9738
    %v9743 = vsel %vm228, %v9742, %v9741
    %v9744 = vpack.c.b16 %v9743, %v9743
    %v9746 = vsel %vm163, %v9744, 0
    %9748 = vmatprep.subr.bf16.mxu0 0
    %9749 = vmatpush1.bf16.msra.mxu0 0
    %9750 = vmatprep.subr.bf16.mxu0 0
    %9751 = vmatpush1.bf16.msra.mxu0 0
    %9752 = vmatprep.subr.bf16.mxu0 0
    %9753 = vmatpush1.bf16.msra.mxu0 0
    %9754 = vmatprep.subr.bf16.mxu0 0
    %9755 = vmatpush1.bf16.msra.mxu0 0
    %9756 = vmatprep.subr.bf16.mxu0 0
    %9757 = vmatpush1.bf16.msra.mxu0 0
    %9758 = vmatprep.subr.bf16.mxu0 0
    %9759 = vmatpush1.bf16.msra.mxu0 0
    %9760 = vmatprep.subr.bf16.mxu0 0
    %9761 = vmatpush1.bf16.msra.mxu0 0
    %9762 = vmatprep.subr.bf16.mxu0 0
    %9763 = vmatpush1.bf16.msra.mxu0 %v235
    %9764 = vmatprep.subr.bf16.mxu0 0
    %9765 = vmatpush2.bf16.msra.mxu0 0
    %9766 = vmatprep.subr.bf16.mxu0 0
    %9767 = vmatpush2.bf16.msra.mxu0 0
    %9768 = vmatprep.subr.bf16.mxu0 0
    %9769 = vmatpush2.bf16.msra.mxu0 0
    %9770 = vmatprep.subr.bf16.mxu0 0
    %9771 = vmatpush2.bf16.msra.mxu0 0
    %9772 = vmatprep.subr.bf16.mxu0 0
    %9773 = vmatpush2.bf16.msra.mxu0 0
    %9774 = vmatprep.subr.bf16.mxu0 0
    %9775 = vmatpush2.bf16.msra.mxu0 0
    %9776 = vmatprep.subr.bf16.mxu0 0
    %9777 = vmatpush2.bf16.msra.mxu0 0
    %9778 = vmatprep.subr.bf16.mxu0 0
    %9779 = vmatpush2.bf16.msra.mxu0 0
    %9780 = vmatprep.mubr.bf16.mxu0 0
    %9781 = vmatmul.mubr.bf16.gmra.mxu0 %v9746
    %v9782 = vpop.f32.mrf.mxu0
    %v9783 = vadd.f32 %v222, %v9782
    %v9784 = vpop.f32.mrf.mxu0
    %v9785 = vpop.f32.mrf.mxu0
    %v9786 = vpop.f32.mrf.mxu0
    %9787 = vdwg.mxu0
    %v9788 = vmax.f32 %v9783, 0.0
    %v9789 = vpack.c.bf16 %v9788, %v9788
    %s9790 = scalar_lea.vmem [#allocation7], 7680
    %v9791 = vld [vmem:[%s9790] sm:$0xff]
    %v9792 = vld [vmem:[%s9790 + $0x8] sm:$0xff]
    %v9793 = vld [vmem:[%s9790 + $0x10] sm:$0xff]
    %v9794 = vld [vmem:[%s9790 + $0x18] sm:$0xff]
    %v9795 = vld [vmem:[%s9790 + $0x20] sm:$0xff]
    %v9796 = vld [vmem:[%s9790 + $0x28] sm:$0xff]
    %v9797 = vld [vmem:[%s9790 + $0x30] sm:$0xff]
    %v9798 = vld [vmem:[%s9790 + $0x38] sm:$0xff]
    %v9799 = vld [vmem:[%s9790 + $0x40] sm:$0xff]
    %v9800 = vld [vmem:[%s9790 + $0x48] sm:$0xff]
    %v9801 = vld [vmem:[%s9790 + $0x50] sm:$0xff]
    %v9802 = vld [vmem:[%s9790 + $0x58] sm:$0xff]
    %v9803 = vld [vmem:[%s9790 + $0x60] sm:$0xff]
    %v9804 = vld [vmem:[%s9790 + $0x68] sm:$0xff]
    %v9805 = vld [vmem:[%s9790 + $0x70] sm:$0xff]
    %v9806 = vld [vmem:[%s9790 + $0x78] sm:$0xff]
    %v9807 = vld [vmem:[%s9790 + $0x80] sm:$0xff]
    %v9808 = vld [vmem:[%s9790 + $0x88] sm:$0xff]
    %v9809 = vld [vmem:[%s9790 + $0x90] sm:$0xff]
    %v9810 = vld [vmem:[%s9790 + $0x98] sm:$0xff]
    %v9811 = vld [vmem:[%s9790 + $0xa0] sm:$0xff]
    %v9812 = vld [vmem:[%s9790 + $0xa8] sm:$0xff]
    %v9813 = vld [vmem:[%s9790 + $0xb0] sm:$0xff]
    %v9814 = vld [vmem:[%s9790 + $0xb8] sm:$0xff]
    %v9815 = vld [vmem:[%s9790 + $0xc0] sm:$0xff]
    %v9816 = vld [vmem:[%s9790 + $0xc8] sm:$0xff]
    %v9817 = vld [vmem:[%s9790 + $0xd0] sm:$0xff]
    %v9818 = vld [vmem:[%s9790 + $0xd8] sm:$0xff]
    %v9819 = vld [vmem:[%s9790 + $0xe0] sm:$0xff]
    %v9820 = vld [vmem:[%s9790 + $0xe8] sm:$0xff]
    %v9821 = vld [vmem:[%s9790 + $0xf0] sm:$0xff]
    %v9822 = vld [vmem:[%s9790 + $0xf8] sm:$0xff]
    %v9823 = vld [vmem:[%s9790 + $0x100] sm:$0xff]
    %v9824 = vld [vmem:[%s9790 + $0x108] sm:$0xff]
    %v9825 = vld [vmem:[%s9790 + $0x110] sm:$0xff]
    %v9826 = vld [vmem:[%s9790 + $0x118] sm:$0xff]
    %v9827 = vld [vmem:[%s9790 + $0x120] sm:$0xff]
    %v9828 = vld [vmem:[%s9790 + $0x128] sm:$0xff]
    %v9829 = vld [vmem:[%s9790 + $0x130] sm:$0xff]
    %v9830 = vld [vmem:[%s9790 + $0x138] sm:$0xff]
    %v9831 = vld [vmem:[%s9790 + $0x140] sm:$0xff]
    %v9832 = vld [vmem:[%s9790 + $0x148] sm:$0xff]
    %v9833 = vld [vmem:[%s9790 + $0x150] sm:$0xff]
    %v9834 = vld [vmem:[%s9790 + $0x158] sm:$0xff]
    %v9835 = vld [vmem:[%s9790 + $0x160] sm:$0xff]
    %v9836 = vld [vmem:[%s9790 + $0x168] sm:$0xff]
    %v9837 = vld [vmem:[%s9790 + $0x170] sm:$0xff]
    %v9838 = vld [vmem:[%s9790 + $0x178] sm:$0xff]
    %v9839 = vld [vmem:[%s9790 + $0x180] sm:$0xff]
    %v9840 = vld [vmem:[%s9790 + $0x188] sm:$0xff]
    %v9841 = vld [vmem:[%s9790 + $0x190] sm:$0xff]
    %v9842 = vld [vmem:[%s9790 + $0x198] sm:$0xff]
    %v9843 = vld [vmem:[%s9790 + $0x1a0] sm:$0xff]
    %v9844 = vld [vmem:[%s9790 + $0x1a8] sm:$0xff]
    %v9845 = vld [vmem:[%s9790 + $0x1b0] sm:$0xff]
    %v9846 = vld [vmem:[%s9790 + $0x1b8] sm:$0xff]
    %v9847 = vld [vmem:[%s9790 + $0x1c0] sm:$0xff]
    %v9848 = vld [vmem:[%s9790 + $0x1c8] sm:$0xff]
    %v9849 = vld [vmem:[%s9790 + $0x1d0] sm:$0xff]
    %v9850 = vld [vmem:[%s9790 + $0x1d8] sm:$0xff]
    %v9851 = vld [vmem:[%s9790 + $0x1e0] sm:$0xff]
    %v9852 = vld [vmem:[%s9790 + $0x1e8] sm:$0xff]
    %v9853 = vld [vmem:[%s9790 + $0x1f0] sm:$0xff]
    %v9854 = vld [vmem:[%s9790 + $0x1f8] sm:$0xff]
    %v9919 = vunpack.c.l.b16 %v9791
    %v9920 = vunpack.c.h.b16 %v9791
    %v9921 = vunpack.c.l.b16 %v9792
    %v9922 = vunpack.c.h.b16 %v9792
    %v9923 = vunpack.c.l.b16 %v9793
    %v9924 = vunpack.c.h.b16 %v9793
    %v9925 = vunpack.c.l.b16 %v9794
    %v9926 = vunpack.c.h.b16 %v9794
    %v9927 = vunpack.c.l.b16 %v9795
    %v9928 = vunpack.c.h.b16 %v9795
    %v9929 = vunpack.c.l.b16 %v9796
    %v9930 = vunpack.c.h.b16 %v9796
    %v9931 = vunpack.c.l.b16 %v9797
    %v9932 = vunpack.c.h.b16 %v9797
    %v9933 = vunpack.c.l.b16 %v9798
    %v9934 = vunpack.c.h.b16 %v9798
    %v9935 = vunpack.c.l.b16 %v9799
    %v9936 = vunpack.c.h.b16 %v9799
    %v9937 = vunpack.c.l.b16 %v9800
    %v9938 = vunpack.c.h.b16 %v9800
    %v9939 = vunpack.c.l.b16 %v9801
    %v9940 = vunpack.c.h.b16 %v9801
    %v9941 = vunpack.c.l.b16 %v9802
    %v9942 = vunpack.c.h.b16 %v9802
    %v9943 = vunpack.c.l.b16 %v9803
    %v9944 = vunpack.c.h.b16 %v9803
    %v9945 = vunpack.c.l.b16 %v9804
    %v9946 = vunpack.c.h.b16 %v9804
    %v9947 = vunpack.c.l.b16 %v9805
    %v9948 = vunpack.c.h.b16 %v9805
    %v9949 = vunpack.c.l.b16 %v9806
    %v9950 = vunpack.c.h.b16 %v9806
    %v9951 = vunpack.c.l.b16 %v9807
    %v9952 = vunpack.c.h.b16 %v9807
    %v9953 = vunpack.c.l.b16 %v9808
    %v9954 = vunpack.c.h.b16 %v9808
    %v9955 = vunpack.c.l.b16 %v9809
    %v9956 = vunpack.c.h.b16 %v9809
    %v9957 = vunpack.c.l.b16 %v9810
    %v9958 = vunpack.c.h.b16 %v9810
    %v9959 = vunpack.c.l.b16 %v9811
    %v9960 = vunpack.c.h.b16 %v9811
    %v9961 = vunpack.c.l.b16 %v9812
    %v9962 = vunpack.c.h.b16 %v9812
    %v9963 = vunpack.c.l.b16 %v9813
    %v9964 = vunpack.c.h.b16 %v9813
    %v9965 = vunpack.c.l.b16 %v9814
    %v9966 = vunpack.c.h.b16 %v9814
    %v9967 = vunpack.c.l.b16 %v9815
    %v9968 = vunpack.c.h.b16 %v9815
    %v9969 = vunpack.c.l.b16 %v9816
    %v9970 = vunpack.c.h.b16 %v9816
    %v9971 = vunpack.c.l.b16 %v9817
    %v9972 = vunpack.c.h.b16 %v9817
    %v9973 = vunpack.c.l.b16 %v9818
    %v9974 = vunpack.c.h.b16 %v9818
    %v9975 = vunpack.c.l.b16 %v9819
    %v9976 = vunpack.c.h.b16 %v9819
    %v9977 = vunpack.c.l.b16 %v9820
    %v9978 = vunpack.c.h.b16 %v9820
    %v9979 = vunpack.c.l.b16 %v9821
    %v9980 = vunpack.c.h.b16 %v9821
    %v9981 = vunpack.c.l.b16 %v9822
    %v9982 = vunpack.c.h.b16 %v9822
    %v9983 = vunpack.c.l.b16 %v9823
    %v9984 = vunpack.c.h.b16 %v9823
    %v9985 = vunpack.c.l.b16 %v9824
    %v9986 = vunpack.c.h.b16 %v9824
    %v9987 = vunpack.c.l.b16 %v9825
    %v9988 = vunpack.c.h.b16 %v9825
    %v9989 = vunpack.c.l.b16 %v9826
    %v9990 = vunpack.c.h.b16 %v9826
    %v9991 = vunpack.c.l.b16 %v9827
    %v9992 = vunpack.c.h.b16 %v9827
    %v9993 = vunpack.c.l.b16 %v9828
    %v9994 = vunpack.c.h.b16 %v9828
    %v9995 = vunpack.c.l.b16 %v9829
    %v9996 = vunpack.c.h.b16 %v9829
    %v9997 = vunpack.c.l.b16 %v9830
    %v9998 = vunpack.c.h.b16 %v9830
    %v9999 = vunpack.c.l.b16 %v9831
    %v10000 = vunpack.c.h.b16 %v9831
    %v10001 = vunpack.c.l.b16 %v9832
    %v10002 = vunpack.c.h.b16 %v9832
    %v10003 = vunpack.c.l.b16 %v9833
    %v10004 = vunpack.c.h.b16 %v9833
    %v10005 = vunpack.c.l.b16 %v9834
    %v10006 = vunpack.c.h.b16 %v9834
    %v10007 = vunpack.c.l.b16 %v9835
    %v10008 = vunpack.c.h.b16 %v9835
    %v10009 = vunpack.c.l.b16 %v9836
    %v10010 = vunpack.c.h.b16 %v9836
    %v10011 = vunpack.c.l.b16 %v9837
    %v10012 = vunpack.c.h.b16 %v9837
    %v10013 = vunpack.c.l.b16 %v9838
    %v10014 = vunpack.c.h.b16 %v9838
    %v10015 = vunpack.c.l.b16 %v9839
    %v10016 = vunpack.c.h.b16 %v9839
    %v10017 = vunpack.c.l.b16 %v9840
    %v10018 = vunpack.c.h.b16 %v9840
    %v10019 = vunpack.c.l.b16 %v9841
    %v10020 = vunpack.c.h.b16 %v9841
    %v10021 = vunpack.c.l.b16 %v9842
    %v10022 = vunpack.c.h.b16 %v9842
    %v10023 = vunpack.c.l.b16 %v9843
    %v10024 = vunpack.c.h.b16 %v9843
    %v10025 = vunpack.c.l.b16 %v9844
    %v10026 = vunpack.c.h.b16 %v9844
    %v10027 = vunpack.c.l.b16 %v9845
    %v10028 = vunpack.c.h.b16 %v9845
    %v10029 = vunpack.c.l.b16 %v9846
    %v10030 = vunpack.c.h.b16 %v9846
    %v10031 = vunpack.c.l.b16 %v9847
    %v10032 = vunpack.c.h.b16 %v9847
    %v10033 = vunpack.c.l.b16 %v9848
    %v10034 = vunpack.c.h.b16 %v9848
    %v10035 = vunpack.c.l.b16 %v9849
    %v10036 = vunpack.c.h.b16 %v9849
    %v10037 = vunpack.c.l.b16 %v9850
    %v10038 = vunpack.c.h.b16 %v9850
    %v10039 = vunpack.c.l.b16 %v9851
    %v10040 = vunpack.c.h.b16 %v9851
    %v10041 = vunpack.c.l.b16 %v9852
    %v10042 = vunpack.c.h.b16 %v9852
    %v10043 = vunpack.c.l.b16 %v9853
    %v10044 = vunpack.c.h.b16 %v9853
    %v10045 = vunpack.c.l.b16 %v9854
    %v10046 = vunpack.c.h.b16 %v9854
    %v10047 = vpack.c.b16 %v9927, %v9919
    %v10048 = vpack.c.b16 %v9928, %v9920
    %v10049 = vpack.c.b16 %v9929, %v9921
    %v10050 = vpack.c.b16 %v9930, %v9922
    %v10051 = vpack.c.b16 %v9931, %v9923
    %v10052 = vpack.c.b16 %v9932, %v9924
    %v10053 = vpack.c.b16 %v9933, %v9925
    %v10054 = vpack.c.b16 %v9934, %v9926
    %v10055 = vpack.c.b16 %v9943, %v9935
    %v10056 = vpack.c.b16 %v9944, %v9936
    %v10057 = vpack.c.b16 %v9945, %v9937
    %v10058 = vpack.c.b16 %v9946, %v9938
    %v10059 = vpack.c.b16 %v9947, %v9939
    %v10060 = vpack.c.b16 %v9948, %v9940
    %v10061 = vpack.c.b16 %v9949, %v9941
    %v10062 = vpack.c.b16 %v9950, %v9942
    %v10063 = vpack.c.b16 %v9959, %v9951
    %v10064 = vpack.c.b16 %v9960, %v9952
    %v10065 = vpack.c.b16 %v9961, %v9953
    %v10066 = vpack.c.b16 %v9962, %v9954
    %v10067 = vpack.c.b16 %v9963, %v9955
    %v10068 = vpack.c.b16 %v9964, %v9956
    %v10069 = vpack.c.b16 %v9965, %v9957
    %v10070 = vpack.c.b16 %v9966, %v9958
    %v10071 = vpack.c.b16 %v9975, %v9967
    %v10072 = vpack.c.b16 %v9976, %v9968
    %v10073 = vpack.c.b16 %v9977, %v9969
    %v10074 = vpack.c.b16 %v9978, %v9970
    %v10075 = vpack.c.b16 %v9979, %v9971
    %v10076 = vpack.c.b16 %v9980, %v9972
    %v10077 = vpack.c.b16 %v9981, %v9973
    %v10078 = vpack.c.b16 %v9982, %v9974
    %v10079 = vpack.c.b16 %v9991, %v9983
    %v10080 = vpack.c.b16 %v9992, %v9984
    %v10081 = vpack.c.b16 %v9993, %v9985
    %v10082 = vpack.c.b16 %v9994, %v9986
    %v10083 = vpack.c.b16 %v9995, %v9987
    %v10084 = vpack.c.b16 %v9996, %v9988
    %v10085 = vpack.c.b16 %v9997, %v9989
    %v10086 = vpack.c.b16 %v9998, %v9990
    %v10087 = vpack.c.b16 %v10007, %v9999
    %v10088 = vpack.c.b16 %v10008, %v10000
    %v10089 = vpack.c.b16 %v10009, %v10001
    %v10090 = vpack.c.b16 %v10010, %v10002
    %v10091 = vpack.c.b16 %v10011, %v10003
    %v10092 = vpack.c.b16 %v10012, %v10004
    %v10093 = vpack.c.b16 %v10013, %v10005
    %v10094 = vpack.c.b16 %v10014, %v10006
    %v10095 = vpack.c.b16 %v10023, %v10015
    %v10096 = vpack.c.b16 %v10024, %v10016
    %v10097 = vpack.c.b16 %v10025, %v10017
    %v10098 = vpack.c.b16 %v10026, %v10018
    %v10099 = vpack.c.b16 %v10027, %v10019
    %v10100 = vpack.c.b16 %v10028, %v10020
    %v10101 = vpack.c.b16 %v10029, %v10021
    %v10102 = vpack.c.b16 %v10030, %v10022
    %v10103 = vpack.c.b16 %v10039, %v10031
    %v10104 = vpack.c.b16 %v10040, %v10032
    %v10105 = vpack.c.b16 %v10041, %v10033
    %v10106 = vpack.c.b16 %v10042, %v10034
    %v10107 = vpack.c.b16 %v10043, %v10035
    %v10108 = vpack.c.b16 %v10044, %v10036
    %v10109 = vpack.c.b16 %v10045, %v10037
    %v10110 = vpack.c.b16 %v10046, %v10038
    %10175 = vmatprep.subr.bf16.mxu0 %v10104
    %10176 = vmatpush1.bf16.msra.mxu0 %v10103
    %10177 = vmatprep.subr.bf16.mxu0 %v10096
    %10178 = vmatpush1.bf16.msra.mxu0 %v10095
    %10179 = vmatprep.subr.bf16.mxu0 %v10088
    %10180 = vmatpush1.bf16.msra.mxu0 %v10087
    %10181 = vmatprep.subr.bf16.mxu0 %v10080
    %10182 = vmatpush1.bf16.msra.mxu0 %v10079
    %10183 = vmatprep.subr.bf16.mxu0 %v10072
    %10184 = vmatpush1.bf16.msra.mxu0 %v10071
    %10185 = vmatprep.subr.bf16.mxu0 %v10064
    %10186 = vmatpush1.bf16.msra.mxu0 %v10063
    %10187 = vmatprep.subr.bf16.mxu0 %v10056
    %10188 = vmatpush1.bf16.msra.mxu0 %v10055
    %10189 = vmatprep.subr.bf16.mxu0 %v10048
    %10190 = vmatpush1.bf16.msra.mxu0 %v10047
    %10191 = vmatprep.subr.bf16.mxu0 0
    %10192 = vmatpush2.bf16.msra.mxu0 0
    %10193 = vmatprep.subr.bf16.mxu0 0
    %10194 = vmatpush2.bf16.msra.mxu0 0
    %10195 = vmatprep.subr.bf16.mxu0 0
    %10196 = vmatpush2.bf16.msra.mxu0 0
    %10197 = vmatprep.subr.bf16.mxu0 0
    %10198 = vmatpush2.bf16.msra.mxu0 0
    %10199 = vmatprep.subr.bf16.mxu0 0
    %10200 = vmatpush2.bf16.msra.mxu0 0
    %10201 = vmatprep.subr.bf16.mxu0 0
    %10202 = vmatpush2.bf16.msra.mxu0 0
    %10203 = vmatprep.subr.bf16.mxu0 0
    %10204 = vmatpush2.bf16.msra.mxu0 0
    %10205 = vmatprep.subr.bf16.mxu0 0
    %10206 = vmatpush2.bf16.msra.mxu0 0
    %10207 = vmatprep.mubr.bf16.mxu0 0
    %10208 = vmatmul.mubr.bf16.gmra.mxu0 %v9789
    %v10209 = vpop.f32.mrf.mxu0
    %v10210 = vadd.f32 0.0, %v10209
    %v10211 = vpop.f32.mrf.mxu0
    %v10212 = vadd.f32 0.0, %v10211
    %v10213 = vpop.f32.mrf.mxu0
    %v10214 = vpop.f32.mrf.mxu0
    %10215 = vdwg.mxu0
    %10216 = vmatprep.subr.bf16.mxu0 %v10106
    %10217 = vmatpush1.bf16.msra.mxu0 %v10105
    %10218 = vmatprep.subr.bf16.mxu0 %v10098
    %10219 = vmatpush1.bf16.msra.mxu0 %v10097
    %10220 = vmatprep.subr.bf16.mxu0 %v10090
    %10221 = vmatpush1.bf16.msra.mxu0 %v10089
    %10222 = vmatprep.subr.bf16.mxu0 %v10082
    %10223 = vmatpush1.bf16.msra.mxu0 %v10081
    %10224 = vmatprep.subr.bf16.mxu0 %v10074
    %10225 = vmatpush1.bf16.msra.mxu0 %v10073
    %10226 = vmatprep.subr.bf16.mxu0 %v10066
    %10227 = vmatpush1.bf16.msra.mxu0 %v10065
    %10228 = vmatprep.subr.bf16.mxu0 %v10058
    %10229 = vmatpush1.bf16.msra.mxu0 %v10057
    %10230 = vmatprep.subr.bf16.mxu0 %v10050
    %10231 = vmatpush1.bf16.msra.mxu0 %v10049
    %10232 = vmatprep.subr.bf16.mxu0 0
    %10233 = vmatpush2.bf16.msra.mxu0 0
    %10234 = vmatprep.subr.bf16.mxu0 0
    %10235 = vmatpush2.bf16.msra.mxu0 0
    %10236 = vmatprep.subr.bf16.mxu0 0
    %10237 = vmatpush2.bf16.msra.mxu0 0
    %10238 = vmatprep.subr.bf16.mxu0 0
    %10239 = vmatpush2.bf16.msra.mxu0 0
    %10240 = vmatprep.subr.bf16.mxu0 0
    %10241 = vmatpush2.bf16.msra.mxu0 0
    %10242 = vmatprep.subr.bf16.mxu0 0
    %10243 = vmatpush2.bf16.msra.mxu0 0
    %10244 = vmatprep.subr.bf16.mxu0 0
    %10245 = vmatpush2.bf16.msra.mxu0 0
    %10246 = vmatprep.subr.bf16.mxu0 0
    %10247 = vmatpush2.bf16.msra.mxu0 0
    %10248 = vmatprep.mubr.bf16.mxu0 0
    %10249 = vmatmul.mubr.bf16.gmra.mxu0 %v9789
    %v10250 = vpop.f32.mrf.mxu0
    %v10251 = vadd.f32 0.0, %v10250
    %v10252 = vpop.f32.mrf.mxu0
    %v10253 = vadd.f32 0.0, %v10252
    %v10254 = vpop.f32.mrf.mxu0
    %v10255 = vpop.f32.mrf.mxu0
    %10256 = vdwg.mxu0
    %10257 = vmatprep.subr.bf16.mxu0 %v10108
    %10258 = vmatpush1.bf16.msra.mxu0 %v10107
    %10259 = vmatprep.subr.bf16.mxu0 %v10100
    %10260 = vmatpush1.bf16.msra.mxu0 %v10099
    %10261 = vmatprep.subr.bf16.mxu0 %v10092
    %10262 = vmatpush1.bf16.msra.mxu0 %v10091
    %10263 = vmatprep.subr.bf16.mxu0 %v10084
    %10264 = vmatpush1.bf16.msra.mxu0 %v10083
    %10265 = vmatprep.subr.bf16.mxu0 %v10076
    %10266 = vmatpush1.bf16.msra.mxu0 %v10075
    %10267 = vmatprep.subr.bf16.mxu0 %v10068
    %10268 = vmatpush1.bf16.msra.mxu0 %v10067
    %10269 = vmatprep.subr.bf16.mxu0 %v10060
    %10270 = vmatpush1.bf16.msra.mxu0 %v10059
    %10271 = vmatprep.subr.bf16.mxu0 %v10052
    %10272 = vmatpush1.bf16.msra.mxu0 %v10051
    %10273 = vmatprep.subr.bf16.mxu0 0
    %10274 = vmatpush2.bf16.msra.mxu0 0
    %10275 = vmatprep.subr.bf16.mxu0 0
    %10276 = vmatpush2.bf16.msra.mxu0 0
    %10277 = vmatprep.subr.bf16.mxu0 0
    %10278 = vmatpush2.bf16.msra.mxu0 0
    %10279 = vmatprep.subr.bf16.mxu0 0
    %10280 = vmatpush2.bf16.msra.mxu0 0
    %10281 = vmatprep.subr.bf16.mxu0 0
    %10282 = vmatpush2.bf16.msra.mxu0 0
    %10283 = vmatprep.subr.bf16.mxu0 0
    %10284 = vmatpush2.bf16.msra.mxu0 0
    %10285 = vmatprep.subr.bf16.mxu0 0
    %10286 = vmatpush2.bf16.msra.mxu0 0
    %10287 = vmatprep.subr.bf16.mxu0 0
    %10288 = vmatpush2.bf16.msra.mxu0 0
    %10289 = vmatprep.mubr.bf16.mxu0 0
    %10290 = vmatmul.mubr.bf16.gmra.mxu0 %v9789
    %v10291 = vpop.f32.mrf.mxu0
    %v10292 = vadd.f32 0.0, %v10291
    %v10293 = vpop.f32.mrf.mxu0
    %v10294 = vadd.f32 0.0, %v10293
    %v10295 = vpop.f32.mrf.mxu0
    %v10296 = vpop.f32.mrf.mxu0
    %10297 = vdwg.mxu0
    %10298 = vmatprep.subr.bf16.mxu0 %v10110
    %10299 = vmatpush1.bf16.msra.mxu0 %v10109
    %10300 = vmatprep.subr.bf16.mxu0 %v10102
    %10301 = vmatpush1.bf16.msra.mxu0 %v10101
    %10302 = vmatprep.subr.bf16.mxu0 %v10094
    %10303 = vmatpush1.bf16.msra.mxu0 %v10093
    %10304 = vmatprep.subr.bf16.mxu0 %v10086
    %10305 = vmatpush1.bf16.msra.mxu0 %v10085
    %10306 = vmatprep.subr.bf16.mxu0 %v10078
    %10307 = vmatpush1.bf16.msra.mxu0 %v10077
    %10308 = vmatprep.subr.bf16.mxu0 %v10070
    %10309 = vmatpush1.bf16.msra.mxu0 %v10069
    %10310 = vmatprep.subr.bf16.mxu0 %v10062
    %10311 = vmatpush1.bf16.msra.mxu0 %v10061
    %10312 = vmatprep.subr.bf16.mxu0 %v10054
    %10313 = vmatpush1.bf16.msra.mxu0 %v10053
    %10314 = vmatprep.subr.bf16.mxu0 0
    %10315 = vmatpush2.bf16.msra.mxu0 0
    %10316 = vmatprep.subr.bf16.mxu0 0
    %10317 = vmatpush2.bf16.msra.mxu0 0
    %10318 = vmatprep.subr.bf16.mxu0 0
    %10319 = vmatpush2.bf16.msra.mxu0 0
    %10320 = vmatprep.subr.bf16.mxu0 0
    %10321 = vmatpush2.bf16.msra.mxu0 0
    %10322 = vmatprep.subr.bf16.mxu0 0
    %10323 = vmatpush2.bf16.msra.mxu0 0
    %10324 = vmatprep.subr.bf16.mxu0 0
    %10325 = vmatpush2.bf16.msra.mxu0 0
    %10326 = vmatprep.subr.bf16.mxu0 0
    %10327 = vmatpush2.bf16.msra.mxu0 0
    %10328 = vmatprep.subr.bf16.mxu0 0
    %10329 = vmatpush2.bf16.msra.mxu0 0
    %10330 = vmatprep.mubr.bf16.mxu0 0
    %10331 = vmatmul.mubr.bf16.gmra.mxu0 %v9789
    %v10332 = vpop.f32.mrf.mxu0
    %v10333 = vadd.f32 0.0, %v10332
    %v10334 = vpop.f32.mrf.mxu0
    %v10335 = vadd.f32 0.0, %v10334
    %v10336 = vpop.f32.mrf.mxu0
    %v10337 = vpop.f32.mrf.mxu0
    %10338 = vdwg.mxu0
    %v10339 = vadd.f32 %v9711, %v10210
    %v10340 = vadd.f32 %v9712, %v10212
    %v10341 = vadd.f32 %v9713, %v10251
    %v10342 = vadd.f32 %v9714, %v10253
    %v10343 = vadd.f32 %v9715, %v10292
    %v10344 = vadd.f32 %v9716, %v10294
    %v10345 = vadd.f32 %v9717, %v10333
    %v10346 = vadd.f32 %v9718, %v10335
    %v10347 = vld [vmem:[#allocation8] sm:$0xff]
    %v10349 = vlaneseq
    %v10350 = vshrl.u32 %v10349, 7
    %v10351 = vsub.s32 0, %v10350
    %v10352 = vrot.slane %v10347, %v10351
    %v10353 = vlaneseq
    %v10354 = vshrl.u32 %v10353, 7
    %v10355 = vsub.s32 1, %v10354
    %v10356 = vrot.slane %v10347, %v10355
    %v10357 = vlaneseq
    %v10358 = vshrl.u32 %v10357, 7
    %v10359 = vsub.s32 2, %v10358
    %v10360 = vrot.slane %v10347, %v10359
    %v10361 = vlaneseq
    %v10362 = vshrl.u32 %v10361, 7
    %v10363 = vsub.s32 3, %v10362
    %v10364 = vrot.slane %v10347, %v10363
    %v10365 = vlaneseq
    %v10366 = vshrl.u32 %v10365, 7
    %v10367 = vsub.s32 4, %v10366
    %v10368 = vrot.slane %v10347, %v10367
    %v10369 = vlaneseq
    %v10370 = vshrl.u32 %v10369, 7
    %v10371 = vsub.s32 5, %v10370
    %v10372 = vrot.slane %v10347, %v10371
    %v10373 = vlaneseq
    %v10374 = vshrl.u32 %v10373, 7
    %v10375 = vsub.s32 6, %v10374
    %v10376 = vrot.slane %v10347, %v10375
    %v10377 = vlaneseq
    %v10378 = vshrl.u32 %v10377, 7
    %v10379 = vsub.s32 7, %v10378
    %v10380 = vrot.slane %v10347, %v10379
    %v10389 = vadd.f32 %v10339, %v10352
    %v10390 = vadd.f32 %v10340, %v10356
    %v10391 = vadd.f32 %v10341, %v10360
    %v10392 = vadd.f32 %v10342, %v10364
    %v10393 = vadd.f32 %v10343, %v10368
    %v10394 = vadd.f32 %v10344, %v10372
    %v10395 = vadd.f32 %v10345, %v10376
    %v10396 = vadd.f32 %v10346, %v10380
    %v10397 = vmax.f32 %v10389, 0.0
    %v10398 = vmax.f32 %v10390, 0.0
    %v10399 = vmax.f32 %v10391, 0.0
    %v10400 = vmax.f32 %v10392, 0.0
    %v10401 = vmax.f32 %v10393, 0.0
    %v10402 = vmax.f32 %v10394, 0.0
    %v10403 = vmax.f32 %v10395, 0.0
    %v10404 = vmax.f32 %v10396, 0.0
    %v10405 = vpack.c.bf16 %v10397, %v10397
    %v10406 = vpack.c.bf16 %v10398, %v10398
    %v10407 = vpack.c.bf16 %v10399, %v10399
    %v10408 = vpack.c.bf16 %v10400, %v10400
    %v10409 = vpack.c.bf16 %v10401, %v10401
    %v10410 = vpack.c.bf16 %v10402, %v10402
    %v10411 = vpack.c.bf16 %v10403, %v10403
    %v10412 = vpack.c.bf16 %v10404, %v10404
    %v10413 = vld [vmem:[#allocation10] sm:$0xf]
    %v10414 = vld [vmem:[#allocation10 + $0x4] sm:$0xf]
    %v10415 = vld [vmem:[#allocation10 + $0x8] sm:$0xf]
    %v10416 = vld [vmem:[#allocation10 + $0xc] sm:$0xf]
    %v10417 = vld [vmem:[#allocation10 + $0x10] sm:$0xf]
    %v10418 = vld [vmem:[#allocation10 + $0x14] sm:$0xf]
    %v10419 = vld [vmem:[#allocation10 + $0x18] sm:$0xf]
    %v10420 = vld [vmem:[#allocation10 + $0x1c] sm:$0xf]
    %v10421 = vld [vmem:[#allocation10 + $0x20] sm:$0xf]
    %v10422 = vld [vmem:[#allocation10 + $0x24] sm:$0xf]
    %v10423 = vld [vmem:[#allocation10 + $0x28] sm:$0xf]
    %v10424 = vld [vmem:[#allocation10 + $0x2c] sm:$0xf]
    %v10425 = vld [vmem:[#allocation10 + $0x30] sm:$0xf]
    %v10426 = vld [vmem:[#allocation10 + $0x34] sm:$0xf]
    %v10427 = vld [vmem:[#allocation10 + $0x38] sm:$0xf]
    %v10428 = vld [vmem:[#allocation10 + $0x3c] sm:$0xf]
    %v10429 = vld [vmem:[#allocation10 + $0x40] sm:$0xf]
    %v10430 = vld [vmem:[#allocation10 + $0x44] sm:$0xf]
    %v10431 = vld [vmem:[#allocation10 + $0x48] sm:$0xf]
    %v10432 = vld [vmem:[#allocation10 + $0x4c] sm:$0xf]
    %v10433 = vld [vmem:[#allocation10 + $0x50] sm:$0xf]
    %v10434 = vld [vmem:[#allocation10 + $0x54] sm:$0xf]
    %v10435 = vld [vmem:[#allocation10 + $0x58] sm:$0xf]
    %v10436 = vld [vmem:[#allocation10 + $0x5c] sm:$0xf]
    %v10437 = vld [vmem:[#allocation10 + $0x60] sm:$0xf]
    %v10438 = vld [vmem:[#allocation10 + $0x64] sm:$0xf]
    %v10439 = vld [vmem:[#allocation10 + $0x68] sm:$0xf]
    %v10440 = vld [vmem:[#allocation10 + $0x6c] sm:$0xf]
    %v10441 = vld [vmem:[#allocation10 + $0x70] sm:$0xf]
    %v10442 = vld [vmem:[#allocation10 + $0x74] sm:$0xf]
    %v10443 = vld [vmem:[#allocation10 + $0x78] sm:$0xf]
    %v10444 = vld [vmem:[#allocation10 + $0x7c] sm:$0xf]
    %v10445 = vld [vmem:[#allocation10 + $0x80] sm:$0xf]
    %v10446 = vld [vmem:[#allocation10 + $0x84] sm:$0xf]
    %v10447 = vld [vmem:[#allocation10 + $0x88] sm:$0xf]
    %v10448 = vld [vmem:[#allocation10 + $0x8c] sm:$0xf]
    %v10449 = vld [vmem:[#allocation10 + $0x90] sm:$0xf]
    %v10450 = vld [vmem:[#allocation10 + $0x94] sm:$0xf]
    %v10451 = vld [vmem:[#allocation10 + $0x98] sm:$0xf]
    %v10452 = vld [vmem:[#allocation10 + $0x9c] sm:$0xf]
    %v10453 = vld [vmem:[#allocation10 + $0xa0] sm:$0xf]
    %v10454 = vld [vmem:[#allocation10 + $0xa4] sm:$0xf]
    %v10455 = vld [vmem:[#allocation10 + $0xa8] sm:$0xf]
    %v10456 = vld [vmem:[#allocation10 + $0xac] sm:$0xf]
    %v10457 = vld [vmem:[#allocation10 + $0xb0] sm:$0xf]
    %v10458 = vld [vmem:[#allocation10 + $0xb4] sm:$0xf]
    %v10459 = vld [vmem:[#allocation10 + $0xb8] sm:$0xf]
    %v10460 = vld [vmem:[#allocation10 + $0xbc] sm:$0xf]
    %v10461 = vld [vmem:[#allocation10 + $0xc0] sm:$0xf]
    %v10462 = vld [vmem:[#allocation10 + $0xc4] sm:$0xf]
    %v10463 = vld [vmem:[#allocation10 + $0xc8] sm:$0xf]
    %v10464 = vld [vmem:[#allocation10 + $0xcc] sm:$0xf]
    %v10465 = vld [vmem:[#allocation10 + $0xd0] sm:$0xf]
    %v10466 = vld [vmem:[#allocation10 + $0xd4] sm:$0xf]
    %v10467 = vld [vmem:[#allocation10 + $0xd8] sm:$0xf]
    %v10468 = vld [vmem:[#allocation10 + $0xdc] sm:$0xf]
    %v10469 = vld [vmem:[#allocation10 + $0xe0] sm:$0xf]
    %v10470 = vld [vmem:[#allocation10 + $0xe4] sm:$0xf]
    %v10471 = vld [vmem:[#allocation10 + $0xe8] sm:$0xf]
    %v10472 = vld [vmem:[#allocation10 + $0xec] sm:$0xf]
    %v10473 = vld [vmem:[#allocation10 + $0xf0] sm:$0xf]
    %v10474 = vld [vmem:[#allocation10 + $0xf4] sm:$0xf]
    %v10475 = vld [vmem:[#allocation10 + $0xf8] sm:$0xf]
    %v10476 = vld [vmem:[#allocation10 + $0xfc] sm:$0xf]
    %v10477 = vld [vmem:[#allocation10 + $0x100] sm:$0xf]
    %v10478 = vld [vmem:[#allocation10 + $0x104] sm:$0xf]
    %v10479 = vld [vmem:[#allocation10 + $0x108] sm:$0xf]
    %v10480 = vld [vmem:[#allocation10 + $0x10c] sm:$0xf]
    %v10481 = vld [vmem:[#allocation10 + $0x110] sm:$0xf]
    %v10482 = vld [vmem:[#allocation10 + $0x114] sm:$0xf]
    %v10483 = vld [vmem:[#allocation10 + $0x118] sm:$0xf]
    %v10484 = vld [vmem:[#allocation10 + $0x11c] sm:$0xf]
    %v10485 = vld [vmem:[#allocation10 + $0x120] sm:$0xf]
    %v10486 = vld [vmem:[#allocation10 + $0x124] sm:$0xf]
    %v10487 = vld [vmem:[#allocation10 + $0x128] sm:$0xf]
    %v10488 = vld [vmem:[#allocation10 + $0x12c] sm:$0xf]
    %v10489 = vld [vmem:[#allocation10 + $0x130] sm:$0xf]
    %v10490 = vld [vmem:[#allocation10 + $0x134] sm:$0xf]
    %v10491 = vld [vmem:[#allocation10 + $0x138] sm:$0xf]
    %v10492 = vld [vmem:[#allocation10 + $0x13c] sm:$0xf]
    %v10493 = vld [vmem:[#allocation10 + $0x140] sm:$0xf]
    %v10494 = vld [vmem:[#allocation10 + $0x144] sm:$0xf]
    %v10495 = vld [vmem:[#allocation10 + $0x148] sm:$0xf]
    %v10496 = vld [vmem:[#allocation10 + $0x14c] sm:$0xf]
    %v10497 = vld [vmem:[#allocation10 + $0x150] sm:$0xf]
    %v10498 = vld [vmem:[#allocation10 + $0x154] sm:$0xf]
    %v10499 = vld [vmem:[#allocation10 + $0x158] sm:$0xf]
    %v10500 = vld [vmem:[#allocation10 + $0x15c] sm:$0xf]
    %v10501 = vld [vmem:[#allocation10 + $0x160] sm:$0xf]
    %v10502 = vld [vmem:[#allocation10 + $0x164] sm:$0xf]
    %v10503 = vld [vmem:[#allocation10 + $0x168] sm:$0xf]
    %v10504 = vld [vmem:[#allocation10 + $0x16c] sm:$0xf]
    %v10505 = vld [vmem:[#allocation10 + $0x170] sm:$0xf]
    %v10506 = vld [vmem:[#allocation10 + $0x174] sm:$0xf]
    %v10507 = vld [vmem:[#allocation10 + $0x178] sm:$0xf]
    %v10508 = vld [vmem:[#allocation10 + $0x17c] sm:$0xf]
    %v10509 = vld [vmem:[#allocation10 + $0x180] sm:$0xf]
    %v10510 = vld [vmem:[#allocation10 + $0x184] sm:$0xf]
    %v10511 = vld [vmem:[#allocation10 + $0x188] sm:$0xf]
    %v10512 = vld [vmem:[#allocation10 + $0x18c] sm:$0xf]
    %v10513 = vld [vmem:[#allocation10 + $0x190] sm:$0xf]
    %v10514 = vld [vmem:[#allocation10 + $0x194] sm:$0xf]
    %v10515 = vld [vmem:[#allocation10 + $0x198] sm:$0xf]
    %v10516 = vld [vmem:[#allocation10 + $0x19c] sm:$0xf]
    %v10517 = vld [vmem:[#allocation10 + $0x1a0] sm:$0xf]
    %v10518 = vld [vmem:[#allocation10 + $0x1a4] sm:$0xf]
    %v10519 = vld [vmem:[#allocation10 + $0x1a8] sm:$0xf]
    %v10520 = vld [vmem:[#allocation10 + $0x1ac] sm:$0xf]
    %v10521 = vld [vmem:[#allocation10 + $0x1b0] sm:$0xf]
    %v10522 = vld [vmem:[#allocation10 + $0x1b4] sm:$0xf]
    %v10523 = vld [vmem:[#allocation10 + $0x1b8] sm:$0xf]
    %v10524 = vld [vmem:[#allocation10 + $0x1bc] sm:$0xf]
    %v10525 = vld [vmem:[#allocation10 + $0x1c0] sm:$0xf]
    %v10526 = vld [vmem:[#allocation10 + $0x1c4] sm:$0xf]
    %v10527 = vld [vmem:[#allocation10 + $0x1c8] sm:$0xf]
    %v10528 = vld [vmem:[#allocation10 + $0x1cc] sm:$0xf]
    %v10529 = vld [vmem:[#allocation10 + $0x1d0] sm:$0xf]
    %v10530 = vld [vmem:[#allocation10 + $0x1d4] sm:$0xf]
    %v10531 = vld [vmem:[#allocation10 + $0x1d8] sm:$0xf]
    %v10532 = vld [vmem:[#allocation10 + $0x1dc] sm:$0xf]
    %v10533 = vld [vmem:[#allocation10 + $0x1e0] sm:$0xf]
    %v10534 = vld [vmem:[#allocation10 + $0x1e4] sm:$0xf]
    %v10535 = vld [vmem:[#allocation10 + $0x1e8] sm:$0xf]
    %v10536 = vld [vmem:[#allocation10 + $0x1ec] sm:$0xf]
    %v10537 = vld [vmem:[#allocation10 + $0x1f0] sm:$0xf]
    %v10538 = vld [vmem:[#allocation10 + $0x1f4] sm:$0xf]
    %v10539 = vld [vmem:[#allocation10 + $0x1f8] sm:$0xf]
    %v10540 = vld [vmem:[#allocation10 + $0x1fc] sm:$0xf]
    %v10541 = vld [vmem:[#allocation11] sm:$0x1]
    %v10543 = vlaneseq
    %v10544 = vshrl.u32 %v10543, 7
    %v10545 = vsub.s32 0, %v10544
    %v10546 = vrot.slane %v10541, %v10545
    %v10676 = vunpack.c.l.b16 %v10413
    %v10677 = vunpack.c.l.b16 %v10414
    %v10678 = vunpack.c.l.b16 %v10415
    %v10679 = vunpack.c.l.b16 %v10416
    %v10680 = vunpack.c.l.b16 %v10417
    %v10681 = vunpack.c.l.b16 %v10418
    %v10682 = vunpack.c.l.b16 %v10419
    %v10683 = vunpack.c.l.b16 %v10420
    %v10684 = vunpack.c.l.b16 %v10421
    %v10685 = vunpack.c.l.b16 %v10422
    %v10686 = vunpack.c.l.b16 %v10423
    %v10687 = vunpack.c.l.b16 %v10424
    %v10688 = vunpack.c.l.b16 %v10425
    %v10689 = vunpack.c.l.b16 %v10426
    %v10690 = vunpack.c.l.b16 %v10427
    %v10691 = vunpack.c.l.b16 %v10428
    %v10692 = vunpack.c.l.b16 %v10429
    %v10693 = vunpack.c.l.b16 %v10430
    %v10694 = vunpack.c.l.b16 %v10431
    %v10695 = vunpack.c.l.b16 %v10432
    %v10696 = vunpack.c.l.b16 %v10433
    %v10697 = vunpack.c.l.b16 %v10434
    %v10698 = vunpack.c.l.b16 %v10435
    %v10699 = vunpack.c.l.b16 %v10436
    %v10700 = vunpack.c.l.b16 %v10437
    %v10701 = vunpack.c.l.b16 %v10438
    %v10702 = vunpack.c.l.b16 %v10439
    %v10703 = vunpack.c.l.b16 %v10440
    %v10704 = vunpack.c.l.b16 %v10441
    %v10705 = vunpack.c.l.b16 %v10442
    %v10706 = vunpack.c.l.b16 %v10443
    %v10707 = vunpack.c.l.b16 %v10444
    %v10708 = vunpack.c.l.b16 %v10445
    %v10709 = vunpack.c.l.b16 %v10446
    %v10710 = vunpack.c.l.b16 %v10447
    %v10711 = vunpack.c.l.b16 %v10448
    %v10712 = vunpack.c.l.b16 %v10449
    %v10713 = vunpack.c.l.b16 %v10450
    %v10714 = vunpack.c.l.b16 %v10451
    %v10715 = vunpack.c.l.b16 %v10452
    %v10716 = vunpack.c.l.b16 %v10453
    %v10717 = vunpack.c.l.b16 %v10454
    %v10718 = vunpack.c.l.b16 %v10455
    %v10719 = vunpack.c.l.b16 %v10456
    %v10720 = vunpack.c.l.b16 %v10457
    %v10721 = vunpack.c.l.b16 %v10458
    %v10722 = vunpack.c.l.b16 %v10459
    %v10723 = vunpack.c.l.b16 %v10460
    %v10724 = vunpack.c.l.b16 %v10461
    %v10725 = vunpack.c.l.b16 %v10462
    %v10726 = vunpack.c.l.b16 %v10463
    %v10727 = vunpack.c.l.b16 %v10464
    %v10728 = vunpack.c.l.b16 %v10465
    %v10729 = vunpack.c.l.b16 %v10466
    %v10730 = vunpack.c.l.b16 %v10467
    %v10731 = vunpack.c.l.b16 %v10468
    %v10732 = vunpack.c.l.b16 %v10469
    %v10733 = vunpack.c.l.b16 %v10470
    %v10734 = vunpack.c.l.b16 %v10471
    %v10735 = vunpack.c.l.b16 %v10472
    %v10736 = vunpack.c.l.b16 %v10473
    %v10737 = vunpack.c.l.b16 %v10474
    %v10738 = vunpack.c.l.b16 %v10475
    %v10739 = vunpack.c.l.b16 %v10476
    %v10740 = vunpack.c.l.b16 %v10477
    %v10741 = vunpack.c.l.b16 %v10478
    %v10742 = vunpack.c.l.b16 %v10479
    %v10743 = vunpack.c.l.b16 %v10480
    %v10744 = vunpack.c.l.b16 %v10481
    %v10745 = vunpack.c.l.b16 %v10482
    %v10746 = vunpack.c.l.b16 %v10483
    %v10747 = vunpack.c.l.b16 %v10484
    %v10748 = vunpack.c.l.b16 %v10485
    %v10749 = vunpack.c.l.b16 %v10486
    %v10750 = vunpack.c.l.b16 %v10487
    %v10751 = vunpack.c.l.b16 %v10488
    %v10752 = vunpack.c.l.b16 %v10489
    %v10753 = vunpack.c.l.b16 %v10490
    %v10754 = vunpack.c.l.b16 %v10491
    %v10755 = vunpack.c.l.b16 %v10492
    %v10756 = vunpack.c.l.b16 %v10493
    %v10757 = vunpack.c.l.b16 %v10494
    %v10758 = vunpack.c.l.b16 %v10495
    %v10759 = vunpack.c.l.b16 %v10496
    %v10760 = vunpack.c.l.b16 %v10497
    %v10761 = vunpack.c.l.b16 %v10498
    %v10762 = vunpack.c.l.b16 %v10499
    %v10763 = vunpack.c.l.b16 %v10500
    %v10764 = vunpack.c.l.b16 %v10501
    %v10765 = vunpack.c.l.b16 %v10502
    %v10766 = vunpack.c.l.b16 %v10503
    %v10767 = vunpack.c.l.b16 %v10504
    %v10768 = vunpack.c.l.b16 %v10505
    %v10769 = vunpack.c.l.b16 %v10506
    %v10770 = vunpack.c.l.b16 %v10507
    %v10771 = vunpack.c.l.b16 %v10508
    %v10772 = vunpack.c.l.b16 %v10509
    %v10773 = vunpack.c.l.b16 %v10510
    %v10774 = vunpack.c.l.b16 %v10511
    %v10775 = vunpack.c.l.b16 %v10512
    %v10776 = vunpack.c.l.b16 %v10513
    %v10777 = vunpack.c.l.b16 %v10514
    %v10778 = vunpack.c.l.b16 %v10515
    %v10779 = vunpack.c.l.b16 %v10516
    %v10780 = vunpack.c.l.b16 %v10517
    %v10781 = vunpack.c.l.b16 %v10518
    %v10782 = vunpack.c.l.b16 %v10519
    %v10783 = vunpack.c.l.b16 %v10520
    %v10784 = vunpack.c.l.b16 %v10521
    %v10785 = vunpack.c.l.b16 %v10522
    %v10786 = vunpack.c.l.b16 %v10523
    %v10787 = vunpack.c.l.b16 %v10524
    %v10788 = vunpack.c.l.b16 %v10525
    %v10789 = vunpack.c.l.b16 %v10526
    %v10790 = vunpack.c.l.b16 %v10527
    %v10791 = vunpack.c.l.b16 %v10528
    %v10792 = vunpack.c.l.b16 %v10529
    %v10793 = vunpack.c.l.b16 %v10530
    %v10794 = vunpack.c.l.b16 %v10531
    %v10795 = vunpack.c.l.b16 %v10532
    %v10796 = vunpack.c.l.b16 %v10533
    %v10797 = vunpack.c.l.b16 %v10534
    %v10798 = vunpack.c.l.b16 %v10535
    %v10799 = vunpack.c.l.b16 %v10536
    %v10800 = vunpack.c.l.b16 %v10537
    %v10801 = vunpack.c.l.b16 %v10538
    %v10802 = vunpack.c.l.b16 %v10539
    %v10803 = vunpack.c.l.b16 %v10540
    %v10804 = vpack.c.b16 %v10677, %v10676
    %v10805 = vpack.c.b16 %v10679, %v10678
    %v10806 = vpack.c.b16 %v10681, %v10680
    %v10807 = vpack.c.b16 %v10683, %v10682
    %v10808 = vpack.c.b16 %v10685, %v10684
    %v10809 = vpack.c.b16 %v10687, %v10686
    %v10810 = vpack.c.b16 %v10689, %v10688
    %v10811 = vpack.c.b16 %v10691, %v10690
    %v10812 = vpack.c.b16 %v10693, %v10692
    %v10813 = vpack.c.b16 %v10695, %v10694
    %v10814 = vpack.c.b16 %v10697, %v10696
    %v10815 = vpack.c.b16 %v10699, %v10698
    %v10816 = vpack.c.b16 %v10701, %v10700
    %v10817 = vpack.c.b16 %v10703, %v10702
    %v10818 = vpack.c.b16 %v10705, %v10704
    %v10819 = vpack.c.b16 %v10707, %v10706
    %v10820 = vpack.c.b16 %v10709, %v10708
    %v10821 = vpack.c.b16 %v10711, %v10710
    %v10822 = vpack.c.b16 %v10713, %v10712
    %v10823 = vpack.c.b16 %v10715, %v10714
    %v10824 = vpack.c.b16 %v10717, %v10716
    %v10825 = vpack.c.b16 %v10719, %v10718
    %v10826 = vpack.c.b16 %v10721, %v10720
    %v10827 = vpack.c.b16 %v10723, %v10722
    %v10828 = vpack.c.b16 %v10725, %v10724
    %v10829 = vpack.c.b16 %v10727, %v10726
    %v10830 = vpack.c.b16 %v10729, %v10728
    %v10831 = vpack.c.b16 %v10731, %v10730
    %v10832 = vpack.c.b16 %v10733, %v10732
    %v10833 = vpack.c.b16 %v10735, %v10734
    %v10834 = vpack.c.b16 %v10737, %v10736
    %v10835 = vpack.c.b16 %v10739, %v10738
    %v10836 = vpack.c.b16 %v10741, %v10740
    %v10837 = vpack.c.b16 %v10743, %v10742
    %v10838 = vpack.c.b16 %v10745, %v10744
    %v10839 = vpack.c.b16 %v10747, %v10746
    %v10840 = vpack.c.b16 %v10749, %v10748
    %v10841 = vpack.c.b16 %v10751, %v10750
    %v10842 = vpack.c.b16 %v10753, %v10752
    %v10843 = vpack.c.b16 %v10755, %v10754
    %v10844 = vpack.c.b16 %v10757, %v10756
    %v10845 = vpack.c.b16 %v10759, %v10758
    %v10846 = vpack.c.b16 %v10761, %v10760
    %v10847 = vpack.c.b16 %v10763, %v10762
    %v10848 = vpack.c.b16 %v10765, %v10764
    %v10849 = vpack.c.b16 %v10767, %v10766
    %v10850 = vpack.c.b16 %v10769, %v10768
    %v10851 = vpack.c.b16 %v10771, %v10770
    %v10852 = vpack.c.b16 %v10773, %v10772
    %v10853 = vpack.c.b16 %v10775, %v10774
    %v10854 = vpack.c.b16 %v10777, %v10776
    %v10855 = vpack.c.b16 %v10779, %v10778
    %v10856 = vpack.c.b16 %v10781, %v10780
    %v10857 = vpack.c.b16 %v10783, %v10782
    %v10858 = vpack.c.b16 %v10785, %v10784
    %v10859 = vpack.c.b16 %v10787, %v10786
    %v10860 = vpack.c.b16 %v10789, %v10788
    %v10861 = vpack.c.b16 %v10791, %v10790
    %v10862 = vpack.c.b16 %v10793, %v10792
    %v10863 = vpack.c.b16 %v10795, %v10794
    %v10864 = vpack.c.b16 %v10797, %v10796
    %v10865 = vpack.c.b16 %v10799, %v10798
    %v10866 = vpack.c.b16 %v10801, %v10800
    %v10867 = vpack.c.b16 %v10803, %v10802
    %10932 = vmatprep.subr.bf16.mxu0 0
    %10933 = vmatpush1.bf16.msra.mxu0 %v10811
    %10934 = vmatprep.subr.bf16.mxu0 0
    %10935 = vmatpush1.bf16.msra.mxu0 %v10810
    %10936 = vmatprep.subr.bf16.mxu0 0
    %10937 = vmatpush1.bf16.msra.mxu0 %v10809
    %10938 = vmatprep.subr.bf16.mxu0 0
    %10939 = vmatpush1.bf16.msra.mxu0 %v10808
    %10940 = vmatprep.subr.bf16.mxu0 0
    %10941 = vmatpush1.bf16.msra.mxu0 %v10807
    %10942 = vmatprep.subr.bf16.mxu0 0
    %10943 = vmatpush1.bf16.msra.mxu0 %v10806
    %10944 = vmatprep.subr.bf16.mxu0 0
    %10945 = vmatpush1.bf16.msra.mxu0 %v10805
    %10946 = vmatprep.subr.bf16.mxu0 0
    %10947 = vmatpush1.bf16.msra.mxu0 %v10804
    %10948 = vmatprep.subr.bf16.mxu0 0
    %10949 = vmatpush2.bf16.msra.mxu0 %v10819
    %10950 = vmatprep.subr.bf16.mxu0 0
    %10951 = vmatpush2.bf16.msra.mxu0 %v10818
    %10952 = vmatprep.subr.bf16.mxu0 0
    %10953 = vmatpush2.bf16.msra.mxu0 %v10817
    %10954 = vmatprep.subr.bf16.mxu0 0
    %10955 = vmatpush2.bf16.msra.mxu0 %v10816
    %10956 = vmatprep.subr.bf16.mxu0 0
    %10957 = vmatpush2.bf16.msra.mxu0 %v10815
    %10958 = vmatprep.subr.bf16.mxu0 0
    %10959 = vmatpush2.bf16.msra.mxu0 %v10814
    %10960 = vmatprep.subr.bf16.mxu0 0
    %10961 = vmatpush2.bf16.msra.mxu0 %v10813
    %10962 = vmatprep.subr.bf16.mxu0 0
    %10963 = vmatpush2.bf16.msra.mxu0 %v10812
    %10964 = vmatprep.mubr.bf16.mxu0 %v10406
    %10965 = vmatmul.mubr.bf16.gmra.mxu0 %v10405
    %v10966 = vpop.f32.mrf.mxu0
    %v10967 = vadd.f32 %v10546, %v10966
    %v10968 = vpop.f32.mrf.mxu0
    %v10969 = vpop.f32.mrf.mxu0
    %v10970 = vpop.f32.mrf.mxu0
    %10971 = vdwg.mxu0
    %10972 = vmatprep.subr.bf16.mxu0 0
    %10973 = vmatpush1.bf16.msra.mxu0 %v10827
    %10974 = vmatprep.subr.bf16.mxu0 0
    %10975 = vmatpush1.bf16.msra.mxu0 %v10826
    %10976 = vmatprep.subr.bf16.mxu0 0
    %10977 = vmatpush1.bf16.msra.mxu0 %v10825
    %10978 = vmatprep.subr.bf16.mxu0 0
    %10979 = vmatpush1.bf16.msra.mxu0 %v10824
    %10980 = vmatprep.subr.bf16.mxu0 0
    %10981 = vmatpush1.bf16.msra.mxu0 %v10823
    %10982 = vmatprep.subr.bf16.mxu0 0
    %10983 = vmatpush1.bf16.msra.mxu0 %v10822
    %10984 = vmatprep.subr.bf16.mxu0 0
    %10985 = vmatpush1.bf16.msra.mxu0 %v10821
    %10986 = vmatprep.subr.bf16.mxu0 0
    %10987 = vmatpush1.bf16.msra.mxu0 %v10820
    %10988 = vmatprep.subr.bf16.mxu0 0
    %10989 = vmatpush2.bf16.msra.mxu0 %v10835
    %10990 = vmatprep.subr.bf16.mxu0 0
    %10991 = vmatpush2.bf16.msra.mxu0 %v10834
    %10992 = vmatprep.subr.bf16.mxu0 0
    %10993 = vmatpush2.bf16.msra.mxu0 %v10833
    %10994 = vmatprep.subr.bf16.mxu0 0
    %10995 = vmatpush2.bf16.msra.mxu0 %v10832
    %10996 = vmatprep.subr.bf16.mxu0 0
    %10997 = vmatpush2.bf16.msra.mxu0 %v10831
    %10998 = vmatprep.subr.bf16.mxu0 0
    %10999 = vmatpush2.bf16.msra.mxu0 %v10830
    %11000 = vmatprep.subr.bf16.mxu0 0
    %11001 = vmatpush2.bf16.msra.mxu0 %v10829
    %11002 = vmatprep.subr.bf16.mxu0 0
    %11003 = vmatpush2.bf16.msra.mxu0 %v10828
    %11004 = vmatprep.mubr.bf16.mxu0 %v10408
    %11005 = vmatmul.mubr.bf16.gmra.mxu0 %v10407
    %v11006 = vpop.f32.mrf.mxu0
    %v11007 = vadd.f32 %v10967, %v11006
    %v11008 = vpop.f32.mrf.mxu0
    %v11009 = vpop.f32.mrf.mxu0
    %v11010 = vpop.f32.mrf.mxu0
    %11011 = vdwg.mxu0
    %11012 = vmatprep.subr.bf16.mxu0 0
    %11013 = vmatpush1.bf16.msra.mxu0 %v10843
    %11014 = vmatprep.subr.bf16.mxu0 0
    %11015 = vmatpush1.bf16.msra.mxu0 %v10842
    %11016 = vmatprep.subr.bf16.mxu0 0
    %11017 = vmatpush1.bf16.msra.mxu0 %v10841
    %11018 = vmatprep.subr.bf16.mxu0 0
    %11019 = vmatpush1.bf16.msra.mxu0 %v10840
    %11020 = vmatprep.subr.bf16.mxu0 0
    %11021 = vmatpush1.bf16.msra.mxu0 %v10839
    %11022 = vmatprep.subr.bf16.mxu0 0
    %11023 = vmatpush1.bf16.msra.mxu0 %v10838
    %11024 = vmatprep.subr.bf16.mxu0 0
    %11025 = vmatpush1.bf16.msra.mxu0 %v10837
    %11026 = vmatprep.subr.bf16.mxu0 0
    %11027 = vmatpush1.bf16.msra.mxu0 %v10836
    %11028 = vmatprep.subr.bf16.mxu0 0
    %11029 = vmatpush2.bf16.msra.mxu0 %v10851
    %11030 = vmatprep.subr.bf16.mxu0 0
    %11031 = vmatpush2.bf16.msra.mxu0 %v10850
    %11032 = vmatprep.subr.bf16.mxu0 0
    %11033 = vmatpush2.bf16.msra.mxu0 %v10849
    %11034 = vmatprep.subr.bf16.mxu0 0
    %11035 = vmatpush2.bf16.msra.mxu0 %v10848
    %11036 = vmatprep.subr.bf16.mxu0 0
    %11037 = vmatpush2.bf16.msra.mxu0 %v10847
    %11038 = vmatprep.subr.bf16.mxu0 0
    %11039 = vmatpush2.bf16.msra.mxu0 %v10846
    %11040 = vmatprep.subr.bf16.mxu0 0
    %11041 = vmatpush2.bf16.msra.mxu0 %v10845
    %11042 = vmatprep.subr.bf16.mxu0 0
    %11043 = vmatpush2.bf16.msra.mxu0 %v10844
    %11044 = vmatprep.mubr.bf16.mxu0 %v10410
    %11045 = vmatmul.mubr.bf16.gmra.mxu0 %v10409
    %v11046 = vpop.f32.mrf.mxu0
    %v11047 = vadd.f32 %v11007, %v11046
    %v11048 = vpop.f32.mrf.mxu0
    %v11049 = vpop.f32.mrf.mxu0
    %v11050 = vpop.f32.mrf.mxu0
    %11051 = vdwg.mxu0
    %11052 = vmatprep.subr.bf16.mxu0 0
    %11053 = vmatpush1.bf16.msra.mxu0 %v10859
    %11054 = vmatprep.subr.bf16.mxu0 0
    %11055 = vmatpush1.bf16.msra.mxu0 %v10858
    %11056 = vmatprep.subr.bf16.mxu0 0
    %11057 = vmatpush1.bf16.msra.mxu0 %v10857
    %11058 = vmatprep.subr.bf16.mxu0 0
    %11059 = vmatpush1.bf16.msra.mxu0 %v10856
    %11060 = vmatprep.subr.bf16.mxu0 0
    %11061 = vmatpush1.bf16.msra.mxu0 %v10855
    %11062 = vmatprep.subr.bf16.mxu0 0
    %11063 = vmatpush1.bf16.msra.mxu0 %v10854
    %11064 = vmatprep.subr.bf16.mxu0 0
    %11065 = vmatpush1.bf16.msra.mxu0 %v10853
    %11066 = vmatprep.subr.bf16.mxu0 0
    %11067 = vmatpush1.bf16.msra.mxu0 %v10852
    %11068 = vmatprep.subr.bf16.mxu0 0
    %11069 = vmatpush2.bf16.msra.mxu0 %v10867
    %11070 = vmatprep.subr.bf16.mxu0 0
    %11071 = vmatpush2.bf16.msra.mxu0 %v10866
    %11072 = vmatprep.subr.bf16.mxu0 0
    %11073 = vmatpush2.bf16.msra.mxu0 %v10865
    %11074 = vmatprep.subr.bf16.mxu0 0
    %11075 = vmatpush2.bf16.msra.mxu0 %v10864
    %11076 = vmatprep.subr.bf16.mxu0 0
    %11077 = vmatpush2.bf16.msra.mxu0 %v10863
    %11078 = vmatprep.subr.bf16.mxu0 0
    %11079 = vmatpush2.bf16.msra.mxu0 %v10862
    %11080 = vmatprep.subr.bf16.mxu0 0
    %11081 = vmatpush2.bf16.msra.mxu0 %v10861
    %11082 = vmatprep.subr.bf16.mxu0 0
    %11083 = vmatpush2.bf16.msra.mxu0 %v10860
    %11084 = vmatprep.mubr.bf16.mxu0 %v10412
    %11085 = vmatmul.mubr.bf16.gmra.mxu0 %v10411
    %v11086 = vpop.f32.mrf.mxu0
    %v11087 = vadd.f32 %v11047, %v11086
    %v11088 = vpop.f32.mrf.mxu0
    %v11089 = vpop.f32.mrf.mxu0
    %v11090 = vpop.f32.mrf.mxu0
    %11091 = vdwg.mxu0
    %11092 = vst [vmem:[#allocation13] sm:$0x3] %v11087
    // Predicated region
    $region54: #{tpu_custom_call.1} parent=1 // pred_check
      _
    $region55: #{tpu_custom_call.1} parent=1 // pred_check_branch
      %11094 = sbr.rel (0) target = $region57
    $region56: #{tpu_custom_call.1} parent=1 // pred_region
      %s11096 = ssub.s32 32, 32
      %11097 = vsyncadd [#allocation4], %s11096
      %s11099 = sshll.u32 [#allocation13], 4
      %s11100 = int_to_ptr.vmem [resolvable:$true] %s11099
      %11102 = dma.vmem_to_hbm [thread:$0]  %s11100, 32, %s7, [#allocation4]
    $region57: #{tpu_custom_call.1} parent=1 // pred_fallthru
      _
    // Predicated region
    $region58: #{tpu_custom_call.1} parent=1 // pred_check
      _
    $region59: #{tpu_custom_call.1} parent=1 // pred_check_branch
      %11104 = sbr.rel (0) target = $region61
    $region60: #{tpu_custom_call.1} parent=1 // pred_region
      %11105 = dma.done [#allocation4], 32
    $region61: #{tpu_custom_call.1} parent=1 // pred_fallthru
      _
    %11106 = vsyncpa [#allocation3], 1
    %11107 = vsyncpa [#allocation6], 1
    %11108 = vsyncpa [#allocation9], 1
    %11109 = vsyncpa [#allocation12], 1
    %11110 = vsyncpa [#allocation4], 1

</llo_original>
